<compile_context>
chip_gen: v6e
topology: v6e:2x2x1
jax: 0.10.0
libtpu: 0.0.40
codegen_flags: <defaults>
</compile_context>

<pallas_src>
import jax
import jax.numpy as jnp
from jax.experimental import pallas as pl
from jax.experimental.pallas import tpu as pltpu

EMBED_DIM = 100
SEQ_LEN = 50
IN_DIM = SEQ_LEN * EMBED_DIM      # 5000 (multiple of 8 -> no K padding needed)
H1 = 1200
H2 = 128
OUT_DIM = 2

H1_PAD = 1280                     # hidden-1 padded so tiles are multiples of 128
TH1 = 640                         # large H1 slab per grid step (2 steps total)
N_STEPS = H1_PAD // TH1


def _mlp_kernel(x_ref, w1_ref, b1_ref, w2_ref, b2_ref, w3_ref, b3_ref,
                o_ref, acc_ref):
    j = pl.program_id(0)

    @pl.when(j == 0)
    def _():
        acc_ref[...] = jnp.zeros_like(acc_ref)

    # Layer 1 on this H1 slab: (B,5000) bf16 @ (5000,TH1) bf16 -> f32, +bias, ReLU.
    xb = x_ref[...].astype(jnp.bfloat16)          # in-kernel cast; x is tiny
    h1 = jnp.dot(xb, w1_ref[...], preferred_element_type=jnp.float32)
    h1 = jnp.maximum(h1 + b1_ref[...], 0.0)

    # Partial layer-2 contribution: (B,TH1) bf16 @ (TH1,128) bf16 -> f32 accumulate.
    acc_ref[...] += jnp.dot(h1.astype(jnp.bfloat16), w2_ref[...],
                            preferred_element_type=jnp.float32)

    # Finalize on the last slab: bias + ReLU, then layer 3.
    @pl.when(j == pl.num_programs(0) - 1)
    def _():
        h2 = jnp.maximum(acc_ref[...] + b2_ref[...], 0.0)
        o_ref[...] = (jnp.dot(h2, w3_ref[...], preferred_element_type=jnp.float32)
                      + b3_ref[...]).astype(o_ref.dtype)


@jax.jit
def mlp_forward(x, params):
    B, K = x.shape
    assert K == IN_DIM

    w1p, b1p, w2p = params["w1"], params["b1"], params["w2"]
    b2p, w3p, b3p = params["b2"], params["w3"], params["b3"]

    flops = 2 * B * IN_DIM * H1_PAD + 2 * B * H1_PAD * H2 + 2 * B * H2 * OUT_DIM
    bytes_accessed = (x.size * 4 + w1p.size * 2 + b1p.size * 4 + w2p.size * 2
                      + b2p.size * 4 + w3p.size * 4 + b3p.size * 4
                      + B * OUT_DIM * 4)

    out = pl.pallas_call(
        _mlp_kernel,
        out_shape=jax.ShapeDtypeStruct((B, OUT_DIM), jnp.float32),
        grid=(N_STEPS,),
        in_specs=[
            pl.BlockSpec((B, IN_DIM), lambda j: (0, 0)),       # x (f32, resident)
            pl.BlockSpec((IN_DIM, TH1), lambda j: (0, j)),     # W1 slab (bf16)
            pl.BlockSpec((1, TH1), lambda j: (0, j)),          # b1 slab (f32)
            pl.BlockSpec((TH1, H2), lambda j: (j, 0)),         # W2 slab (bf16)
            pl.BlockSpec((1, H2), lambda j: (0, 0)),           # b2 (resident)
            pl.BlockSpec((H2, OUT_DIM), lambda j: (0, 0)),     # W3 (resident)
            pl.BlockSpec((1, OUT_DIM), lambda j: (0, 0)),      # b3 (resident)
        ],
        out_specs=pl.BlockSpec((B, OUT_DIM), lambda j: (0, 0)),
        scratch_shapes=[pltpu.VMEM((B, H2), jnp.float32)],     # layer-2 accumulator
        compiler_params=pltpu.CompilerParams(
            dimension_semantics=("arbitrary",),                # H1 axis is a reduction
            vmem_limit_bytes=32 << 20,                         # ~13.5 MiB actually used
        ),
        cost_estimate=pl.CostEstimate(flops=flops, transcendentals=0,
                                      bytes_accessed=bytes_accessed),
    )(x, w1p, b1p, w2p, b2p, w3p, b3p)
    return out


def prepare_params(w1, b1, w2, b2, w3, b3):
    """One-time weight transform (outside the jitted forward): pad H1 1200->1280
    with zeros (padded columns/rows contribute exactly 0 through ReLU and W2),
    and cast the streamed weights W1/W2 to bf16."""
    pad = H1_PAD - H1
    w1p = jnp.pad(w1, ((0, 0), (0, pad))).astype(jnp.bfloat16)      # (5000, 1280)
    b1p = jnp.pad(b1, (0, pad)).astype(jnp.float32).reshape(1, H1_PAD)
    w2p = jnp.pad(w2, ((0, pad), (0, 0))).astype(jnp.bfloat16)      # (1280, 128)
    return dict(
        w1=w1p, b1=b1p, w2=w2p,
        b2=b2.astype(jnp.float32).reshape(1, H2),
        w3=w3.astype(jnp.float32),
        b3=b3.astype(jnp.float32).reshape(1, OUT_DIM),
    )


def init_params(key):
    """Deterministic init mimicking PyTorch nn.Linear default (uniform +/- 1/sqrt(fan_in)),
    stored as (in_features, out_features) so the forward is x @ W + b."""
    ks = jax.random.split(key, 6)

    def linear(kw, kb, fan_in, fan_out):
        bound = 1.0 / jnp.sqrt(fan_in)
        w = jax.random.uniform(kw, (fan_in, fan_out), jnp.float32, -bound, bound)
        b = jax.random.uniform(kb, (fan_out,), jnp.float32, -bound, bound)
        return w, b

    w1, b1 = linear(ks[0], ks[1], IN_DIM, H1)
    w2, b2 = linear(ks[2], ks[3], H1, H2)
    w3, b3 = linear(ks[4], ks[5], H2, OUT_DIM)
    return w1, b1, w2, b2, w3, b3


def reference_forward(x, w1, b1, w2, b2, w3, b3):
    # Mirrors the kernel's quantization: x/W1 bf16, h1/W2 bf16, f32 accumulation,
    # final layer in f32.
    h1 = jnp.dot(x.astype(jnp.bfloat16), w1.astype(jnp.bfloat16),
                 preferred_element_type=jnp.float32)
    h1 = jnp.maximum(h1 + b1, 0.0)
    h2 = jnp.dot(h1.astype(jnp.bfloat16), w2.astype(jnp.bfloat16),
                 preferred_element_type=jnp.float32)
    h2 = jnp.maximum(h2 + b2, 0.0)
    return jnp.dot(h2, w3, preferred_element_type=jnp.float32) + b3


if __name__ == "__main__":
    key = jax.random.PRNGKey(0)
    k_params, k_x = jax.random.split(key)

    raw = init_params(k_params)
    params = prepare_params(*raw)     # one-time: pad / bf16-cast weights

    batch = 2
    x = jax.random.normal(k_x, (batch, IN_DIM), jnp.float32)

    out = jax.block_until_ready(mlp_forward(x, params))
    ref = reference_forward(x, *raw)

    assert out.shape == (batch, OUT_DIM)
    assert jnp.allclose(out, ref, atol=2e-2, rtol=2e-2), (
        f"mismatch vs reference: max abs diff {float(jnp.max(jnp.abs(out - ref)))}")
    print("KERNEL_OK")
</pallas_src>

<mosaic_0001>
module attributes {stable_mosaic.version = 11 : i64} {
  func.func @_mlp_kernel(%arg0: i32, %arg1: memref<2x5000xf32, #tpu.memory_space<vmem>>, %arg2: memref<5000x640xbf16, #tpu.memory_space<vmem>>, %arg3: memref<1x640xf32, #tpu.memory_space<vmem>>, %arg4: memref<640x128xbf16, #tpu.memory_space<vmem>>, %arg5: memref<1x128xf32, #tpu.memory_space<vmem>>, %arg6: memref<128x2xf32, #tpu.memory_space<vmem>>, %arg7: memref<1x2xf32, #tpu.memory_space<vmem>>, %arg8: memref<2x2xf32, #tpu.memory_space<vmem>>, %arg9: memref<2x128xf32, #tpu.memory_space<vmem>>) attributes {dimension_semantics = [#tpu.dimension_semantics<arbitrary>], iteration_bounds = array<i64: 2>, scalar_prefetch = 0 : i64, scratch_operands = 1 : i64, tpu.core_type = #tpu.core_type<tc>, window_params = [{pipeline_mode = #tpu.pipeline_mode<synchronous>, transform_indices = @transform_0, window_bounds = array<i64: 2, 5000>}, {transform_indices = @transform_1, window_bounds = array<i64: 5000, 640>}, {transform_indices = @transform_2, window_bounds = array<i64: 1, 640>}, {transform_indices = @transform_3, window_bounds = array<i64: 640, 128>}, {pipeline_mode = #tpu.pipeline_mode<synchronous>, transform_indices = @transform_4, window_bounds = array<i64: 1, 128>}, {pipeline_mode = #tpu.pipeline_mode<synchronous>, transform_indices = @transform_5, window_bounds = array<i64: 128, 2>}, {pipeline_mode = #tpu.pipeline_mode<synchronous>, transform_indices = @transform_6, window_bounds = array<i64: 1, 2>}, {pipeline_mode = #tpu.pipeline_mode<synchronous>, transform_indices = @transform_7, window_bounds = array<i64: 2, 2>}]} {
    %c0_i32 = arith.constant 0 : i32
    %0 = arith.cmpi eq, %arg0, %c0_i32 : i32
    %1 = arith.extui %0 : i1 to i32
    %c0_i32_0 = arith.constant 0 : i32
    %2 = arith.cmpi ne, %1, %c0_i32_0 : i32
    scf.if %2 {
      %cst_15 = arith.constant 0.000000e+00 : f32
      %21 = vector.broadcast %cst_15 : f32 to vector<2x128xf32>
      %c0_16 = arith.constant 0 : index
      %c0_17 = arith.constant 0 : index
      %22 = vector.load %arg9[%c0_16, %c0_17] : memref<2x128xf32, #tpu.memory_space<vmem>>, vector<2x128xf32>
      tpu.vector_store %arg9[%c0_16, %c0_17], %21 {strides = array<i32>} : memref<2x128xf32, #tpu.memory_space<vmem>>, vector<2x128xf32>,
    } else {
    }
    %c0 = arith.constant 0 : index
    %c0_1 = arith.constant 0 : index
    %3 = vector.load %arg1[%c0, %c0_1] : memref<2x5000xf32, #tpu.memory_space<vmem>>, vector<2x5000xf32>
    %4 = arith.truncf %3 : vector<2x5000xf32> to vector<2x5000xbf16>
    %c0_2 = arith.constant 0 : index
    %c0_3 = arith.constant 0 : index
    %5 = vector.load %arg2[%c0_2, %c0_3] : memref<5000x640xbf16, #tpu.memory_space<vmem>>, vector<5000x640xbf16>
    %cst = arith.constant dense<0.000000e+00> : vector<2x640xf32>
    %6 = tpu.matmul %4, %5, %cst {dimension_numbers = #tpu.dot_dimension_numbers<[1], [0], [0], [1], [0, 0, 1, 1], [], []>} : vector<2x5000xbf16>, vector<5000x640xbf16>, vector<2x640xf32> -> vector<2x640xf32>
    %c0_4 = arith.constant 0 : index
    %c0_5 = arith.constant 0 : index
    %7 = vector.load %arg3[%c0_4, %c0_5] : memref<1x640xf32, #tpu.memory_space<vmem>>, vector<1x640xf32>
    %8 = vector.broadcast %7 : vector<1x640xf32> to vector<2x640xf32>
    %9 = arith.addf %6, %8 : vector<2x640xf32>
    %cst_6 = arith.constant 0.000000e+00 : f32
    %10 = vector.broadcast %cst_6 : f32 to vector<2x640xf32>
    %11 = arith.maximumf %9, %10 : vector<2x640xf32>
    %c0_7 = arith.constant 0 : index
    %c0_8 = arith.constant 0 : index
    %12 = vector.load %arg9[%c0_7, %c0_8] : memref<2x128xf32, #tpu.memory_space<vmem>>, vector<2x128xf32>
    %13 = arith.truncf %11 : vector<2x640xf32> to vector<2x640xbf16>
    %c0_9 = arith.constant 0 : index
    %c0_10 = arith.constant 0 : index
    %14 = vector.load %arg4[%c0_9, %c0_10] : memref<640x128xbf16, #tpu.memory_space<vmem>>, vector<640x128xbf16>
    %cst_11 = arith.constant dense<0.000000e+00> : vector<2x128xf32>
    %15 = tpu.matmul %13, %14, %cst_11 {dimension_numbers = #tpu.dot_dimension_numbers<[1], [0], [0], [1], [0, 0, 1, 1], [], []>} : vector<2x640xbf16>, vector<640x128xbf16>, vector<2x128xf32> -> vector<2x128xf32>
    %16 = arith.addf %12, %15 : vector<2x128xf32>
    %c0_12 = arith.constant 0 : index
    %c0_13 = arith.constant 0 : index
    %17 = vector.load %arg9[%c0_12, %c0_13] : memref<2x128xf32, #tpu.memory_space<vmem>>, vector<2x128xf32>
    tpu.vector_store %arg9[%c0_12, %c0_13], %16 {strides = array<i32>} : memref<2x128xf32, #tpu.memory_space<vmem>>, vector<2x128xf32>,
    %c1_i32 = arith.constant 1 : i32
    %18 = arith.cmpi eq, %arg0, %c1_i32 : i32
    %19 = arith.extui %18 : i1 to i32
    %c0_i32_14 = arith.constant 0 : i32
    %20 = arith.cmpi ne, %19, %c0_i32_14 : i32
    scf.if %20 {
      %c0_15 = arith.constant 0 : index
      %c0_16 = arith.constant 0 : index
      %21 = vector.load %arg9[%c0_15, %c0_16] : memref<2x128xf32, #tpu.memory_space<vmem>>, vector<2x128xf32>
      %c0_17 = arith.constant 0 : index
      %c0_18 = arith.constant 0 : index
      %22 = vector.load %arg5[%c0_17, %c0_18] : memref<1x128xf32, #tpu.memory_space<vmem>>, vector<1x128xf32>
      %23 = vector.broadcast %22 : vector<1x128xf32> to vector<2x128xf32>
      %24 = arith.addf %21, %23 : vector<2x128xf32>
      %cst_19 = arith.constant 0.000000e+00 : f32
      %25 = vector.broadcast %cst_19 : f32 to vector<2x128xf32>
      %26 = arith.maximumf %24, %25 : vector<2x128xf32>
      %c0_20 = arith.constant 0 : index
      %c0_21 = arith.constant 0 : index
      %27 = vector.load %arg6[%c0_20, %c0_21] : memref<128x2xf32, #tpu.memory_space<vmem>>, vector<128x2xf32>
      %cst_22 = arith.constant dense<0.000000e+00> : vector<2x2xf32>
      %28 = tpu.matmul %26, %27, %cst_22 {dimension_numbers = #tpu.dot_dimension_numbers<[1], [0], [0], [1], [0, 0, 1, 1], [], []>} : vector<2x128xf32>, vector<128x2xf32>, vector<2x2xf32> -> vector<2x2xf32>
      %c0_23 = arith.constant 0 : index
      %c0_24 = arith.constant 0 : index
      %29 = vector.load %arg7[%c0_23, %c0_24] : memref<1x2xf32, #tpu.memory_space<vmem>>, vector<1x2xf32>
      %30 = vector.broadcast %29 : vector<1x2xf32> to vector<2x2xf32>
      %31 = arith.addf %28, %30 : vector<2x2xf32>
      %c0_25 = arith.constant 0 : index
      %c0_26 = arith.constant 0 : index
      %32 = vector.load %arg8[%c0_25, %c0_26] : memref<2x2xf32, #tpu.memory_space<vmem>>, vector<2x2xf32>
      tpu.vector_store %arg8[%c0_25, %c0_26], %31 {strides = array<i32>} : memref<2x2xf32, #tpu.memory_space<vmem>>, vector<2x2xf32>,
    } else {
    }
    return
  }
  func.func @transform_0(%arg0: i32) -> (i32, i32) {
    %c0_i32 = arith.constant 0 : i32
    %c0_i32_0 = arith.constant 0 : i32
    %c0_i32_1 = arith.constant 0 : i32
    return %c0_i32, %c0_i32_0 : i32, i32
  }
  func.func @transform_1(%arg0: i32) -> (i32, i32) {
    %c0_i32 = arith.constant 0 : i32
    %c0_i32_0 = arith.constant 0 : i32
    return %c0_i32, %arg0 : i32, i32
  }
  func.func @transform_2(%arg0: i32) -> (i32, i32) {
    %c0_i32 = arith.constant 0 : i32
    %c0_i32_0 = arith.constant 0 : i32
    return %c0_i32, %arg0 : i32, i32
  }
  func.func @transform_3(%arg0: i32) -> (i32, i32) {
    %c0_i32 = arith.constant 0 : i32
    %c0_i32_0 = arith.constant 0 : i32
    return %arg0, %c0_i32 : i32, i32
  }
  func.func @transform_4(%arg0: i32) -> (i32, i32) {
    %c0_i32 = arith.constant 0 : i32
    %c0_i32_0 = arith.constant 0 : i32
    %c0_i32_1 = arith.constant 0 : i32
    return %c0_i32, %c0_i32_0 : i32, i32
  }
  func.func @transform_5(%arg0: i32) -> (i32, i32) {
    %c0_i32 = arith.constant 0 : i32
    %c0_i32_0 = arith.constant 0 : i32
    %c0_i32_1 = arith.constant 0 : i32
    return %c0_i32, %c0_i32_0 : i32, i32
  }
  func.func @transform_6(%arg0: i32) -> (i32, i32) {
    %c0_i32 = arith.constant 0 : i32
    %c0_i32_0 = arith.constant 0 : i32
    %c0_i32_1 = arith.constant 0 : i32
    return %c0_i32, %c0_i32_0 : i32, i32
  }
  func.func @transform_7(%arg0: i32) -> (i32, i32) {
    %c0_i32 = arith.constant 0 : i32
    %c0_i32_0 = arith.constant 0 : i32
    %c0_i32_1 = arith.constant 0 : i32
    return %c0_i32, %c0_i32_0 : i32, i32
  }
}

</mosaic_0001>

<llo_original>
// kernel: mlp_forward.1
$region0: #{mlp_forward.1}
  #allocation0 [shape = 'u32[]', space=smem, size = 0x4, offset = 0x4, fixed_abs, tag = 'smem constant byte address 0x4 - core index']
  #allocation1 [shape = 'u32[144,128]{1,0:T(1,128)}', space=vmem, size = 0x12000, scoped, tag = 'internal scratch']
  #allocation2 [shape = 'f32[2,128]{1,0:T(2,128)}', space=vmem, size = 0x400, scoped, tag = 'scratch operand']
  %s0 = inlined_call_operand.hbm [shape: f32[2,5000], index: 0, kind: input, shape index: {}]
  %s1 = inlined_call_operand.hbm [shape: bf16[5000,1280], index: 1, kind: input, shape index: {}]
  %s2 = inlined_call_operand.hbm [shape: f32[1,1280], index: 2, kind: input, shape index: {}]
  %s3 = inlined_call_operand.hbm [shape: bf16[1280,128], index: 3, kind: input, shape index: {}]
  %s4 = inlined_call_operand.hbm [shape: f32[1,128], index: 4, kind: input, shape index: {}]
  %s5 = inlined_call_operand.vmem [shape: f32[128,2], index: 5, kind: input, shape index: {}]
  %s6 = inlined_call_operand.hbm [shape: f32[1,2], index: 6, kind: input, shape index: {}]
  %s7 = inlined_call_operand.hbm [shape: f32[2,2], index: 7, kind: output, shape index: {}]
  %s8 = sld [smem:[#allocation0]]
  $region93: #{mlp_forward.1} parent=0
    _
  %s10 = ssub.s32 1, %s8
  %s11 = scalar_select 0, %s10, %s8
  $region1: #{mlp_forward.1} parent=0
    #allocation3 [shape = 'u8[40960]{0}', space=vmem, size = 0xa000, scoped, tag = 'input window, operand 0, single buffered']
    #allocation4 [shape = 's32[2]{0}', space=sflag, size = 0x8, scoped, tag = 'scoped memory for mlp_forward.1']
    #allocation5 [shape = 's32[2]{0}', space=sflag, size = 0x8, scoped, tag = 'scoped memory for mlp_forward.1']
    #allocation6 [shape = 'u8[12800000]{0}', space=vmem, size = 0xc35000, scoped, tag = 'input window, operand 1']
    #allocation7 [shape = 's32[2]{0}', space=sflag, size = 0x8, scoped, tag = 'scoped memory for mlp_forward.1']
    #allocation8 [shape = 'u8[5120]{0}', space=vmem, size = 0x1400, scoped, tag = 'input window, operand 2']
    #allocation9 [shape = 'u8[327680]{0}', space=vmem, size = 0x50000, scoped, tag = 'input window, operand 3']
    #allocation10 [shape = 's32[2]{0}', space=sflag, size = 0x8, scoped, tag = 'scoped memory for mlp_forward.1']
    #allocation11 [shape = 'u8[512]{0}', space=vmem, size = 0x400, scoped, tag = 'input window, operand 4, single buffered']
    #allocation12 [shape = 'u8[512]{0}', space=vmem, size = 0x400, scoped, tag = 'input window, operand 6, single buffered']
    #allocation13 [shape = 's32[1]{0}', space=sflag, size = 0x4, scoped, tag = 'scoped memory for mlp_forward.1']
    #allocation14 [shape = 'u8[1024]{0}', space=vmem, size = 0x400, scoped, tag = 'output window, operand 0, single buffered']
    %12 = vsyncpa [#allocation4], 0
    %13 = vsyncpa [#allocation7], 0
    %s14 = scalar_lea.sflag [#allocation7], 1
    %15 = vsyncpa %s14, 0
    %16 = vsyncpa [#allocation10], 0
    %s17 = scalar_lea.sflag [#allocation10], 1
    %18 = vsyncpa %s17, 0
    %19 = vsyncpa [#allocation13], 0
    %20 = vsyncpa [#allocation5], 0
    loop: start=0, step=1, limit=4
    $region2: #{mlp_forward.1} parent=1 // loop_pre_header
      _
    $region3: #{mlp_forward.1} parent=1 // loop_header
      %s22 = sphi 0, %s26
      %p23 = scmp.ge.s32.totalorder %s22, 4
      %s30 = sphi 0, %s30
      %s32 = sphi 0, %s30
      %s33 = sphi 0, %s32
      %s47 = sphi 0, %s33
      %s53 = sphi 0, %s55
      %s56 = sphi 0, %s53
      %s57 = sphi 0, %s56
      %s73 = sphi 0, %s57
      %s79 = sphi 0, %s81
      %s82 = sphi 0, %s79
      %s83 = sphi 0, %s82
      %s99 = sphi 0, %s83
      %s105 = sphi 0, %s107
      %s108 = sphi 0, %s105
      %s109 = sphi 0, %s108
      %s125 = sphi 0, %s109
      %s129 = sphi 0, %s129
      %s131 = sphi 0, %s129
      %s132 = sphi 0, %s131
      %s146 = sphi 0, %s132
      %s150 = sphi 0, %s150
      %s152 = sphi 0, %s150
      %s153 = sphi 0, %s152
      %s167 = sphi 0, %s153
      %s171 = sphi 0, %s171
      %s173 = sphi 0, %s171
      %s174 = sphi 0, %s173
      %s188 = sphi 0, %s174
      %s192 = sphi 0, %s192
      %s194 = sphi 0, %s192
      %s195 = sphi 0, %s194
      %s209 = sphi 0, %s195
    $region4: #{mlp_forward.1} parent=1 // loop_header_branch
      %25 = sbr.rel (%p23) target = $region8
    $region5: #{mlp_forward.1} parent=1 // loop_body
      %s27 = ssub.s32 %s22, 1
      %s28 = ssub.s32 %s22, 2
      %s29 = sadd.s32 %s22, 1
      %s31 = sadd.s32 %s30, 1
      %p34 = scmp.eq.s32.totalorder %s22, 1
      %p35 = scmp.ne.s32.totalorder %s30, %s32
      %p36 = scmp.eq.s32.totalorder %s22, 0
      %p37 = por %p35, %p36
      %p38 = scmp.ne.s32.totalorder %s30, %s32
      %p39 = scmp.eq.s32.totalorder %s27, 1
      %p40 = por %p38, %p39
      %p41 = scmp.ne.s32.totalorder %s32, %s33
      %p42 = scmp.eq.s32.totalorder %s27, 0
      %p43 = por %p41, %p42
      %p44 = scmp.ne.s32.totalorder %s32, %s33
      %p45 = scmp.eq.s32.totalorder %s28, 1
      %p46 = por %p44, %p45
      %p48 = scmp.ne.s32.totalorder %s33, %s47
      %p49 = scmp.eq.s32.totalorder %s28, 0
      %p50 = por %p48, %p49
      %s51 = ssub.s32 %s22, %s29
      %p52 = scmp.eq.s32.totalorder %s51, 0
      %s54 = sadd.s32 %s53, 1
      %s55 = scalar_select %p52, %s53, %s54
      %p58 = pneg %p52
      %p59 = scmp.eq.s32.totalorder %s22, 1
      %p60 = por %p58, %p59
      %p61 = scmp.ne.s32.totalorder %s53, %s56
      %p62 = scmp.eq.s32.totalorder %s22, 0
      %p63 = por %p61, %p62
      %p64 = scmp.ne.s32.totalorder %s53, %s56
      %p65 = scmp.eq.s32.totalorder %s27, 1
      %p66 = por %p64, %p65
      %p67 = scmp.ne.s32.totalorder %s56, %s57
      %p68 = scmp.eq.s32.totalorder %s27, 0
      %p69 = por %p67, %p68
      %p70 = scmp.ne.s32.totalorder %s56, %s57
      %p71 = scmp.eq.s32.totalorder %s28, 1
      %p72 = por %p70, %p71
      %p74 = scmp.ne.s32.totalorder %s57, %s73
      %p75 = scmp.eq.s32.totalorder %s28, 0
      %p76 = por %p74, %p75
      %s77 = ssub.s32 %s22, %s29
      %p78 = scmp.eq.s32.totalorder %s77, 0
      %s80 = sadd.s32 %s79, 1
      %s81 = scalar_select %p78, %s79, %s80
      %p84 = pneg %p78
      %p85 = scmp.eq.s32.totalorder %s22, 1
      %p86 = por %p84, %p85
      %p87 = scmp.ne.s32.totalorder %s79, %s82
      %p88 = scmp.eq.s32.totalorder %s22, 0
      %p89 = por %p87, %p88
      %p90 = scmp.ne.s32.totalorder %s79, %s82
      %p91 = scmp.eq.s32.totalorder %s27, 1
      %p92 = por %p90, %p91
      %p93 = scmp.ne.s32.totalorder %s82, %s83
      %p94 = scmp.eq.s32.totalorder %s27, 0
      %p95 = por %p93, %p94
      %p96 = scmp.ne.s32.totalorder %s82, %s83
      %p97 = scmp.eq.s32.totalorder %s28, 1
      %p98 = por %p96, %p97
      %p100 = scmp.ne.s32.totalorder %s83, %s99
      %p101 = scmp.eq.s32.totalorder %s28, 0
      %p102 = por %p100, %p101
      %s103 = ssub.s32 %s22, %s29
      %p104 = scmp.eq.s32.totalorder %s103, 0
      %s106 = sadd.s32 %s105, 1
      %s107 = scalar_select %p104, %s105, %s106
      %p110 = pneg %p104
      %p111 = scmp.eq.s32.totalorder %s22, 1
      %p112 = por %p110, %p111
      %p113 = scmp.ne.s32.totalorder %s105, %s108
      %p114 = scmp.eq.s32.totalorder %s22, 0
      %p115 = por %p113, %p114
      %p116 = scmp.ne.s32.totalorder %s105, %s108
      %p117 = scmp.eq.s32.totalorder %s27, 1
      %p118 = por %p116, %p117
      %p119 = scmp.ne.s32.totalorder %s108, %s109
      %p120 = scmp.eq.s32.totalorder %s27, 0
      %p121 = por %p119, %p120
      %p122 = scmp.ne.s32.totalorder %s108, %s109
      %p123 = scmp.eq.s32.totalorder %s28, 1
      %p124 = por %p122, %p123
      %p126 = scmp.ne.s32.totalorder %s109, %s125
      %p127 = scmp.eq.s32.totalorder %s28, 0
      %p128 = por %p126, %p127
      %s130 = sadd.s32 %s129, 1
      %p133 = scmp.eq.s32.totalorder %s22, 1
      %p134 = scmp.ne.s32.totalorder %s129, %s131
      %p135 = scmp.eq.s32.totalorder %s22, 0
      %p136 = por %p134, %p135
      %p137 = scmp.ne.s32.totalorder %s129, %s131
      %p138 = scmp.eq.s32.totalorder %s27, 1
      %p139 = por %p137, %p138
      %p140 = scmp.ne.s32.totalorder %s131, %s132
      %p141 = scmp.eq.s32.totalorder %s27, 0
      %p142 = por %p140, %p141
      %p143 = scmp.ne.s32.totalorder %s131, %s132
      %p144 = scmp.eq.s32.totalorder %s28, 1
      %p145 = por %p143, %p144
      %p147 = scmp.ne.s32.totalorder %s132, %s146
      %p148 = scmp.eq.s32.totalorder %s28, 0
      %p149 = por %p147, %p148
      %s151 = sadd.s32 %s150, 1
      %p154 = scmp.eq.s32.totalorder %s22, 1
      %p155 = scmp.ne.s32.totalorder %s150, %s152
      %p156 = scmp.eq.s32.totalorder %s22, 0
      %p157 = por %p155, %p156
      %p158 = scmp.ne.s32.totalorder %s150, %s152
      %p159 = scmp.eq.s32.totalorder %s27, 1
      %p160 = por %p158, %p159
      %p161 = scmp.ne.s32.totalorder %s152, %s153
      %p162 = scmp.eq.s32.totalorder %s27, 0
      %p163 = por %p161, %p162
      %p164 = scmp.ne.s32.totalorder %s152, %s153
      %p165 = scmp.eq.s32.totalorder %s28, 1
      %p166 = por %p164, %p165
      %p168 = scmp.ne.s32.totalorder %s153, %s167
      %p169 = scmp.eq.s32.totalorder %s28, 0
      %p170 = por %p168, %p169
      %s172 = sadd.s32 %s171, 1
      %p175 = scmp.eq.s32.totalorder %s22, 1
      %p176 = scmp.ne.s32.totalorder %s171, %s173
      %p177 = scmp.eq.s32.totalorder %s22, 0
      %p178 = por %p176, %p177
      %p179 = scmp.ne.s32.totalorder %s171, %s173
      %p180 = scmp.eq.s32.totalorder %s27, 1
      %p181 = por %p179, %p180
      %p182 = scmp.ne.s32.totalorder %s173, %s174
      %p183 = scmp.eq.s32.totalorder %s27, 0
      %p184 = por %p182, %p183
      %p185 = scmp.ne.s32.totalorder %s173, %s174
      %p186 = scmp.eq.s32.totalorder %s28, 1
      %p187 = por %p185, %p186
      %p189 = scmp.ne.s32.totalorder %s174, %s188
      %p190 = scmp.eq.s32.totalorder %s28, 0
      %p191 = por %p189, %p190
      %s193 = sadd.s32 %s192, 1
      %p196 = scmp.eq.s32.totalorder %s22, 1
      %p197 = scmp.ne.s32.totalorder %s192, %s194
      %p198 = scmp.eq.s32.totalorder %s22, 0
      %p199 = por %p197, %p198
      %p200 = scmp.ne.s32.totalorder %s192, %s194
      %p201 = scmp.eq.s32.totalorder %s27, 1
      %p202 = por %p200, %p201
      %p203 = scmp.ne.s32.totalorder %s194, %s195
      %p204 = scmp.eq.s32.totalorder %s27, 0
      %p205 = por %p203, %p204
      %p206 = scmp.ne.s32.totalorder %s194, %s195
      %p207 = scmp.eq.s32.totalorder %s28, 1
      %p208 = por %p206, %p207
      %p210 = scmp.ne.s32.totalorder %s195, %s209
      %p211 = scmp.eq.s32.totalorder %s28, 0
      %p212 = por %p210, %p211
      %p213 = scmp.le.s32.totalorder 1, %s22
      %p214 = scmp.lt.s32.totalorder %s22, 3
      %p215 = pnand %p213, %p214
      %p216 = pneg %p215
      // Predicated region
      $region9: #{mlp_forward.1} parent=5 // pred_check
        _
      $region10: #{mlp_forward.1} parent=5 // pred_check_branch
        %218 = sbr.rel (%p215) target = $region12
      $region11: #{mlp_forward.1} parent=5 // pred_region
        %s219 = ssub.s32 %s22, 1
        // Predicated region
        $region13: #{mlp_forward.1} parent=11 // pred_check
          %p220 = pneg %p43
        $region14: #{mlp_forward.1} parent=11 // pred_check_branch
          %222 = sbr.rel (%p220) target = $region16
        $region15: #{mlp_forward.1} parent=11 // pred_region
          %s224 = ssub.s32 1280, 1280
          %225 = vsyncadd [#allocation4], %s224
          %s227 = sshll.u32 [#allocation3], 4
          %s228 = int_to_ptr.vmem [resolvable:$true] %s227
          %230 = dma.hbm_to_vmem [thread:$0]  %s0, 1280, %s228, [#allocation4]
        $region16: #{mlp_forward.1} parent=11 // pred_fallthru
          _
        // Predicated region
        $region17: #{mlp_forward.1} parent=11 // pred_check
          %p231 = pneg %p142
        $region18: #{mlp_forward.1} parent=11 // pred_check_branch
          %233 = sbr.rel (%p231) target = $region20
        $region19: #{mlp_forward.1} parent=11 // pred_region
          %s235 = ssub.s32 16, 16
          %236 = vsyncadd [#allocation10], %s235
          %s238 = sshll.u32 [#allocation11], 4
          %s239 = int_to_ptr.vmem [resolvable:$true] %s238
          %241 = dma.hbm_to_vmem [thread:$0]  %s4, 16, %s239, [#allocation10]
        $region20: #{mlp_forward.1} parent=11 // pred_fallthru
          _
        // Predicated region
        $region21: #{mlp_forward.1} parent=11 // pred_check
          %p242 = pneg %p163
        $region22: #{mlp_forward.1} parent=11 // pred_check_branch
          %244 = sbr.rel (%p242) target = $region24
        $region23: #{mlp_forward.1} parent=11 // pred_region
          _
        $region24: #{mlp_forward.1} parent=11 // pred_fallthru
          _
        // Predicated region
        $region25: #{mlp_forward.1} parent=11 // pred_check
          %p245 = pneg %p184
        $region26: #{mlp_forward.1} parent=11 // pred_check_branch
          %247 = sbr.rel (%p245) target = $region28
        $region27: #{mlp_forward.1} parent=11 // pred_region
          %s249 = ssub.s32 16, 16
          %250 = vsyncadd [#allocation13], %s249
          %s252 = sshll.u32 [#allocation12], 4
          %s253 = int_to_ptr.vmem [resolvable:$true] %s252
          %255 = dma.hbm_to_vmem [thread:$0]  %s6, 16, %s253, [#allocation13]
        $region28: #{mlp_forward.1} parent=11 // pred_fallthru
          _
      $region12: #{mlp_forward.1} parent=5 // pred_fallthru
        _
      %p256 = scmp.lt.s32.totalorder %s22, 2
      // Predicated region
      $region29: #{mlp_forward.1} parent=5 // pred_check
        %p257 = pneg %p256
      $region30: #{mlp_forward.1} parent=5 // pred_check_branch
        %259 = sbr.rel (%p257) target = $region32
      $region31: #{mlp_forward.1} parent=5 // pred_region
        // Predicated region
        $region33: #{mlp_forward.1} parent=31 // pred_check
          %p260 = pneg %p63
        $region34: #{mlp_forward.1} parent=31 // pred_check_branch
          %262 = sbr.rel (%p260) target = $region36
        $region35: #{mlp_forward.1} parent=31 // pred_region
          %s263 = sand.u32 %s22, 1
          %s264 = scalar_lea.sflag [#allocation7], %s263
          %s265 = sand.u32 %s53, 1
          %s266 = smul.addr %s265, 12500
          %s267 = scalar_lea.vmem [#allocation6], %s266
          %s268 = smul.u32 5, %s22
          %s270 = ssub.s32 200000, 200000
          %271 = vsyncadd %s264, %s270
          %s272 = smul.addr %s268, 64
          %s273 = scalar_lea.hbm %s1, %s272
          %s274 = sshll.u32 %s267, 4
          %s275 = int_to_ptr.vmem [resolvable:$true] %s274
          %280 = dma.hbm_to_vmem [thread:$0]  %s273, 200000, %s275, %s264, 640, 320, 20
        $region36: #{mlp_forward.1} parent=31 // pred_fallthru
          _
        // Predicated region
        $region37: #{mlp_forward.1} parent=31 // pred_check
          %p281 = pneg %p89
        $region38: #{mlp_forward.1} parent=31 // pred_check_branch
          %283 = sbr.rel (%p281) target = $region40
        $region39: #{mlp_forward.1} parent=31 // pred_region
          %s284 = sand.u32 %s22, 1
          %s285 = scalar_lea.sflag [#allocation7], %s284
          %s286 = sand.u32 %s79, 1
          %s287 = smul.addr %s286, 5
          %s288 = scalar_lea.vmem [#allocation8], %s287
          %s289 = smul.u32 5, %s22
          %s291 = ssub.s32 80, 80
          %292 = vsyncadd %s285, %s291
          %s293 = smul.addr %s289, 16
          %s294 = scalar_lea.hbm %s2, %s293
          %s296 = sshll.u32 %s288, 4
          %s297 = int_to_ptr.vmem [resolvable:$true] %s296
          %299 = dma.hbm_to_vmem [thread:$0]  %s294, 80, %s297, %s285
        $region40: #{mlp_forward.1} parent=31 // pred_fallthru
          _
        // Predicated region
        $region41: #{mlp_forward.1} parent=31 // pred_check
          %p300 = pneg %p115
        $region42: #{mlp_forward.1} parent=31 // pred_check_branch
          %302 = sbr.rel (%p300) target = $region44
        $region43: #{mlp_forward.1} parent=31 // pred_region
          %s303 = sand.u32 %s22, 1
          %s304 = scalar_lea.sflag [#allocation10], %s303
          %s305 = sand.u32 %s105, 1
          %s306 = smul.addr %s305, 320
          %s307 = scalar_lea.vmem [#allocation9], %s306
          %s308 = smul.u32 80, %s22
          %s310 = ssub.s32 5120, 5120
          %311 = vsyncadd %s304, %s310
          %s312 = smul.addr %s308, 64
          %s313 = scalar_lea.hbm %s3, %s312
          %s314 = sshll.u32 %s307, 4
          %s315 = int_to_ptr.vmem [resolvable:$true] %s314
          %320 = dma.hbm_to_vmem [thread:$0]  %s313, 5120, %s315, %s304, 64, 64, 4
        $region44: #{mlp_forward.1} parent=31 // pred_fallthru
          _
      $region32: #{mlp_forward.1} parent=5 // pred_fallthru
        _
      %p321 = scmp.le.s32.totalorder 1, %s22
      %p322 = scmp.lt.s32.totalorder %s22, 3
      %p323 = pnand %p321, %p322
      %p324 = pneg %p323
      // Predicated region
      $region45: #{mlp_forward.1} parent=5 // pred_check
        _
      $region46: #{mlp_forward.1} parent=5 // pred_check_branch
        %326 = sbr.rel (%p323) target = $region48
      $region47: #{mlp_forward.1} parent=5 // pred_region
        %s327 = ssub.s32 %s22, 1
        // Predicated region
        $region49: #{mlp_forward.1} parent=47 // pred_check
          %p328 = pneg %p43
        $region50: #{mlp_forward.1} parent=47 // pred_check_branch
          %330 = sbr.rel (%p328) target = $region52
        $region51: #{mlp_forward.1} parent=47 // pred_region
          %331 = dma.done [#allocation4], 1280
        $region52: #{mlp_forward.1} parent=47 // pred_fallthru
          _
        %s332 = sand.u32 %s27, 1
        %s333 = scalar_lea.sflag [#allocation7], %s332
        %s334 = sand.u32 %s56, 1
        %s335 = smul.addr %s334, 12500
        %s336 = scalar_lea.vmem [#allocation6], %s335
        // Predicated region
        $region53: #{mlp_forward.1} parent=47 // pred_check
          %p337 = pneg %p69
        $region54: #{mlp_forward.1} parent=47 // pred_check_branch
          %339 = sbr.rel (%p337) target = $region56
        $region55: #{mlp_forward.1} parent=47 // pred_region
          %340 = dma.done %s333, 200000
        $region56: #{mlp_forward.1} parent=47 // pred_fallthru
          _
        %s341 = sand.u32 %s27, 1
        %s342 = scalar_lea.sflag [#allocation7], %s341
        %s343 = sand.u32 %s82, 1
        %s344 = smul.addr %s343, 5
        %s345 = scalar_lea.vmem [#allocation8], %s344
        // Predicated region
        $region57: #{mlp_forward.1} parent=47 // pred_check
          %p346 = pneg %p95
        $region58: #{mlp_forward.1} parent=47 // pred_check_branch
          %348 = sbr.rel (%p346) target = $region60
        $region59: #{mlp_forward.1} parent=47 // pred_region
          %349 = dma.done %s342, 80
        $region60: #{mlp_forward.1} parent=47 // pred_fallthru
          _
        %s350 = sand.u32 %s27, 1
        %s351 = scalar_lea.sflag [#allocation10], %s350
        %s352 = sand.u32 %s108, 1
        %s353 = smul.addr %s352, 320
        %s354 = scalar_lea.vmem [#allocation9], %s353
        // Predicated region
        $region61: #{mlp_forward.1} parent=47 // pred_check
          %p355 = pneg %p121
        $region62: #{mlp_forward.1} parent=47 // pred_check_branch
          %357 = sbr.rel (%p355) target = $region64
        $region63: #{mlp_forward.1} parent=47 // pred_region
          %358 = dma.done %s351, 5120
        $region64: #{mlp_forward.1} parent=47 // pred_fallthru
          _
        // Predicated region
        $region65: #{mlp_forward.1} parent=47 // pred_check
          %p359 = pneg %p142
        $region66: #{mlp_forward.1} parent=47 // pred_check_branch
          %361 = sbr.rel (%p359) target = $region68
        $region67: #{mlp_forward.1} parent=47 // pred_region
          %362 = dma.done [#allocation10], 16
        $region68: #{mlp_forward.1} parent=47 // pred_fallthru
          _
        // Predicated region
        $region69: #{mlp_forward.1} parent=47 // pred_check
          %p363 = pneg %p184
        $region70: #{mlp_forward.1} parent=47 // pred_check_branch
          %365 = sbr.rel (%p363) target = $region72
        $region71: #{mlp_forward.1} parent=47 // pred_region
          %366 = dma.done [#allocation13], 16
        $region72: #{mlp_forward.1} parent=47 // pred_fallthru
          _
        %p367 = pneg %p43
        %p368 = pneg %p40
        %s369 = sand.u32 %s27, 1
        %s370 = scalar_lea.sflag [#allocation7], %s369
        %s371 = sand.u32 %s56, 1
        %s372 = smul.addr %s371, 12500
        %s373 = scalar_lea.vmem [#allocation6], %s372
        %p374 = pneg %p69
        %p375 = pneg %p66
        %s376 = sand.u32 %s27, 1
        %s377 = scalar_lea.sflag [#allocation7], %s376
        %s378 = sand.u32 %s82, 1
        %s379 = smul.addr %s378, 5
        %s380 = scalar_lea.vmem [#allocation8], %s379
        %p381 = pneg %p95
        %p382 = pneg %p92
        %s383 = sand.u32 %s27, 1
        %s384 = scalar_lea.sflag [#allocation10], %s383
        %s385 = sand.u32 %s108, 1
        %s386 = smul.addr %s385, 320
        %s387 = scalar_lea.vmem [#allocation9], %s386
        %p388 = pneg %p121
        %p389 = pneg %p118
        %p390 = pneg %p142
        %p391 = pneg %p139
        %p392 = pneg %p163
        %p393 = pneg %p160
        %p394 = pneg %p184
        %p395 = pneg %p181
        %p396 = pneg %p205
        %p397 = pneg %p202
        %s398 = smul.u32 5, %s27
        %s399 = smul.u32 5, %s27
        %s400 = smul.u32 80, %s27
        %p402 = scmp.eq.s32.totalorder %s27, 0
        // Predicated region
        $region73: #{mlp_forward.1} parent=47 // pred_check
          %p403 = pneg %p402
        $region74: #{mlp_forward.1} parent=47 // pred_check_branch
          %405 = sbr.rel (%p403) target = $region76
        $region75: #{mlp_forward.1} parent=47 // pred_region
          %406 = vst [vmem:[#allocation2] sm:$0x3] 0.0
        $region76: #{mlp_forward.1} parent=47 // pred_fallthru
          _
        %v407 = vld [vmem:[#allocation3] sm:$0xff]
        %v408 = vld [vmem:[#allocation3 + $0x8] sm:$0xff]
        %v409 = vld [vmem:[#allocation3 + $0x10] sm:$0xff]
        %v410 = vld [vmem:[#allocation3 + $0x18] sm:$0xff]
        %v411 = vld [vmem:[#allocation3 + $0x20] sm:$0xff]
        %v412 = vld [vmem:[#allocation3 + $0x28] sm:$0xff]
        %v413 = vld [vmem:[#allocation3 + $0x30] sm:$0xff]
        %v414 = vld [vmem:[#allocation3 + $0x38] sm:$0xff]
        %v415 = vld [vmem:[#allocation3 + $0x40] sm:$0xff]
        %v416 = vld [vmem:[#allocation3 + $0x48] sm:$0xff]
        %v427 = vcombine.high %v407, %v407
        %v429 = vunpack.c.l.s4 1983009808
        %v430 = vunpack.c.0.s8 %v429
        %v431 = vlaneseq
        %v432 = vshrl.u32 %v431, 7
        %v433 = vsub.s32 %v430, %v432
        %v434 = vrot.slane %v407, %v433
        %v436 = vunpack.c.l.s4 1983009808
        %v437 = vunpack.c.0.s8 %v436
        %v438 = vlaneseq
        %v439 = vshrl.u32 %v438, 7
        %v440 = vsub.s32 %v437, %v439
        %v441 = vrot.slane %v427, %v440
        %v442 = vcombine.high %v434, %v434
        %v443 = vcombine.high %v441, %v441
        %v444 = vcombine.high %v408, %v408
        %v446 = vunpack.c.l.s4 1983009808
        %v447 = vunpack.c.0.s8 %v446
        %v448 = vlaneseq
        %v449 = vshrl.u32 %v448, 7
        %v450 = vsub.s32 %v447, %v449
        %v451 = vrot.slane %v408, %v450
        %v453 = vunpack.c.l.s4 1983009808
        %v454 = vunpack.c.0.s8 %v453
        %v455 = vlaneseq
        %v456 = vshrl.u32 %v455, 7
        %v457 = vsub.s32 %v454, %v456
        %v458 = vrot.slane %v444, %v457
        %v459 = vcombine.high %v451, %v451
        %v460 = vcombine.high %v458, %v458
        %v461 = vcombine.high %v409, %v409
        %v463 = vunpack.c.l.s4 1983009808
        %v464 = vunpack.c.0.s8 %v463
        %v465 = vlaneseq
        %v466 = vshrl.u32 %v465, 7
        %v467 = vsub.s32 %v464, %v466
        %v468 = vrot.slane %v409, %v467
        %v470 = vunpack.c.l.s4 1983009808
        %v471 = vunpack.c.0.s8 %v470
        %v472 = vlaneseq
        %v473 = vshrl.u32 %v472, 7
        %v474 = vsub.s32 %v471, %v473
        %v475 = vrot.slane %v461, %v474
        %v476 = vcombine.high %v468, %v468
        %v477 = vcombine.high %v475, %v475
        %v478 = vcombine.high %v410, %v410
        %v480 = vunpack.c.l.s4 1983009808
        %v481 = vunpack.c.0.s8 %v480
        %v482 = vlaneseq
        %v483 = vshrl.u32 %v482, 7
        %v484 = vsub.s32 %v481, %v483
        %v485 = vrot.slane %v410, %v484
        %v487 = vunpack.c.l.s4 1983009808
        %v488 = vunpack.c.0.s8 %v487
        %v489 = vlaneseq
        %v490 = vshrl.u32 %v489, 7
        %v491 = vsub.s32 %v488, %v490
        %v492 = vrot.slane %v478, %v491
        %v493 = vcombine.high %v485, %v485
        %v494 = vcombine.high %v492, %v492
        %v495 = vcombine.high %v411, %v411
        %v497 = vunpack.c.l.s4 1983009808
        %v498 = vunpack.c.0.s8 %v497
        %v499 = vlaneseq
        %v500 = vshrl.u32 %v499, 7
        %v501 = vsub.s32 %v498, %v500
        %v502 = vrot.slane %v411, %v501
        %v504 = vunpack.c.l.s4 1983009808
        %v505 = vunpack.c.0.s8 %v504
        %v506 = vlaneseq
        %v507 = vshrl.u32 %v506, 7
        %v508 = vsub.s32 %v505, %v507
        %v509 = vrot.slane %v495, %v508
        %v510 = vcombine.high %v502, %v502
        %v511 = vcombine.high %v509, %v509
        %v512 = vcombine.high %v412, %v412
        %v514 = vunpack.c.l.s4 1983009808
        %v515 = vunpack.c.0.s8 %v514
        %v516 = vlaneseq
        %v517 = vshrl.u32 %v516, 7
        %v518 = vsub.s32 %v515, %v517
        %v519 = vrot.slane %v412, %v518
        %v521 = vunpack.c.l.s4 1983009808
        %v522 = vunpack.c.0.s8 %v521
        %v523 = vlaneseq
        %v524 = vshrl.u32 %v523, 7
        %v525 = vsub.s32 %v522, %v524
        %v526 = vrot.slane %v512, %v525
        %v527 = vcombine.high %v519, %v519
        %v528 = vcombine.high %v526, %v526
        %v529 = vcombine.high %v413, %v413
        %v531 = vunpack.c.l.s4 1983009808
        %v532 = vunpack.c.0.s8 %v531
        %v533 = vlaneseq
        %v534 = vshrl.u32 %v533, 7
        %v535 = vsub.s32 %v532, %v534
        %v536 = vrot.slane %v413, %v535
        %v538 = vunpack.c.l.s4 1983009808
        %v539 = vunpack.c.0.s8 %v538
        %v540 = vlaneseq
        %v541 = vshrl.u32 %v540, 7
        %v542 = vsub.s32 %v539, %v541
        %v543 = vrot.slane %v529, %v542
        %v544 = vcombine.high %v536, %v536
        %v545 = vcombine.high %v543, %v543
        %v546 = vcombine.high %v414, %v414
        %v548 = vunpack.c.l.s4 1983009808
        %v549 = vunpack.c.0.s8 %v548
        %v550 = vlaneseq
        %v551 = vshrl.u32 %v550, 7
        %v552 = vsub.s32 %v549, %v551
        %v553 = vrot.slane %v414, %v552
        %v555 = vunpack.c.l.s4 1983009808
        %v556 = vunpack.c.0.s8 %v555
        %v557 = vlaneseq
        %v558 = vshrl.u32 %v557, 7
        %v559 = vsub.s32 %v556, %v558
        %v560 = vrot.slane %v546, %v559
        %v561 = vcombine.high %v553, %v553
        %v562 = vcombine.high %v560, %v560
        %v563 = vcombine.high %v415, %v415
        %v565 = vunpack.c.l.s4 1983009808
        %v566 = vunpack.c.0.s8 %v565
        %v567 = vlaneseq
        %v568 = vshrl.u32 %v567, 7
        %v569 = vsub.s32 %v566, %v568
        %v570 = vrot.slane %v415, %v569
        %v572 = vunpack.c.l.s4 1983009808
        %v573 = vunpack.c.0.s8 %v572
        %v574 = vlaneseq
        %v575 = vshrl.u32 %v574, 7
        %v576 = vsub.s32 %v573, %v575
        %v577 = vrot.slane %v563, %v576
        %v578 = vcombine.high %v570, %v570
        %v579 = vcombine.high %v577, %v577
        %v580 = vcombine.high %v416, %v416
        %v582 = vunpack.c.l.s4 1983009808
        %v583 = vunpack.c.0.s8 %v582
        %v584 = vlaneseq
        %v585 = vshrl.u32 %v584, 7
        %v586 = vsub.s32 %v583, %v585
        %v587 = vrot.slane %v416, %v586
        %v589 = vunpack.c.l.s4 1983009808
        %v590 = vunpack.c.0.s8 %v589
        %v591 = vlaneseq
        %v592 = vshrl.u32 %v591, 7
        %v593 = vsub.s32 %v590, %v592
        %v594 = vrot.slane %v580, %v593
        %v595 = vcombine.high %v587, %v587
        %v596 = vcombine.high %v594, %v594
        %v637 = vpack.c.bf16 %v434, %v434
        %v638 = vpack.c.bf16 %v442, %v442
        %v639 = vpack.c.bf16 %v441, %v441
        %v640 = vpack.c.bf16 %v443, %v443
        %v641 = vpack.c.bf16 %v451, %v451
        %v642 = vpack.c.bf16 %v459, %v459
        %v643 = vpack.c.bf16 %v458, %v458
        %v644 = vpack.c.bf16 %v460, %v460
        %v645 = vpack.c.bf16 %v468, %v468
        %v646 = vpack.c.bf16 %v476, %v476
        %v647 = vpack.c.bf16 %v475, %v475
        %v648 = vpack.c.bf16 %v477, %v477
        %v649 = vpack.c.bf16 %v485, %v485
        %v650 = vpack.c.bf16 %v493, %v493
        %v651 = vpack.c.bf16 %v492, %v492
        %v652 = vpack.c.bf16 %v494, %v494
        %v653 = vpack.c.bf16 %v502, %v502
        %v654 = vpack.c.bf16 %v510, %v510
        %v655 = vpack.c.bf16 %v509, %v509
        %v656 = vpack.c.bf16 %v511, %v511
        %v657 = vpack.c.bf16 %v519, %v519
        %v658 = vpack.c.bf16 %v527, %v527
        %v659 = vpack.c.bf16 %v526, %v526
        %v660 = vpack.c.bf16 %v528, %v528
        %v661 = vpack.c.bf16 %v536, %v536
        %v662 = vpack.c.bf16 %v544, %v544
        %v663 = vpack.c.bf16 %v543, %v543
        %v664 = vpack.c.bf16 %v545, %v545
        %v665 = vpack.c.bf16 %v553, %v553
        %v666 = vpack.c.bf16 %v561, %v561
        %v667 = vpack.c.bf16 %v560, %v560
        %v668 = vpack.c.bf16 %v562, %v562
        %v669 = vpack.c.bf16 %v570, %v570
        %v670 = vpack.c.bf16 %v578, %v578
        %v671 = vpack.c.bf16 %v577, %v577
        %v672 = vpack.c.bf16 %v579, %v579
        %v673 = vpack.c.bf16 %v587, %v587
        %v674 = vpack.c.bf16 %v595, %v595
        %v675 = vpack.c.bf16 %v594, %v594
        %v676 = vpack.c.bf16 %v596, %v596
        %v677 = vld [vmem:[%s336] sm:$0xff]
        %v678 = vld [vmem:[%s336 + $0x8] sm:$0xff]
        %v679 = vld [vmem:[%s336 + $0x10] sm:$0xf]
        %v680 = vld [vmem:[%s336 + $0x14] sm:$0xff]
        %v681 = vld [vmem:[%s336 + $0x1c] sm:$0xff]
        %v682 = vld [vmem:[%s336 + $0x24] sm:$0xf]
        %v683 = vld [vmem:[%s336 + $0x28] sm:$0xff]
        %v684 = vld [vmem:[%s336 + $0x30] sm:$0xff]
        %v685 = vld [vmem:[%s336 + $0x38] sm:$0xf]
        %v686 = vld [vmem:[%s336 + $0x3c] sm:$0xff]
        %v687 = vld [vmem:[%s336 + $0x44] sm:$0xff]
        %v688 = vld [vmem:[%s336 + $0x4c] sm:$0xf]
        %v689 = vld [vmem:[%s336 + $0x50] sm:$0xff]
        %v690 = vld [vmem:[%s336 + $0x58] sm:$0xff]
        %v691 = vld [vmem:[%s336 + $0x60] sm:$0xf]
        %v692 = vld [vmem:[%s336 + $0x64] sm:$0xff]
        %v693 = vld [vmem:[%s336 + $0x6c] sm:$0xff]
        %v694 = vld [vmem:[%s336 + $0x74] sm:$0xf]
        %v695 = vld [vmem:[%s336 + $0x78] sm:$0xff]
        %v696 = vld [vmem:[%s336 + $0x80] sm:$0xff]
        %v697 = vld [vmem:[%s336 + $0x88] sm:$0xf]
        %v698 = vld [vmem:[%s336 + $0x8c] sm:$0xff]
        %v699 = vld [vmem:[%s336 + $0x94] sm:$0xff]
        %v700 = vld [vmem:[%s336 + $0x9c] sm:$0xf]
        %v701 = vld [vmem:[%s336 + $0xa0] sm:$0xff]
        %v702 = vld [vmem:[%s336 + $0xa8] sm:$0xff]
        %v703 = vld [vmem:[%s336 + $0xb0] sm:$0xf]
        %v704 = vld [vmem:[%s336 + $0xb4] sm:$0xff]
        %v705 = vld [vmem:[%s336 + $0xbc] sm:$0xff]
        %v706 = vld [vmem:[%s336 + $0xc4] sm:$0xf]
        %v707 = vld [vmem:[%s336 + $0xc8] sm:$0xff]
        %v708 = vld [vmem:[%s336 + $0xd0] sm:$0xff]
        %v709 = vld [vmem:[%s336 + $0xd8] sm:$0xf]
        %v710 = vld [vmem:[%s336 + $0xdc] sm:$0xff]
        %v711 = vld [vmem:[%s336 + $0xe4] sm:$0xff]
        %v712 = vld [vmem:[%s336 + $0xec] sm:$0xf]
        %v713 = vld [vmem:[%s336 + $0xf0] sm:$0xff]
        %v714 = vld [vmem:[%s336 + $0xf8] sm:$0xff]
        %v715 = vld [vmem:[%s336 + $0x100] sm:$0xf]
        %v716 = vld [vmem:[%s336 + $0x104] sm:$0xff]
        %v717 = vld [vmem:[%s336 + $0x10c] sm:$0xff]
        %v718 = vld [vmem:[%s336 + $0x114] sm:$0xf]
        %v719 = vld [vmem:[%s336 + $0x118] sm:$0xff]
        %v720 = vld [vmem:[%s336 + $0x120] sm:$0xff]
        %v721 = vld [vmem:[%s336 + $0x128] sm:$0xf]
        %v722 = vld [vmem:[%s336 + $0x12c] sm:$0xff]
        %v723 = vld [vmem:[%s336 + $0x134] sm:$0xff]
        %v724 = vld [vmem:[%s336 + $0x13c] sm:$0xf]
        %v725 = vld [vmem:[%s336 + $0x140] sm:$0xff]
        %v726 = vld [vmem:[%s336 + $0x148] sm:$0xff]
        %v727 = vld [vmem:[%s336 + $0x150] sm:$0xf]
        %v728 = vld [vmem:[%s336 + $0x154] sm:$0xff]
        %v729 = vld [vmem:[%s336 + $0x15c] sm:$0xff]
        %v730 = vld [vmem:[%s336 + $0x164] sm:$0xf]
        %v731 = vld [vmem:[%s336 + $0x168] sm:$0xff]
        %v732 = vld [vmem:[%s336 + $0x170] sm:$0xff]
        %v733 = vld [vmem:[%s336 + $0x178] sm:$0xf]
        %v734 = vld [vmem:[%s336 + $0x17c] sm:$0xff]
        %v735 = vld [vmem:[%s336 + $0x184] sm:$0xff]
        %v736 = vld [vmem:[%s336 + $0x18c] sm:$0xf]
        %v737 = vld [vmem:[%s336 + $0x190] sm:$0xff]
        %v738 = vld [vmem:[%s336 + $0x198] sm:$0xff]
        %v739 = vld [vmem:[%s336 + $0x1a0] sm:$0xf]
        %v740 = vld [vmem:[%s336 + $0x1a4] sm:$0xff]
        %v741 = vld [vmem:[%s336 + $0x1ac] sm:$0xff]
        %v742 = vld [vmem:[%s336 + $0x1b4] sm:$0xf]
        %v743 = vld [vmem:[%s336 + $0x1b8] sm:$0xff]
        %v744 = vld [vmem:[%s336 + $0x1c0] sm:$0xff]
        %v745 = vld [vmem:[%s336 + $0x1c8] sm:$0xf]
        %v746 = vld [vmem:[%s336 + $0x1cc] sm:$0xff]
        %v747 = vld [vmem:[%s336 + $0x1d4] sm:$0xff]
        %v748 = vld [vmem:[%s336 + $0x1dc] sm:$0xf]
        %v749 = vld [vmem:[%s336 + $0x1e0] sm:$0xff]
        %v750 = vld [vmem:[%s336 + $0x1e8] sm:$0xff]
        %v751 = vld [vmem:[%s336 + $0x1f0] sm:$0xf]
        %v752 = vld [vmem:[%s336 + $0x1f4] sm:$0xff]
        %v753 = vld [vmem:[%s336 + $0x1fc] sm:$0xff]
        %v754 = vld [vmem:[%s336 + $0x204] sm:$0xf]
        %v755 = vld [vmem:[%s336 + $0x208] sm:$0xff]
        %v756 = vld [vmem:[%s336 + $0x210] sm:$0xff]
        %v757 = vld [vmem:[%s336 + $0x218] sm:$0xf]
        %v758 = vld [vmem:[%s336 + $0x21c] sm:$0xff]
        %v759 = vld [vmem:[%s336 + $0x224] sm:$0xff]
        %v760 = vld [vmem:[%s336 + $0x22c] sm:$0xf]
        %v761 = vld [vmem:[%s336 + $0x230] sm:$0xff]
        %v762 = vld [vmem:[%s336 + $0x238] sm:$0xff]
        %v763 = vld [vmem:[%s336 + $0x240] sm:$0xf]
        %v764 = vld [vmem:[%s336 + $0x244] sm:$0xff]
        %v765 = vld [vmem:[%s336 + $0x24c] sm:$0xff]
        %v766 = vld [vmem:[%s336 + $0x254] sm:$0xf]
        %v767 = vld [vmem:[%s336 + $0x258] sm:$0xff]
        %v768 = vld [vmem:[%s336 + $0x260] sm:$0xff]
        %v769 = vld [vmem:[%s336 + $0x268] sm:$0xf]
        %v770 = vld [vmem:[%s336 + $0x26c] sm:$0xff]
        %v771 = vld [vmem:[%s336 + $0x274] sm:$0xff]
        %v772 = vld [vmem:[%s336 + $0x27c] sm:$0xf]
        %v773 = vld [vmem:[%s336 + $0x280] sm:$0xff]
        %v774 = vld [vmem:[%s336 + $0x288] sm:$0xff]
        %v775 = vld [vmem:[%s336 + $0x290] sm:$0xf]
        %v776 = vld [vmem:[%s336 + $0x294] sm:$0xff]
        %v777 = vld [vmem:[%s336 + $0x29c] sm:$0xff]
        %v778 = vld [vmem:[%s336 + $0x2a4] sm:$0xf]
        %v779 = vld [vmem:[%s336 + $0x2a8] sm:$0xff]
        %v780 = vld [vmem:[%s336 + $0x2b0] sm:$0xff]
        %v781 = vld [vmem:[%s336 + $0x2b8] sm:$0xf]
        %v782 = vld [vmem:[%s336 + $0x2bc] sm:$0xff]
        %v783 = vld [vmem:[%s336 + $0x2c4] sm:$0xff]
        %v784 = vld [vmem:[%s336 + $0x2cc] sm:$0xf]
        %v785 = vld [vmem:[%s336 + $0x2d0] sm:$0xff]
        %v786 = vld [vmem:[%s336 + $0x2d8] sm:$0xff]
        %v787 = vld [vmem:[%s336 + $0x2e0] sm:$0xf]
        %v788 = vld [vmem:[%s336 + $0x2e4] sm:$0xff]
        %v789 = vld [vmem:[%s336 + $0x2ec] sm:$0xff]
        %v790 = vld [vmem:[%s336 + $0x2f4] sm:$0xf]
        %v791 = vld [vmem:[%s336 + $0x2f8] sm:$0xff]
        %v792 = vld [vmem:[%s336 + $0x300] sm:$0xff]
        %v793 = vld [vmem:[%s336 + $0x308] sm:$0xf]
        %v794 = vld [vmem:[%s336 + $0x30c] sm:$0xff]
        %v795 = vld [vmem:[%s336 + $0x314] sm:$0xff]
        %v796 = vld [vmem:[%s336 + $0x31c] sm:$0xf]
        %v797 = vld [vmem:[%s336 + $0x320] sm:$0xff]
        %v798 = vld [vmem:[%s336 + $0x328] sm:$0xff]
        %v799 = vld [vmem:[%s336 + $0x330] sm:$0xf]
        %v800 = vld [vmem:[%s336 + $0x334] sm:$0xff]
        %v801 = vld [vmem:[%s336 + $0x33c] sm:$0xff]
        %v802 = vld [vmem:[%s336 + $0x344] sm:$0xf]
        %v803 = vld [vmem:[%s336 + $0x348] sm:$0xff]
        %v804 = vld [vmem:[%s336 + $0x350] sm:$0xff]
        %v805 = vld [vmem:[%s336 + $0x358] sm:$0xf]
        %v806 = vld [vmem:[%s336 + $0x35c] sm:$0xff]
        %v807 = vld [vmem:[%s336 + $0x364] sm:$0xff]
        %v808 = vld [vmem:[%s336 + $0x36c] sm:$0xf]
        %v809 = vld [vmem:[%s336 + $0x370] sm:$0xff]
        %v810 = vld [vmem:[%s336 + $0x378] sm:$0xff]
        %v811 = vld [vmem:[%s336 + $0x380] sm:$0xf]
        %v812 = vld [vmem:[%s336 + $0x384] sm:$0xff]
        %v813 = vld [vmem:[%s336 + $0x38c] sm:$0xff]
        %v814 = vld [vmem:[%s336 + $0x394] sm:$0xf]
        %v815 = vld [vmem:[%s336 + $0x398] sm:$0xff]
        %v816 = vld [vmem:[%s336 + $0x3a0] sm:$0xff]
        %v817 = vld [vmem:[%s336 + $0x3a8] sm:$0xf]
        %v818 = vld [vmem:[%s336 + $0x3ac] sm:$0xff]
        %v819 = vld [vmem:[%s336 + $0x3b4] sm:$0xff]
        %v820 = vld [vmem:[%s336 + $0x3bc] sm:$0xf]
        %v821 = vld [vmem:[%s336 + $0x3c0] sm:$0xff]
        %v822 = vld [vmem:[%s336 + $0x3c8] sm:$0xff]
        %v823 = vld [vmem:[%s336 + $0x3d0] sm:$0xf]
        %v824 = vld [vmem:[%s336 + $0x3d4] sm:$0xff]
        %v825 = vld [vmem:[%s336 + $0x3dc] sm:$0xff]
        %v826 = vld [vmem:[%s336 + $0x3e4] sm:$0xf]
        %v827 = vld [vmem:[%s336 + $0x3e8] sm:$0xff]
        %v828 = vld [vmem:[%s336 + $0x3f0] sm:$0xff]
        %v829 = vld [vmem:[%s336 + $0x3f8] sm:$0xf]
        %v830 = vld [vmem:[%s336 + $0x3fc] sm:$0xff]
        %v831 = vld [vmem:[%s336 + $0x404] sm:$0xff]
        %v832 = vld [vmem:[%s336 + $0x40c] sm:$0xf]
        %v833 = vld [vmem:[%s336 + $0x410] sm:$0xff]
        %v834 = vld [vmem:[%s336 + $0x418] sm:$0xff]
        %v835 = vld [vmem:[%s336 + $0x420] sm:$0xf]
        %v836 = vld [vmem:[%s336 + $0x424] sm:$0xff]
        %v837 = vld [vmem:[%s336 + $0x42c] sm:$0xff]
        %v838 = vld [vmem:[%s336 + $0x434] sm:$0xf]
        %v839 = vld [vmem:[%s336 + $0x438] sm:$0xff]
        %v840 = vld [vmem:[%s336 + $0x440] sm:$0xff]
        %v841 = vld [vmem:[%s336 + $0x448] sm:$0xf]
        %v842 = vld [vmem:[%s336 + $0x44c] sm:$0xff]
        %v843 = vld [vmem:[%s336 + $0x454] sm:$0xff]
        %v844 = vld [vmem:[%s336 + $0x45c] sm:$0xf]
        %v845 = vld [vmem:[%s336 + $0x460] sm:$0xff]
        %v846 = vld [vmem:[%s336 + $0x468] sm:$0xff]
        %v847 = vld [vmem:[%s336 + $0x470] sm:$0xf]
        %v848 = vld [vmem:[%s336 + $0x474] sm:$0xff]
        %v849 = vld [vmem:[%s336 + $0x47c] sm:$0xff]
        %v850 = vld [vmem:[%s336 + $0x484] sm:$0xf]
        %v851 = vld [vmem:[%s336 + $0x488] sm:$0xff]
        %v852 = vld [vmem:[%s336 + $0x490] sm:$0xff]
        %v853 = vld [vmem:[%s336 + $0x498] sm:$0xf]
        %v854 = vld [vmem:[%s336 + $0x49c] sm:$0xff]
        %v855 = vld [vmem:[%s336 + $0x4a4] sm:$0xff]
        %v856 = vld [vmem:[%s336 + $0x4ac] sm:$0xf]
        %v857 = vld [vmem:[%s336 + $0x4b0] sm:$0xff]
        %v858 = vld [vmem:[%s336 + $0x4b8] sm:$0xff]
        %v859 = vld [vmem:[%s336 + $0x4c0] sm:$0xf]
        %v860 = vld [vmem:[%s336 + $0x4c4] sm:$0xff]
        %v861 = vld [vmem:[%s336 + $0x4cc] sm:$0xff]
        %v862 = vld [vmem:[%s336 + $0x4d4] sm:$0xf]
        %v863 = vld [vmem:[%s336 + $0x4d8] sm:$0xff]
        %v864 = vld [vmem:[%s336 + $0x4e0] sm:$0xff]
        %v865 = vld [vmem:[%s336 + $0x4e8] sm:$0xf]
        %v866 = vld [vmem:[%s336 + $0x4ec] sm:$0xff]
        %v867 = vld [vmem:[%s336 + $0x4f4] sm:$0xff]
        %v868 = vld [vmem:[%s336 + $0x4fc] sm:$0xf]
        %v869 = vld [vmem:[%s336 + $0x500] sm:$0xff]
        %v870 = vld [vmem:[%s336 + $0x508] sm:$0xff]
        %v871 = vld [vmem:[%s336 + $0x510] sm:$0xf]
        %v872 = vld [vmem:[%s336 + $0x514] sm:$0xff]
        %v873 = vld [vmem:[%s336 + $0x51c] sm:$0xff]
        %v874 = vld [vmem:[%s336 + $0x524] sm:$0xf]
        %v875 = vld [vmem:[%s336 + $0x528] sm:$0xff]
        %v876 = vld [vmem:[%s336 + $0x530] sm:$0xff]
        %v877 = vld [vmem:[%s336 + $0x538] sm:$0xf]
        %v878 = vld [vmem:[%s336 + $0x53c] sm:$0xff]
        %v879 = vld [vmem:[%s336 + $0x544] sm:$0xff]
        %v880 = vld [vmem:[%s336 + $0x54c] sm:$0xf]
        %v881 = vld [vmem:[%s336 + $0x550] sm:$0xff]
        %v882 = vld [vmem:[%s336 + $0x558] sm:$0xff]
        %v883 = vld [vmem:[%s336 + $0x560] sm:$0xf]
        %v884 = vld [vmem:[%s336 + $0x564] sm:$0xff]
        %v885 = vld [vmem:[%s336 + $0x56c] sm:$0xff]
        %v886 = vld [vmem:[%s336 + $0x574] sm:$0xf]
        %v887 = vld [vmem:[%s336 + $0x578] sm:$0xff]
        %v888 = vld [vmem:[%s336 + $0x580] sm:$0xff]
        %v889 = vld [vmem:[%s336 + $0x588] sm:$0xf]
        %v890 = vld [vmem:[%s336 + $0x58c] sm:$0xff]
        %v891 = vld [vmem:[%s336 + $0x594] sm:$0xff]
        %v892 = vld [vmem:[%s336 + $0x59c] sm:$0xf]
        %v893 = vld [vmem:[%s336 + $0x5a0] sm:$0xff]
        %v894 = vld [vmem:[%s336 + $0x5a8] sm:$0xff]
        %v895 = vld [vmem:[%s336 + $0x5b0] sm:$0xf]
        %v896 = vld [vmem:[%s336 + $0x5b4] sm:$0xff]
        %v897 = vld [vmem:[%s336 + $0x5bc] sm:$0xff]
        %v898 = vld [vmem:[%s336 + $0x5c4] sm:$0xf]
        %v899 = vld [vmem:[%s336 + $0x5c8] sm:$0xff]
        %v900 = vld [vmem:[%s336 + $0x5d0] sm:$0xff]
        %v901 = vld [vmem:[%s336 + $0x5d8] sm:$0xf]
        %v902 = vld [vmem:[%s336 + $0x5dc] sm:$0xff]
        %v903 = vld [vmem:[%s336 + $0x5e4] sm:$0xff]
        %v904 = vld [vmem:[%s336 + $0x5ec] sm:$0xf]
        %v905 = vld [vmem:[%s336 + $0x5f0] sm:$0xff]
        %v906 = vld [vmem:[%s336 + $0x5f8] sm:$0xff]
        %v907 = vld [vmem:[%s336 + $0x600] sm:$0xf]
        %v908 = vld [vmem:[%s336 + $0x604] sm:$0xff]
        %v909 = vld [vmem:[%s336 + $0x60c] sm:$0xff]
        %v910 = vld [vmem:[%s336 + $0x614] sm:$0xf]
        %v911 = vld [vmem:[%s336 + $0x618] sm:$0xff]
        %v912 = vld [vmem:[%s336 + $0x620] sm:$0xff]
        %v913 = vld [vmem:[%s336 + $0x628] sm:$0xf]
        %v914 = vld [vmem:[%s336 + $0x62c] sm:$0xff]
        %v915 = vld [vmem:[%s336 + $0x634] sm:$0xff]
        %v916 = vld [vmem:[%s336 + $0x63c] sm:$0xf]
        %v917 = vld [vmem:[%s336 + $0x640] sm:$0xff]
        %v918 = vld [vmem:[%s336 + $0x648] sm:$0xff]
        %v919 = vld [vmem:[%s336 + $0x650] sm:$0xf]
        %v920 = vld [vmem:[%s336 + $0x654] sm:$0xff]
        %v921 = vld [vmem:[%s336 + $0x65c] sm:$0xff]
        %v922 = vld [vmem:[%s336 + $0x664] sm:$0xf]
        %v923 = vld [vmem:[%s336 + $0x668] sm:$0xff]
        %v924 = vld [vmem:[%s336 + $0x670] sm:$0xff]
        %v925 = vld [vmem:[%s336 + $0x678] sm:$0xf]
        %v926 = vld [vmem:[%s336 + $0x67c] sm:$0xff]
        %v927 = vld [vmem:[%s336 + $0x684] sm:$0xff]
        %v928 = vld [vmem:[%s336 + $0x68c] sm:$0xf]
        %v929 = vld [vmem:[%s336 + $0x690] sm:$0xff]
        %v930 = vld [vmem:[%s336 + $0x698] sm:$0xff]
        %v931 = vld [vmem:[%s336 + $0x6a0] sm:$0xf]
        %v932 = vld [vmem:[%s336 + $0x6a4] sm:$0xff]
        %v933 = vld [vmem:[%s336 + $0x6ac] sm:$0xff]
        %v934 = vld [vmem:[%s336 + $0x6b4] sm:$0xf]
        %v935 = vld [vmem:[%s336 + $0x6b8] sm:$0xff]
        %v936 = vld [vmem:[%s336 + $0x6c0] sm:$0xff]
        %v937 = vld [vmem:[%s336 + $0x6c8] sm:$0xf]
        %v938 = vld [vmem:[%s336 + $0x6cc] sm:$0xff]
        %v939 = vld [vmem:[%s336 + $0x6d4] sm:$0xff]
        %v940 = vld [vmem:[%s336 + $0x6dc] sm:$0xf]
        %v941 = vld [vmem:[%s336 + $0x6e0] sm:$0xff]
        %v942 = vld [vmem:[%s336 + $0x6e8] sm:$0xff]
        %v943 = vld [vmem:[%s336 + $0x6f0] sm:$0xf]
        %v944 = vld [vmem:[%s336 + $0x6f4] sm:$0xff]
        %v945 = vld [vmem:[%s336 + $0x6fc] sm:$0xff]
        %v946 = vld [vmem:[%s336 + $0x704] sm:$0xf]
        %v947 = vld [vmem:[%s336 + $0x708] sm:$0xff]
        %v948 = vld [vmem:[%s336 + $0x710] sm:$0xff]
        %v949 = vld [vmem:[%s336 + $0x718] sm:$0xf]
        %v950 = vld [vmem:[%s336 + $0x71c] sm:$0xff]
        %v951 = vld [vmem:[%s336 + $0x724] sm:$0xff]
        %v952 = vld [vmem:[%s336 + $0x72c] sm:$0xf]
        %v953 = vld [vmem:[%s336 + $0x730] sm:$0xff]
        %v954 = vld [vmem:[%s336 + $0x738] sm:$0xff]
        %v955 = vld [vmem:[%s336 + $0x740] sm:$0xf]
        %v956 = vld [vmem:[%s336 + $0x744] sm:$0xff]
        %v957 = vld [vmem:[%s336 + $0x74c] sm:$0xff]
        %v958 = vld [vmem:[%s336 + $0x754] sm:$0xf]
        %v959 = vld [vmem:[%s336 + $0x758] sm:$0xff]
        %v960 = vld [vmem:[%s336 + $0x760] sm:$0xff]
        %v961 = vld [vmem:[%s336 + $0x768] sm:$0xf]
        %v962 = vld [vmem:[%s336 + $0x76c] sm:$0xff]
        %v963 = vld [vmem:[%s336 + $0x774] sm:$0xff]
        %v964 = vld [vmem:[%s336 + $0x77c] sm:$0xf]
        %v965 = vld [vmem:[%s336 + $0x780] sm:$0xff]
        %v966 = vld [vmem:[%s336 + $0x788] sm:$0xff]
        %v967 = vld [vmem:[%s336 + $0x790] sm:$0xf]
        %v968 = vld [vmem:[%s336 + $0x794] sm:$0xff]
        %v969 = vld [vmem:[%s336 + $0x79c] sm:$0xff]
        %v970 = vld [vmem:[%s336 + $0x7a4] sm:$0xf]
        %v971 = vld [vmem:[%s336 + $0x7a8] sm:$0xff]
        %v972 = vld [vmem:[%s336 + $0x7b0] sm:$0xff]
        %v973 = vld [vmem:[%s336 + $0x7b8] sm:$0xf]
        %v974 = vld [vmem:[%s336 + $0x7bc] sm:$0xff]
        %v975 = vld [vmem:[%s336 + $0x7c4] sm:$0xff]
        %v976 = vld [vmem:[%s336 + $0x7cc] sm:$0xf]
        %v977 = vld [vmem:[%s336 + $0x7d0] sm:$0xff]
        %v978 = vld [vmem:[%s336 + $0x7d8] sm:$0xff]
        %v979 = vld [vmem:[%s336 + $0x7e0] sm:$0xf]
        %v980 = vld [vmem:[%s336 + $0x7e4] sm:$0xff]
        %v981 = vld [vmem:[%s336 + $0x7ec] sm:$0xff]
        %v982 = vld [vmem:[%s336 + $0x7f4] sm:$0xf]
        %v983 = vld [vmem:[%s336 + $0x7f8] sm:$0xff]
        %v984 = vld [vmem:[%s336 + $0x800] sm:$0xff]
        %v985 = vld [vmem:[%s336 + $0x808] sm:$0xf]
        %v986 = vld [vmem:[%s336 + $0x80c] sm:$0xff]
        %v987 = vld [vmem:[%s336 + $0x814] sm:$0xff]
        %v988 = vld [vmem:[%s336 + $0x81c] sm:$0xf]
        %v989 = vld [vmem:[%s336 + $0x820] sm:$0xff]
        %v990 = vld [vmem:[%s336 + $0x828] sm:$0xff]
        %v991 = vld [vmem:[%s336 + $0x830] sm:$0xf]
        %v992 = vld [vmem:[%s336 + $0x834] sm:$0xff]
        %v993 = vld [vmem:[%s336 + $0x83c] sm:$0xff]
        %v994 = vld [vmem:[%s336 + $0x844] sm:$0xf]
        %v995 = vld [vmem:[%s336 + $0x848] sm:$0xff]
        %v996 = vld [vmem:[%s336 + $0x850] sm:$0xff]
        %v997 = vld [vmem:[%s336 + $0x858] sm:$0xf]
        %v998 = vld [vmem:[%s336 + $0x85c] sm:$0xff]
        %v999 = vld [vmem:[%s336 + $0x864] sm:$0xff]
        %v1000 = vld [vmem:[%s336 + $0x86c] sm:$0xf]
        %v1001 = vld [vmem:[%s336 + $0x870] sm:$0xff]
        %v1002 = vld [vmem:[%s336 + $0x878] sm:$0xff]
        %v1003 = vld [vmem:[%s336 + $0x880] sm:$0xf]
        %v1004 = vld [vmem:[%s336 + $0x884] sm:$0xff]
        %v1005 = vld [vmem:[%s336 + $0x88c] sm:$0xff]
        %v1006 = vld [vmem:[%s336 + $0x894] sm:$0xf]
        %v1007 = vld [vmem:[%s336 + $0x898] sm:$0xff]
        %v1008 = vld [vmem:[%s336 + $0x8a0] sm:$0xff]
        %v1009 = vld [vmem:[%s336 + $0x8a8] sm:$0xf]
        %v1010 = vld [vmem:[%s336 + $0x8ac] sm:$0xff]
        %v1011 = vld [vmem:[%s336 + $0x8b4] sm:$0xff]
        %v1012 = vld [vmem:[%s336 + $0x8bc] sm:$0xf]
        %v1013 = vld [vmem:[%s336 + $0x8c0] sm:$0xff]
        %v1014 = vld [vmem:[%s336 + $0x8c8] sm:$0xff]
        %v1015 = vld [vmem:[%s336 + $0x8d0] sm:$0xf]
        %v1016 = vld [vmem:[%s336 + $0x8d4] sm:$0xff]
        %v1017 = vld [vmem:[%s336 + $0x8dc] sm:$0xff]
        %v1018 = vld [vmem:[%s336 + $0x8e4] sm:$0xf]
        %v1019 = vld [vmem:[%s336 + $0x8e8] sm:$0xff]
        %v1020 = vld [vmem:[%s336 + $0x8f0] sm:$0xff]
        %v1021 = vld [vmem:[%s336 + $0x8f8] sm:$0xf]
        %v1022 = vld [vmem:[%s336 + $0x8fc] sm:$0xff]
        %v1023 = vld [vmem:[%s336 + $0x904] sm:$0xff]
        %v1024 = vld [vmem:[%s336 + $0x90c] sm:$0xf]
        %v1025 = vld [vmem:[%s336 + $0x910] sm:$0xff]
        %v1026 = vld [vmem:[%s336 + $0x918] sm:$0xff]
        %v1027 = vld [vmem:[%s336 + $0x920] sm:$0xf]
        %v1028 = vld [vmem:[%s336 + $0x924] sm:$0xff]
        %v1029 = vld [vmem:[%s336 + $0x92c] sm:$0xff]
        %v1030 = vld [vmem:[%s336 + $0x934] sm:$0xf]
        %v1031 = vld [vmem:[%s336 + $0x938] sm:$0xff]
        %v1032 = vld [vmem:[%s336 + $0x940] sm:$0xff]
        %v1033 = vld [vmem:[%s336 + $0x948] sm:$0xf]
        %v1034 = vld [vmem:[%s336 + $0x94c] sm:$0xff]
        %v1035 = vld [vmem:[%s336 + $0x954] sm:$0xff]
        %v1036 = vld [vmem:[%s336 + $0x95c] sm:$0xf]
        %v1037 = vld [vmem:[%s336 + $0x960] sm:$0xff]
        %v1038 = vld [vmem:[%s336 + $0x968] sm:$0xff]
        %v1039 = vld [vmem:[%s336 + $0x970] sm:$0xf]
        %v1040 = vld [vmem:[%s336 + $0x974] sm:$0xff]
        %v1041 = vld [vmem:[%s336 + $0x97c] sm:$0xff]
        %v1042 = vld [vmem:[%s336 + $0x984] sm:$0xf]
        %v1043 = vld [vmem:[%s336 + $0x988] sm:$0xff]
        %v1044 = vld [vmem:[%s336 + $0x990] sm:$0xff]
        %v1045 = vld [vmem:[%s336 + $0x998] sm:$0xf]
        %v1046 = vld [vmem:[%s336 + $0x99c] sm:$0xff]
        %v1047 = vld [vmem:[%s336 + $0x9a4] sm:$0xff]
        %v1048 = vld [vmem:[%s336 + $0x9ac] sm:$0xf]
        %v1049 = vld [vmem:[%s336 + $0x9b0] sm:$0xff]
        %v1050 = vld [vmem:[%s336 + $0x9b8] sm:$0xff]
        %v1051 = vld [vmem:[%s336 + $0x9c0] sm:$0xf]
        %v1052 = vld [vmem:[%s336 + $0x9c4] sm:$0xff]
        %v1053 = vld [vmem:[%s336 + $0x9cc] sm:$0xff]
        %v1054 = vld [vmem:[%s336 + $0x9d4] sm:$0xf]
        %v1055 = vld [vmem:[%s336 + $0x9d8] sm:$0xff]
        %v1056 = vld [vmem:[%s336 + $0x9e0] sm:$0xff]
        %v1057 = vld [vmem:[%s336 + $0x9e8] sm:$0xf]
        %v1058 = vld [vmem:[%s336 + $0x9ec] sm:$0xff]
        %v1059 = vld [vmem:[%s336 + $0x9f4] sm:$0xff]
        %v1060 = vld [vmem:[%s336 + $0x9fc] sm:$0xf]
        %v1061 = vld [vmem:[%s336 + $0xa00] sm:$0xff]
        %v1062 = vld [vmem:[%s336 + $0xa08] sm:$0xff]
        %v1063 = vld [vmem:[%s336 + $0xa10] sm:$0xf]
        %v1064 = vld [vmem:[%s336 + $0xa14] sm:$0xff]
        %v1065 = vld [vmem:[%s336 + $0xa1c] sm:$0xff]
        %v1066 = vld [vmem:[%s336 + $0xa24] sm:$0xf]
        %v1067 = vld [vmem:[%s336 + $0xa28] sm:$0xff]
        %v1068 = vld [vmem:[%s336 + $0xa30] sm:$0xff]
        %v1069 = vld [vmem:[%s336 + $0xa38] sm:$0xf]
        %v1070 = vld [vmem:[%s336 + $0xa3c] sm:$0xff]
        %v1071 = vld [vmem:[%s336 + $0xa44] sm:$0xff]
        %v1072 = vld [vmem:[%s336 + $0xa4c] sm:$0xf]
        %v1073 = vld [vmem:[%s336 + $0xa50] sm:$0xff]
        %v1074 = vld [vmem:[%s336 + $0xa58] sm:$0xff]
        %v1075 = vld [vmem:[%s336 + $0xa60] sm:$0xf]
        %v1076 = vld [vmem:[%s336 + $0xa64] sm:$0xff]
        %v1077 = vld [vmem:[%s336 + $0xa6c] sm:$0xff]
        %v1078 = vld [vmem:[%s336 + $0xa74] sm:$0xf]
        %v1079 = vld [vmem:[%s336 + $0xa78] sm:$0xff]
        %v1080 = vld [vmem:[%s336 + $0xa80] sm:$0xff]
        %v1081 = vld [vmem:[%s336 + $0xa88] sm:$0xf]
        %v1082 = vld [vmem:[%s336 + $0xa8c] sm:$0xff]
        %v1083 = vld [vmem:[%s336 + $0xa94] sm:$0xff]
        %v1084 = vld [vmem:[%s336 + $0xa9c] sm:$0xf]
        %v1085 = vld [vmem:[%s336 + $0xaa0] sm:$0xff]
        %v1086 = vld [vmem:[%s336 + $0xaa8] sm:$0xff]
        %v1087 = vld [vmem:[%s336 + $0xab0] sm:$0xf]
        %v1088 = vld [vmem:[%s336 + $0xab4] sm:$0xff]
        %v1089 = vld [vmem:[%s336 + $0xabc] sm:$0xff]
        %v1090 = vld [vmem:[%s336 + $0xac4] sm:$0xf]
        %v1091 = vld [vmem:[%s336 + $0xac8] sm:$0xff]
        %v1092 = vld [vmem:[%s336 + $0xad0] sm:$0xff]
        %v1093 = vld [vmem:[%s336 + $0xad8] sm:$0xf]
        %v1094 = vld [vmem:[%s336 + $0xadc] sm:$0xff]
        %v1095 = vld [vmem:[%s336 + $0xae4] sm:$0xff]
        %v1096 = vld [vmem:[%s336 + $0xaec] sm:$0xf]
        %v1097 = vld [vmem:[%s336 + $0xaf0] sm:$0xff]
        %v1098 = vld [vmem:[%s336 + $0xaf8] sm:$0xff]
        %v1099 = vld [vmem:[%s336 + $0xb00] sm:$0xf]
        %v1100 = vld [vmem:[%s336 + $0xb04] sm:$0xff]
        %v1101 = vld [vmem:[%s336 + $0xb0c] sm:$0xff]
        %v1102 = vld [vmem:[%s336 + $0xb14] sm:$0xf]
        %v1103 = vld [vmem:[%s336 + $0xb18] sm:$0xff]
        %v1104 = vld [vmem:[%s336 + $0xb20] sm:$0xff]
        %v1105 = vld [vmem:[%s336 + $0xb28] sm:$0xf]
        %v1106 = vld [vmem:[%s336 + $0xb2c] sm:$0xff]
        %v1107 = vld [vmem:[%s336 + $0xb34] sm:$0xff]
        %v1108 = vld [vmem:[%s336 + $0xb3c] sm:$0xf]
        %v1109 = vld [vmem:[%s336 + $0xb40] sm:$0xff]
        %v1110 = vld [vmem:[%s336 + $0xb48] sm:$0xff]
        %v1111 = vld [vmem:[%s336 + $0xb50] sm:$0xf]
        %v1112 = vld [vmem:[%s336 + $0xb54] sm:$0xff]
        %v1113 = vld [vmem:[%s336 + $0xb5c] sm:$0xff]
        %v1114 = vld [vmem:[%s336 + $0xb64] sm:$0xf]
        %v1115 = vld [vmem:[%s336 + $0xb68] sm:$0xff]
        %v1116 = vld [vmem:[%s336 + $0xb70] sm:$0xff]
        %v1117 = vld [vmem:[%s336 + $0xb78] sm:$0xf]
        %v1118 = vld [vmem:[%s336 + $0xb7c] sm:$0xff]
        %v1119 = vld [vmem:[%s336 + $0xb84] sm:$0xff]
        %v1120 = vld [vmem:[%s336 + $0xb8c] sm:$0xf]
        %v1121 = vld [vmem:[%s336 + $0xb90] sm:$0xff]
        %v1122 = vld [vmem:[%s336 + $0xb98] sm:$0xff]
        %v1123 = vld [vmem:[%s336 + $0xba0] sm:$0xf]
        %v1124 = vld [vmem:[%s336 + $0xba4] sm:$0xff]
        %v1125 = vld [vmem:[%s336 + $0xbac] sm:$0xff]
        %v1126 = vld [vmem:[%s336 + $0xbb4] sm:$0xf]
        %v1127 = vld [vmem:[%s336 + $0xbb8] sm:$0xff]
        %v1128 = vld [vmem:[%s336 + $0xbc0] sm:$0xff]
        %v1129 = vld [vmem:[%s336 + $0xbc8] sm:$0xf]
        %v1130 = vld [vmem:[%s336 + $0xbcc] sm:$0xff]
        %v1131 = vld [vmem:[%s336 + $0xbd4] sm:$0xff]
        %v1132 = vld [vmem:[%s336 + $0xbdc] sm:$0xf]
        %v1133 = vld [vmem:[%s336 + $0xbe0] sm:$0xff]
        %v1134 = vld [vmem:[%s336 + $0xbe8] sm:$0xff]
        %v1135 = vld [vmem:[%s336 + $0xbf0] sm:$0xf]
        %v1136 = vld [vmem:[%s336 + $0xbf4] sm:$0xff]
        %v1137 = vld [vmem:[%s336 + $0xbfc] sm:$0xff]
        %v1138 = vld [vmem:[%s336 + $0xc04] sm:$0xf]
        %v1139 = vld [vmem:[%s336 + $0xc08] sm:$0xff]
        %v1140 = vld [vmem:[%s336 + $0xc10] sm:$0xff]
        %v1141 = vld [vmem:[%s336 + $0xc18] sm:$0xf]
        %v1142 = vld [vmem:[%s336 + $0xc1c] sm:$0xff]
        %v1143 = vld [vmem:[%s336 + $0xc24] sm:$0xff]
        %v1144 = vld [vmem:[%s336 + $0xc2c] sm:$0xf]
        %v1145 = vld [vmem:[%s336 + $0xc30] sm:$0xff]
        %v1146 = vld [vmem:[%s336 + $0xc38] sm:$0xff]
        %v1147 = vld [vmem:[%s336 + $0xc40] sm:$0xf]
        %v1148 = vld [vmem:[%s336 + $0xc44] sm:$0xff]
        %v1149 = vld [vmem:[%s336 + $0xc4c] sm:$0xff]
        %v1150 = vld [vmem:[%s336 + $0xc54] sm:$0xf]
        %v1151 = vld [vmem:[%s336 + $0xc58] sm:$0xff]
        %v1152 = vld [vmem:[%s336 + $0xc60] sm:$0xff]
        %v1153 = vld [vmem:[%s336 + $0xc68] sm:$0xf]
        %v1154 = vld [vmem:[%s336 + $0xc6c] sm:$0xff]
        %v1155 = vld [vmem:[%s336 + $0xc74] sm:$0xff]
        %v1156 = vld [vmem:[%s336 + $0xc7c] sm:$0xf]
        %v1157 = vld [vmem:[%s336 + $0xc80] sm:$0xff]
        %v1158 = vld [vmem:[%s336 + $0xc88] sm:$0xff]
        %v1159 = vld [vmem:[%s336 + $0xc90] sm:$0xf]
        %v1160 = vld [vmem:[%s336 + $0xc94] sm:$0xff]
        %v1161 = vld [vmem:[%s336 + $0xc9c] sm:$0xff]
        %v1162 = vld [vmem:[%s336 + $0xca4] sm:$0xf]
        %v1163 = vld [vmem:[%s336 + $0xca8] sm:$0xff]
        %v1164 = vld [vmem:[%s336 + $0xcb0] sm:$0xff]
        %v1165 = vld [vmem:[%s336 + $0xcb8] sm:$0xf]
        %v1166 = vld [vmem:[%s336 + $0xcbc] sm:$0xff]
        %v1167 = vld [vmem:[%s336 + $0xcc4] sm:$0xff]
        %v1168 = vld [vmem:[%s336 + $0xccc] sm:$0xf]
        %v1169 = vld [vmem:[%s336 + $0xcd0] sm:$0xff]
        %v1170 = vld [vmem:[%s336 + $0xcd8] sm:$0xff]
        %v1171 = vld [vmem:[%s336 + $0xce0] sm:$0xf]
        %v1172 = vld [vmem:[%s336 + $0xce4] sm:$0xff]
        %v1173 = vld [vmem:[%s336 + $0xcec] sm:$0xff]
        %v1174 = vld [vmem:[%s336 + $0xcf4] sm:$0xf]
        %v1175 = vld [vmem:[%s336 + $0xcf8] sm:$0xff]
        %v1176 = vld [vmem:[%s336 + $0xd00] sm:$0xff]
        %v1177 = vld [vmem:[%s336 + $0xd08] sm:$0xf]
        %v1178 = vld [vmem:[%s336 + $0xd0c] sm:$0xff]
        %v1179 = vld [vmem:[%s336 + $0xd14] sm:$0xff]
        %v1180 = vld [vmem:[%s336 + $0xd1c] sm:$0xf]
        %v1181 = vld [vmem:[%s336 + $0xd20] sm:$0xff]
        %v1182 = vld [vmem:[%s336 + $0xd28] sm:$0xff]
        %v1183 = vld [vmem:[%s336 + $0xd30] sm:$0xf]
        %v1184 = vld [vmem:[%s336 + $0xd34] sm:$0xff]
        %v1185 = vld [vmem:[%s336 + $0xd3c] sm:$0xff]
        %v1186 = vld [vmem:[%s336 + $0xd44] sm:$0xf]
        %v1187 = vld [vmem:[%s336 + $0xd48] sm:$0xff]
        %v1188 = vld [vmem:[%s336 + $0xd50] sm:$0xff]
        %v1189 = vld [vmem:[%s336 + $0xd58] sm:$0xf]
        %v1190 = vld [vmem:[%s336 + $0xd5c] sm:$0xff]
        %v1191 = vld [vmem:[%s336 + $0xd64] sm:$0xff]
        %v1192 = vld [vmem:[%s336 + $0xd6c] sm:$0xf]
        %v1193 = vld [vmem:[%s336 + $0xd70] sm:$0xff]
        %v1194 = vld [vmem:[%s336 + $0xd78] sm:$0xff]
        %v1195 = vld [vmem:[%s336 + $0xd80] sm:$0xf]
        %v1196 = vld [vmem:[%s336 + $0xd84] sm:$0xff]
        %v1197 = vld [vmem:[%s336 + $0xd8c] sm:$0xff]
        %v1198 = vld [vmem:[%s336 + $0xd94] sm:$0xf]
        %v1199 = vld [vmem:[%s336 + $0xd98] sm:$0xff]
        %v1200 = vld [vmem:[%s336 + $0xda0] sm:$0xff]
        %v1201 = vld [vmem:[%s336 + $0xda8] sm:$0xf]
        %v1202 = vld [vmem:[%s336 + $0xdac] sm:$0xff]
        %v1203 = vld [vmem:[%s336 + $0xdb4] sm:$0xff]
        %v1204 = vld [vmem:[%s336 + $0xdbc] sm:$0xf]
        %v1205 = vld [vmem:[%s336 + $0xdc0] sm:$0xff]
        %v1206 = vld [vmem:[%s336 + $0xdc8] sm:$0xff]
        %v1207 = vld [vmem:[%s336 + $0xdd0] sm:$0xf]
        %v1208 = vld [vmem:[%s336 + $0xdd4] sm:$0xff]
        %v1209 = vld [vmem:[%s336 + $0xddc] sm:$0xff]
        %v1210 = vld [vmem:[%s336 + $0xde4] sm:$0xf]
        %v1211 = vld [vmem:[%s336 + $0xde8] sm:$0xff]
        %v1212 = vld [vmem:[%s336 + $0xdf0] sm:$0xff]
        %v1213 = vld [vmem:[%s336 + $0xdf8] sm:$0xf]
        %v1214 = vld [vmem:[%s336 + $0xdfc] sm:$0xff]
        %v1215 = vld [vmem:[%s336 + $0xe04] sm:$0xff]
        %v1216 = vld [vmem:[%s336 + $0xe0c] sm:$0xf]
        %v1217 = vld [vmem:[%s336 + $0xe10] sm:$0xff]
        %v1218 = vld [vmem:[%s336 + $0xe18] sm:$0xff]
        %v1219 = vld [vmem:[%s336 + $0xe20] sm:$0xf]
        %v1220 = vld [vmem:[%s336 + $0xe24] sm:$0xff]
        %v1221 = vld [vmem:[%s336 + $0xe2c] sm:$0xff]
        %v1222 = vld [vmem:[%s336 + $0xe34] sm:$0xf]
        %v1223 = vld [vmem:[%s336 + $0xe38] sm:$0xff]
        %v1224 = vld [vmem:[%s336 + $0xe40] sm:$0xff]
        %v1225 = vld [vmem:[%s336 + $0xe48] sm:$0xf]
        %v1226 = vld [vmem:[%s336 + $0xe4c] sm:$0xff]
        %v1227 = vld [vmem:[%s336 + $0xe54] sm:$0xff]
        %v1228 = vld [vmem:[%s336 + $0xe5c] sm:$0xf]
        %v1229 = vld [vmem:[%s336 + $0xe60] sm:$0xff]
        %v1230 = vld [vmem:[%s336 + $0xe68] sm:$0xff]
        %v1231 = vld [vmem:[%s336 + $0xe70] sm:$0xf]
        %v1232 = vld [vmem:[%s336 + $0xe74] sm:$0xff]
        %v1233 = vld [vmem:[%s336 + $0xe7c] sm:$0xff]
        %v1234 = vld [vmem:[%s336 + $0xe84] sm:$0xf]
        %v1235 = vld [vmem:[%s336 + $0xe88] sm:$0xff]
        %v1236 = vld [vmem:[%s336 + $0xe90] sm:$0xff]
        %v1237 = vld [vmem:[%s336 + $0xe98] sm:$0xf]
        %v1238 = vld [vmem:[%s336 + $0xe9c] sm:$0xff]
        %v1239 = vld [vmem:[%s336 + $0xea4] sm:$0xff]
        %v1240 = vld [vmem:[%s336 + $0xeac] sm:$0xf]
        %v1241 = vld [vmem:[%s336 + $0xeb0] sm:$0xff]
        %v1242 = vld [vmem:[%s336 + $0xeb8] sm:$0xff]
        %v1243 = vld [vmem:[%s336 + $0xec0] sm:$0xf]
        %v1244 = vld [vmem:[%s336 + $0xec4] sm:$0xff]
        %v1245 = vld [vmem:[%s336 + $0xecc] sm:$0xff]
        %v1246 = vld [vmem:[%s336 + $0xed4] sm:$0xf]
        %v1247 = vld [vmem:[%s336 + $0xed8] sm:$0xff]
        %v1248 = vld [vmem:[%s336 + $0xee0] sm:$0xff]
        %v1249 = vld [vmem:[%s336 + $0xee8] sm:$0xf]
        %v1250 = vld [vmem:[%s336 + $0xeec] sm:$0xff]
        %v1251 = vld [vmem:[%s336 + $0xef4] sm:$0xff]
        %v1252 = vld [vmem:[%s336 + $0xefc] sm:$0xf]
        %v1253 = vld [vmem:[%s336 + $0xf00] sm:$0xff]
        %v1254 = vld [vmem:[%s336 + $0xf08] sm:$0xff]
        %v1255 = vld [vmem:[%s336 + $0xf10] sm:$0xf]
        %v1256 = vld [vmem:[%s336 + $0xf14] sm:$0xff]
        %v1257 = vld [vmem:[%s336 + $0xf1c] sm:$0xff]
        %v1258 = vld [vmem:[%s336 + $0xf24] sm:$0xf]
        %v1259 = vld [vmem:[%s336 + $0xf28] sm:$0xff]
        %v1260 = vld [vmem:[%s336 + $0xf30] sm:$0xff]
        %v1261 = vld [vmem:[%s336 + $0xf38] sm:$0xf]
        %v1262 = vld [vmem:[%s336 + $0xf3c] sm:$0xff]
        %v1263 = vld [vmem:[%s336 + $0xf44] sm:$0xff]
        %v1264 = vld [vmem:[%s336 + $0xf4c] sm:$0xf]
        %v1265 = vld [vmem:[%s336 + $0xf50] sm:$0xff]
        %v1266 = vld [vmem:[%s336 + $0xf58] sm:$0xff]
        %v1267 = vld [vmem:[%s336 + $0xf60] sm:$0xf]
        %v1268 = vld [vmem:[%s336 + $0xf64] sm:$0xff]
        %v1269 = vld [vmem:[%s336 + $0xf6c] sm:$0xff]
        %v1270 = vld [vmem:[%s336 + $0xf74] sm:$0xf]
        %v1271 = vld [vmem:[%s336 + $0xf78] sm:$0xff]
        %v1272 = vld [vmem:[%s336 + $0xf80] sm:$0xff]
        %v1273 = vld [vmem:[%s336 + $0xf88] sm:$0xf]
        %v1274 = vld [vmem:[%s336 + $0xf8c] sm:$0xff]
        %v1275 = vld [vmem:[%s336 + $0xf94] sm:$0xff]
        %v1276 = vld [vmem:[%s336 + $0xf9c] sm:$0xf]
        %v1277 = vld [vmem:[%s336 + $0xfa0] sm:$0xff]
        %v1278 = vld [vmem:[%s336 + $0xfa8] sm:$0xff]
        %v1279 = vld [vmem:[%s336 + $0xfb0] sm:$0xf]
        %v1280 = vld [vmem:[%s336 + $0xfb4] sm:$0xff]
        %v1281 = vld [vmem:[%s336 + $0xfbc] sm:$0xff]
        %v1282 = vld [vmem:[%s336 + $0xfc4] sm:$0xf]
        %v1283 = vld [vmem:[%s336 + $0xfc8] sm:$0xff]
        %v1284 = vld [vmem:[%s336 + $0xfd0] sm:$0xff]
        %v1285 = vld [vmem:[%s336 + $0xfd8] sm:$0xf]
        %v1286 = vld [vmem:[%s336 + $0xfdc] sm:$0xff]
        %v1287 = vld [vmem:[%s336 + $0xfe4] sm:$0xff]
        %v1288 = vld [vmem:[%s336 + $0xfec] sm:$0xf]
        %v1289 = vld [vmem:[%s336 + $0xff0] sm:$0xff]
        %v1290 = vld [vmem:[%s336 + $0xff8] sm:$0xff]
        %v1291 = vld [vmem:[%s336 + $0x1000] sm:$0xf]
        %v1292 = vld [vmem:[%s336 + $0x1004] sm:$0xff]
        %v1293 = vld [vmem:[%s336 + $0x100c] sm:$0xff]
        %v1294 = vld [vmem:[%s336 + $0x1014] sm:$0xf]
        %v1295 = vld [vmem:[%s336 + $0x1018] sm:$0xff]
        %v1296 = vld [vmem:[%s336 + $0x1020] sm:$0xff]
        %v1297 = vld [vmem:[%s336 + $0x1028] sm:$0xf]
        %v1298 = vld [vmem:[%s336 + $0x102c] sm:$0xff]
        %v1299 = vld [vmem:[%s336 + $0x1034] sm:$0xff]
        %v1300 = vld [vmem:[%s336 + $0x103c] sm:$0xf]
        %v1301 = vld [vmem:[%s336 + $0x1040] sm:$0xff]
        %v1302 = vld [vmem:[%s336 + $0x1048] sm:$0xff]
        %v1303 = vld [vmem:[%s336 + $0x1050] sm:$0xf]
        %v1304 = vld [vmem:[%s336 + $0x1054] sm:$0xff]
        %v1305 = vld [vmem:[%s336 + $0x105c] sm:$0xff]
        %v1306 = vld [vmem:[%s336 + $0x1064] sm:$0xf]
        %v1307 = vld [vmem:[%s336 + $0x1068] sm:$0xff]
        %v1308 = vld [vmem:[%s336 + $0x1070] sm:$0xff]
        %v1309 = vld [vmem:[%s336 + $0x1078] sm:$0xf]
        %v1310 = vld [vmem:[%s336 + $0x107c] sm:$0xff]
        %v1311 = vld [vmem:[%s336 + $0x1084] sm:$0xff]
        %v1312 = vld [vmem:[%s336 + $0x108c] sm:$0xf]
        %v1313 = vld [vmem:[%s336 + $0x1090] sm:$0xff]
        %v1314 = vld [vmem:[%s336 + $0x1098] sm:$0xff]
        %v1315 = vld [vmem:[%s336 + $0x10a0] sm:$0xf]
        %v1316 = vld [vmem:[%s336 + $0x10a4] sm:$0xff]
        %v1317 = vld [vmem:[%s336 + $0x10ac] sm:$0xff]
        %v1318 = vld [vmem:[%s336 + $0x10b4] sm:$0xf]
        %v1319 = vld [vmem:[%s336 + $0x10b8] sm:$0xff]
        %v1320 = vld [vmem:[%s336 + $0x10c0] sm:$0xff]
        %v1321 = vld [vmem:[%s336 + $0x10c8] sm:$0xf]
        %v1322 = vld [vmem:[%s336 + $0x10cc] sm:$0xff]
        %v1323 = vld [vmem:[%s336 + $0x10d4] sm:$0xff]
        %v1324 = vld [vmem:[%s336 + $0x10dc] sm:$0xf]
        %v1325 = vld [vmem:[%s336 + $0x10e0] sm:$0xff]
        %v1326 = vld [vmem:[%s336 + $0x10e8] sm:$0xff]
        %v1327 = vld [vmem:[%s336 + $0x10f0] sm:$0xf]
        %v1328 = vld [vmem:[%s336 + $0x10f4] sm:$0xff]
        %v1329 = vld [vmem:[%s336 + $0x10fc] sm:$0xff]
        %v1330 = vld [vmem:[%s336 + $0x1104] sm:$0xf]
        %v1331 = vld [vmem:[%s336 + $0x1108] sm:$0xff]
        %v1332 = vld [vmem:[%s336 + $0x1110] sm:$0xff]
        %v1333 = vld [vmem:[%s336 + $0x1118] sm:$0xf]
        %v1334 = vld [vmem:[%s336 + $0x111c] sm:$0xff]
        %v1335 = vld [vmem:[%s336 + $0x1124] sm:$0xff]
        %v1336 = vld [vmem:[%s336 + $0x112c] sm:$0xf]
        %v1337 = vld [vmem:[%s336 + $0x1130] sm:$0xff]
        %v1338 = vld [vmem:[%s336 + $0x1138] sm:$0xff]
        %v1339 = vld [vmem:[%s336 + $0x1140] sm:$0xf]
        %v1340 = vld [vmem:[%s336 + $0x1144] sm:$0xff]
        %v1341 = vld [vmem:[%s336 + $0x114c] sm:$0xff]
        %v1342 = vld [vmem:[%s336 + $0x1154] sm:$0xf]
        %v1343 = vld [vmem:[%s336 + $0x1158] sm:$0xff]
        %v1344 = vld [vmem:[%s336 + $0x1160] sm:$0xff]
        %v1345 = vld [vmem:[%s336 + $0x1168] sm:$0xf]
        %v1346 = vld [vmem:[%s336 + $0x116c] sm:$0xff]
        %v1347 = vld [vmem:[%s336 + $0x1174] sm:$0xff]
        %v1348 = vld [vmem:[%s336 + $0x117c] sm:$0xf]
        %v1349 = vld [vmem:[%s336 + $0x1180] sm:$0xff]
        %v1350 = vld [vmem:[%s336 + $0x1188] sm:$0xff]
        %v1351 = vld [vmem:[%s336 + $0x1190] sm:$0xf]
        %v1352 = vld [vmem:[%s336 + $0x1194] sm:$0xff]
        %v1353 = vld [vmem:[%s336 + $0x119c] sm:$0xff]
        %v1354 = vld [vmem:[%s336 + $0x11a4] sm:$0xf]
        %v1355 = vld [vmem:[%s336 + $0x11a8] sm:$0xff]
        %v1356 = vld [vmem:[%s336 + $0x11b0] sm:$0xff]
        %v1357 = vld [vmem:[%s336 + $0x11b8] sm:$0xf]
        %v1358 = vld [vmem:[%s336 + $0x11bc] sm:$0xff]
        %v1359 = vld [vmem:[%s336 + $0x11c4] sm:$0xff]
        %v1360 = vld [vmem:[%s336 + $0x11cc] sm:$0xf]
        %v1361 = vld [vmem:[%s336 + $0x11d0] sm:$0xff]
        %v1362 = vld [vmem:[%s336 + $0x11d8] sm:$0xff]
        %v1363 = vld [vmem:[%s336 + $0x11e0] sm:$0xf]
        %v1364 = vld [vmem:[%s336 + $0x11e4] sm:$0xff]
        %v1365 = vld [vmem:[%s336 + $0x11ec] sm:$0xff]
        %v1366 = vld [vmem:[%s336 + $0x11f4] sm:$0xf]
        %v1367 = vld [vmem:[%s336 + $0x11f8] sm:$0xff]
        %v1368 = vld [vmem:[%s336 + $0x1200] sm:$0xff]
        %v1369 = vld [vmem:[%s336 + $0x1208] sm:$0xf]
        %v1370 = vld [vmem:[%s336 + $0x120c] sm:$0xff]
        %v1371 = vld [vmem:[%s336 + $0x1214] sm:$0xff]
        %v1372 = vld [vmem:[%s336 + $0x121c] sm:$0xf]
        %v1373 = vld [vmem:[%s336 + $0x1220] sm:$0xff]
        %v1374 = vld [vmem:[%s336 + $0x1228] sm:$0xff]
        %v1375 = vld [vmem:[%s336 + $0x1230] sm:$0xf]
        %v1376 = vld [vmem:[%s336 + $0x1234] sm:$0xff]
        %v1377 = vld [vmem:[%s336 + $0x123c] sm:$0xff]
        %v1378 = vld [vmem:[%s336 + $0x1244] sm:$0xf]
        %v1379 = vld [vmem:[%s336 + $0x1248] sm:$0xff]
        %v1380 = vld [vmem:[%s336 + $0x1250] sm:$0xff]
        %v1381 = vld [vmem:[%s336 + $0x1258] sm:$0xf]
        %v1382 = vld [vmem:[%s336 + $0x125c] sm:$0xff]
        %v1383 = vld [vmem:[%s336 + $0x1264] sm:$0xff]
        %v1384 = vld [vmem:[%s336 + $0x126c] sm:$0xf]
        %v1385 = vld [vmem:[%s336 + $0x1270] sm:$0xff]
        %v1386 = vld [vmem:[%s336 + $0x1278] sm:$0xff]
        %v1387 = vld [vmem:[%s336 + $0x1280] sm:$0xf]
        %v1388 = vld [vmem:[%s336 + $0x1284] sm:$0xff]
        %v1389 = vld [vmem:[%s336 + $0x128c] sm:$0xff]
        %v1390 = vld [vmem:[%s336 + $0x1294] sm:$0xf]
        %v1391 = vld [vmem:[%s336 + $0x1298] sm:$0xff]
        %v1392 = vld [vmem:[%s336 + $0x12a0] sm:$0xff]
        %v1393 = vld [vmem:[%s336 + $0x12a8] sm:$0xf]
        %v1394 = vld [vmem:[%s336 + $0x12ac] sm:$0xff]
        %v1395 = vld [vmem:[%s336 + $0x12b4] sm:$0xff]
        %v1396 = vld [vmem:[%s336 + $0x12bc] sm:$0xf]
        %v1397 = vld [vmem:[%s336 + $0x12c0] sm:$0xff]
        %v1398 = vld [vmem:[%s336 + $0x12c8] sm:$0xff]
        %v1399 = vld [vmem:[%s336 + $0x12d0] sm:$0xf]
        %v1400 = vld [vmem:[%s336 + $0x12d4] sm:$0xff]
        %v1401 = vld [vmem:[%s336 + $0x12dc] sm:$0xff]
        %v1402 = vld [vmem:[%s336 + $0x12e4] sm:$0xf]
        %v1403 = vld [vmem:[%s336 + $0x12e8] sm:$0xff]
        %v1404 = vld [vmem:[%s336 + $0x12f0] sm:$0xff]
        %v1405 = vld [vmem:[%s336 + $0x12f8] sm:$0xf]
        %v1406 = vld [vmem:[%s336 + $0x12fc] sm:$0xff]
        %v1407 = vld [vmem:[%s336 + $0x1304] sm:$0xff]
        %v1408 = vld [vmem:[%s336 + $0x130c] sm:$0xf]
        %v1409 = vld [vmem:[%s336 + $0x1310] sm:$0xff]
        %v1410 = vld [vmem:[%s336 + $0x1318] sm:$0xff]
        %v1411 = vld [vmem:[%s336 + $0x1320] sm:$0xf]
        %v1412 = vld [vmem:[%s336 + $0x1324] sm:$0xff]
        %v1413 = vld [vmem:[%s336 + $0x132c] sm:$0xff]
        %v1414 = vld [vmem:[%s336 + $0x1334] sm:$0xf]
        %v1415 = vld [vmem:[%s336 + $0x1338] sm:$0xff]
        %v1416 = vld [vmem:[%s336 + $0x1340] sm:$0xff]
        %v1417 = vld [vmem:[%s336 + $0x1348] sm:$0xf]
        %v1418 = vld [vmem:[%s336 + $0x134c] sm:$0xff]
        %v1419 = vld [vmem:[%s336 + $0x1354] sm:$0xff]
        %v1420 = vld [vmem:[%s336 + $0x135c] sm:$0xf]
        %v1421 = vld [vmem:[%s336 + $0x1360] sm:$0xff]
        %v1422 = vld [vmem:[%s336 + $0x1368] sm:$0xff]
        %v1423 = vld [vmem:[%s336 + $0x1370] sm:$0xf]
        %v1424 = vld [vmem:[%s336 + $0x1374] sm:$0xff]
        %v1425 = vld [vmem:[%s336 + $0x137c] sm:$0xff]
        %v1426 = vld [vmem:[%s336 + $0x1384] sm:$0xf]
        %v1427 = vld [vmem:[%s336 + $0x1388] sm:$0xff]
        %v1428 = vld [vmem:[%s336 + $0x1390] sm:$0xff]
        %v1429 = vld [vmem:[%s336 + $0x1398] sm:$0xf]
        %v1430 = vld [vmem:[%s336 + $0x139c] sm:$0xff]
        %v1431 = vld [vmem:[%s336 + $0x13a4] sm:$0xff]
        %v1432 = vld [vmem:[%s336 + $0x13ac] sm:$0xf]
        %v1433 = vld [vmem:[%s336 + $0x13b0] sm:$0xff]
        %v1434 = vld [vmem:[%s336 + $0x13b8] sm:$0xff]
        %v1435 = vld [vmem:[%s336 + $0x13c0] sm:$0xf]
        %v1436 = vld [vmem:[%s336 + $0x13c4] sm:$0xff]
        %v1437 = vld [vmem:[%s336 + $0x13cc] sm:$0xff]
        %v1438 = vld [vmem:[%s336 + $0x13d4] sm:$0xf]
        %v1439 = vld [vmem:[%s336 + $0x13d8] sm:$0xff]
        %v1440 = vld [vmem:[%s336 + $0x13e0] sm:$0xff]
        %v1441 = vld [vmem:[%s336 + $0x13e8] sm:$0xf]
        %v1442 = vld [vmem:[%s336 + $0x13ec] sm:$0xff]
        %v1443 = vld [vmem:[%s336 + $0x13f4] sm:$0xff]
        %v1444 = vld [vmem:[%s336 + $0x13fc] sm:$0xf]
        %v1445 = vld [vmem:[%s336 + $0x1400] sm:$0xff]
        %v1446 = vld [vmem:[%s336 + $0x1408] sm:$0xff]
        %v1447 = vld [vmem:[%s336 + $0x1410] sm:$0xf]
        %v1448 = vld [vmem:[%s336 + $0x1414] sm:$0xff]
        %v1449 = vld [vmem:[%s336 + $0x141c] sm:$0xff]
        %v1450 = vld [vmem:[%s336 + $0x1424] sm:$0xf]
        %v1451 = vld [vmem:[%s336 + $0x1428] sm:$0xff]
        %v1452 = vld [vmem:[%s336 + $0x1430] sm:$0xff]
        %v1453 = vld [vmem:[%s336 + $0x1438] sm:$0xf]
        %v1454 = vld [vmem:[%s336 + $0x143c] sm:$0xff]
        %v1455 = vld [vmem:[%s336 + $0x1444] sm:$0xff]
        %v1456 = vld [vmem:[%s336 + $0x144c] sm:$0xf]
        %v1457 = vld [vmem:[%s336 + $0x1450] sm:$0xff]
        %v1458 = vld [vmem:[%s336 + $0x1458] sm:$0xff]
        %v1459 = vld [vmem:[%s336 + $0x1460] sm:$0xf]
        %v1460 = vld [vmem:[%s336 + $0x1464] sm:$0xff]
        %v1461 = vld [vmem:[%s336 + $0x146c] sm:$0xff]
        %v1462 = vld [vmem:[%s336 + $0x1474] sm:$0xf]
        %v1463 = vld [vmem:[%s336 + $0x1478] sm:$0xff]
        %v1464 = vld [vmem:[%s336 + $0x1480] sm:$0xff]
        %v1465 = vld [vmem:[%s336 + $0x1488] sm:$0xf]
        %v1466 = vld [vmem:[%s336 + $0x148c] sm:$0xff]
        %v1467 = vld [vmem:[%s336 + $0x1494] sm:$0xff]
        %v1468 = vld [vmem:[%s336 + $0x149c] sm:$0xf]
        %v1469 = vld [vmem:[%s336 + $0x14a0] sm:$0xff]
        %v1470 = vld [vmem:[%s336 + $0x14a8] sm:$0xff]
        %v1471 = vld [vmem:[%s336 + $0x14b0] sm:$0xf]
        %v1472 = vld [vmem:[%s336 + $0x14b4] sm:$0xff]
        %v1473 = vld [vmem:[%s336 + $0x14bc] sm:$0xff]
        %v1474 = vld [vmem:[%s336 + $0x14c4] sm:$0xf]
        %v1475 = vld [vmem:[%s336 + $0x14c8] sm:$0xff]
        %v1476 = vld [vmem:[%s336 + $0x14d0] sm:$0xff]
        %v1477 = vld [vmem:[%s336 + $0x14d8] sm:$0xf]
        %v1478 = vld [vmem:[%s336 + $0x14dc] sm:$0xff]
        %v1479 = vld [vmem:[%s336 + $0x14e4] sm:$0xff]
        %v1480 = vld [vmem:[%s336 + $0x14ec] sm:$0xf]
        %v1481 = vld [vmem:[%s336 + $0x14f0] sm:$0xff]
        %v1482 = vld [vmem:[%s336 + $0x14f8] sm:$0xff]
        %v1483 = vld [vmem:[%s336 + $0x1500] sm:$0xf]
        %v1484 = vld [vmem:[%s336 + $0x1504] sm:$0xff]
        %v1485 = vld [vmem:[%s336 + $0x150c] sm:$0xff]
        %v1486 = vld [vmem:[%s336 + $0x1514] sm:$0xf]
        %v1487 = vld [vmem:[%s336 + $0x1518] sm:$0xff]
        %v1488 = vld [vmem:[%s336 + $0x1520] sm:$0xff]
        %v1489 = vld [vmem:[%s336 + $0x1528] sm:$0xf]
        %v1490 = vld [vmem:[%s336 + $0x152c] sm:$0xff]
        %v1491 = vld [vmem:[%s336 + $0x1534] sm:$0xff]
        %v1492 = vld [vmem:[%s336 + $0x153c] sm:$0xf]
        %v1493 = vld [vmem:[%s336 + $0x1540] sm:$0xff]
        %v1494 = vld [vmem:[%s336 + $0x1548] sm:$0xff]
        %v1495 = vld [vmem:[%s336 + $0x1550] sm:$0xf]
        %v1496 = vld [vmem:[%s336 + $0x1554] sm:$0xff]
        %v1497 = vld [vmem:[%s336 + $0x155c] sm:$0xff]
        %v1498 = vld [vmem:[%s336 + $0x1564] sm:$0xf]
        %v1499 = vld [vmem:[%s336 + $0x1568] sm:$0xff]
        %v1500 = vld [vmem:[%s336 + $0x1570] sm:$0xff]
        %v1501 = vld [vmem:[%s336 + $0x1578] sm:$0xf]
        %v1502 = vld [vmem:[%s336 + $0x157c] sm:$0xff]
        %v1503 = vld [vmem:[%s336 + $0x1584] sm:$0xff]
        %v1504 = vld [vmem:[%s336 + $0x158c] sm:$0xf]
        %v1505 = vld [vmem:[%s336 + $0x1590] sm:$0xff]
        %v1506 = vld [vmem:[%s336 + $0x1598] sm:$0xff]
        %v1507 = vld [vmem:[%s336 + $0x15a0] sm:$0xf]
        %v1508 = vld [vmem:[%s336 + $0x15a4] sm:$0xff]
        %v1509 = vld [vmem:[%s336 + $0x15ac] sm:$0xff]
        %v1510 = vld [vmem:[%s336 + $0x15b4] sm:$0xf]
        %v1511 = vld [vmem:[%s336 + $0x15b8] sm:$0xff]
        %v1512 = vld [vmem:[%s336 + $0x15c0] sm:$0xff]
        %v1513 = vld [vmem:[%s336 + $0x15c8] sm:$0xf]
        %v1514 = vld [vmem:[%s336 + $0x15cc] sm:$0xff]
        %v1515 = vld [vmem:[%s336 + $0x15d4] sm:$0xff]
        %v1516 = vld [vmem:[%s336 + $0x15dc] sm:$0xf]
        %v1517 = vld [vmem:[%s336 + $0x15e0] sm:$0xff]
        %v1518 = vld [vmem:[%s336 + $0x15e8] sm:$0xff]
        %v1519 = vld [vmem:[%s336 + $0x15f0] sm:$0xf]
        %v1520 = vld [vmem:[%s336 + $0x15f4] sm:$0xff]
        %v1521 = vld [vmem:[%s336 + $0x15fc] sm:$0xff]
        %v1522 = vld [vmem:[%s336 + $0x1604] sm:$0xf]
        %v1523 = vld [vmem:[%s336 + $0x1608] sm:$0xff]
        %v1524 = vld [vmem:[%s336 + $0x1610] sm:$0xff]
        %v1525 = vld [vmem:[%s336 + $0x1618] sm:$0xf]
        %v1526 = vld [vmem:[%s336 + $0x161c] sm:$0xff]
        %v1527 = vld [vmem:[%s336 + $0x1624] sm:$0xff]
        %v1528 = vld [vmem:[%s336 + $0x162c] sm:$0xf]
        %v1529 = vld [vmem:[%s336 + $0x1630] sm:$0xff]
        %v1530 = vld [vmem:[%s336 + $0x1638] sm:$0xff]
        %v1531 = vld [vmem:[%s336 + $0x1640] sm:$0xf]
        %v1532 = vld [vmem:[%s336 + $0x1644] sm:$0xff]
        %v1533 = vld [vmem:[%s336 + $0x164c] sm:$0xff]
        %v1534 = vld [vmem:[%s336 + $0x1654] sm:$0xf]
        %v1535 = vld [vmem:[%s336 + $0x1658] sm:$0xff]
        %v1536 = vld [vmem:[%s336 + $0x1660] sm:$0xff]
        %v1537 = vld [vmem:[%s336 + $0x1668] sm:$0xf]
        %v1538 = vld [vmem:[%s336 + $0x166c] sm:$0xff]
        %v1539 = vld [vmem:[%s336 + $0x1674] sm:$0xff]
        %v1540 = vld [vmem:[%s336 + $0x167c] sm:$0xf]
        %v1541 = vld [vmem:[%s336 + $0x1680] sm:$0xff]
        %v1542 = vld [vmem:[%s336 + $0x1688] sm:$0xff]
        %v1543 = vld [vmem:[%s336 + $0x1690] sm:$0xf]
        %v1544 = vld [vmem:[%s336 + $0x1694] sm:$0xff]
        %v1545 = vld [vmem:[%s336 + $0x169c] sm:$0xff]
        %v1546 = vld [vmem:[%s336 + $0x16a4] sm:$0xf]
        %v1547 = vld [vmem:[%s336 + $0x16a8] sm:$0xff]
        %v1548 = vld [vmem:[%s336 + $0x16b0] sm:$0xff]
        %v1549 = vld [vmem:[%s336 + $0x16b8] sm:$0xf]
        %v1550 = vld [vmem:[%s336 + $0x16bc] sm:$0xff]
        %v1551 = vld [vmem:[%s336 + $0x16c4] sm:$0xff]
        %v1552 = vld [vmem:[%s336 + $0x16cc] sm:$0xf]
        %v1553 = vld [vmem:[%s336 + $0x16d0] sm:$0xff]
        %v1554 = vld [vmem:[%s336 + $0x16d8] sm:$0xff]
        %v1555 = vld [vmem:[%s336 + $0x16e0] sm:$0xf]
        %v1556 = vld [vmem:[%s336 + $0x16e4] sm:$0xff]
        %v1557 = vld [vmem:[%s336 + $0x16ec] sm:$0xff]
        %v1558 = vld [vmem:[%s336 + $0x16f4] sm:$0xf]
        %v1559 = vld [vmem:[%s336 + $0x16f8] sm:$0xff]
        %v1560 = vld [vmem:[%s336 + $0x1700] sm:$0xff]
        %v1561 = vld [vmem:[%s336 + $0x1708] sm:$0xf]
        %v1562 = vld [vmem:[%s336 + $0x170c] sm:$0xff]
        %v1563 = vld [vmem:[%s336 + $0x1714] sm:$0xff]
        %v1564 = vld [vmem:[%s336 + $0x171c] sm:$0xf]
        %v1565 = vld [vmem:[%s336 + $0x1720] sm:$0xff]
        %v1566 = vld [vmem:[%s336 + $0x1728] sm:$0xff]
        %v1567 = vld [vmem:[%s336 + $0x1730] sm:$0xf]
        %v1568 = vld [vmem:[%s336 + $0x1734] sm:$0xff]
        %v1569 = vld [vmem:[%s336 + $0x173c] sm:$0xff]
        %v1570 = vld [vmem:[%s336 + $0x1744] sm:$0xf]
        %v1571 = vld [vmem:[%s336 + $0x1748] sm:$0xff]
        %v1572 = vld [vmem:[%s336 + $0x1750] sm:$0xff]
        %v1573 = vld [vmem:[%s336 + $0x1758] sm:$0xf]
        %v1574 = vld [vmem:[%s336 + $0x175c] sm:$0xff]
        %v1575 = vld [vmem:[%s336 + $0x1764] sm:$0xff]
        %v1576 = vld [vmem:[%s336 + $0x176c] sm:$0xf]
        %v1577 = vld [vmem:[%s336 + $0x1770] sm:$0xff]
        %v1578 = vld [vmem:[%s336 + $0x1778] sm:$0xff]
        %v1579 = vld [vmem:[%s336 + $0x1780] sm:$0xf]
        %v1580 = vld [vmem:[%s336 + $0x1784] sm:$0xff]
        %v1581 = vld [vmem:[%s336 + $0x178c] sm:$0xff]
        %v1582 = vld [vmem:[%s336 + $0x1794] sm:$0xf]
        %v1583 = vld [vmem:[%s336 + $0x1798] sm:$0xff]
        %v1584 = vld [vmem:[%s336 + $0x17a0] sm:$0xff]
        %v1585 = vld [vmem:[%s336 + $0x17a8] sm:$0xf]
        %v1586 = vld [vmem:[%s336 + $0x17ac] sm:$0xff]
        %v1587 = vld [vmem:[%s336 + $0x17b4] sm:$0xff]
        %v1588 = vld [vmem:[%s336 + $0x17bc] sm:$0xf]
        %v1589 = vld [vmem:[%s336 + $0x17c0] sm:$0xff]
        %v1590 = vld [vmem:[%s336 + $0x17c8] sm:$0xff]
        %v1591 = vld [vmem:[%s336 + $0x17d0] sm:$0xf]
        %v1592 = vld [vmem:[%s336 + $0x17d4] sm:$0xff]
        %v1593 = vld [vmem:[%s336 + $0x17dc] sm:$0xff]
        %v1594 = vld [vmem:[%s336 + $0x17e4] sm:$0xf]
        %v1595 = vld [vmem:[%s336 + $0x17e8] sm:$0xff]
        %v1596 = vld [vmem:[%s336 + $0x17f0] sm:$0xff]
        %v1597 = vld [vmem:[%s336 + $0x17f8] sm:$0xf]
        %v1598 = vld [vmem:[%s336 + $0x17fc] sm:$0xff]
        %v1599 = vld [vmem:[%s336 + $0x1804] sm:$0xff]
        %v1600 = vld [vmem:[%s336 + $0x180c] sm:$0xf]
        %v1601 = vld [vmem:[%s336 + $0x1810] sm:$0xff]
        %v1602 = vld [vmem:[%s336 + $0x1818] sm:$0xff]
        %v1603 = vld [vmem:[%s336 + $0x1820] sm:$0xf]
        %v1604 = vld [vmem:[%s336 + $0x1824] sm:$0xff]
        %v1605 = vld [vmem:[%s336 + $0x182c] sm:$0xff]
        %v1606 = vld [vmem:[%s336 + $0x1834] sm:$0xf]
        %v1607 = vld [vmem:[%s336 + $0x1838] sm:$0xff]
        %v1608 = vld [vmem:[%s336 + $0x1840] sm:$0xff]
        %v1609 = vld [vmem:[%s336 + $0x1848] sm:$0xf]
        %v1610 = vld [vmem:[%s336 + $0x184c] sm:$0xff]
        %v1611 = vld [vmem:[%s336 + $0x1854] sm:$0xff]
        %v1612 = vld [vmem:[%s336 + $0x185c] sm:$0xf]
        %v1613 = vld [vmem:[%s336 + $0x1860] sm:$0xff]
        %v1614 = vld [vmem:[%s336 + $0x1868] sm:$0xff]
        %v1615 = vld [vmem:[%s336 + $0x1870] sm:$0xf]
        %v1616 = vld [vmem:[%s336 + $0x1874] sm:$0xff]
        %v1617 = vld [vmem:[%s336 + $0x187c] sm:$0xff]
        %v1618 = vld [vmem:[%s336 + $0x1884] sm:$0xf]
        %v1619 = vld [vmem:[%s336 + $0x1888] sm:$0xff]
        %v1620 = vld [vmem:[%s336 + $0x1890] sm:$0xff]
        %v1621 = vld [vmem:[%s336 + $0x1898] sm:$0xf]
        %v1622 = vld [vmem:[%s336 + $0x189c] sm:$0xff]
        %v1623 = vld [vmem:[%s336 + $0x18a4] sm:$0xff]
        %v1624 = vld [vmem:[%s336 + $0x18ac] sm:$0xf]
        %v1625 = vld [vmem:[%s336 + $0x18b0] sm:$0xff]
        %v1626 = vld [vmem:[%s336 + $0x18b8] sm:$0xff]
        %v1627 = vld [vmem:[%s336 + $0x18c0] sm:$0xf]
        %v1628 = vld [vmem:[%s336 + $0x18c4] sm:$0xff]
        %v1629 = vld [vmem:[%s336 + $0x18cc] sm:$0xff]
        %v1630 = vld [vmem:[%s336 + $0x18d4] sm:$0xf]
        %v1631 = vld [vmem:[%s336 + $0x18d8] sm:$0xff]
        %v1632 = vld [vmem:[%s336 + $0x18e0] sm:$0xff]
        %v1633 = vld [vmem:[%s336 + $0x18e8] sm:$0xf]
        %v1634 = vld [vmem:[%s336 + $0x18ec] sm:$0xff]
        %v1635 = vld [vmem:[%s336 + $0x18f4] sm:$0xff]
        %v1636 = vld [vmem:[%s336 + $0x18fc] sm:$0xf]
        %v1637 = vld [vmem:[%s336 + $0x1900] sm:$0xff]
        %v1638 = vld [vmem:[%s336 + $0x1908] sm:$0xff]
        %v1639 = vld [vmem:[%s336 + $0x1910] sm:$0xf]
        %v1640 = vld [vmem:[%s336 + $0x1914] sm:$0xff]
        %v1641 = vld [vmem:[%s336 + $0x191c] sm:$0xff]
        %v1642 = vld [vmem:[%s336 + $0x1924] sm:$0xf]
        %v1643 = vld [vmem:[%s336 + $0x1928] sm:$0xff]
        %v1644 = vld [vmem:[%s336 + $0x1930] sm:$0xff]
        %v1645 = vld [vmem:[%s336 + $0x1938] sm:$0xf]
        %v1646 = vld [vmem:[%s336 + $0x193c] sm:$0xff]
        %v1647 = vld [vmem:[%s336 + $0x1944] sm:$0xff]
        %v1648 = vld [vmem:[%s336 + $0x194c] sm:$0xf]
        %v1649 = vld [vmem:[%s336 + $0x1950] sm:$0xff]
        %v1650 = vld [vmem:[%s336 + $0x1958] sm:$0xff]
        %v1651 = vld [vmem:[%s336 + $0x1960] sm:$0xf]
        %v1652 = vld [vmem:[%s336 + $0x1964] sm:$0xff]
        %v1653 = vld [vmem:[%s336 + $0x196c] sm:$0xff]
        %v1654 = vld [vmem:[%s336 + $0x1974] sm:$0xf]
        %v1655 = vld [vmem:[%s336 + $0x1978] sm:$0xff]
        %v1656 = vld [vmem:[%s336 + $0x1980] sm:$0xff]
        %v1657 = vld [vmem:[%s336 + $0x1988] sm:$0xf]
        %v1658 = vld [vmem:[%s336 + $0x198c] sm:$0xff]
        %v1659 = vld [vmem:[%s336 + $0x1994] sm:$0xff]
        %v1660 = vld [vmem:[%s336 + $0x199c] sm:$0xf]
        %v1661 = vld [vmem:[%s336 + $0x19a0] sm:$0xff]
        %v1662 = vld [vmem:[%s336 + $0x19a8] sm:$0xff]
        %v1663 = vld [vmem:[%s336 + $0x19b0] sm:$0xf]
        %v1664 = vld [vmem:[%s336 + $0x19b4] sm:$0xff]
        %v1665 = vld [vmem:[%s336 + $0x19bc] sm:$0xff]
        %v1666 = vld [vmem:[%s336 + $0x19c4] sm:$0xf]
        %v1667 = vld [vmem:[%s336 + $0x19c8] sm:$0xff]
        %v1668 = vld [vmem:[%s336 + $0x19d0] sm:$0xff]
        %v1669 = vld [vmem:[%s336 + $0x19d8] sm:$0xf]
        %v1670 = vld [vmem:[%s336 + $0x19dc] sm:$0xff]
        %v1671 = vld [vmem:[%s336 + $0x19e4] sm:$0xff]
        %v1672 = vld [vmem:[%s336 + $0x19ec] sm:$0xf]
        %v1673 = vld [vmem:[%s336 + $0x19f0] sm:$0xff]
        %v1674 = vld [vmem:[%s336 + $0x19f8] sm:$0xff]
        %v1675 = vld [vmem:[%s336 + $0x1a00] sm:$0xf]
        %v1676 = vld [vmem:[%s336 + $0x1a04] sm:$0xff]
        %v1677 = vld [vmem:[%s336 + $0x1a0c] sm:$0xff]
        %v1678 = vld [vmem:[%s336 + $0x1a14] sm:$0xf]
        %v1679 = vld [vmem:[%s336 + $0x1a18] sm:$0xff]
        %v1680 = vld [vmem:[%s336 + $0x1a20] sm:$0xff]
        %v1681 = vld [vmem:[%s336 + $0x1a28] sm:$0xf]
        %v1682 = vld [vmem:[%s336 + $0x1a2c] sm:$0xff]
        %v1683 = vld [vmem:[%s336 + $0x1a34] sm:$0xff]
        %v1684 = vld [vmem:[%s336 + $0x1a3c] sm:$0xf]
        %v1685 = vld [vmem:[%s336 + $0x1a40] sm:$0xff]
        %v1686 = vld [vmem:[%s336 + $0x1a48] sm:$0xff]
        %v1687 = vld [vmem:[%s336 + $0x1a50] sm:$0xf]
        %v1688 = vld [vmem:[%s336 + $0x1a54] sm:$0xff]
        %v1689 = vld [vmem:[%s336 + $0x1a5c] sm:$0xff]
        %v1690 = vld [vmem:[%s336 + $0x1a64] sm:$0xf]
        %v1691 = vld [vmem:[%s336 + $0x1a68] sm:$0xff]
        %v1692 = vld [vmem:[%s336 + $0x1a70] sm:$0xff]
        %v1693 = vld [vmem:[%s336 + $0x1a78] sm:$0xf]
        %v1694 = vld [vmem:[%s336 + $0x1a7c] sm:$0xff]
        %v1695 = vld [vmem:[%s336 + $0x1a84] sm:$0xff]
        %v1696 = vld [vmem:[%s336 + $0x1a8c] sm:$0xf]
        %v1697 = vld [vmem:[%s336 + $0x1a90] sm:$0xff]
        %v1698 = vld [vmem:[%s336 + $0x1a98] sm:$0xff]
        %v1699 = vld [vmem:[%s336 + $0x1aa0] sm:$0xf]
        %v1700 = vld [vmem:[%s336 + $0x1aa4] sm:$0xff]
        %v1701 = vld [vmem:[%s336 + $0x1aac] sm:$0xff]
        %v1702 = vld [vmem:[%s336 + $0x1ab4] sm:$0xf]
        %v1703 = vld [vmem:[%s336 + $0x1ab8] sm:$0xff]
        %v1704 = vld [vmem:[%s336 + $0x1ac0] sm:$0xff]
        %v1705 = vld [vmem:[%s336 + $0x1ac8] sm:$0xf]
        %v1706 = vld [vmem:[%s336 + $0x1acc] sm:$0xff]
        %v1707 = vld [vmem:[%s336 + $0x1ad4] sm:$0xff]
        %v1708 = vld [vmem:[%s336 + $0x1adc] sm:$0xf]
        %v1709 = vld [vmem:[%s336 + $0x1ae0] sm:$0xff]
        %v1710 = vld [vmem:[%s336 + $0x1ae8] sm:$0xff]
        %v1711 = vld [vmem:[%s336 + $0x1af0] sm:$0xf]
        %v1712 = vld [vmem:[%s336 + $0x1af4] sm:$0xff]
        %v1713 = vld [vmem:[%s336 + $0x1afc] sm:$0xff]
        %v1714 = vld [vmem:[%s336 + $0x1b04] sm:$0xf]
        %v1715 = vld [vmem:[%s336 + $0x1b08] sm:$0xff]
        %v1716 = vld [vmem:[%s336 + $0x1b10] sm:$0xff]
        %v1717 = vld [vmem:[%s336 + $0x1b18] sm:$0xf]
        %v1718 = vld [vmem:[%s336 + $0x1b1c] sm:$0xff]
        %v1719 = vld [vmem:[%s336 + $0x1b24] sm:$0xff]
        %v1720 = vld [vmem:[%s336 + $0x1b2c] sm:$0xf]
        %v1721 = vld [vmem:[%s336 + $0x1b30] sm:$0xff]
        %v1722 = vld [vmem:[%s336 + $0x1b38] sm:$0xff]
        %v1723 = vld [vmem:[%s336 + $0x1b40] sm:$0xf]
        %v1724 = vld [vmem:[%s336 + $0x1b44] sm:$0xff]
        %v1725 = vld [vmem:[%s336 + $0x1b4c] sm:$0xff]
        %v1726 = vld [vmem:[%s336 + $0x1b54] sm:$0xf]
        %v1727 = vld [vmem:[%s336 + $0x1b58] sm:$0xff]
        %v1728 = vld [vmem:[%s336 + $0x1b60] sm:$0xff]
        %v1729 = vld [vmem:[%s336 + $0x1b68] sm:$0xf]
        %v1730 = vld [vmem:[%s336 + $0x1b6c] sm:$0xff]
        %v1731 = vld [vmem:[%s336 + $0x1b74] sm:$0xff]
        %v1732 = vld [vmem:[%s336 + $0x1b7c] sm:$0xf]
        %v1733 = vld [vmem:[%s336 + $0x1b80] sm:$0xff]
        %v1734 = vld [vmem:[%s336 + $0x1b88] sm:$0xff]
        %v1735 = vld [vmem:[%s336 + $0x1b90] sm:$0xf]
        %v1736 = vld [vmem:[%s336 + $0x1b94] sm:$0xff]
        %v1737 = vld [vmem:[%s336 + $0x1b9c] sm:$0xff]
        %v1738 = vld [vmem:[%s336 + $0x1ba4] sm:$0xf]
        %v1739 = vld [vmem:[%s336 + $0x1ba8] sm:$0xff]
        %v1740 = vld [vmem:[%s336 + $0x1bb0] sm:$0xff]
        %v1741 = vld [vmem:[%s336 + $0x1bb8] sm:$0xf]
        %v1742 = vld [vmem:[%s336 + $0x1bbc] sm:$0xff]
        %v1743 = vld [vmem:[%s336 + $0x1bc4] sm:$0xff]
        %v1744 = vld [vmem:[%s336 + $0x1bcc] sm:$0xf]
        %v1745 = vld [vmem:[%s336 + $0x1bd0] sm:$0xff]
        %v1746 = vld [vmem:[%s336 + $0x1bd8] sm:$0xff]
        %v1747 = vld [vmem:[%s336 + $0x1be0] sm:$0xf]
        %v1748 = vld [vmem:[%s336 + $0x1be4] sm:$0xff]
        %v1749 = vld [vmem:[%s336 + $0x1bec] sm:$0xff]
        %v1750 = vld [vmem:[%s336 + $0x1bf4] sm:$0xf]
        %v1751 = vld [vmem:[%s336 + $0x1bf8] sm:$0xff]
        %v1752 = vld [vmem:[%s336 + $0x1c00] sm:$0xff]
        %v1753 = vld [vmem:[%s336 + $0x1c08] sm:$0xf]
        %v1754 = vld [vmem:[%s336 + $0x1c0c] sm:$0xff]
        %v1755 = vld [vmem:[%s336 + $0x1c14] sm:$0xff]
        %v1756 = vld [vmem:[%s336 + $0x1c1c] sm:$0xf]
        %v1757 = vld [vmem:[%s336 + $0x1c20] sm:$0xff]
        %v1758 = vld [vmem:[%s336 + $0x1c28] sm:$0xff]
        %v1759 = vld [vmem:[%s336 + $0x1c30] sm:$0xf]
        %v1760 = vld [vmem:[%s336 + $0x1c34] sm:$0xff]
        %v1761 = vld [vmem:[%s336 + $0x1c3c] sm:$0xff]
        %v1762 = vld [vmem:[%s336 + $0x1c44] sm:$0xf]
        %v1763 = vld [vmem:[%s336 + $0x1c48] sm:$0xff]
        %v1764 = vld [vmem:[%s336 + $0x1c50] sm:$0xff]
        %v1765 = vld [vmem:[%s336 + $0x1c58] sm:$0xf]
        %v1766 = vld [vmem:[%s336 + $0x1c5c] sm:$0xff]
        %v1767 = vld [vmem:[%s336 + $0x1c64] sm:$0xff]
        %v1768 = vld [vmem:[%s336 + $0x1c6c] sm:$0xf]
        %v1769 = vld [vmem:[%s336 + $0x1c70] sm:$0xff]
        %v1770 = vld [vmem:[%s336 + $0x1c78] sm:$0xff]
        %v1771 = vld [vmem:[%s336 + $0x1c80] sm:$0xf]
        %v1772 = vld [vmem:[%s336 + $0x1c84] sm:$0xff]
        %v1773 = vld [vmem:[%s336 + $0x1c8c] sm:$0xff]
        %v1774 = vld [vmem:[%s336 + $0x1c94] sm:$0xf]
        %v1775 = vld [vmem:[%s336 + $0x1c98] sm:$0xff]
        %v1776 = vld [vmem:[%s336 + $0x1ca0] sm:$0xff]
        %v1777 = vld [vmem:[%s336 + $0x1ca8] sm:$0xf]
        %v1778 = vld [vmem:[%s336 + $0x1cac] sm:$0xff]
        %v1779 = vld [vmem:[%s336 + $0x1cb4] sm:$0xff]
        %v1780 = vld [vmem:[%s336 + $0x1cbc] sm:$0xf]
        %v1781 = vld [vmem:[%s336 + $0x1cc0] sm:$0xff]
        %v1782 = vld [vmem:[%s336 + $0x1cc8] sm:$0xff]
        %v1783 = vld [vmem:[%s336 + $0x1cd0] sm:$0xf]
        %v1784 = vld [vmem:[%s336 + $0x1cd4] sm:$0xff]
        %v1785 = vld [vmem:[%s336 + $0x1cdc] sm:$0xff]
        %v1786 = vld [vmem:[%s336 + $0x1ce4] sm:$0xf]
        %v1787 = vld [vmem:[%s336 + $0x1ce8] sm:$0xff]
        %v1788 = vld [vmem:[%s336 + $0x1cf0] sm:$0xff]
        %v1789 = vld [vmem:[%s336 + $0x1cf8] sm:$0xf]
        %v1790 = vld [vmem:[%s336 + $0x1cfc] sm:$0xff]
        %v1791 = vld [vmem:[%s336 + $0x1d04] sm:$0xff]
        %v1792 = vld [vmem:[%s336 + $0x1d0c] sm:$0xf]
        %v1793 = vld [vmem:[%s336 + $0x1d10] sm:$0xff]
        %v1794 = vld [vmem:[%s336 + $0x1d18] sm:$0xff]
        %v1795 = vld [vmem:[%s336 + $0x1d20] sm:$0xf]
        %v1796 = vld [vmem:[%s336 + $0x1d24] sm:$0xff]
        %v1797 = vld [vmem:[%s336 + $0x1d2c] sm:$0xff]
        %v1798 = vld [vmem:[%s336 + $0x1d34] sm:$0xf]
        %v1799 = vld [vmem:[%s336 + $0x1d38] sm:$0xff]
        %v1800 = vld [vmem:[%s336 + $0x1d40] sm:$0xff]
        %v1801 = vld [vmem:[%s336 + $0x1d48] sm:$0xf]
        %v1802 = vld [vmem:[%s336 + $0x1d4c] sm:$0xff]
        %v1803 = vld [vmem:[%s336 + $0x1d54] sm:$0xff]
        %v1804 = vld [vmem:[%s336 + $0x1d5c] sm:$0xf]
        %v1805 = vld [vmem:[%s336 + $0x1d60] sm:$0xff]
        %v1806 = vld [vmem:[%s336 + $0x1d68] sm:$0xff]
        %v1807 = vld [vmem:[%s336 + $0x1d70] sm:$0xf]
        %v1808 = vld [vmem:[%s336 + $0x1d74] sm:$0xff]
        %v1809 = vld [vmem:[%s336 + $0x1d7c] sm:$0xff]
        %v1810 = vld [vmem:[%s336 + $0x1d84] sm:$0xf]
        %v1811 = vld [vmem:[%s336 + $0x1d88] sm:$0xff]
        %v1812 = vld [vmem:[%s336 + $0x1d90] sm:$0xff]
        %v1813 = vld [vmem:[%s336 + $0x1d98] sm:$0xf]
        %v1814 = vld [vmem:[%s336 + $0x1d9c] sm:$0xff]
        %v1815 = vld [vmem:[%s336 + $0x1da4] sm:$0xff]
        %v1816 = vld [vmem:[%s336 + $0x1dac] sm:$0xf]
        %v1817 = vld [vmem:[%s336 + $0x1db0] sm:$0xff]
        %v1818 = vld [vmem:[%s336 + $0x1db8] sm:$0xff]
        %v1819 = vld [vmem:[%s336 + $0x1dc0] sm:$0xf]
        %v1820 = vld [vmem:[%s336 + $0x1dc4] sm:$0xff]
        %v1821 = vld [vmem:[%s336 + $0x1dcc] sm:$0xff]
        %v1822 = vld [vmem:[%s336 + $0x1dd4] sm:$0xf]
        %v1823 = vld [vmem:[%s336 + $0x1dd8] sm:$0xff]
        %v1824 = vld [vmem:[%s336 + $0x1de0] sm:$0xff]
        %v1825 = vld [vmem:[%s336 + $0x1de8] sm:$0xf]
        %v1826 = vld [vmem:[%s336 + $0x1dec] sm:$0xff]
        %v1827 = vld [vmem:[%s336 + $0x1df4] sm:$0xff]
        %v1828 = vld [vmem:[%s336 + $0x1dfc] sm:$0xf]
        %v1829 = vld [vmem:[%s336 + $0x1e00] sm:$0xff]
        %v1830 = vld [vmem:[%s336 + $0x1e08] sm:$0xff]
        %v1831 = vld [vmem:[%s336 + $0x1e10] sm:$0xf]
        %v1832 = vld [vmem:[%s336 + $0x1e14] sm:$0xff]
        %v1833 = vld [vmem:[%s336 + $0x1e1c] sm:$0xff]
        %v1834 = vld [vmem:[%s336 + $0x1e24] sm:$0xf]
        %v1835 = vld [vmem:[%s336 + $0x1e28] sm:$0xff]
        %v1836 = vld [vmem:[%s336 + $0x1e30] sm:$0xff]
        %v1837 = vld [vmem:[%s336 + $0x1e38] sm:$0xf]
        %v1838 = vld [vmem:[%s336 + $0x1e3c] sm:$0xff]
        %v1839 = vld [vmem:[%s336 + $0x1e44] sm:$0xff]
        %v1840 = vld [vmem:[%s336 + $0x1e4c] sm:$0xf]
        %v1841 = vld [vmem:[%s336 + $0x1e50] sm:$0xff]
        %v1842 = vld [vmem:[%s336 + $0x1e58] sm:$0xff]
        %v1843 = vld [vmem:[%s336 + $0x1e60] sm:$0xf]
        %v1844 = vld [vmem:[%s336 + $0x1e64] sm:$0xff]
        %v1845 = vld [vmem:[%s336 + $0x1e6c] sm:$0xff]
        %v1846 = vld [vmem:[%s336 + $0x1e74] sm:$0xf]
        %v1847 = vld [vmem:[%s336 + $0x1e78] sm:$0xff]
        %v1848 = vld [vmem:[%s336 + $0x1e80] sm:$0xff]
        %v1849 = vld [vmem:[%s336 + $0x1e88] sm:$0xf]
        %v1850 = vld [vmem:[%s336 + $0x1e8c] sm:$0xff]
        %v1851 = vld [vmem:[%s336 + $0x1e94] sm:$0xff]
        %v1852 = vld [vmem:[%s336 + $0x1e9c] sm:$0xf]
        %v1853 = vld [vmem:[%s336 + $0x1ea0] sm:$0xff]
        %v1854 = vld [vmem:[%s336 + $0x1ea8] sm:$0xff]
        %v1855 = vld [vmem:[%s336 + $0x1eb0] sm:$0xf]
        %v1856 = vld [vmem:[%s336 + $0x1eb4] sm:$0xff]
        %v1857 = vld [vmem:[%s336 + $0x1ebc] sm:$0xff]
        %v1858 = vld [vmem:[%s336 + $0x1ec4] sm:$0xf]
        %v1859 = vld [vmem:[%s336 + $0x1ec8] sm:$0xff]
        %v1860 = vld [vmem:[%s336 + $0x1ed0] sm:$0xff]
        %v1861 = vld [vmem:[%s336 + $0x1ed8] sm:$0xf]
        %v1862 = vld [vmem:[%s336 + $0x1edc] sm:$0xff]
        %v1863 = vld [vmem:[%s336 + $0x1ee4] sm:$0xff]
        %v1864 = vld [vmem:[%s336 + $0x1eec] sm:$0xf]
        %v1865 = vld [vmem:[%s336 + $0x1ef0] sm:$0xff]
        %v1866 = vld [vmem:[%s336 + $0x1ef8] sm:$0xff]
        %v1867 = vld [vmem:[%s336 + $0x1f00] sm:$0xf]
        %v1868 = vld [vmem:[%s336 + $0x1f04] sm:$0xff]
        %v1869 = vld [vmem:[%s336 + $0x1f0c] sm:$0xff]
        %v1870 = vld [vmem:[%s336 + $0x1f14] sm:$0xf]
        %v1871 = vld [vmem:[%s336 + $0x1f18] sm:$0xff]
        %v1872 = vld [vmem:[%s336 + $0x1f20] sm:$0xff]
        %v1873 = vld [vmem:[%s336 + $0x1f28] sm:$0xf]
        %v1874 = vld [vmem:[%s336 + $0x1f2c] sm:$0xff]
        %v1875 = vld [vmem:[%s336 + $0x1f34] sm:$0xff]
        %v1876 = vld [vmem:[%s336 + $0x1f3c] sm:$0xf]
        %v1877 = vld [vmem:[%s336 + $0x1f40] sm:$0xff]
        %v1878 = vld [vmem:[%s336 + $0x1f48] sm:$0xff]
        %v1879 = vld [vmem:[%s336 + $0x1f50] sm:$0xf]
        %v1880 = vld [vmem:[%s336 + $0x1f54] sm:$0xff]
        %v1881 = vld [vmem:[%s336 + $0x1f5c] sm:$0xff]
        %v1882 = vld [vmem:[%s336 + $0x1f64] sm:$0xf]
        %v1883 = vld [vmem:[%s336 + $0x1f68] sm:$0xff]
        %v1884 = vld [vmem:[%s336 + $0x1f70] sm:$0xff]
        %v1885 = vld [vmem:[%s336 + $0x1f78] sm:$0xf]
        %v1886 = vld [vmem:[%s336 + $0x1f7c] sm:$0xff]
        %v1887 = vld [vmem:[%s336 + $0x1f84] sm:$0xff]
        %v1888 = vld [vmem:[%s336 + $0x1f8c] sm:$0xf]
        %v1889 = vld [vmem:[%s336 + $0x1f90] sm:$0xff]
        %v1890 = vld [vmem:[%s336 + $0x1f98] sm:$0xff]
        %v1891 = vld [vmem:[%s336 + $0x1fa0] sm:$0xf]
        %v1892 = vld [vmem:[%s336 + $0x1fa4] sm:$0xff]
        %v1893 = vld [vmem:[%s336 + $0x1fac] sm:$0xff]
        %v1894 = vld [vmem:[%s336 + $0x1fb4] sm:$0xf]
        %v1895 = vld [vmem:[%s336 + $0x1fb8] sm:$0xff]
        %v1896 = vld [vmem:[%s336 + $0x1fc0] sm:$0xff]
        %v1897 = vld [vmem:[%s336 + $0x1fc8] sm:$0xf]
        %v1898 = vld [vmem:[%s336 + $0x1fcc] sm:$0xff]
        %v1899 = vld [vmem:[%s336 + $0x1fd4] sm:$0xff]
        %v1900 = vld [vmem:[%s336 + $0x1fdc] sm:$0xf]
        %v1901 = vld [vmem:[%s336 + $0x1fe0] sm:$0xff]
        %v1902 = vld [vmem:[%s336 + $0x1fe8] sm:$0xff]
        %v1903 = vld [vmem:[%s336 + $0x1ff0] sm:$0xf]
        %v1904 = vld [vmem:[%s336 + $0x1ff4] sm:$0xff]
        %v1905 = vld [vmem:[%s336 + $0x1ffc] sm:$0xff]
        %v1906 = vld [vmem:[%s336 + $0x2004] sm:$0xf]
        %v1907 = vld [vmem:[%s336 + $0x2008] sm:$0xff]
        %v1908 = vld [vmem:[%s336 + $0x2010] sm:$0xff]
        %v1909 = vld [vmem:[%s336 + $0x2018] sm:$0xf]
        %v1910 = vld [vmem:[%s336 + $0x201c] sm:$0xff]
        %v1911 = vld [vmem:[%s336 + $0x2024] sm:$0xff]
        %v1912 = vld [vmem:[%s336 + $0x202c] sm:$0xf]
        %v1913 = vld [vmem:[%s336 + $0x2030] sm:$0xff]
        %v1914 = vld [vmem:[%s336 + $0x2038] sm:$0xff]
        %v1915 = vld [vmem:[%s336 + $0x2040] sm:$0xf]
        %v1916 = vld [vmem:[%s336 + $0x2044] sm:$0xff]
        %v1917 = vld [vmem:[%s336 + $0x204c] sm:$0xff]
        %v1918 = vld [vmem:[%s336 + $0x2054] sm:$0xf]
        %v1919 = vld [vmem:[%s336 + $0x2058] sm:$0xff]
        %v1920 = vld [vmem:[%s336 + $0x2060] sm:$0xff]
        %v1921 = vld [vmem:[%s336 + $0x2068] sm:$0xf]
        %v1922 = vld [vmem:[%s336 + $0x206c] sm:$0xff]
        %v1923 = vld [vmem:[%s336 + $0x2074] sm:$0xff]
        %v1924 = vld [vmem:[%s336 + $0x207c] sm:$0xf]
        %v1925 = vld [vmem:[%s336 + $0x2080] sm:$0xff]
        %v1926 = vld [vmem:[%s336 + $0x2088] sm:$0xff]
        %v1927 = vld [vmem:[%s336 + $0x2090] sm:$0xf]
        %v1928 = vld [vmem:[%s336 + $0x2094] sm:$0xff]
        %v1929 = vld [vmem:[%s336 + $0x209c] sm:$0xff]
        %v1930 = vld [vmem:[%s336 + $0x20a4] sm:$0xf]
        %v1931 = vld [vmem:[%s336 + $0x20a8] sm:$0xff]
        %v1932 = vld [vmem:[%s336 + $0x20b0] sm:$0xff]
        %v1933 = vld [vmem:[%s336 + $0x20b8] sm:$0xf]
        %v1934 = vld [vmem:[%s336 + $0x20bc] sm:$0xff]
        %v1935 = vld [vmem:[%s336 + $0x20c4] sm:$0xff]
        %v1936 = vld [vmem:[%s336 + $0x20cc] sm:$0xf]
        %v1937 = vld [vmem:[%s336 + $0x20d0] sm:$0xff]
        %v1938 = vld [vmem:[%s336 + $0x20d8] sm:$0xff]
        %v1939 = vld [vmem:[%s336 + $0x20e0] sm:$0xf]
        %v1940 = vld [vmem:[%s336 + $0x20e4] sm:$0xff]
        %v1941 = vld [vmem:[%s336 + $0x20ec] sm:$0xff]
        %v1942 = vld [vmem:[%s336 + $0x20f4] sm:$0xf]
        %v1943 = vld [vmem:[%s336 + $0x20f8] sm:$0xff]
        %v1944 = vld [vmem:[%s336 + $0x2100] sm:$0xff]
        %v1945 = vld [vmem:[%s336 + $0x2108] sm:$0xf]
        %v1946 = vld [vmem:[%s336 + $0x210c] sm:$0xff]
        %v1947 = vld [vmem:[%s336 + $0x2114] sm:$0xff]
        %v1948 = vld [vmem:[%s336 + $0x211c] sm:$0xf]
        %v1949 = vld [vmem:[%s336 + $0x2120] sm:$0xff]
        %v1950 = vld [vmem:[%s336 + $0x2128] sm:$0xff]
        %v1951 = vld [vmem:[%s336 + $0x2130] sm:$0xf]
        %v1952 = vld [vmem:[%s336 + $0x2134] sm:$0xff]
        %v1953 = vld [vmem:[%s336 + $0x213c] sm:$0xff]
        %v1954 = vld [vmem:[%s336 + $0x2144] sm:$0xf]
        %v1955 = vld [vmem:[%s336 + $0x2148] sm:$0xff]
        %v1956 = vld [vmem:[%s336 + $0x2150] sm:$0xff]
        %v1957 = vld [vmem:[%s336 + $0x2158] sm:$0xf]
        %v1958 = vld [vmem:[%s336 + $0x215c] sm:$0xff]
        %v1959 = vld [vmem:[%s336 + $0x2164] sm:$0xff]
        %v1960 = vld [vmem:[%s336 + $0x216c] sm:$0xf]
        %v1961 = vld [vmem:[%s336 + $0x2170] sm:$0xff]
        %v1962 = vld [vmem:[%s336 + $0x2178] sm:$0xff]
        %v1963 = vld [vmem:[%s336 + $0x2180] sm:$0xf]
        %v1964 = vld [vmem:[%s336 + $0x2184] sm:$0xff]
        %v1965 = vld [vmem:[%s336 + $0x218c] sm:$0xff]
        %v1966 = vld [vmem:[%s336 + $0x2194] sm:$0xf]
        %v1967 = vld [vmem:[%s336 + $0x2198] sm:$0xff]
        %v1968 = vld [vmem:[%s336 + $0x21a0] sm:$0xff]
        %v1969 = vld [vmem:[%s336 + $0x21a8] sm:$0xf]
        %v1970 = vld [vmem:[%s336 + $0x21ac] sm:$0xff]
        %v1971 = vld [vmem:[%s336 + $0x21b4] sm:$0xff]
        %v1972 = vld [vmem:[%s336 + $0x21bc] sm:$0xf]
        %v1973 = vld [vmem:[%s336 + $0x21c0] sm:$0xff]
        %v1974 = vld [vmem:[%s336 + $0x21c8] sm:$0xff]
        %v1975 = vld [vmem:[%s336 + $0x21d0] sm:$0xf]
        %v1976 = vld [vmem:[%s336 + $0x21d4] sm:$0xff]
        %v1977 = vld [vmem:[%s336 + $0x21dc] sm:$0xff]
        %v1978 = vld [vmem:[%s336 + $0x21e4] sm:$0xf]
        %v1979 = vld [vmem:[%s336 + $0x21e8] sm:$0xff]
        %v1980 = vld [vmem:[%s336 + $0x21f0] sm:$0xff]
        %v1981 = vld [vmem:[%s336 + $0x21f8] sm:$0xf]
        %v1982 = vld [vmem:[%s336 + $0x21fc] sm:$0xff]
        %v1983 = vld [vmem:[%s336 + $0x2204] sm:$0xff]
        %v1984 = vld [vmem:[%s336 + $0x220c] sm:$0xf]
        %v1985 = vld [vmem:[%s336 + $0x2210] sm:$0xff]
        %v1986 = vld [vmem:[%s336 + $0x2218] sm:$0xff]
        %v1987 = vld [vmem:[%s336 + $0x2220] sm:$0xf]
        %v1988 = vld [vmem:[%s336 + $0x2224] sm:$0xff]
        %v1989 = vld [vmem:[%s336 + $0x222c] sm:$0xff]
        %v1990 = vld [vmem:[%s336 + $0x2234] sm:$0xf]
        %v1991 = vld [vmem:[%s336 + $0x2238] sm:$0xff]
        %v1992 = vld [vmem:[%s336 + $0x2240] sm:$0xff]
        %v1993 = vld [vmem:[%s336 + $0x2248] sm:$0xf]
        %v1994 = vld [vmem:[%s336 + $0x224c] sm:$0xff]
        %v1995 = vld [vmem:[%s336 + $0x2254] sm:$0xff]
        %v1996 = vld [vmem:[%s336 + $0x225c] sm:$0xf]
        %v1997 = vld [vmem:[%s336 + $0x2260] sm:$0xff]
        %v1998 = vld [vmem:[%s336 + $0x2268] sm:$0xff]
        %v1999 = vld [vmem:[%s336 + $0x2270] sm:$0xf]
        %v2000 = vld [vmem:[%s336 + $0x2274] sm:$0xff]
        %v2001 = vld [vmem:[%s336 + $0x227c] sm:$0xff]
        %v2002 = vld [vmem:[%s336 + $0x2284] sm:$0xf]
        %v2003 = vld [vmem:[%s336 + $0x2288] sm:$0xff]
        %v2004 = vld [vmem:[%s336 + $0x2290] sm:$0xff]
        %v2005 = vld [vmem:[%s336 + $0x2298] sm:$0xf]
        %v2006 = vld [vmem:[%s336 + $0x229c] sm:$0xff]
        %v2007 = vld [vmem:[%s336 + $0x22a4] sm:$0xff]
        %v2008 = vld [vmem:[%s336 + $0x22ac] sm:$0xf]
        %v2009 = vld [vmem:[%s336 + $0x22b0] sm:$0xff]
        %v2010 = vld [vmem:[%s336 + $0x22b8] sm:$0xff]
        %v2011 = vld [vmem:[%s336 + $0x22c0] sm:$0xf]
        %v2012 = vld [vmem:[%s336 + $0x22c4] sm:$0xff]
        %v2013 = vld [vmem:[%s336 + $0x22cc] sm:$0xff]
        %v2014 = vld [vmem:[%s336 + $0x22d4] sm:$0xf]
        %v2015 = vld [vmem:[%s336 + $0x22d8] sm:$0xff]
        %v2016 = vld [vmem:[%s336 + $0x22e0] sm:$0xff]
        %v2017 = vld [vmem:[%s336 + $0x22e8] sm:$0xf]
        %v2018 = vld [vmem:[%s336 + $0x22ec] sm:$0xff]
        %v2019 = vld [vmem:[%s336 + $0x22f4] sm:$0xff]
        %v2020 = vld [vmem:[%s336 + $0x22fc] sm:$0xf]
        %v2021 = vld [vmem:[%s336 + $0x2300] sm:$0xff]
        %v2022 = vld [vmem:[%s336 + $0x2308] sm:$0xff]
        %v2023 = vld [vmem:[%s336 + $0x2310] sm:$0xf]
        %v2024 = vld [vmem:[%s336 + $0x2314] sm:$0xff]
        %v2025 = vld [vmem:[%s336 + $0x231c] sm:$0xff]
        %v2026 = vld [vmem:[%s336 + $0x2324] sm:$0xf]
        %v2027 = vld [vmem:[%s336 + $0x2328] sm:$0xff]
        %v2028 = vld [vmem:[%s336 + $0x2330] sm:$0xff]
        %v2029 = vld [vmem:[%s336 + $0x2338] sm:$0xf]
        %v2030 = vld [vmem:[%s336 + $0x233c] sm:$0xff]
        %v2031 = vld [vmem:[%s336 + $0x2344] sm:$0xff]
        %v2032 = vld [vmem:[%s336 + $0x234c] sm:$0xf]
        %v2033 = vld [vmem:[%s336 + $0x2350] sm:$0xff]
        %v2034 = vld [vmem:[%s336 + $0x2358] sm:$0xff]
        %v2035 = vld [vmem:[%s336 + $0x2360] sm:$0xf]
        %v2036 = vld [vmem:[%s336 + $0x2364] sm:$0xff]
        %v2037 = vld [vmem:[%s336 + $0x236c] sm:$0xff]
        %v2038 = vld [vmem:[%s336 + $0x2374] sm:$0xf]
        %v2039 = vld [vmem:[%s336 + $0x2378] sm:$0xff]
        %v2040 = vld [vmem:[%s336 + $0x2380] sm:$0xff]
        %v2041 = vld [vmem:[%s336 + $0x2388] sm:$0xf]
        %v2042 = vld [vmem:[%s336 + $0x238c] sm:$0xff]
        %v2043 = vld [vmem:[%s336 + $0x2394] sm:$0xff]
        %v2044 = vld [vmem:[%s336 + $0x239c] sm:$0xf]
        %v2045 = vld [vmem:[%s336 + $0x23a0] sm:$0xff]
        %v2046 = vld [vmem:[%s336 + $0x23a8] sm:$0xff]
        %v2047 = vld [vmem:[%s336 + $0x23b0] sm:$0xf]
        %v2048 = vld [vmem:[%s336 + $0x23b4] sm:$0xff]
        %v2049 = vld [vmem:[%s336 + $0x23bc] sm:$0xff]
        %v2050 = vld [vmem:[%s336 + $0x23c4] sm:$0xf]
        %v2051 = vld [vmem:[%s336 + $0x23c8] sm:$0xff]
        %v2052 = vld [vmem:[%s336 + $0x23d0] sm:$0xff]
        %v2053 = vld [vmem:[%s336 + $0x23d8] sm:$0xf]
        %v2054 = vld [vmem:[%s336 + $0x23dc] sm:$0xff]
        %v2055 = vld [vmem:[%s336 + $0x23e4] sm:$0xff]
        %v2056 = vld [vmem:[%s336 + $0x23ec] sm:$0xf]
        %v2057 = vld [vmem:[%s336 + $0x23f0] sm:$0xff]
        %v2058 = vld [vmem:[%s336 + $0x23f8] sm:$0xff]
        %v2059 = vld [vmem:[%s336 + $0x2400] sm:$0xf]
        %v2060 = vld [vmem:[%s336 + $0x2404] sm:$0xff]
        %v2061 = vld [vmem:[%s336 + $0x240c] sm:$0xff]
        %v2062 = vld [vmem:[%s336 + $0x2414] sm:$0xf]
        %v2063 = vld [vmem:[%s336 + $0x2418] sm:$0xff]
        %v2064 = vld [vmem:[%s336 + $0x2420] sm:$0xff]
        %v2065 = vld [vmem:[%s336 + $0x2428] sm:$0xf]
        %v2066 = vld [vmem:[%s336 + $0x242c] sm:$0xff]
        %v2067 = vld [vmem:[%s336 + $0x2434] sm:$0xff]
        %v2068 = vld [vmem:[%s336 + $0x243c] sm:$0xf]
        %v2069 = vld [vmem:[%s336 + $0x2440] sm:$0xff]
        %v2070 = vld [vmem:[%s336 + $0x2448] sm:$0xff]
        %v2071 = vld [vmem:[%s336 + $0x2450] sm:$0xf]
        %v2072 = vld [vmem:[%s336 + $0x2454] sm:$0xff]
        %v2073 = vld [vmem:[%s336 + $0x245c] sm:$0xff]
        %v2074 = vld [vmem:[%s336 + $0x2464] sm:$0xf]
        %v2075 = vld [vmem:[%s336 + $0x2468] sm:$0xff]
        %v2076 = vld [vmem:[%s336 + $0x2470] sm:$0xff]
        %v2077 = vld [vmem:[%s336 + $0x2478] sm:$0xf]
        %v2078 = vld [vmem:[%s336 + $0x247c] sm:$0xff]
        %v2079 = vld [vmem:[%s336 + $0x2484] sm:$0xff]
        %v2080 = vld [vmem:[%s336 + $0x248c] sm:$0xf]
        %v2081 = vld [vmem:[%s336 + $0x2490] sm:$0xff]
        %v2082 = vld [vmem:[%s336 + $0x2498] sm:$0xff]
        %v2083 = vld [vmem:[%s336 + $0x24a0] sm:$0xf]
        %v2084 = vld [vmem:[%s336 + $0x24a4] sm:$0xff]
        %v2085 = vld [vmem:[%s336 + $0x24ac] sm:$0xff]
        %v2086 = vld [vmem:[%s336 + $0x24b4] sm:$0xf]
        %v2087 = vld [vmem:[%s336 + $0x24b8] sm:$0xff]
        %v2088 = vld [vmem:[%s336 + $0x24c0] sm:$0xff]
        %v2089 = vld [vmem:[%s336 + $0x24c8] sm:$0xf]
        %v2090 = vld [vmem:[%s336 + $0x24cc] sm:$0xff]
        %v2091 = vld [vmem:[%s336 + $0x24d4] sm:$0xff]
        %v2092 = vld [vmem:[%s336 + $0x24dc] sm:$0xf]
        %v2093 = vld [vmem:[%s336 + $0x24e0] sm:$0xff]
        %v2094 = vld [vmem:[%s336 + $0x24e8] sm:$0xff]
        %v2095 = vld [vmem:[%s336 + $0x24f0] sm:$0xf]
        %v2096 = vld [vmem:[%s336 + $0x24f4] sm:$0xff]
        %v2097 = vld [vmem:[%s336 + $0x24fc] sm:$0xff]
        %v2098 = vld [vmem:[%s336 + $0x2504] sm:$0xf]
        %v2099 = vld [vmem:[%s336 + $0x2508] sm:$0xff]
        %v2100 = vld [vmem:[%s336 + $0x2510] sm:$0xff]
        %v2101 = vld [vmem:[%s336 + $0x2518] sm:$0xf]
        %v2102 = vld [vmem:[%s336 + $0x251c] sm:$0xff]
        %v2103 = vld [vmem:[%s336 + $0x2524] sm:$0xff]
        %v2104 = vld [vmem:[%s336 + $0x252c] sm:$0xf]
        %v2105 = vld [vmem:[%s336 + $0x2530] sm:$0xff]
        %v2106 = vld [vmem:[%s336 + $0x2538] sm:$0xff]
        %v2107 = vld [vmem:[%s336 + $0x2540] sm:$0xf]
        %v2108 = vld [vmem:[%s336 + $0x2544] sm:$0xff]
        %v2109 = vld [vmem:[%s336 + $0x254c] sm:$0xff]
        %v2110 = vld [vmem:[%s336 + $0x2554] sm:$0xf]
        %v2111 = vld [vmem:[%s336 + $0x2558] sm:$0xff]
        %v2112 = vld [vmem:[%s336 + $0x2560] sm:$0xff]
        %v2113 = vld [vmem:[%s336 + $0x2568] sm:$0xf]
        %v2114 = vld [vmem:[%s336 + $0x256c] sm:$0xff]
        %v2115 = vld [vmem:[%s336 + $0x2574] sm:$0xff]
        %v2116 = vld [vmem:[%s336 + $0x257c] sm:$0xf]
        %v2117 = vld [vmem:[%s336 + $0x2580] sm:$0xff]
        %v2118 = vld [vmem:[%s336 + $0x2588] sm:$0xff]
        %v2119 = vld [vmem:[%s336 + $0x2590] sm:$0xf]
        %v2120 = vld [vmem:[%s336 + $0x2594] sm:$0xff]
        %v2121 = vld [vmem:[%s336 + $0x259c] sm:$0xff]
        %v2122 = vld [vmem:[%s336 + $0x25a4] sm:$0xf]
        %v2123 = vld [vmem:[%s336 + $0x25a8] sm:$0xff]
        %v2124 = vld [vmem:[%s336 + $0x25b0] sm:$0xff]
        %v2125 = vld [vmem:[%s336 + $0x25b8] sm:$0xf]
        %v2126 = vld [vmem:[%s336 + $0x25bc] sm:$0xff]
        %v2127 = vld [vmem:[%s336 + $0x25c4] sm:$0xff]
        %v2128 = vld [vmem:[%s336 + $0x25cc] sm:$0xf]
        %v2129 = vld [vmem:[%s336 + $0x25d0] sm:$0xff]
        %v2130 = vld [vmem:[%s336 + $0x25d8] sm:$0xff]
        %v2131 = vld [vmem:[%s336 + $0x25e0] sm:$0xf]
        %v2132 = vld [vmem:[%s336 + $0x25e4] sm:$0xff]
        %v2133 = vld [vmem:[%s336 + $0x25ec] sm:$0xff]
        %v2134 = vld [vmem:[%s336 + $0x25f4] sm:$0xf]
        %v2135 = vld [vmem:[%s336 + $0x25f8] sm:$0xff]
        %v2136 = vld [vmem:[%s336 + $0x2600] sm:$0xff]
        %v2137 = vld [vmem:[%s336 + $0x2608] sm:$0xf]
        %v2138 = vld [vmem:[%s336 + $0x260c] sm:$0xff]
        %v2139 = vld [vmem:[%s336 + $0x2614] sm:$0xff]
        %v2140 = vld [vmem:[%s336 + $0x261c] sm:$0xf]
        %v2141 = vld [vmem:[%s336 + $0x2620] sm:$0xff]
        %v2142 = vld [vmem:[%s336 + $0x2628] sm:$0xff]
        %v2143 = vld [vmem:[%s336 + $0x2630] sm:$0xf]
        %v2144 = vld [vmem:[%s336 + $0x2634] sm:$0xff]
        %v2145 = vld [vmem:[%s336 + $0x263c] sm:$0xff]
        %v2146 = vld [vmem:[%s336 + $0x2644] sm:$0xf]
        %v2147 = vld [vmem:[%s336 + $0x2648] sm:$0xff]
        %v2148 = vld [vmem:[%s336 + $0x2650] sm:$0xff]
        %v2149 = vld [vmem:[%s336 + $0x2658] sm:$0xf]
        %v2150 = vld [vmem:[%s336 + $0x265c] sm:$0xff]
        %v2151 = vld [vmem:[%s336 + $0x2664] sm:$0xff]
        %v2152 = vld [vmem:[%s336 + $0x266c] sm:$0xf]
        %v2153 = vld [vmem:[%s336 + $0x2670] sm:$0xff]
        %v2154 = vld [vmem:[%s336 + $0x2678] sm:$0xff]
        %v2155 = vld [vmem:[%s336 + $0x2680] sm:$0xf]
        %v2156 = vld [vmem:[%s336 + $0x2684] sm:$0xff]
        %v2157 = vld [vmem:[%s336 + $0x268c] sm:$0xff]
        %v2158 = vld [vmem:[%s336 + $0x2694] sm:$0xf]
        %v2159 = vld [vmem:[%s336 + $0x2698] sm:$0xff]
        %v2160 = vld [vmem:[%s336 + $0x26a0] sm:$0xff]
        %v2161 = vld [vmem:[%s336 + $0x26a8] sm:$0xf]
        %v2162 = vld [vmem:[%s336 + $0x26ac] sm:$0xff]
        %v2163 = vld [vmem:[%s336 + $0x26b4] sm:$0xff]
        %v2164 = vld [vmem:[%s336 + $0x26bc] sm:$0xf]
        %v2165 = vld [vmem:[%s336 + $0x26c0] sm:$0xff]
        %v2166 = vld [vmem:[%s336 + $0x26c8] sm:$0xff]
        %v2167 = vld [vmem:[%s336 + $0x26d0] sm:$0xf]
        %v2168 = vld [vmem:[%s336 + $0x26d4] sm:$0xff]
        %v2169 = vld [vmem:[%s336 + $0x26dc] sm:$0xff]
        %v2170 = vld [vmem:[%s336 + $0x26e4] sm:$0xf]
        %v2171 = vld [vmem:[%s336 + $0x26e8] sm:$0xff]
        %v2172 = vld [vmem:[%s336 + $0x26f0] sm:$0xff]
        %v2173 = vld [vmem:[%s336 + $0x26f8] sm:$0xf]
        %v2174 = vld [vmem:[%s336 + $0x26fc] sm:$0xff]
        %v2175 = vld [vmem:[%s336 + $0x2704] sm:$0xff]
        %v2176 = vld [vmem:[%s336 + $0x270c] sm:$0xf]
        %v2177 = vld [vmem:[%s336 + $0x2710] sm:$0xff]
        %v2178 = vld [vmem:[%s336 + $0x2718] sm:$0xff]
        %v2179 = vld [vmem:[%s336 + $0x2720] sm:$0xf]
        %v2180 = vld [vmem:[%s336 + $0x2724] sm:$0xff]
        %v2181 = vld [vmem:[%s336 + $0x272c] sm:$0xff]
        %v2182 = vld [vmem:[%s336 + $0x2734] sm:$0xf]
        %v2183 = vld [vmem:[%s336 + $0x2738] sm:$0xff]
        %v2184 = vld [vmem:[%s336 + $0x2740] sm:$0xff]
        %v2185 = vld [vmem:[%s336 + $0x2748] sm:$0xf]
        %v2186 = vld [vmem:[%s336 + $0x274c] sm:$0xff]
        %v2187 = vld [vmem:[%s336 + $0x2754] sm:$0xff]
        %v2188 = vld [vmem:[%s336 + $0x275c] sm:$0xf]
        %v2189 = vld [vmem:[%s336 + $0x2760] sm:$0xff]
        %v2190 = vld [vmem:[%s336 + $0x2768] sm:$0xff]
        %v2191 = vld [vmem:[%s336 + $0x2770] sm:$0xf]
        %v2192 = vld [vmem:[%s336 + $0x2774] sm:$0xff]
        %v2193 = vld [vmem:[%s336 + $0x277c] sm:$0xff]
        %v2194 = vld [vmem:[%s336 + $0x2784] sm:$0xf]
        %v2195 = vld [vmem:[%s336 + $0x2788] sm:$0xff]
        %v2196 = vld [vmem:[%s336 + $0x2790] sm:$0xff]
        %v2197 = vld [vmem:[%s336 + $0x2798] sm:$0xf]
        %v2198 = vld [vmem:[%s336 + $0x279c] sm:$0xff]
        %v2199 = vld [vmem:[%s336 + $0x27a4] sm:$0xff]
        %v2200 = vld [vmem:[%s336 + $0x27ac] sm:$0xf]
        %v2201 = vld [vmem:[%s336 + $0x27b0] sm:$0xff]
        %v2202 = vld [vmem:[%s336 + $0x27b8] sm:$0xff]
        %v2203 = vld [vmem:[%s336 + $0x27c0] sm:$0xf]
        %v2204 = vld [vmem:[%s336 + $0x27c4] sm:$0xff]
        %v2205 = vld [vmem:[%s336 + $0x27cc] sm:$0xff]
        %v2206 = vld [vmem:[%s336 + $0x27d4] sm:$0xf]
        %v2207 = vld [vmem:[%s336 + $0x27d8] sm:$0xff]
        %v2208 = vld [vmem:[%s336 + $0x27e0] sm:$0xff]
        %v2209 = vld [vmem:[%s336 + $0x27e8] sm:$0xf]
        %v2210 = vld [vmem:[%s336 + $0x27ec] sm:$0xff]
        %v2211 = vld [vmem:[%s336 + $0x27f4] sm:$0xff]
        %v2212 = vld [vmem:[%s336 + $0x27fc] sm:$0xf]
        %v2213 = vld [vmem:[%s336 + $0x2800] sm:$0xff]
        %v2214 = vld [vmem:[%s336 + $0x2808] sm:$0xff]
        %v2215 = vld [vmem:[%s336 + $0x2810] sm:$0xf]
        %v2216 = vld [vmem:[%s336 + $0x2814] sm:$0xff]
        %v2217 = vld [vmem:[%s336 + $0x281c] sm:$0xff]
        %v2218 = vld [vmem:[%s336 + $0x2824] sm:$0xf]
        %v2219 = vld [vmem:[%s336 + $0x2828] sm:$0xff]
        %v2220 = vld [vmem:[%s336 + $0x2830] sm:$0xff]
        %v2221 = vld [vmem:[%s336 + $0x2838] sm:$0xf]
        %v2222 = vld [vmem:[%s336 + $0x283c] sm:$0xff]
        %v2223 = vld [vmem:[%s336 + $0x2844] sm:$0xff]
        %v2224 = vld [vmem:[%s336 + $0x284c] sm:$0xf]
        %v2225 = vld [vmem:[%s336 + $0x2850] sm:$0xff]
        %v2226 = vld [vmem:[%s336 + $0x2858] sm:$0xff]
        %v2227 = vld [vmem:[%s336 + $0x2860] sm:$0xf]
        %v2228 = vld [vmem:[%s336 + $0x2864] sm:$0xff]
        %v2229 = vld [vmem:[%s336 + $0x286c] sm:$0xff]
        %v2230 = vld [vmem:[%s336 + $0x2874] sm:$0xf]
        %v2231 = vld [vmem:[%s336 + $0x2878] sm:$0xff]
        %v2232 = vld [vmem:[%s336 + $0x2880] sm:$0xff]
        %v2233 = vld [vmem:[%s336 + $0x2888] sm:$0xf]
        %v2234 = vld [vmem:[%s336 + $0x288c] sm:$0xff]
        %v2235 = vld [vmem:[%s336 + $0x2894] sm:$0xff]
        %v2236 = vld [vmem:[%s336 + $0x289c] sm:$0xf]
        %v2237 = vld [vmem:[%s336 + $0x28a0] sm:$0xff]
        %v2238 = vld [vmem:[%s336 + $0x28a8] sm:$0xff]
        %v2239 = vld [vmem:[%s336 + $0x28b0] sm:$0xf]
        %v2240 = vld [vmem:[%s336 + $0x28b4] sm:$0xff]
        %v2241 = vld [vmem:[%s336 + $0x28bc] sm:$0xff]
        %v2242 = vld [vmem:[%s336 + $0x28c4] sm:$0xf]
        %v2243 = vld [vmem:[%s336 + $0x28c8] sm:$0xff]
        %v2244 = vld [vmem:[%s336 + $0x28d0] sm:$0xff]
        %v2245 = vld [vmem:[%s336 + $0x28d8] sm:$0xf]
        %v2246 = vld [vmem:[%s336 + $0x28dc] sm:$0xff]
        %v2247 = vld [vmem:[%s336 + $0x28e4] sm:$0xff]
        %v2248 = vld [vmem:[%s336 + $0x28ec] sm:$0xf]
        %v2249 = vld [vmem:[%s336 + $0x28f0] sm:$0xff]
        %v2250 = vld [vmem:[%s336 + $0x28f8] sm:$0xff]
        %v2251 = vld [vmem:[%s336 + $0x2900] sm:$0xf]
        %v2252 = vld [vmem:[%s336 + $0x2904] sm:$0xff]
        %v2253 = vld [vmem:[%s336 + $0x290c] sm:$0xff]
        %v2254 = vld [vmem:[%s336 + $0x2914] sm:$0xf]
        %v2255 = vld [vmem:[%s336 + $0x2918] sm:$0xff]
        %v2256 = vld [vmem:[%s336 + $0x2920] sm:$0xff]
        %v2257 = vld [vmem:[%s336 + $0x2928] sm:$0xf]
        %v2258 = vld [vmem:[%s336 + $0x292c] sm:$0xff]
        %v2259 = vld [vmem:[%s336 + $0x2934] sm:$0xff]
        %v2260 = vld [vmem:[%s336 + $0x293c] sm:$0xf]
        %v2261 = vld [vmem:[%s336 + $0x2940] sm:$0xff]
        %v2262 = vld [vmem:[%s336 + $0x2948] sm:$0xff]
        %v2263 = vld [vmem:[%s336 + $0x2950] sm:$0xf]
        %v2264 = vld [vmem:[%s336 + $0x2954] sm:$0xff]
        %v2265 = vld [vmem:[%s336 + $0x295c] sm:$0xff]
        %v2266 = vld [vmem:[%s336 + $0x2964] sm:$0xf]
        %v2267 = vld [vmem:[%s336 + $0x2968] sm:$0xff]
        %v2268 = vld [vmem:[%s336 + $0x2970] sm:$0xff]
        %v2269 = vld [vmem:[%s336 + $0x2978] sm:$0xf]
        %v2270 = vld [vmem:[%s336 + $0x297c] sm:$0xff]
        %v2271 = vld [vmem:[%s336 + $0x2984] sm:$0xff]
        %v2272 = vld [vmem:[%s336 + $0x298c] sm:$0xf]
        %v2273 = vld [vmem:[%s336 + $0x2990] sm:$0xff]
        %v2274 = vld [vmem:[%s336 + $0x2998] sm:$0xff]
        %v2275 = vld [vmem:[%s336 + $0x29a0] sm:$0xf]
        %v2276 = vld [vmem:[%s336 + $0x29a4] sm:$0xff]
        %v2277 = vld [vmem:[%s336 + $0x29ac] sm:$0xff]
        %v2278 = vld [vmem:[%s336 + $0x29b4] sm:$0xf]
        %v2279 = vld [vmem:[%s336 + $0x29b8] sm:$0xff]
        %v2280 = vld [vmem:[%s336 + $0x29c0] sm:$0xff]
        %v2281 = vld [vmem:[%s336 + $0x29c8] sm:$0xf]
        %v2282 = vld [vmem:[%s336 + $0x29cc] sm:$0xff]
        %v2283 = vld [vmem:[%s336 + $0x29d4] sm:$0xff]
        %v2284 = vld [vmem:[%s336 + $0x29dc] sm:$0xf]
        %v2285 = vld [vmem:[%s336 + $0x29e0] sm:$0xff]
        %v2286 = vld [vmem:[%s336 + $0x29e8] sm:$0xff]
        %v2287 = vld [vmem:[%s336 + $0x29f0] sm:$0xf]
        %v2288 = vld [vmem:[%s336 + $0x29f4] sm:$0xff]
        %v2289 = vld [vmem:[%s336 + $0x29fc] sm:$0xff]
        %v2290 = vld [vmem:[%s336 + $0x2a04] sm:$0xf]
        %v2291 = vld [vmem:[%s336 + $0x2a08] sm:$0xff]
        %v2292 = vld [vmem:[%s336 + $0x2a10] sm:$0xff]
        %v2293 = vld [vmem:[%s336 + $0x2a18] sm:$0xf]
        %v2294 = vld [vmem:[%s336 + $0x2a1c] sm:$0xff]
        %v2295 = vld [vmem:[%s336 + $0x2a24] sm:$0xff]
        %v2296 = vld [vmem:[%s336 + $0x2a2c] sm:$0xf]
        %v2297 = vld [vmem:[%s336 + $0x2a30] sm:$0xff]
        %v2298 = vld [vmem:[%s336 + $0x2a38] sm:$0xff]
        %v2299 = vld [vmem:[%s336 + $0x2a40] sm:$0xf]
        %v2300 = vld [vmem:[%s336 + $0x2a44] sm:$0xff]
        %v2301 = vld [vmem:[%s336 + $0x2a4c] sm:$0xff]
        %v2302 = vld [vmem:[%s336 + $0x2a54] sm:$0xf]
        %v2303 = vld [vmem:[%s336 + $0x2a58] sm:$0xff]
        %v2304 = vld [vmem:[%s336 + $0x2a60] sm:$0xff]
        %v2305 = vld [vmem:[%s336 + $0x2a68] sm:$0xf]
        %v2306 = vld [vmem:[%s336 + $0x2a6c] sm:$0xff]
        %v2307 = vld [vmem:[%s336 + $0x2a74] sm:$0xff]
        %v2308 = vld [vmem:[%s336 + $0x2a7c] sm:$0xf]
        %v2309 = vld [vmem:[%s336 + $0x2a80] sm:$0xff]
        %v2310 = vld [vmem:[%s336 + $0x2a88] sm:$0xff]
        %v2311 = vld [vmem:[%s336 + $0x2a90] sm:$0xf]
        %v2312 = vld [vmem:[%s336 + $0x2a94] sm:$0xff]
        %v2313 = vld [vmem:[%s336 + $0x2a9c] sm:$0xff]
        %v2314 = vld [vmem:[%s336 + $0x2aa4] sm:$0xf]
        %v2315 = vld [vmem:[%s336 + $0x2aa8] sm:$0xff]
        %v2316 = vld [vmem:[%s336 + $0x2ab0] sm:$0xff]
        %v2317 = vld [vmem:[%s336 + $0x2ab8] sm:$0xf]
        %v2318 = vld [vmem:[%s336 + $0x2abc] sm:$0xff]
        %v2319 = vld [vmem:[%s336 + $0x2ac4] sm:$0xff]
        %v2320 = vld [vmem:[%s336 + $0x2acc] sm:$0xf]
        %v2321 = vld [vmem:[%s336 + $0x2ad0] sm:$0xff]
        %v2322 = vld [vmem:[%s336 + $0x2ad8] sm:$0xff]
        %v2323 = vld [vmem:[%s336 + $0x2ae0] sm:$0xf]
        %v2324 = vld [vmem:[%s336 + $0x2ae4] sm:$0xff]
        %v2325 = vld [vmem:[%s336 + $0x2aec] sm:$0xff]
        %v2326 = vld [vmem:[%s336 + $0x2af4] sm:$0xf]
        %v2327 = vld [vmem:[%s336 + $0x2af8] sm:$0xff]
        %v2328 = vld [vmem:[%s336 + $0x2b00] sm:$0xff]
        %v2329 = vld [vmem:[%s336 + $0x2b08] sm:$0xf]
        %v2330 = vld [vmem:[%s336 + $0x2b0c] sm:$0xff]
        %v2331 = vld [vmem:[%s336 + $0x2b14] sm:$0xff]
        %v2332 = vld [vmem:[%s336 + $0x2b1c] sm:$0xf]
        %v2333 = vld [vmem:[%s336 + $0x2b20] sm:$0xff]
        %v2334 = vld [vmem:[%s336 + $0x2b28] sm:$0xff]
        %v2335 = vld [vmem:[%s336 + $0x2b30] sm:$0xf]
        %v2336 = vld [vmem:[%s336 + $0x2b34] sm:$0xff]
        %v2337 = vld [vmem:[%s336 + $0x2b3c] sm:$0xff]
        %v2338 = vld [vmem:[%s336 + $0x2b44] sm:$0xf]
        %v2339 = vld [vmem:[%s336 + $0x2b48] sm:$0xff]
        %v2340 = vld [vmem:[%s336 + $0x2b50] sm:$0xff]
        %v2341 = vld [vmem:[%s336 + $0x2b58] sm:$0xf]
        %v2342 = vld [vmem:[%s336 + $0x2b5c] sm:$0xff]
        %v2343 = vld [vmem:[%s336 + $0x2b64] sm:$0xff]
        %v2344 = vld [vmem:[%s336 + $0x2b6c] sm:$0xf]
        %v2345 = vld [vmem:[%s336 + $0x2b70] sm:$0xff]
        %v2346 = vld [vmem:[%s336 + $0x2b78] sm:$0xff]
        %v2347 = vld [vmem:[%s336 + $0x2b80] sm:$0xf]
        %v2348 = vld [vmem:[%s336 + $0x2b84] sm:$0xff]
        %v2349 = vld [vmem:[%s336 + $0x2b8c] sm:$0xff]
        %v2350 = vld [vmem:[%s336 + $0x2b94] sm:$0xf]
        %v2351 = vld [vmem:[%s336 + $0x2b98] sm:$0xff]
        %v2352 = vld [vmem:[%s336 + $0x2ba0] sm:$0xff]
        %v2353 = vld [vmem:[%s336 + $0x2ba8] sm:$0xf]
        %v2354 = vld [vmem:[%s336 + $0x2bac] sm:$0xff]
        %v2355 = vld [vmem:[%s336 + $0x2bb4] sm:$0xff]
        %v2356 = vld [vmem:[%s336 + $0x2bbc] sm:$0xf]
        %v2357 = vld [vmem:[%s336 + $0x2bc0] sm:$0xff]
        %v2358 = vld [vmem:[%s336 + $0x2bc8] sm:$0xff]
        %v2359 = vld [vmem:[%s336 + $0x2bd0] sm:$0xf]
        %v2360 = vld [vmem:[%s336 + $0x2bd4] sm:$0xff]
        %v2361 = vld [vmem:[%s336 + $0x2bdc] sm:$0xff]
        %v2362 = vld [vmem:[%s336 + $0x2be4] sm:$0xf]
        %v2363 = vld [vmem:[%s336 + $0x2be8] sm:$0xff]
        %v2364 = vld [vmem:[%s336 + $0x2bf0] sm:$0xff]
        %v2365 = vld [vmem:[%s336 + $0x2bf8] sm:$0xf]
        %v2366 = vld [vmem:[%s336 + $0x2bfc] sm:$0xff]
        %v2367 = vld [vmem:[%s336 + $0x2c04] sm:$0xff]
        %v2368 = vld [vmem:[%s336 + $0x2c0c] sm:$0xf]
        %v2369 = vld [vmem:[%s336 + $0x2c10] sm:$0xff]
        %v2370 = vld [vmem:[%s336 + $0x2c18] sm:$0xff]
        %v2371 = vld [vmem:[%s336 + $0x2c20] sm:$0xf]
        %v2372 = vld [vmem:[%s336 + $0x2c24] sm:$0xff]
        %v2373 = vld [vmem:[%s336 + $0x2c2c] sm:$0xff]
        %v2374 = vld [vmem:[%s336 + $0x2c34] sm:$0xf]
        %v2375 = vld [vmem:[%s336 + $0x2c38] sm:$0xff]
        %v2376 = vld [vmem:[%s336 + $0x2c40] sm:$0xff]
        %v2377 = vld [vmem:[%s336 + $0x2c48] sm:$0xf]
        %v2378 = vld [vmem:[%s336 + $0x2c4c] sm:$0xff]
        %v2379 = vld [vmem:[%s336 + $0x2c54] sm:$0xff]
        %v2380 = vld [vmem:[%s336 + $0x2c5c] sm:$0xf]
        %v2381 = vld [vmem:[%s336 + $0x2c60] sm:$0xff]
        %v2382 = vld [vmem:[%s336 + $0x2c68] sm:$0xff]
        %v2383 = vld [vmem:[%s336 + $0x2c70] sm:$0xf]
        %v2384 = vld [vmem:[%s336 + $0x2c74] sm:$0xff]
        %v2385 = vld [vmem:[%s336 + $0x2c7c] sm:$0xff]
        %v2386 = vld [vmem:[%s336 + $0x2c84] sm:$0xf]
        %v2387 = vld [vmem:[%s336 + $0x2c88] sm:$0xff]
        %v2388 = vld [vmem:[%s336 + $0x2c90] sm:$0xff]
        %v2389 = vld [vmem:[%s336 + $0x2c98] sm:$0xf]
        %v2390 = vld [vmem:[%s336 + $0x2c9c] sm:$0xff]
        %v2391 = vld [vmem:[%s336 + $0x2ca4] sm:$0xff]
        %v2392 = vld [vmem:[%s336 + $0x2cac] sm:$0xf]
        %v2393 = vld [vmem:[%s336 + $0x2cb0] sm:$0xff]
        %v2394 = vld [vmem:[%s336 + $0x2cb8] sm:$0xff]
        %v2395 = vld [vmem:[%s336 + $0x2cc0] sm:$0xf]
        %v2396 = vld [vmem:[%s336 + $0x2cc4] sm:$0xff]
        %v2397 = vld [vmem:[%s336 + $0x2ccc] sm:$0xff]
        %v2398 = vld [vmem:[%s336 + $0x2cd4] sm:$0xf]
        %v2399 = vld [vmem:[%s336 + $0x2cd8] sm:$0xff]
        %v2400 = vld [vmem:[%s336 + $0x2ce0] sm:$0xff]
        %v2401 = vld [vmem:[%s336 + $0x2ce8] sm:$0xf]
        %v2402 = vld [vmem:[%s336 + $0x2cec] sm:$0xff]
        %v2403 = vld [vmem:[%s336 + $0x2cf4] sm:$0xff]
        %v2404 = vld [vmem:[%s336 + $0x2cfc] sm:$0xf]
        %v2405 = vld [vmem:[%s336 + $0x2d00] sm:$0xff]
        %v2406 = vld [vmem:[%s336 + $0x2d08] sm:$0xff]
        %v2407 = vld [vmem:[%s336 + $0x2d10] sm:$0xf]
        %v2408 = vld [vmem:[%s336 + $0x2d14] sm:$0xff]
        %v2409 = vld [vmem:[%s336 + $0x2d1c] sm:$0xff]
        %v2410 = vld [vmem:[%s336 + $0x2d24] sm:$0xf]
        %v2411 = vld [vmem:[%s336 + $0x2d28] sm:$0xff]
        %v2412 = vld [vmem:[%s336 + $0x2d30] sm:$0xff]
        %v2413 = vld [vmem:[%s336 + $0x2d38] sm:$0xf]
        %v2414 = vld [vmem:[%s336 + $0x2d3c] sm:$0xff]
        %v2415 = vld [vmem:[%s336 + $0x2d44] sm:$0xff]
        %v2416 = vld [vmem:[%s336 + $0x2d4c] sm:$0xf]
        %v2417 = vld [vmem:[%s336 + $0x2d50] sm:$0xff]
        %v2418 = vld [vmem:[%s336 + $0x2d58] sm:$0xff]
        %v2419 = vld [vmem:[%s336 + $0x2d60] sm:$0xf]
        %v2420 = vld [vmem:[%s336 + $0x2d64] sm:$0xff]
        %v2421 = vld [vmem:[%s336 + $0x2d6c] sm:$0xff]
        %v2422 = vld [vmem:[%s336 + $0x2d74] sm:$0xf]
        %v2423 = vld [vmem:[%s336 + $0x2d78] sm:$0xff]
        %v2424 = vld [vmem:[%s336 + $0x2d80] sm:$0xff]
        %v2425 = vld [vmem:[%s336 + $0x2d88] sm:$0xf]
        %v2426 = vld [vmem:[%s336 + $0x2d8c] sm:$0xff]
        %v2427 = vld [vmem:[%s336 + $0x2d94] sm:$0xff]
        %v2428 = vld [vmem:[%s336 + $0x2d9c] sm:$0xf]
        %v2429 = vld [vmem:[%s336 + $0x2da0] sm:$0xff]
        %v2430 = vld [vmem:[%s336 + $0x2da8] sm:$0xff]
        %v2431 = vld [vmem:[%s336 + $0x2db0] sm:$0xf]
        %v2432 = vld [vmem:[%s336 + $0x2db4] sm:$0xff]
        %v2433 = vld [vmem:[%s336 + $0x2dbc] sm:$0xff]
        %v2434 = vld [vmem:[%s336 + $0x2dc4] sm:$0xf]
        %v2435 = vld [vmem:[%s336 + $0x2dc8] sm:$0xff]
        %v2436 = vld [vmem:[%s336 + $0x2dd0] sm:$0xff]
        %v2437 = vld [vmem:[%s336 + $0x2dd8] sm:$0xf]
        %v2438 = vld [vmem:[%s336 + $0x2ddc] sm:$0xff]
        %v2439 = vld [vmem:[%s336 + $0x2de4] sm:$0xff]
        %v2440 = vld [vmem:[%s336 + $0x2dec] sm:$0xf]
        %v2441 = vld [vmem:[%s336 + $0x2df0] sm:$0xff]
        %v2442 = vld [vmem:[%s336 + $0x2df8] sm:$0xff]
        %v2443 = vld [vmem:[%s336 + $0x2e00] sm:$0xf]
        %v2444 = vld [vmem:[%s336 + $0x2e04] sm:$0xff]
        %v2445 = vld [vmem:[%s336 + $0x2e0c] sm:$0xff]
        %v2446 = vld [vmem:[%s336 + $0x2e14] sm:$0xf]
        %v2447 = vld [vmem:[%s336 + $0x2e18] sm:$0xff]
        %v2448 = vld [vmem:[%s336 + $0x2e20] sm:$0xff]
        %v2449 = vld [vmem:[%s336 + $0x2e28] sm:$0xf]
        %v2450 = vld [vmem:[%s336 + $0x2e2c] sm:$0xff]
        %v2451 = vld [vmem:[%s336 + $0x2e34] sm:$0xff]
        %v2452 = vld [vmem:[%s336 + $0x2e3c] sm:$0xf]
        %v2453 = vld [vmem:[%s336 + $0x2e40] sm:$0xff]
        %v2454 = vld [vmem:[%s336 + $0x2e48] sm:$0xff]
        %v2455 = vld [vmem:[%s336 + $0x2e50] sm:$0xf]
        %v2456 = vld [vmem:[%s336 + $0x2e54] sm:$0xff]
        %v2457 = vld [vmem:[%s336 + $0x2e5c] sm:$0xff]
        %v2458 = vld [vmem:[%s336 + $0x2e64] sm:$0xf]
        %v2459 = vld [vmem:[%s336 + $0x2e68] sm:$0xff]
        %v2460 = vld [vmem:[%s336 + $0x2e70] sm:$0xff]
        %v2461 = vld [vmem:[%s336 + $0x2e78] sm:$0xf]
        %v2462 = vld [vmem:[%s336 + $0x2e7c] sm:$0xff]
        %v2463 = vld [vmem:[%s336 + $0x2e84] sm:$0xff]
        %v2464 = vld [vmem:[%s336 + $0x2e8c] sm:$0xf]
        %v2465 = vld [vmem:[%s336 + $0x2e90] sm:$0xff]
        %v2466 = vld [vmem:[%s336 + $0x2e98] sm:$0xff]
        %v2467 = vld [vmem:[%s336 + $0x2ea0] sm:$0xf]
        %v2468 = vld [vmem:[%s336 + $0x2ea4] sm:$0xff]
        %v2469 = vld [vmem:[%s336 + $0x2eac] sm:$0xff]
        %v2470 = vld [vmem:[%s336 + $0x2eb4] sm:$0xf]
        %v2471 = vld [vmem:[%s336 + $0x2eb8] sm:$0xff]
        %v2472 = vld [vmem:[%s336 + $0x2ec0] sm:$0xff]
        %v2473 = vld [vmem:[%s336 + $0x2ec8] sm:$0xf]
        %v2474 = vld [vmem:[%s336 + $0x2ecc] sm:$0xff]
        %v2475 = vld [vmem:[%s336 + $0x2ed4] sm:$0xff]
        %v2476 = vld [vmem:[%s336 + $0x2edc] sm:$0xf]
        %v2477 = vld [vmem:[%s336 + $0x2ee0] sm:$0xff]
        %v2478 = vld [vmem:[%s336 + $0x2ee8] sm:$0xff]
        %v2479 = vld [vmem:[%s336 + $0x2ef0] sm:$0xf]
        %v2480 = vld [vmem:[%s336 + $0x2ef4] sm:$0xff]
        %v2481 = vld [vmem:[%s336 + $0x2efc] sm:$0xff]
        %v2482 = vld [vmem:[%s336 + $0x2f04] sm:$0xf]
        %v2483 = vld [vmem:[%s336 + $0x2f08] sm:$0xff]
        %v2484 = vld [vmem:[%s336 + $0x2f10] sm:$0xff]
        %v2485 = vld [vmem:[%s336 + $0x2f18] sm:$0xf]
        %v2486 = vld [vmem:[%s336 + $0x2f1c] sm:$0xff]
        %v2487 = vld [vmem:[%s336 + $0x2f24] sm:$0xff]
        %v2488 = vld [vmem:[%s336 + $0x2f2c] sm:$0xf]
        %v2489 = vld [vmem:[%s336 + $0x2f30] sm:$0xff]
        %v2490 = vld [vmem:[%s336 + $0x2f38] sm:$0xff]
        %v2491 = vld [vmem:[%s336 + $0x2f40] sm:$0xf]
        %v2492 = vld [vmem:[%s336 + $0x2f44] sm:$0xff]
        %v2493 = vld [vmem:[%s336 + $0x2f4c] sm:$0xff]
        %v2494 = vld [vmem:[%s336 + $0x2f54] sm:$0xf]
        %v2495 = vld [vmem:[%s336 + $0x2f58] sm:$0xff]
        %v2496 = vld [vmem:[%s336 + $0x2f60] sm:$0xff]
        %v2497 = vld [vmem:[%s336 + $0x2f68] sm:$0xf]
        %v2498 = vld [vmem:[%s336 + $0x2f6c] sm:$0xff]
        %v2499 = vld [vmem:[%s336 + $0x2f74] sm:$0xff]
        %v2500 = vld [vmem:[%s336 + $0x2f7c] sm:$0xf]
        %v2501 = vld [vmem:[%s336 + $0x2f80] sm:$0xff]
        %v2502 = vld [vmem:[%s336 + $0x2f88] sm:$0xff]
        %v2503 = vld [vmem:[%s336 + $0x2f90] sm:$0xf]
        %v2504 = vld [vmem:[%s336 + $0x2f94] sm:$0xff]
        %v2505 = vld [vmem:[%s336 + $0x2f9c] sm:$0xff]
        %v2506 = vld [vmem:[%s336 + $0x2fa4] sm:$0xf]
        %v2507 = vld [vmem:[%s336 + $0x2fa8] sm:$0xff]
        %v2508 = vld [vmem:[%s336 + $0x2fb0] sm:$0xff]
        %v2509 = vld [vmem:[%s336 + $0x2fb8] sm:$0xf]
        %v2510 = vld [vmem:[%s336 + $0x2fbc] sm:$0xff]
        %v2511 = vld [vmem:[%s336 + $0x2fc4] sm:$0xff]
        %v2512 = vld [vmem:[%s336 + $0x2fcc] sm:$0xf]
        %v2513 = vld [vmem:[%s336 + $0x2fd0] sm:$0xff]
        %v2514 = vld [vmem:[%s336 + $0x2fd8] sm:$0xff]
        %v2515 = vld [vmem:[%s336 + $0x2fe0] sm:$0xf]
        %v2516 = vld [vmem:[%s336 + $0x2fe4] sm:$0xff]
        %v2517 = vld [vmem:[%s336 + $0x2fec] sm:$0xff]
        %v2518 = vld [vmem:[%s336 + $0x2ff4] sm:$0xf]
        %v2519 = vld [vmem:[%s336 + $0x2ff8] sm:$0xff]
        %v2520 = vld [vmem:[%s336 + $0x3000] sm:$0xff]
        %v2521 = vld [vmem:[%s336 + $0x3008] sm:$0xf]
        %v2522 = vld [vmem:[%s336 + $0x300c] sm:$0xff]
        %v2523 = vld [vmem:[%s336 + $0x3014] sm:$0xff]
        %v2524 = vld [vmem:[%s336 + $0x301c] sm:$0xf]
        %v2525 = vld [vmem:[%s336 + $0x3020] sm:$0xff]
        %v2526 = vld [vmem:[%s336 + $0x3028] sm:$0xff]
        %v2527 = vld [vmem:[%s336 + $0x3030] sm:$0xf]
        %v2528 = vld [vmem:[%s336 + $0x3034] sm:$0xff]
        %v2529 = vld [vmem:[%s336 + $0x303c] sm:$0xff]
        %v2530 = vld [vmem:[%s336 + $0x3044] sm:$0xf]
        %v2531 = vld [vmem:[%s336 + $0x3048] sm:$0xff]
        %v2532 = vld [vmem:[%s336 + $0x3050] sm:$0xff]
        %v2533 = vld [vmem:[%s336 + $0x3058] sm:$0xf]
        %v2534 = vld [vmem:[%s336 + $0x305c] sm:$0xff]
        %v2535 = vld [vmem:[%s336 + $0x3064] sm:$0xff]
        %v2536 = vld [vmem:[%s336 + $0x306c] sm:$0xf]
        %v2537 = vld [vmem:[%s336 + $0x3070] sm:$0xff]
        %v2538 = vld [vmem:[%s336 + $0x3078] sm:$0xff]
        %v2539 = vld [vmem:[%s336 + $0x3080] sm:$0xf]
        %v2540 = vld [vmem:[%s336 + $0x3084] sm:$0xff]
        %v2541 = vld [vmem:[%s336 + $0x308c] sm:$0xff]
        %v2542 = vld [vmem:[%s336 + $0x3094] sm:$0xf]
        %v2543 = vld [vmem:[%s336 + $0x3098] sm:$0xff]
        %v2544 = vld [vmem:[%s336 + $0x30a0] sm:$0xff]
        %v2545 = vld [vmem:[%s336 + $0x30a8] sm:$0xf]
        %v2546 = vld [vmem:[%s336 + $0x30ac] sm:$0xff]
        %v2547 = vld [vmem:[%s336 + $0x30b4] sm:$0xff]
        %v2548 = vld [vmem:[%s336 + $0x30bc] sm:$0xf]
        %v2549 = vld [vmem:[%s336 + $0x30c0] sm:$0xff]
        %v2550 = vld [vmem:[%s336 + $0x30c8] sm:$0xff]
        %v2551 = vld [vmem:[%s336 + $0x30d0] sm:$0xf]
        %v2552 = vld [vmem:[%s345] sm:$0x1f]
        %v2554 = vlaneseq
        %v2555 = vshrl.u32 %v2554, 7
        %v2556 = vsub.s32 0, %v2555
        %v2557 = vrot.slane %v2552, %v2556
        %v2558 = vlaneseq
        %v2559 = vshrl.u32 %v2558, 7
        %v2560 = vsub.s32 1, %v2559
        %v2561 = vrot.slane %v2552, %v2560
        %v2562 = vlaneseq
        %v2563 = vshrl.u32 %v2562, 7
        %v2564 = vsub.s32 2, %v2563
        %v2565 = vrot.slane %v2552, %v2564
        %v2566 = vlaneseq
        %v2567 = vshrl.u32 %v2566, 7
        %v2568 = vsub.s32 3, %v2567
        %v2569 = vrot.slane %v2552, %v2568
        %v2570 = vlaneseq
        %v2571 = vshrl.u32 %v2570, 7
        %v2572 = vsub.s32 4, %v2571
        %v2573 = vrot.slane %v2552, %v2572
        %v4454 = vunpack.c.l.b16 %v677
        %v4455 = vunpack.c.h.b16 %v677
        %v4456 = vunpack.c.l.b16 %v678
        %v4457 = vunpack.c.h.b16 %v678
        %v4458 = vunpack.c.l.b16 %v679
        %v4459 = vunpack.c.l.b16 %v680
        %v4460 = vunpack.c.h.b16 %v680
        %v4461 = vunpack.c.l.b16 %v681
        %v4462 = vunpack.c.h.b16 %v681
        %v4463 = vunpack.c.l.b16 %v682
        %v4464 = vunpack.c.l.b16 %v683
        %v4465 = vunpack.c.h.b16 %v683
        %v4466 = vunpack.c.l.b16 %v684
        %v4467 = vunpack.c.h.b16 %v684
        %v4468 = vunpack.c.l.b16 %v685
        %v4469 = vunpack.c.l.b16 %v686
        %v4470 = vunpack.c.h.b16 %v686
        %v4471 = vunpack.c.l.b16 %v687
        %v4472 = vunpack.c.h.b16 %v687
        %v4473 = vunpack.c.l.b16 %v688
        %v4474 = vunpack.c.l.b16 %v689
        %v4475 = vunpack.c.h.b16 %v689
        %v4476 = vunpack.c.l.b16 %v690
        %v4477 = vunpack.c.h.b16 %v690
        %v4478 = vunpack.c.l.b16 %v691
        %v4479 = vunpack.c.l.b16 %v692
        %v4480 = vunpack.c.h.b16 %v692
        %v4481 = vunpack.c.l.b16 %v693
        %v4482 = vunpack.c.h.b16 %v693
        %v4483 = vunpack.c.l.b16 %v694
        %v4484 = vunpack.c.l.b16 %v695
        %v4485 = vunpack.c.h.b16 %v695
        %v4486 = vunpack.c.l.b16 %v696
        %v4487 = vunpack.c.h.b16 %v696
        %v4488 = vunpack.c.l.b16 %v697
        %v4489 = vunpack.c.l.b16 %v698
        %v4490 = vunpack.c.h.b16 %v698
        %v4491 = vunpack.c.l.b16 %v699
        %v4492 = vunpack.c.h.b16 %v699
        %v4493 = vunpack.c.l.b16 %v700
        %v4494 = vunpack.c.l.b16 %v701
        %v4495 = vunpack.c.h.b16 %v701
        %v4496 = vunpack.c.l.b16 %v702
        %v4497 = vunpack.c.h.b16 %v702
        %v4498 = vunpack.c.l.b16 %v703
        %v4499 = vunpack.c.l.b16 %v704
        %v4500 = vunpack.c.h.b16 %v704
        %v4501 = vunpack.c.l.b16 %v705
        %v4502 = vunpack.c.h.b16 %v705
        %v4503 = vunpack.c.l.b16 %v706
        %v4504 = vunpack.c.l.b16 %v707
        %v4505 = vunpack.c.h.b16 %v707
        %v4506 = vunpack.c.l.b16 %v708
        %v4507 = vunpack.c.h.b16 %v708
        %v4508 = vunpack.c.l.b16 %v709
        %v4509 = vunpack.c.l.b16 %v710
        %v4510 = vunpack.c.h.b16 %v710
        %v4511 = vunpack.c.l.b16 %v711
        %v4512 = vunpack.c.h.b16 %v711
        %v4513 = vunpack.c.l.b16 %v712
        %v4514 = vunpack.c.l.b16 %v713
        %v4515 = vunpack.c.h.b16 %v713
        %v4516 = vunpack.c.l.b16 %v714
        %v4517 = vunpack.c.h.b16 %v714
        %v4518 = vunpack.c.l.b16 %v715
        %v4519 = vunpack.c.l.b16 %v716
        %v4520 = vunpack.c.h.b16 %v716
        %v4521 = vunpack.c.l.b16 %v717
        %v4522 = vunpack.c.h.b16 %v717
        %v4523 = vunpack.c.l.b16 %v718
        %v4524 = vunpack.c.l.b16 %v719
        %v4525 = vunpack.c.h.b16 %v719
        %v4526 = vunpack.c.l.b16 %v720
        %v4527 = vunpack.c.h.b16 %v720
        %v4528 = vunpack.c.l.b16 %v721
        %v4529 = vunpack.c.l.b16 %v722
        %v4530 = vunpack.c.h.b16 %v722
        %v4531 = vunpack.c.l.b16 %v723
        %v4532 = vunpack.c.h.b16 %v723
        %v4533 = vunpack.c.l.b16 %v724
        %v4534 = vunpack.c.l.b16 %v725
        %v4535 = vunpack.c.h.b16 %v725
        %v4536 = vunpack.c.l.b16 %v726
        %v4537 = vunpack.c.h.b16 %v726
        %v4538 = vunpack.c.l.b16 %v727
        %v4539 = vunpack.c.l.b16 %v728
        %v4540 = vunpack.c.h.b16 %v728
        %v4541 = vunpack.c.l.b16 %v729
        %v4542 = vunpack.c.h.b16 %v729
        %v4543 = vunpack.c.l.b16 %v730
        %v4544 = vunpack.c.l.b16 %v731
        %v4545 = vunpack.c.h.b16 %v731
        %v4546 = vunpack.c.l.b16 %v732
        %v4547 = vunpack.c.h.b16 %v732
        %v4548 = vunpack.c.l.b16 %v733
        %v4549 = vunpack.c.l.b16 %v734
        %v4550 = vunpack.c.h.b16 %v734
        %v4551 = vunpack.c.l.b16 %v735
        %v4552 = vunpack.c.h.b16 %v735
        %v4553 = vunpack.c.l.b16 %v736
        %v4554 = vunpack.c.l.b16 %v737
        %v4555 = vunpack.c.h.b16 %v737
        %v4556 = vunpack.c.l.b16 %v738
        %v4557 = vunpack.c.h.b16 %v738
        %v4558 = vunpack.c.l.b16 %v739
        %v4559 = vunpack.c.l.b16 %v740
        %v4560 = vunpack.c.h.b16 %v740
        %v4561 = vunpack.c.l.b16 %v741
        %v4562 = vunpack.c.h.b16 %v741
        %v4563 = vunpack.c.l.b16 %v742
        %v4564 = vunpack.c.l.b16 %v743
        %v4565 = vunpack.c.h.b16 %v743
        %v4566 = vunpack.c.l.b16 %v744
        %v4567 = vunpack.c.h.b16 %v744
        %v4568 = vunpack.c.l.b16 %v745
        %v4569 = vunpack.c.l.b16 %v746
        %v4570 = vunpack.c.h.b16 %v746
        %v4571 = vunpack.c.l.b16 %v747
        %v4572 = vunpack.c.h.b16 %v747
        %v4573 = vunpack.c.l.b16 %v748
        %v4574 = vunpack.c.l.b16 %v749
        %v4575 = vunpack.c.h.b16 %v749
        %v4576 = vunpack.c.l.b16 %v750
        %v4577 = vunpack.c.h.b16 %v750
        %v4578 = vunpack.c.l.b16 %v751
        %v4579 = vunpack.c.l.b16 %v752
        %v4580 = vunpack.c.h.b16 %v752
        %v4581 = vunpack.c.l.b16 %v753
        %v4582 = vunpack.c.h.b16 %v753
        %v4583 = vunpack.c.l.b16 %v754
        %v4584 = vunpack.c.l.b16 %v755
        %v4585 = vunpack.c.h.b16 %v755
        %v4586 = vunpack.c.l.b16 %v756
        %v4587 = vunpack.c.h.b16 %v756
        %v4588 = vunpack.c.l.b16 %v757
        %v4589 = vunpack.c.l.b16 %v758
        %v4590 = vunpack.c.h.b16 %v758
        %v4591 = vunpack.c.l.b16 %v759
        %v4592 = vunpack.c.h.b16 %v759
        %v4593 = vunpack.c.l.b16 %v760
        %v4594 = vunpack.c.l.b16 %v761
        %v4595 = vunpack.c.h.b16 %v761
        %v4596 = vunpack.c.l.b16 %v762
        %v4597 = vunpack.c.h.b16 %v762
        %v4598 = vunpack.c.l.b16 %v763
        %v4599 = vunpack.c.l.b16 %v764
        %v4600 = vunpack.c.h.b16 %v764
        %v4601 = vunpack.c.l.b16 %v765
        %v4602 = vunpack.c.h.b16 %v765
        %v4603 = vunpack.c.l.b16 %v766
        %v4604 = vunpack.c.l.b16 %v767
        %v4605 = vunpack.c.h.b16 %v767
        %v4606 = vunpack.c.l.b16 %v768
        %v4607 = vunpack.c.h.b16 %v768
        %v4608 = vunpack.c.l.b16 %v769
        %v4609 = vunpack.c.l.b16 %v770
        %v4610 = vunpack.c.h.b16 %v770
        %v4611 = vunpack.c.l.b16 %v771
        %v4612 = vunpack.c.h.b16 %v771
        %v4613 = vunpack.c.l.b16 %v772
        %v4614 = vunpack.c.l.b16 %v773
        %v4615 = vunpack.c.h.b16 %v773
        %v4616 = vunpack.c.l.b16 %v774
        %v4617 = vunpack.c.h.b16 %v774
        %v4618 = vunpack.c.l.b16 %v775
        %v4619 = vunpack.c.l.b16 %v776
        %v4620 = vunpack.c.h.b16 %v776
        %v4621 = vunpack.c.l.b16 %v777
        %v4622 = vunpack.c.h.b16 %v777
        %v4623 = vunpack.c.l.b16 %v778
        %v4624 = vunpack.c.l.b16 %v779
        %v4625 = vunpack.c.h.b16 %v779
        %v4626 = vunpack.c.l.b16 %v780
        %v4627 = vunpack.c.h.b16 %v780
        %v4628 = vunpack.c.l.b16 %v781
        %v4629 = vunpack.c.l.b16 %v782
        %v4630 = vunpack.c.h.b16 %v782
        %v4631 = vunpack.c.l.b16 %v783
        %v4632 = vunpack.c.h.b16 %v783
        %v4633 = vunpack.c.l.b16 %v784
        %v4634 = vunpack.c.l.b16 %v785
        %v4635 = vunpack.c.h.b16 %v785
        %v4636 = vunpack.c.l.b16 %v786
        %v4637 = vunpack.c.h.b16 %v786
        %v4638 = vunpack.c.l.b16 %v787
        %v4639 = vunpack.c.l.b16 %v788
        %v4640 = vunpack.c.h.b16 %v788
        %v4641 = vunpack.c.l.b16 %v789
        %v4642 = vunpack.c.h.b16 %v789
        %v4643 = vunpack.c.l.b16 %v790
        %v4644 = vunpack.c.l.b16 %v791
        %v4645 = vunpack.c.h.b16 %v791
        %v4646 = vunpack.c.l.b16 %v792
        %v4647 = vunpack.c.h.b16 %v792
        %v4648 = vunpack.c.l.b16 %v793
        %v4649 = vunpack.c.l.b16 %v794
        %v4650 = vunpack.c.h.b16 %v794
        %v4651 = vunpack.c.l.b16 %v795
        %v4652 = vunpack.c.h.b16 %v795
        %v4653 = vunpack.c.l.b16 %v796
        %v4654 = vunpack.c.l.b16 %v797
        %v4655 = vunpack.c.h.b16 %v797
        %v4656 = vunpack.c.l.b16 %v798
        %v4657 = vunpack.c.h.b16 %v798
        %v4658 = vunpack.c.l.b16 %v799
        %v4659 = vunpack.c.l.b16 %v800
        %v4660 = vunpack.c.h.b16 %v800
        %v4661 = vunpack.c.l.b16 %v801
        %v4662 = vunpack.c.h.b16 %v801
        %v4663 = vunpack.c.l.b16 %v802
        %v4664 = vunpack.c.l.b16 %v803
        %v4665 = vunpack.c.h.b16 %v803
        %v4666 = vunpack.c.l.b16 %v804
        %v4667 = vunpack.c.h.b16 %v804
        %v4668 = vunpack.c.l.b16 %v805
        %v4669 = vunpack.c.l.b16 %v806
        %v4670 = vunpack.c.h.b16 %v806
        %v4671 = vunpack.c.l.b16 %v807
        %v4672 = vunpack.c.h.b16 %v807
        %v4673 = vunpack.c.l.b16 %v808
        %v4674 = vunpack.c.l.b16 %v809
        %v4675 = vunpack.c.h.b16 %v809
        %v4676 = vunpack.c.l.b16 %v810
        %v4677 = vunpack.c.h.b16 %v810
        %v4678 = vunpack.c.l.b16 %v811
        %v4679 = vunpack.c.l.b16 %v812
        %v4680 = vunpack.c.h.b16 %v812
        %v4681 = vunpack.c.l.b16 %v813
        %v4682 = vunpack.c.h.b16 %v813
        %v4683 = vunpack.c.l.b16 %v814
        %v4684 = vunpack.c.l.b16 %v815
        %v4685 = vunpack.c.h.b16 %v815
        %v4686 = vunpack.c.l.b16 %v816
        %v4687 = vunpack.c.h.b16 %v816
        %v4688 = vunpack.c.l.b16 %v817
        %v4689 = vunpack.c.l.b16 %v818
        %v4690 = vunpack.c.h.b16 %v818
        %v4691 = vunpack.c.l.b16 %v819
        %v4692 = vunpack.c.h.b16 %v819
        %v4693 = vunpack.c.l.b16 %v820
        %v4694 = vunpack.c.l.b16 %v821
        %v4695 = vunpack.c.h.b16 %v821
        %v4696 = vunpack.c.l.b16 %v822
        %v4697 = vunpack.c.h.b16 %v822
        %v4698 = vunpack.c.l.b16 %v823
        %v4699 = vunpack.c.l.b16 %v824
        %v4700 = vunpack.c.h.b16 %v824
        %v4701 = vunpack.c.l.b16 %v825
        %v4702 = vunpack.c.h.b16 %v825
        %v4703 = vunpack.c.l.b16 %v826
        %v4704 = vunpack.c.l.b16 %v827
        %v4705 = vunpack.c.h.b16 %v827
        %v4706 = vunpack.c.l.b16 %v828
        %v4707 = vunpack.c.h.b16 %v828
        %v4708 = vunpack.c.l.b16 %v829
        %v4709 = vunpack.c.l.b16 %v830
        %v4710 = vunpack.c.h.b16 %v830
        %v4711 = vunpack.c.l.b16 %v831
        %v4712 = vunpack.c.h.b16 %v831
        %v4713 = vunpack.c.l.b16 %v832
        %v4714 = vunpack.c.l.b16 %v833
        %v4715 = vunpack.c.h.b16 %v833
        %v4716 = vunpack.c.l.b16 %v834
        %v4717 = vunpack.c.h.b16 %v834
        %v4718 = vunpack.c.l.b16 %v835
        %v4719 = vunpack.c.l.b16 %v836
        %v4720 = vunpack.c.h.b16 %v836
        %v4721 = vunpack.c.l.b16 %v837
        %v4722 = vunpack.c.h.b16 %v837
        %v4723 = vunpack.c.l.b16 %v838
        %v4724 = vunpack.c.l.b16 %v839
        %v4725 = vunpack.c.h.b16 %v839
        %v4726 = vunpack.c.l.b16 %v840
        %v4727 = vunpack.c.h.b16 %v840
        %v4728 = vunpack.c.l.b16 %v841
        %v4729 = vunpack.c.l.b16 %v842
        %v4730 = vunpack.c.h.b16 %v842
        %v4731 = vunpack.c.l.b16 %v843
        %v4732 = vunpack.c.h.b16 %v843
        %v4733 = vunpack.c.l.b16 %v844
        %v4734 = vunpack.c.l.b16 %v845
        %v4735 = vunpack.c.h.b16 %v845
        %v4736 = vunpack.c.l.b16 %v846
        %v4737 = vunpack.c.h.b16 %v846
        %v4738 = vunpack.c.l.b16 %v847
        %v4739 = vunpack.c.l.b16 %v848
        %v4740 = vunpack.c.h.b16 %v848
        %v4741 = vunpack.c.l.b16 %v849
        %v4742 = vunpack.c.h.b16 %v849
        %v4743 = vunpack.c.l.b16 %v850
        %v4744 = vunpack.c.l.b16 %v851
        %v4745 = vunpack.c.h.b16 %v851
        %v4746 = vunpack.c.l.b16 %v852
        %v4747 = vunpack.c.h.b16 %v852
        %v4748 = vunpack.c.l.b16 %v853
        %v4749 = vunpack.c.l.b16 %v854
        %v4750 = vunpack.c.h.b16 %v854
        %v4751 = vunpack.c.l.b16 %v855
        %v4752 = vunpack.c.h.b16 %v855
        %v4753 = vunpack.c.l.b16 %v856
        %v4754 = vunpack.c.l.b16 %v857
        %v4755 = vunpack.c.h.b16 %v857
        %v4756 = vunpack.c.l.b16 %v858
        %v4757 = vunpack.c.h.b16 %v858
        %v4758 = vunpack.c.l.b16 %v859
        %v4759 = vunpack.c.l.b16 %v860
        %v4760 = vunpack.c.h.b16 %v860
        %v4761 = vunpack.c.l.b16 %v861
        %v4762 = vunpack.c.h.b16 %v861
        %v4763 = vunpack.c.l.b16 %v862
        %v4764 = vunpack.c.l.b16 %v863
        %v4765 = vunpack.c.h.b16 %v863
        %v4766 = vunpack.c.l.b16 %v864
        %v4767 = vunpack.c.h.b16 %v864
        %v4768 = vunpack.c.l.b16 %v865
        %v4769 = vunpack.c.l.b16 %v866
        %v4770 = vunpack.c.h.b16 %v866
        %v4771 = vunpack.c.l.b16 %v867
        %v4772 = vunpack.c.h.b16 %v867
        %v4773 = vunpack.c.l.b16 %v868
        %v4774 = vunpack.c.l.b16 %v869
        %v4775 = vunpack.c.h.b16 %v869
        %v4776 = vunpack.c.l.b16 %v870
        %v4777 = vunpack.c.h.b16 %v870
        %v4778 = vunpack.c.l.b16 %v871
        %v4779 = vunpack.c.l.b16 %v872
        %v4780 = vunpack.c.h.b16 %v872
        %v4781 = vunpack.c.l.b16 %v873
        %v4782 = vunpack.c.h.b16 %v873
        %v4783 = vunpack.c.l.b16 %v874
        %v4784 = vunpack.c.l.b16 %v875
        %v4785 = vunpack.c.h.b16 %v875
        %v4786 = vunpack.c.l.b16 %v876
        %v4787 = vunpack.c.h.b16 %v876
        %v4788 = vunpack.c.l.b16 %v877
        %v4789 = vunpack.c.l.b16 %v878
        %v4790 = vunpack.c.h.b16 %v878
        %v4791 = vunpack.c.l.b16 %v879
        %v4792 = vunpack.c.h.b16 %v879
        %v4793 = vunpack.c.l.b16 %v880
        %v4794 = vunpack.c.l.b16 %v881
        %v4795 = vunpack.c.h.b16 %v881
        %v4796 = vunpack.c.l.b16 %v882
        %v4797 = vunpack.c.h.b16 %v882
        %v4798 = vunpack.c.l.b16 %v883
        %v4799 = vunpack.c.l.b16 %v884
        %v4800 = vunpack.c.h.b16 %v884
        %v4801 = vunpack.c.l.b16 %v885
        %v4802 = vunpack.c.h.b16 %v885
        %v4803 = vunpack.c.l.b16 %v886
        %v4804 = vunpack.c.l.b16 %v887
        %v4805 = vunpack.c.h.b16 %v887
        %v4806 = vunpack.c.l.b16 %v888
        %v4807 = vunpack.c.h.b16 %v888
        %v4808 = vunpack.c.l.b16 %v889
        %v4809 = vunpack.c.l.b16 %v890
        %v4810 = vunpack.c.h.b16 %v890
        %v4811 = vunpack.c.l.b16 %v891
        %v4812 = vunpack.c.h.b16 %v891
        %v4813 = vunpack.c.l.b16 %v892
        %v4814 = vunpack.c.l.b16 %v893
        %v4815 = vunpack.c.h.b16 %v893
        %v4816 = vunpack.c.l.b16 %v894
        %v4817 = vunpack.c.h.b16 %v894
        %v4818 = vunpack.c.l.b16 %v895
        %v4819 = vunpack.c.l.b16 %v896
        %v4820 = vunpack.c.h.b16 %v896
        %v4821 = vunpack.c.l.b16 %v897
        %v4822 = vunpack.c.h.b16 %v897
        %v4823 = vunpack.c.l.b16 %v898
        %v4824 = vunpack.c.l.b16 %v899
        %v4825 = vunpack.c.h.b16 %v899
        %v4826 = vunpack.c.l.b16 %v900
        %v4827 = vunpack.c.h.b16 %v900
        %v4828 = vunpack.c.l.b16 %v901
        %v4829 = vunpack.c.l.b16 %v902
        %v4830 = vunpack.c.h.b16 %v902
        %v4831 = vunpack.c.l.b16 %v903
        %v4832 = vunpack.c.h.b16 %v903
        %v4833 = vunpack.c.l.b16 %v904
        %v4834 = vunpack.c.l.b16 %v905
        %v4835 = vunpack.c.h.b16 %v905
        %v4836 = vunpack.c.l.b16 %v906
        %v4837 = vunpack.c.h.b16 %v906
        %v4838 = vunpack.c.l.b16 %v907
        %v4839 = vunpack.c.l.b16 %v908
        %v4840 = vunpack.c.h.b16 %v908
        %v4841 = vunpack.c.l.b16 %v909
        %v4842 = vunpack.c.h.b16 %v909
        %v4843 = vunpack.c.l.b16 %v910
        %v4844 = vunpack.c.l.b16 %v911
        %v4845 = vunpack.c.h.b16 %v911
        %v4846 = vunpack.c.l.b16 %v912
        %v4847 = vunpack.c.h.b16 %v912
        %v4848 = vunpack.c.l.b16 %v913
        %v4849 = vunpack.c.l.b16 %v914
        %v4850 = vunpack.c.h.b16 %v914
        %v4851 = vunpack.c.l.b16 %v915
        %v4852 = vunpack.c.h.b16 %v915
        %v4853 = vunpack.c.l.b16 %v916
        %v4854 = vunpack.c.l.b16 %v917
        %v4855 = vunpack.c.h.b16 %v917
        %v4856 = vunpack.c.l.b16 %v918
        %v4857 = vunpack.c.h.b16 %v918
        %v4858 = vunpack.c.l.b16 %v919
        %v4859 = vunpack.c.l.b16 %v920
        %v4860 = vunpack.c.h.b16 %v920
        %v4861 = vunpack.c.l.b16 %v921
        %v4862 = vunpack.c.h.b16 %v921
        %v4863 = vunpack.c.l.b16 %v922
        %v4864 = vunpack.c.l.b16 %v923
        %v4865 = vunpack.c.h.b16 %v923
        %v4866 = vunpack.c.l.b16 %v924
        %v4867 = vunpack.c.h.b16 %v924
        %v4868 = vunpack.c.l.b16 %v925
        %v4869 = vunpack.c.l.b16 %v926
        %v4870 = vunpack.c.h.b16 %v926
        %v4871 = vunpack.c.l.b16 %v927
        %v4872 = vunpack.c.h.b16 %v927
        %v4873 = vunpack.c.l.b16 %v928
        %v4874 = vunpack.c.l.b16 %v929
        %v4875 = vunpack.c.h.b16 %v929
        %v4876 = vunpack.c.l.b16 %v930
        %v4877 = vunpack.c.h.b16 %v930
        %v4878 = vunpack.c.l.b16 %v931
        %v4879 = vunpack.c.l.b16 %v932
        %v4880 = vunpack.c.h.b16 %v932
        %v4881 = vunpack.c.l.b16 %v933
        %v4882 = vunpack.c.h.b16 %v933
        %v4883 = vunpack.c.l.b16 %v934
        %v4884 = vunpack.c.l.b16 %v935
        %v4885 = vunpack.c.h.b16 %v935
        %v4886 = vunpack.c.l.b16 %v936
        %v4887 = vunpack.c.h.b16 %v936
        %v4888 = vunpack.c.l.b16 %v937
        %v4889 = vunpack.c.l.b16 %v938
        %v4890 = vunpack.c.h.b16 %v938
        %v4891 = vunpack.c.l.b16 %v939
        %v4892 = vunpack.c.h.b16 %v939
        %v4893 = vunpack.c.l.b16 %v940
        %v4894 = vunpack.c.l.b16 %v941
        %v4895 = vunpack.c.h.b16 %v941
        %v4896 = vunpack.c.l.b16 %v942
        %v4897 = vunpack.c.h.b16 %v942
        %v4898 = vunpack.c.l.b16 %v943
        %v4899 = vunpack.c.l.b16 %v944
        %v4900 = vunpack.c.h.b16 %v944
        %v4901 = vunpack.c.l.b16 %v945
        %v4902 = vunpack.c.h.b16 %v945
        %v4903 = vunpack.c.l.b16 %v946
        %v4904 = vunpack.c.l.b16 %v947
        %v4905 = vunpack.c.h.b16 %v947
        %v4906 = vunpack.c.l.b16 %v948
        %v4907 = vunpack.c.h.b16 %v948
        %v4908 = vunpack.c.l.b16 %v949
        %v4909 = vunpack.c.l.b16 %v950
        %v4910 = vunpack.c.h.b16 %v950
        %v4911 = vunpack.c.l.b16 %v951
        %v4912 = vunpack.c.h.b16 %v951
        %v4913 = vunpack.c.l.b16 %v952
        %v4914 = vunpack.c.l.b16 %v953
        %v4915 = vunpack.c.h.b16 %v953
        %v4916 = vunpack.c.l.b16 %v954
        %v4917 = vunpack.c.h.b16 %v954
        %v4918 = vunpack.c.l.b16 %v955
        %v4919 = vunpack.c.l.b16 %v956
        %v4920 = vunpack.c.h.b16 %v956
        %v4921 = vunpack.c.l.b16 %v957
        %v4922 = vunpack.c.h.b16 %v957
        %v4923 = vunpack.c.l.b16 %v958
        %v4924 = vunpack.c.l.b16 %v959
        %v4925 = vunpack.c.h.b16 %v959
        %v4926 = vunpack.c.l.b16 %v960
        %v4927 = vunpack.c.h.b16 %v960
        %v4928 = vunpack.c.l.b16 %v961
        %v4929 = vunpack.c.l.b16 %v962
        %v4930 = vunpack.c.h.b16 %v962
        %v4931 = vunpack.c.l.b16 %v963
        %v4932 = vunpack.c.h.b16 %v963
        %v4933 = vunpack.c.l.b16 %v964
        %v4934 = vunpack.c.l.b16 %v965
        %v4935 = vunpack.c.h.b16 %v965
        %v4936 = vunpack.c.l.b16 %v966
        %v4937 = vunpack.c.h.b16 %v966
        %v4938 = vunpack.c.l.b16 %v967
        %v4939 = vunpack.c.l.b16 %v968
        %v4940 = vunpack.c.h.b16 %v968
        %v4941 = vunpack.c.l.b16 %v969
        %v4942 = vunpack.c.h.b16 %v969
        %v4943 = vunpack.c.l.b16 %v970
        %v4944 = vunpack.c.l.b16 %v971
        %v4945 = vunpack.c.h.b16 %v971
        %v4946 = vunpack.c.l.b16 %v972
        %v4947 = vunpack.c.h.b16 %v972
        %v4948 = vunpack.c.l.b16 %v973
        %v4949 = vunpack.c.l.b16 %v974
        %v4950 = vunpack.c.h.b16 %v974
        %v4951 = vunpack.c.l.b16 %v975
        %v4952 = vunpack.c.h.b16 %v975
        %v4953 = vunpack.c.l.b16 %v976
        %v4954 = vunpack.c.l.b16 %v977
        %v4955 = vunpack.c.h.b16 %v977
        %v4956 = vunpack.c.l.b16 %v978
        %v4957 = vunpack.c.h.b16 %v978
        %v4958 = vunpack.c.l.b16 %v979
        %v4959 = vunpack.c.l.b16 %v980
        %v4960 = vunpack.c.h.b16 %v980
        %v4961 = vunpack.c.l.b16 %v981
        %v4962 = vunpack.c.h.b16 %v981
        %v4963 = vunpack.c.l.b16 %v982
        %v4964 = vunpack.c.l.b16 %v983
        %v4965 = vunpack.c.h.b16 %v983
        %v4966 = vunpack.c.l.b16 %v984
        %v4967 = vunpack.c.h.b16 %v984
        %v4968 = vunpack.c.l.b16 %v985
        %v4969 = vunpack.c.l.b16 %v986
        %v4970 = vunpack.c.h.b16 %v986
        %v4971 = vunpack.c.l.b16 %v987
        %v4972 = vunpack.c.h.b16 %v987
        %v4973 = vunpack.c.l.b16 %v988
        %v4974 = vunpack.c.l.b16 %v989
        %v4975 = vunpack.c.h.b16 %v989
        %v4976 = vunpack.c.l.b16 %v990
        %v4977 = vunpack.c.h.b16 %v990
        %v4978 = vunpack.c.l.b16 %v991
        %v4979 = vunpack.c.l.b16 %v992
        %v4980 = vunpack.c.h.b16 %v992
        %v4981 = vunpack.c.l.b16 %v993
        %v4982 = vunpack.c.h.b16 %v993
        %v4983 = vunpack.c.l.b16 %v994
        %v4984 = vunpack.c.l.b16 %v995
        %v4985 = vunpack.c.h.b16 %v995
        %v4986 = vunpack.c.l.b16 %v996
        %v4987 = vunpack.c.h.b16 %v996
        %v4988 = vunpack.c.l.b16 %v997
        %v4989 = vunpack.c.l.b16 %v998
        %v4990 = vunpack.c.h.b16 %v998
        %v4991 = vunpack.c.l.b16 %v999
        %v4992 = vunpack.c.h.b16 %v999
        %v4993 = vunpack.c.l.b16 %v1000
        %v4994 = vunpack.c.l.b16 %v1001
        %v4995 = vunpack.c.h.b16 %v1001
        %v4996 = vunpack.c.l.b16 %v1002
        %v4997 = vunpack.c.h.b16 %v1002
        %v4998 = vunpack.c.l.b16 %v1003
        %v4999 = vunpack.c.l.b16 %v1004
        %v5000 = vunpack.c.h.b16 %v1004
        %v5001 = vunpack.c.l.b16 %v1005
        %v5002 = vunpack.c.h.b16 %v1005
        %v5003 = vunpack.c.l.b16 %v1006
        %v5004 = vunpack.c.l.b16 %v1007
        %v5005 = vunpack.c.h.b16 %v1007
        %v5006 = vunpack.c.l.b16 %v1008
        %v5007 = vunpack.c.h.b16 %v1008
        %v5008 = vunpack.c.l.b16 %v1009
        %v5009 = vunpack.c.l.b16 %v1010
        %v5010 = vunpack.c.h.b16 %v1010
        %v5011 = vunpack.c.l.b16 %v1011
        %v5012 = vunpack.c.h.b16 %v1011
        %v5013 = vunpack.c.l.b16 %v1012
        %v5014 = vunpack.c.l.b16 %v1013
        %v5015 = vunpack.c.h.b16 %v1013
        %v5016 = vunpack.c.l.b16 %v1014
        %v5017 = vunpack.c.h.b16 %v1014
        %v5018 = vunpack.c.l.b16 %v1015
        %v5019 = vunpack.c.l.b16 %v1016
        %v5020 = vunpack.c.h.b16 %v1016
        %v5021 = vunpack.c.l.b16 %v1017
        %v5022 = vunpack.c.h.b16 %v1017
        %v5023 = vunpack.c.l.b16 %v1018
        %v5024 = vunpack.c.l.b16 %v1019
        %v5025 = vunpack.c.h.b16 %v1019
        %v5026 = vunpack.c.l.b16 %v1020
        %v5027 = vunpack.c.h.b16 %v1020
        %v5028 = vunpack.c.l.b16 %v1021
        %v5029 = vunpack.c.l.b16 %v1022
        %v5030 = vunpack.c.h.b16 %v1022
        %v5031 = vunpack.c.l.b16 %v1023
        %v5032 = vunpack.c.h.b16 %v1023
        %v5033 = vunpack.c.l.b16 %v1024
        %v5034 = vunpack.c.l.b16 %v1025
        %v5035 = vunpack.c.h.b16 %v1025
        %v5036 = vunpack.c.l.b16 %v1026
        %v5037 = vunpack.c.h.b16 %v1026
        %v5038 = vunpack.c.l.b16 %v1027
        %v5039 = vunpack.c.l.b16 %v1028
        %v5040 = vunpack.c.h.b16 %v1028
        %v5041 = vunpack.c.l.b16 %v1029
        %v5042 = vunpack.c.h.b16 %v1029
        %v5043 = vunpack.c.l.b16 %v1030
        %v5044 = vunpack.c.l.b16 %v1031
        %v5045 = vunpack.c.h.b16 %v1031
        %v5046 = vunpack.c.l.b16 %v1032
        %v5047 = vunpack.c.h.b16 %v1032
        %v5048 = vunpack.c.l.b16 %v1033
        %v5049 = vunpack.c.l.b16 %v1034
        %v5050 = vunpack.c.h.b16 %v1034
        %v5051 = vunpack.c.l.b16 %v1035
        %v5052 = vunpack.c.h.b16 %v1035
        %v5053 = vunpack.c.l.b16 %v1036
        %v5054 = vunpack.c.l.b16 %v1037
        %v5055 = vunpack.c.h.b16 %v1037
        %v5056 = vunpack.c.l.b16 %v1038
        %v5057 = vunpack.c.h.b16 %v1038
        %v5058 = vunpack.c.l.b16 %v1039
        %v5059 = vunpack.c.l.b16 %v1040
        %v5060 = vunpack.c.h.b16 %v1040
        %v5061 = vunpack.c.l.b16 %v1041
        %v5062 = vunpack.c.h.b16 %v1041
        %v5063 = vunpack.c.l.b16 %v1042
        %v5064 = vunpack.c.l.b16 %v1043
        %v5065 = vunpack.c.h.b16 %v1043
        %v5066 = vunpack.c.l.b16 %v1044
        %v5067 = vunpack.c.h.b16 %v1044
        %v5068 = vunpack.c.l.b16 %v1045
        %v5069 = vunpack.c.l.b16 %v1046
        %v5070 = vunpack.c.h.b16 %v1046
        %v5071 = vunpack.c.l.b16 %v1047
        %v5072 = vunpack.c.h.b16 %v1047
        %v5073 = vunpack.c.l.b16 %v1048
        %v5074 = vunpack.c.l.b16 %v1049
        %v5075 = vunpack.c.h.b16 %v1049
        %v5076 = vunpack.c.l.b16 %v1050
        %v5077 = vunpack.c.h.b16 %v1050
        %v5078 = vunpack.c.l.b16 %v1051
        %v5079 = vunpack.c.l.b16 %v1052
        %v5080 = vunpack.c.h.b16 %v1052
        %v5081 = vunpack.c.l.b16 %v1053
        %v5082 = vunpack.c.h.b16 %v1053
        %v5083 = vunpack.c.l.b16 %v1054
        %v5084 = vunpack.c.l.b16 %v1055
        %v5085 = vunpack.c.h.b16 %v1055
        %v5086 = vunpack.c.l.b16 %v1056
        %v5087 = vunpack.c.h.b16 %v1056
        %v5088 = vunpack.c.l.b16 %v1057
        %v5089 = vunpack.c.l.b16 %v1058
        %v5090 = vunpack.c.h.b16 %v1058
        %v5091 = vunpack.c.l.b16 %v1059
        %v5092 = vunpack.c.h.b16 %v1059
        %v5093 = vunpack.c.l.b16 %v1060
        %v5094 = vunpack.c.l.b16 %v1061
        %v5095 = vunpack.c.h.b16 %v1061
        %v5096 = vunpack.c.l.b16 %v1062
        %v5097 = vunpack.c.h.b16 %v1062
        %v5098 = vunpack.c.l.b16 %v1063
        %v5099 = vunpack.c.l.b16 %v1064
        %v5100 = vunpack.c.h.b16 %v1064
        %v5101 = vunpack.c.l.b16 %v1065
        %v5102 = vunpack.c.h.b16 %v1065
        %v5103 = vunpack.c.l.b16 %v1066
        %v5104 = vunpack.c.l.b16 %v1067
        %v5105 = vunpack.c.h.b16 %v1067
        %v5106 = vunpack.c.l.b16 %v1068
        %v5107 = vunpack.c.h.b16 %v1068
        %v5108 = vunpack.c.l.b16 %v1069
        %v5109 = vunpack.c.l.b16 %v1070
        %v5110 = vunpack.c.h.b16 %v1070
        %v5111 = vunpack.c.l.b16 %v1071
        %v5112 = vunpack.c.h.b16 %v1071
        %v5113 = vunpack.c.l.b16 %v1072
        %v5114 = vunpack.c.l.b16 %v1073
        %v5115 = vunpack.c.h.b16 %v1073
        %v5116 = vunpack.c.l.b16 %v1074
        %v5117 = vunpack.c.h.b16 %v1074
        %v5118 = vunpack.c.l.b16 %v1075
        %v5119 = vunpack.c.l.b16 %v1076
        %v5120 = vunpack.c.h.b16 %v1076
        %v5121 = vunpack.c.l.b16 %v1077
        %v5122 = vunpack.c.h.b16 %v1077
        %v5123 = vunpack.c.l.b16 %v1078
        %v5124 = vunpack.c.l.b16 %v1079
        %v5125 = vunpack.c.h.b16 %v1079
        %v5126 = vunpack.c.l.b16 %v1080
        %v5127 = vunpack.c.h.b16 %v1080
        %v5128 = vunpack.c.l.b16 %v1081
        %v5129 = vunpack.c.l.b16 %v1082
        %v5130 = vunpack.c.h.b16 %v1082
        %v5131 = vunpack.c.l.b16 %v1083
        %v5132 = vunpack.c.h.b16 %v1083
        %v5133 = vunpack.c.l.b16 %v1084
        %v5134 = vunpack.c.l.b16 %v1085
        %v5135 = vunpack.c.h.b16 %v1085
        %v5136 = vunpack.c.l.b16 %v1086
        %v5137 = vunpack.c.h.b16 %v1086
        %v5138 = vunpack.c.l.b16 %v1087
        %v5139 = vunpack.c.l.b16 %v1088
        %v5140 = vunpack.c.h.b16 %v1088
        %v5141 = vunpack.c.l.b16 %v1089
        %v5142 = vunpack.c.h.b16 %v1089
        %v5143 = vunpack.c.l.b16 %v1090
        %v5144 = vunpack.c.l.b16 %v1091
        %v5145 = vunpack.c.h.b16 %v1091
        %v5146 = vunpack.c.l.b16 %v1092
        %v5147 = vunpack.c.h.b16 %v1092
        %v5148 = vunpack.c.l.b16 %v1093
        %v5149 = vunpack.c.l.b16 %v1094
        %v5150 = vunpack.c.h.b16 %v1094
        %v5151 = vunpack.c.l.b16 %v1095
        %v5152 = vunpack.c.h.b16 %v1095
        %v5153 = vunpack.c.l.b16 %v1096
        %v5154 = vunpack.c.l.b16 %v1097
        %v5155 = vunpack.c.h.b16 %v1097
        %v5156 = vunpack.c.l.b16 %v1098
        %v5157 = vunpack.c.h.b16 %v1098
        %v5158 = vunpack.c.l.b16 %v1099
        %v5159 = vunpack.c.l.b16 %v1100
        %v5160 = vunpack.c.h.b16 %v1100
        %v5161 = vunpack.c.l.b16 %v1101
        %v5162 = vunpack.c.h.b16 %v1101
        %v5163 = vunpack.c.l.b16 %v1102
        %v5164 = vunpack.c.l.b16 %v1103
        %v5165 = vunpack.c.h.b16 %v1103
        %v5166 = vunpack.c.l.b16 %v1104
        %v5167 = vunpack.c.h.b16 %v1104
        %v5168 = vunpack.c.l.b16 %v1105
        %v5169 = vunpack.c.l.b16 %v1106
        %v5170 = vunpack.c.h.b16 %v1106
        %v5171 = vunpack.c.l.b16 %v1107
        %v5172 = vunpack.c.h.b16 %v1107
        %v5173 = vunpack.c.l.b16 %v1108
        %v5174 = vunpack.c.l.b16 %v1109
        %v5175 = vunpack.c.h.b16 %v1109
        %v5176 = vunpack.c.l.b16 %v1110
        %v5177 = vunpack.c.h.b16 %v1110
        %v5178 = vunpack.c.l.b16 %v1111
        %v5179 = vunpack.c.l.b16 %v1112
        %v5180 = vunpack.c.h.b16 %v1112
        %v5181 = vunpack.c.l.b16 %v1113
        %v5182 = vunpack.c.h.b16 %v1113
        %v5183 = vunpack.c.l.b16 %v1114
        %v5184 = vunpack.c.l.b16 %v1115
        %v5185 = vunpack.c.h.b16 %v1115
        %v5186 = vunpack.c.l.b16 %v1116
        %v5187 = vunpack.c.h.b16 %v1116
        %v5188 = vunpack.c.l.b16 %v1117
        %v5189 = vunpack.c.l.b16 %v1118
        %v5190 = vunpack.c.h.b16 %v1118
        %v5191 = vunpack.c.l.b16 %v1119
        %v5192 = vunpack.c.h.b16 %v1119
        %v5193 = vunpack.c.l.b16 %v1120
        %v5194 = vunpack.c.l.b16 %v1121
        %v5195 = vunpack.c.h.b16 %v1121
        %v5196 = vunpack.c.l.b16 %v1122
        %v5197 = vunpack.c.h.b16 %v1122
        %v5198 = vunpack.c.l.b16 %v1123
        %v5199 = vunpack.c.l.b16 %v1124
        %v5200 = vunpack.c.h.b16 %v1124
        %v5201 = vunpack.c.l.b16 %v1125
        %v5202 = vunpack.c.h.b16 %v1125
        %v5203 = vunpack.c.l.b16 %v1126
        %v5204 = vunpack.c.l.b16 %v1127
        %v5205 = vunpack.c.h.b16 %v1127
        %v5206 = vunpack.c.l.b16 %v1128
        %v5207 = vunpack.c.h.b16 %v1128
        %v5208 = vunpack.c.l.b16 %v1129
        %v5209 = vunpack.c.l.b16 %v1130
        %v5210 = vunpack.c.h.b16 %v1130
        %v5211 = vunpack.c.l.b16 %v1131
        %v5212 = vunpack.c.h.b16 %v1131
        %v5213 = vunpack.c.l.b16 %v1132
        %v5214 = vunpack.c.l.b16 %v1133
        %v5215 = vunpack.c.h.b16 %v1133
        %v5216 = vunpack.c.l.b16 %v1134
        %v5217 = vunpack.c.h.b16 %v1134
        %v5218 = vunpack.c.l.b16 %v1135
        %v5219 = vunpack.c.l.b16 %v1136
        %v5220 = vunpack.c.h.b16 %v1136
        %v5221 = vunpack.c.l.b16 %v1137
        %v5222 = vunpack.c.h.b16 %v1137
        %v5223 = vunpack.c.l.b16 %v1138
        %v5224 = vunpack.c.l.b16 %v1139
        %v5225 = vunpack.c.h.b16 %v1139
        %v5226 = vunpack.c.l.b16 %v1140
        %v5227 = vunpack.c.h.b16 %v1140
        %v5228 = vunpack.c.l.b16 %v1141
        %v5229 = vunpack.c.l.b16 %v1142
        %v5230 = vunpack.c.h.b16 %v1142
        %v5231 = vunpack.c.l.b16 %v1143
        %v5232 = vunpack.c.h.b16 %v1143
        %v5233 = vunpack.c.l.b16 %v1144
        %v5234 = vunpack.c.l.b16 %v1145
        %v5235 = vunpack.c.h.b16 %v1145
        %v5236 = vunpack.c.l.b16 %v1146
        %v5237 = vunpack.c.h.b16 %v1146
        %v5238 = vunpack.c.l.b16 %v1147
        %v5239 = vunpack.c.l.b16 %v1148
        %v5240 = vunpack.c.h.b16 %v1148
        %v5241 = vunpack.c.l.b16 %v1149
        %v5242 = vunpack.c.h.b16 %v1149
        %v5243 = vunpack.c.l.b16 %v1150
        %v5244 = vunpack.c.l.b16 %v1151
        %v5245 = vunpack.c.h.b16 %v1151
        %v5246 = vunpack.c.l.b16 %v1152
        %v5247 = vunpack.c.h.b16 %v1152
        %v5248 = vunpack.c.l.b16 %v1153
        %v5249 = vunpack.c.l.b16 %v1154
        %v5250 = vunpack.c.h.b16 %v1154
        %v5251 = vunpack.c.l.b16 %v1155
        %v5252 = vunpack.c.h.b16 %v1155
        %v5253 = vunpack.c.l.b16 %v1156
        %v5254 = vunpack.c.l.b16 %v1157
        %v5255 = vunpack.c.h.b16 %v1157
        %v5256 = vunpack.c.l.b16 %v1158
        %v5257 = vunpack.c.h.b16 %v1158
        %v5258 = vunpack.c.l.b16 %v1159
        %v5259 = vunpack.c.l.b16 %v1160
        %v5260 = vunpack.c.h.b16 %v1160
        %v5261 = vunpack.c.l.b16 %v1161
        %v5262 = vunpack.c.h.b16 %v1161
        %v5263 = vunpack.c.l.b16 %v1162
        %v5264 = vunpack.c.l.b16 %v1163
        %v5265 = vunpack.c.h.b16 %v1163
        %v5266 = vunpack.c.l.b16 %v1164
        %v5267 = vunpack.c.h.b16 %v1164
        %v5268 = vunpack.c.l.b16 %v1165
        %v5269 = vunpack.c.l.b16 %v1166
        %v5270 = vunpack.c.h.b16 %v1166
        %v5271 = vunpack.c.l.b16 %v1167
        %v5272 = vunpack.c.h.b16 %v1167
        %v5273 = vunpack.c.l.b16 %v1168
        %v5274 = vunpack.c.l.b16 %v1169
        %v5275 = vunpack.c.h.b16 %v1169
        %v5276 = vunpack.c.l.b16 %v1170
        %v5277 = vunpack.c.h.b16 %v1170
        %v5278 = vunpack.c.l.b16 %v1171
        %v5279 = vunpack.c.l.b16 %v1172
        %v5280 = vunpack.c.h.b16 %v1172
        %v5281 = vunpack.c.l.b16 %v1173
        %v5282 = vunpack.c.h.b16 %v1173
        %v5283 = vunpack.c.l.b16 %v1174
        %v5284 = vunpack.c.l.b16 %v1175
        %v5285 = vunpack.c.h.b16 %v1175
        %v5286 = vunpack.c.l.b16 %v1176
        %v5287 = vunpack.c.h.b16 %v1176
        %v5288 = vunpack.c.l.b16 %v1177
        %v5289 = vunpack.c.l.b16 %v1178
        %v5290 = vunpack.c.h.b16 %v1178
        %v5291 = vunpack.c.l.b16 %v1179
        %v5292 = vunpack.c.h.b16 %v1179
        %v5293 = vunpack.c.l.b16 %v1180
        %v5294 = vunpack.c.l.b16 %v1181
        %v5295 = vunpack.c.h.b16 %v1181
        %v5296 = vunpack.c.l.b16 %v1182
        %v5297 = vunpack.c.h.b16 %v1182
        %v5298 = vunpack.c.l.b16 %v1183
        %v5299 = vunpack.c.l.b16 %v1184
        %v5300 = vunpack.c.h.b16 %v1184
        %v5301 = vunpack.c.l.b16 %v1185
        %v5302 = vunpack.c.h.b16 %v1185
        %v5303 = vunpack.c.l.b16 %v1186
        %v5304 = vunpack.c.l.b16 %v1187
        %v5305 = vunpack.c.h.b16 %v1187
        %v5306 = vunpack.c.l.b16 %v1188
        %v5307 = vunpack.c.h.b16 %v1188
        %v5308 = vunpack.c.l.b16 %v1189
        %v5309 = vunpack.c.l.b16 %v1190
        %v5310 = vunpack.c.h.b16 %v1190
        %v5311 = vunpack.c.l.b16 %v1191
        %v5312 = vunpack.c.h.b16 %v1191
        %v5313 = vunpack.c.l.b16 %v1192
        %v5314 = vunpack.c.l.b16 %v1193
        %v5315 = vunpack.c.h.b16 %v1193
        %v5316 = vunpack.c.l.b16 %v1194
        %v5317 = vunpack.c.h.b16 %v1194
        %v5318 = vunpack.c.l.b16 %v1195
        %v5319 = vunpack.c.l.b16 %v1196
        %v5320 = vunpack.c.h.b16 %v1196
        %v5321 = vunpack.c.l.b16 %v1197
        %v5322 = vunpack.c.h.b16 %v1197
        %v5323 = vunpack.c.l.b16 %v1198
        %v5324 = vunpack.c.l.b16 %v1199
        %v5325 = vunpack.c.h.b16 %v1199
        %v5326 = vunpack.c.l.b16 %v1200
        %v5327 = vunpack.c.h.b16 %v1200
        %v5328 = vunpack.c.l.b16 %v1201
        %v5329 = vunpack.c.l.b16 %v1202
        %v5330 = vunpack.c.h.b16 %v1202
        %v5331 = vunpack.c.l.b16 %v1203
        %v5332 = vunpack.c.h.b16 %v1203
        %v5333 = vunpack.c.l.b16 %v1204
        %v5334 = vunpack.c.l.b16 %v1205
        %v5335 = vunpack.c.h.b16 %v1205
        %v5336 = vunpack.c.l.b16 %v1206
        %v5337 = vunpack.c.h.b16 %v1206
        %v5338 = vunpack.c.l.b16 %v1207
        %v5339 = vunpack.c.l.b16 %v1208
        %v5340 = vunpack.c.h.b16 %v1208
        %v5341 = vunpack.c.l.b16 %v1209
        %v5342 = vunpack.c.h.b16 %v1209
        %v5343 = vunpack.c.l.b16 %v1210
        %v5344 = vunpack.c.l.b16 %v1211
        %v5345 = vunpack.c.h.b16 %v1211
        %v5346 = vunpack.c.l.b16 %v1212
        %v5347 = vunpack.c.h.b16 %v1212
        %v5348 = vunpack.c.l.b16 %v1213
        %v5349 = vunpack.c.l.b16 %v1214
        %v5350 = vunpack.c.h.b16 %v1214
        %v5351 = vunpack.c.l.b16 %v1215
        %v5352 = vunpack.c.h.b16 %v1215
        %v5353 = vunpack.c.l.b16 %v1216
        %v5354 = vunpack.c.l.b16 %v1217
        %v5355 = vunpack.c.h.b16 %v1217
        %v5356 = vunpack.c.l.b16 %v1218
        %v5357 = vunpack.c.h.b16 %v1218
        %v5358 = vunpack.c.l.b16 %v1219
        %v5359 = vunpack.c.l.b16 %v1220
        %v5360 = vunpack.c.h.b16 %v1220
        %v5361 = vunpack.c.l.b16 %v1221
        %v5362 = vunpack.c.h.b16 %v1221
        %v5363 = vunpack.c.l.b16 %v1222
        %v5364 = vunpack.c.l.b16 %v1223
        %v5365 = vunpack.c.h.b16 %v1223
        %v5366 = vunpack.c.l.b16 %v1224
        %v5367 = vunpack.c.h.b16 %v1224
        %v5368 = vunpack.c.l.b16 %v1225
        %v5369 = vunpack.c.l.b16 %v1226
        %v5370 = vunpack.c.h.b16 %v1226
        %v5371 = vunpack.c.l.b16 %v1227
        %v5372 = vunpack.c.h.b16 %v1227
        %v5373 = vunpack.c.l.b16 %v1228
        %v5374 = vunpack.c.l.b16 %v1229
        %v5375 = vunpack.c.h.b16 %v1229
        %v5376 = vunpack.c.l.b16 %v1230
        %v5377 = vunpack.c.h.b16 %v1230
        %v5378 = vunpack.c.l.b16 %v1231
        %v5379 = vunpack.c.l.b16 %v1232
        %v5380 = vunpack.c.h.b16 %v1232
        %v5381 = vunpack.c.l.b16 %v1233
        %v5382 = vunpack.c.h.b16 %v1233
        %v5383 = vunpack.c.l.b16 %v1234
        %v5384 = vunpack.c.l.b16 %v1235
        %v5385 = vunpack.c.h.b16 %v1235
        %v5386 = vunpack.c.l.b16 %v1236
        %v5387 = vunpack.c.h.b16 %v1236
        %v5388 = vunpack.c.l.b16 %v1237
        %v5389 = vunpack.c.l.b16 %v1238
        %v5390 = vunpack.c.h.b16 %v1238
        %v5391 = vunpack.c.l.b16 %v1239
        %v5392 = vunpack.c.h.b16 %v1239
        %v5393 = vunpack.c.l.b16 %v1240
        %v5394 = vunpack.c.l.b16 %v1241
        %v5395 = vunpack.c.h.b16 %v1241
        %v5396 = vunpack.c.l.b16 %v1242
        %v5397 = vunpack.c.h.b16 %v1242
        %v5398 = vunpack.c.l.b16 %v1243
        %v5399 = vunpack.c.l.b16 %v1244
        %v5400 = vunpack.c.h.b16 %v1244
        %v5401 = vunpack.c.l.b16 %v1245
        %v5402 = vunpack.c.h.b16 %v1245
        %v5403 = vunpack.c.l.b16 %v1246
        %v5404 = vunpack.c.l.b16 %v1247
        %v5405 = vunpack.c.h.b16 %v1247
        %v5406 = vunpack.c.l.b16 %v1248
        %v5407 = vunpack.c.h.b16 %v1248
        %v5408 = vunpack.c.l.b16 %v1249
        %v5409 = vunpack.c.l.b16 %v1250
        %v5410 = vunpack.c.h.b16 %v1250
        %v5411 = vunpack.c.l.b16 %v1251
        %v5412 = vunpack.c.h.b16 %v1251
        %v5413 = vunpack.c.l.b16 %v1252
        %v5414 = vunpack.c.l.b16 %v1253
        %v5415 = vunpack.c.h.b16 %v1253
        %v5416 = vunpack.c.l.b16 %v1254
        %v5417 = vunpack.c.h.b16 %v1254
        %v5418 = vunpack.c.l.b16 %v1255
        %v5419 = vunpack.c.l.b16 %v1256
        %v5420 = vunpack.c.h.b16 %v1256
        %v5421 = vunpack.c.l.b16 %v1257
        %v5422 = vunpack.c.h.b16 %v1257
        %v5423 = vunpack.c.l.b16 %v1258
        %v5424 = vunpack.c.l.b16 %v1259
        %v5425 = vunpack.c.h.b16 %v1259
        %v5426 = vunpack.c.l.b16 %v1260
        %v5427 = vunpack.c.h.b16 %v1260
        %v5428 = vunpack.c.l.b16 %v1261
        %v5429 = vunpack.c.l.b16 %v1262
        %v5430 = vunpack.c.h.b16 %v1262
        %v5431 = vunpack.c.l.b16 %v1263
        %v5432 = vunpack.c.h.b16 %v1263
        %v5433 = vunpack.c.l.b16 %v1264
        %v5434 = vunpack.c.l.b16 %v1265
        %v5435 = vunpack.c.h.b16 %v1265
        %v5436 = vunpack.c.l.b16 %v1266
        %v5437 = vunpack.c.h.b16 %v1266
        %v5438 = vunpack.c.l.b16 %v1267
        %v5439 = vunpack.c.l.b16 %v1268
        %v5440 = vunpack.c.h.b16 %v1268
        %v5441 = vunpack.c.l.b16 %v1269
        %v5442 = vunpack.c.h.b16 %v1269
        %v5443 = vunpack.c.l.b16 %v1270
        %v5444 = vunpack.c.l.b16 %v1271
        %v5445 = vunpack.c.h.b16 %v1271
        %v5446 = vunpack.c.l.b16 %v1272
        %v5447 = vunpack.c.h.b16 %v1272
        %v5448 = vunpack.c.l.b16 %v1273
        %v5449 = vunpack.c.l.b16 %v1274
        %v5450 = vunpack.c.h.b16 %v1274
        %v5451 = vunpack.c.l.b16 %v1275
        %v5452 = vunpack.c.h.b16 %v1275
        %v5453 = vunpack.c.l.b16 %v1276
        %v5454 = vunpack.c.l.b16 %v1277
        %v5455 = vunpack.c.h.b16 %v1277
        %v5456 = vunpack.c.l.b16 %v1278
        %v5457 = vunpack.c.h.b16 %v1278
        %v5458 = vunpack.c.l.b16 %v1279
        %v5459 = vunpack.c.l.b16 %v1280
        %v5460 = vunpack.c.h.b16 %v1280
        %v5461 = vunpack.c.l.b16 %v1281
        %v5462 = vunpack.c.h.b16 %v1281
        %v5463 = vunpack.c.l.b16 %v1282
        %v5464 = vunpack.c.l.b16 %v1283
        %v5465 = vunpack.c.h.b16 %v1283
        %v5466 = vunpack.c.l.b16 %v1284
        %v5467 = vunpack.c.h.b16 %v1284
        %v5468 = vunpack.c.l.b16 %v1285
        %v5469 = vunpack.c.l.b16 %v1286
        %v5470 = vunpack.c.h.b16 %v1286
        %v5471 = vunpack.c.l.b16 %v1287
        %v5472 = vunpack.c.h.b16 %v1287
        %v5473 = vunpack.c.l.b16 %v1288
        %v5474 = vunpack.c.l.b16 %v1289
        %v5475 = vunpack.c.h.b16 %v1289
        %v5476 = vunpack.c.l.b16 %v1290
        %v5477 = vunpack.c.h.b16 %v1290
        %v5478 = vunpack.c.l.b16 %v1291
        %v5479 = vunpack.c.l.b16 %v1292
        %v5480 = vunpack.c.h.b16 %v1292
        %v5481 = vunpack.c.l.b16 %v1293
        %v5482 = vunpack.c.h.b16 %v1293
        %v5483 = vunpack.c.l.b16 %v1294
        %v5484 = vunpack.c.l.b16 %v1295
        %v5485 = vunpack.c.h.b16 %v1295
        %v5486 = vunpack.c.l.b16 %v1296
        %v5487 = vunpack.c.h.b16 %v1296
        %v5488 = vunpack.c.l.b16 %v1297
        %v5489 = vunpack.c.l.b16 %v1298
        %v5490 = vunpack.c.h.b16 %v1298
        %v5491 = vunpack.c.l.b16 %v1299
        %v5492 = vunpack.c.h.b16 %v1299
        %v5493 = vunpack.c.l.b16 %v1300
        %v5494 = vunpack.c.l.b16 %v1301
        %v5495 = vunpack.c.h.b16 %v1301
        %v5496 = vunpack.c.l.b16 %v1302
        %v5497 = vunpack.c.h.b16 %v1302
        %v5498 = vunpack.c.l.b16 %v1303
        %v5499 = vunpack.c.l.b16 %v1304
        %v5500 = vunpack.c.h.b16 %v1304
        %v5501 = vunpack.c.l.b16 %v1305
        %v5502 = vunpack.c.h.b16 %v1305
        %v5503 = vunpack.c.l.b16 %v1306
        %v5504 = vunpack.c.l.b16 %v1307
        %v5505 = vunpack.c.h.b16 %v1307
        %v5506 = vunpack.c.l.b16 %v1308
        %v5507 = vunpack.c.h.b16 %v1308
        %v5508 = vunpack.c.l.b16 %v1309
        %v5509 = vunpack.c.l.b16 %v1310
        %v5510 = vunpack.c.h.b16 %v1310
        %v5511 = vunpack.c.l.b16 %v1311
        %v5512 = vunpack.c.h.b16 %v1311
        %v5513 = vunpack.c.l.b16 %v1312
        %v5514 = vunpack.c.l.b16 %v1313
        %v5515 = vunpack.c.h.b16 %v1313
        %v5516 = vunpack.c.l.b16 %v1314
        %v5517 = vunpack.c.h.b16 %v1314
        %v5518 = vunpack.c.l.b16 %v1315
        %v5519 = vunpack.c.l.b16 %v1316
        %v5520 = vunpack.c.h.b16 %v1316
        %v5521 = vunpack.c.l.b16 %v1317
        %v5522 = vunpack.c.h.b16 %v1317
        %v5523 = vunpack.c.l.b16 %v1318
        %v5524 = vunpack.c.l.b16 %v1319
        %v5525 = vunpack.c.h.b16 %v1319
        %v5526 = vunpack.c.l.b16 %v1320
        %v5527 = vunpack.c.h.b16 %v1320
        %v5528 = vunpack.c.l.b16 %v1321
        %v5529 = vunpack.c.l.b16 %v1322
        %v5530 = vunpack.c.h.b16 %v1322
        %v5531 = vunpack.c.l.b16 %v1323
        %v5532 = vunpack.c.h.b16 %v1323
        %v5533 = vunpack.c.l.b16 %v1324
        %v5534 = vunpack.c.l.b16 %v1325
        %v5535 = vunpack.c.h.b16 %v1325
        %v5536 = vunpack.c.l.b16 %v1326
        %v5537 = vunpack.c.h.b16 %v1326
        %v5538 = vunpack.c.l.b16 %v1327
        %v5539 = vunpack.c.l.b16 %v1328
        %v5540 = vunpack.c.h.b16 %v1328
        %v5541 = vunpack.c.l.b16 %v1329
        %v5542 = vunpack.c.h.b16 %v1329
        %v5543 = vunpack.c.l.b16 %v1330
        %v5544 = vunpack.c.l.b16 %v1331
        %v5545 = vunpack.c.h.b16 %v1331
        %v5546 = vunpack.c.l.b16 %v1332
        %v5547 = vunpack.c.h.b16 %v1332
        %v5548 = vunpack.c.l.b16 %v1333
        %v5549 = vunpack.c.l.b16 %v1334
        %v5550 = vunpack.c.h.b16 %v1334
        %v5551 = vunpack.c.l.b16 %v1335
        %v5552 = vunpack.c.h.b16 %v1335
        %v5553 = vunpack.c.l.b16 %v1336
        %v5554 = vunpack.c.l.b16 %v1337
        %v5555 = vunpack.c.h.b16 %v1337
        %v5556 = vunpack.c.l.b16 %v1338
        %v5557 = vunpack.c.h.b16 %v1338
        %v5558 = vunpack.c.l.b16 %v1339
        %v5559 = vunpack.c.l.b16 %v1340
        %v5560 = vunpack.c.h.b16 %v1340
        %v5561 = vunpack.c.l.b16 %v1341
        %v5562 = vunpack.c.h.b16 %v1341
        %v5563 = vunpack.c.l.b16 %v1342
        %v5564 = vunpack.c.l.b16 %v1343
        %v5565 = vunpack.c.h.b16 %v1343
        %v5566 = vunpack.c.l.b16 %v1344
        %v5567 = vunpack.c.h.b16 %v1344
        %v5568 = vunpack.c.l.b16 %v1345
        %v5569 = vunpack.c.l.b16 %v1346
        %v5570 = vunpack.c.h.b16 %v1346
        %v5571 = vunpack.c.l.b16 %v1347
        %v5572 = vunpack.c.h.b16 %v1347
        %v5573 = vunpack.c.l.b16 %v1348
        %v5574 = vunpack.c.l.b16 %v1349
        %v5575 = vunpack.c.h.b16 %v1349
        %v5576 = vunpack.c.l.b16 %v1350
        %v5577 = vunpack.c.h.b16 %v1350
        %v5578 = vunpack.c.l.b16 %v1351
        %v5579 = vunpack.c.l.b16 %v1352
        %v5580 = vunpack.c.h.b16 %v1352
        %v5581 = vunpack.c.l.b16 %v1353
        %v5582 = vunpack.c.h.b16 %v1353
        %v5583 = vunpack.c.l.b16 %v1354
        %v5584 = vunpack.c.l.b16 %v1355
        %v5585 = vunpack.c.h.b16 %v1355
        %v5586 = vunpack.c.l.b16 %v1356
        %v5587 = vunpack.c.h.b16 %v1356
        %v5588 = vunpack.c.l.b16 %v1357
        %v5589 = vunpack.c.l.b16 %v1358
        %v5590 = vunpack.c.h.b16 %v1358
        %v5591 = vunpack.c.l.b16 %v1359
        %v5592 = vunpack.c.h.b16 %v1359
        %v5593 = vunpack.c.l.b16 %v1360
        %v5594 = vunpack.c.l.b16 %v1361
        %v5595 = vunpack.c.h.b16 %v1361
        %v5596 = vunpack.c.l.b16 %v1362
        %v5597 = vunpack.c.h.b16 %v1362
        %v5598 = vunpack.c.l.b16 %v1363
        %v5599 = vunpack.c.l.b16 %v1364
        %v5600 = vunpack.c.h.b16 %v1364
        %v5601 = vunpack.c.l.b16 %v1365
        %v5602 = vunpack.c.h.b16 %v1365
        %v5603 = vunpack.c.l.b16 %v1366
        %v5604 = vunpack.c.l.b16 %v1367
        %v5605 = vunpack.c.h.b16 %v1367
        %v5606 = vunpack.c.l.b16 %v1368
        %v5607 = vunpack.c.h.b16 %v1368
        %v5608 = vunpack.c.l.b16 %v1369
        %v5609 = vunpack.c.l.b16 %v1370
        %v5610 = vunpack.c.h.b16 %v1370
        %v5611 = vunpack.c.l.b16 %v1371
        %v5612 = vunpack.c.h.b16 %v1371
        %v5613 = vunpack.c.l.b16 %v1372
        %v5614 = vunpack.c.l.b16 %v1373
        %v5615 = vunpack.c.h.b16 %v1373
        %v5616 = vunpack.c.l.b16 %v1374
        %v5617 = vunpack.c.h.b16 %v1374
        %v5618 = vunpack.c.l.b16 %v1375
        %v5619 = vunpack.c.l.b16 %v1376
        %v5620 = vunpack.c.h.b16 %v1376
        %v5621 = vunpack.c.l.b16 %v1377
        %v5622 = vunpack.c.h.b16 %v1377
        %v5623 = vunpack.c.l.b16 %v1378
        %v5624 = vunpack.c.l.b16 %v1379
        %v5625 = vunpack.c.h.b16 %v1379
        %v5626 = vunpack.c.l.b16 %v1380
        %v5627 = vunpack.c.h.b16 %v1380
        %v5628 = vunpack.c.l.b16 %v1381
        %v5629 = vunpack.c.l.b16 %v1382
        %v5630 = vunpack.c.h.b16 %v1382
        %v5631 = vunpack.c.l.b16 %v1383
        %v5632 = vunpack.c.h.b16 %v1383
        %v5633 = vunpack.c.l.b16 %v1384
        %v5634 = vunpack.c.l.b16 %v1385
        %v5635 = vunpack.c.h.b16 %v1385
        %v5636 = vunpack.c.l.b16 %v1386
        %v5637 = vunpack.c.h.b16 %v1386
        %v5638 = vunpack.c.l.b16 %v1387
        %v5639 = vunpack.c.l.b16 %v1388
        %v5640 = vunpack.c.h.b16 %v1388
        %v5641 = vunpack.c.l.b16 %v1389
        %v5642 = vunpack.c.h.b16 %v1389
        %v5643 = vunpack.c.l.b16 %v1390
        %v5644 = vunpack.c.l.b16 %v1391
        %v5645 = vunpack.c.h.b16 %v1391
        %v5646 = vunpack.c.l.b16 %v1392
        %v5647 = vunpack.c.h.b16 %v1392
        %v5648 = vunpack.c.l.b16 %v1393
        %v5649 = vunpack.c.l.b16 %v1394
        %v5650 = vunpack.c.h.b16 %v1394
        %v5651 = vunpack.c.l.b16 %v1395
        %v5652 = vunpack.c.h.b16 %v1395
        %v5653 = vunpack.c.l.b16 %v1396
        %v5654 = vunpack.c.l.b16 %v1397
        %v5655 = vunpack.c.h.b16 %v1397
        %v5656 = vunpack.c.l.b16 %v1398
        %v5657 = vunpack.c.h.b16 %v1398
        %v5658 = vunpack.c.l.b16 %v1399
        %v5659 = vunpack.c.l.b16 %v1400
        %v5660 = vunpack.c.h.b16 %v1400
        %v5661 = vunpack.c.l.b16 %v1401
        %v5662 = vunpack.c.h.b16 %v1401
        %v5663 = vunpack.c.l.b16 %v1402
        %v5664 = vunpack.c.l.b16 %v1403
        %v5665 = vunpack.c.h.b16 %v1403
        %v5666 = vunpack.c.l.b16 %v1404
        %v5667 = vunpack.c.h.b16 %v1404
        %v5668 = vunpack.c.l.b16 %v1405
        %v5669 = vunpack.c.l.b16 %v1406
        %v5670 = vunpack.c.h.b16 %v1406
        %v5671 = vunpack.c.l.b16 %v1407
        %v5672 = vunpack.c.h.b16 %v1407
        %v5673 = vunpack.c.l.b16 %v1408
        %v5674 = vunpack.c.l.b16 %v1409
        %v5675 = vunpack.c.h.b16 %v1409
        %v5676 = vunpack.c.l.b16 %v1410
        %v5677 = vunpack.c.h.b16 %v1410
        %v5678 = vunpack.c.l.b16 %v1411
        %v5679 = vunpack.c.l.b16 %v1412
        %v5680 = vunpack.c.h.b16 %v1412
        %v5681 = vunpack.c.l.b16 %v1413
        %v5682 = vunpack.c.h.b16 %v1413
        %v5683 = vunpack.c.l.b16 %v1414
        %v5684 = vunpack.c.l.b16 %v1415
        %v5685 = vunpack.c.h.b16 %v1415
        %v5686 = vunpack.c.l.b16 %v1416
        %v5687 = vunpack.c.h.b16 %v1416
        %v5688 = vunpack.c.l.b16 %v1417
        %v5689 = vunpack.c.l.b16 %v1418
        %v5690 = vunpack.c.h.b16 %v1418
        %v5691 = vunpack.c.l.b16 %v1419
        %v5692 = vunpack.c.h.b16 %v1419
        %v5693 = vunpack.c.l.b16 %v1420
        %v5694 = vunpack.c.l.b16 %v1421
        %v5695 = vunpack.c.h.b16 %v1421
        %v5696 = vunpack.c.l.b16 %v1422
        %v5697 = vunpack.c.h.b16 %v1422
        %v5698 = vunpack.c.l.b16 %v1423
        %v5699 = vunpack.c.l.b16 %v1424
        %v5700 = vunpack.c.h.b16 %v1424
        %v5701 = vunpack.c.l.b16 %v1425
        %v5702 = vunpack.c.h.b16 %v1425
        %v5703 = vunpack.c.l.b16 %v1426
        %v5704 = vunpack.c.l.b16 %v1427
        %v5705 = vunpack.c.h.b16 %v1427
        %v5706 = vunpack.c.l.b16 %v1428
        %v5707 = vunpack.c.h.b16 %v1428
        %v5708 = vunpack.c.l.b16 %v1429
        %v5709 = vunpack.c.l.b16 %v1430
        %v5710 = vunpack.c.h.b16 %v1430
        %v5711 = vunpack.c.l.b16 %v1431
        %v5712 = vunpack.c.h.b16 %v1431
        %v5713 = vunpack.c.l.b16 %v1432
        %v5714 = vunpack.c.l.b16 %v1433
        %v5715 = vunpack.c.h.b16 %v1433
        %v5716 = vunpack.c.l.b16 %v1434
        %v5717 = vunpack.c.h.b16 %v1434
        %v5718 = vunpack.c.l.b16 %v1435
        %v5719 = vunpack.c.l.b16 %v1436
        %v5720 = vunpack.c.h.b16 %v1436
        %v5721 = vunpack.c.l.b16 %v1437
        %v5722 = vunpack.c.h.b16 %v1437
        %v5723 = vunpack.c.l.b16 %v1438
        %v5724 = vunpack.c.l.b16 %v1439
        %v5725 = vunpack.c.h.b16 %v1439
        %v5726 = vunpack.c.l.b16 %v1440
        %v5727 = vunpack.c.h.b16 %v1440
        %v5728 = vunpack.c.l.b16 %v1441
        %v5729 = vunpack.c.l.b16 %v1442
        %v5730 = vunpack.c.h.b16 %v1442
        %v5731 = vunpack.c.l.b16 %v1443
        %v5732 = vunpack.c.h.b16 %v1443
        %v5733 = vunpack.c.l.b16 %v1444
        %v5734 = vunpack.c.l.b16 %v1445
        %v5735 = vunpack.c.h.b16 %v1445
        %v5736 = vunpack.c.l.b16 %v1446
        %v5737 = vunpack.c.h.b16 %v1446
        %v5738 = vunpack.c.l.b16 %v1447
        %v5739 = vunpack.c.l.b16 %v1448
        %v5740 = vunpack.c.h.b16 %v1448
        %v5741 = vunpack.c.l.b16 %v1449
        %v5742 = vunpack.c.h.b16 %v1449
        %v5743 = vunpack.c.l.b16 %v1450
        %v5744 = vunpack.c.l.b16 %v1451
        %v5745 = vunpack.c.h.b16 %v1451
        %v5746 = vunpack.c.l.b16 %v1452
        %v5747 = vunpack.c.h.b16 %v1452
        %v5748 = vunpack.c.l.b16 %v1453
        %v5749 = vunpack.c.l.b16 %v1454
        %v5750 = vunpack.c.h.b16 %v1454
        %v5751 = vunpack.c.l.b16 %v1455
        %v5752 = vunpack.c.h.b16 %v1455
        %v5753 = vunpack.c.l.b16 %v1456
        %v5754 = vunpack.c.l.b16 %v1457
        %v5755 = vunpack.c.h.b16 %v1457
        %v5756 = vunpack.c.l.b16 %v1458
        %v5757 = vunpack.c.h.b16 %v1458
        %v5758 = vunpack.c.l.b16 %v1459
        %v5759 = vunpack.c.l.b16 %v1460
        %v5760 = vunpack.c.h.b16 %v1460
        %v5761 = vunpack.c.l.b16 %v1461
        %v5762 = vunpack.c.h.b16 %v1461
        %v5763 = vunpack.c.l.b16 %v1462
        %v5764 = vunpack.c.l.b16 %v1463
        %v5765 = vunpack.c.h.b16 %v1463
        %v5766 = vunpack.c.l.b16 %v1464
        %v5767 = vunpack.c.h.b16 %v1464
        %v5768 = vunpack.c.l.b16 %v1465
        %v5769 = vunpack.c.l.b16 %v1466
        %v5770 = vunpack.c.h.b16 %v1466
        %v5771 = vunpack.c.l.b16 %v1467
        %v5772 = vunpack.c.h.b16 %v1467
        %v5773 = vunpack.c.l.b16 %v1468
        %v5774 = vunpack.c.l.b16 %v1469
        %v5775 = vunpack.c.h.b16 %v1469
        %v5776 = vunpack.c.l.b16 %v1470
        %v5777 = vunpack.c.h.b16 %v1470
        %v5778 = vunpack.c.l.b16 %v1471
        %v5779 = vunpack.c.l.b16 %v1472
        %v5780 = vunpack.c.h.b16 %v1472
        %v5781 = vunpack.c.l.b16 %v1473
        %v5782 = vunpack.c.h.b16 %v1473
        %v5783 = vunpack.c.l.b16 %v1474
        %v5784 = vunpack.c.l.b16 %v1475
        %v5785 = vunpack.c.h.b16 %v1475
        %v5786 = vunpack.c.l.b16 %v1476
        %v5787 = vunpack.c.h.b16 %v1476
        %v5788 = vunpack.c.l.b16 %v1477
        %v5789 = vunpack.c.l.b16 %v1478
        %v5790 = vunpack.c.h.b16 %v1478
        %v5791 = vunpack.c.l.b16 %v1479
        %v5792 = vunpack.c.h.b16 %v1479
        %v5793 = vunpack.c.l.b16 %v1480
        %v5794 = vunpack.c.l.b16 %v1481
        %v5795 = vunpack.c.h.b16 %v1481
        %v5796 = vunpack.c.l.b16 %v1482
        %v5797 = vunpack.c.h.b16 %v1482
        %v5798 = vunpack.c.l.b16 %v1483
        %v5799 = vunpack.c.l.b16 %v1484
        %v5800 = vunpack.c.h.b16 %v1484
        %v5801 = vunpack.c.l.b16 %v1485
        %v5802 = vunpack.c.h.b16 %v1485
        %v5803 = vunpack.c.l.b16 %v1486
        %v5804 = vunpack.c.l.b16 %v1487
        %v5805 = vunpack.c.h.b16 %v1487
        %v5806 = vunpack.c.l.b16 %v1488
        %v5807 = vunpack.c.h.b16 %v1488
        %v5808 = vunpack.c.l.b16 %v1489
        %v5809 = vunpack.c.l.b16 %v1490
        %v5810 = vunpack.c.h.b16 %v1490
        %v5811 = vunpack.c.l.b16 %v1491
        %v5812 = vunpack.c.h.b16 %v1491
        %v5813 = vunpack.c.l.b16 %v1492
        %v5814 = vunpack.c.l.b16 %v1493
        %v5815 = vunpack.c.h.b16 %v1493
        %v5816 = vunpack.c.l.b16 %v1494
        %v5817 = vunpack.c.h.b16 %v1494
        %v5818 = vunpack.c.l.b16 %v1495
        %v5819 = vunpack.c.l.b16 %v1496
        %v5820 = vunpack.c.h.b16 %v1496
        %v5821 = vunpack.c.l.b16 %v1497
        %v5822 = vunpack.c.h.b16 %v1497
        %v5823 = vunpack.c.l.b16 %v1498
        %v5824 = vunpack.c.l.b16 %v1499
        %v5825 = vunpack.c.h.b16 %v1499
        %v5826 = vunpack.c.l.b16 %v1500
        %v5827 = vunpack.c.h.b16 %v1500
        %v5828 = vunpack.c.l.b16 %v1501
        %v5829 = vunpack.c.l.b16 %v1502
        %v5830 = vunpack.c.h.b16 %v1502
        %v5831 = vunpack.c.l.b16 %v1503
        %v5832 = vunpack.c.h.b16 %v1503
        %v5833 = vunpack.c.l.b16 %v1504
        %v5834 = vunpack.c.l.b16 %v1505
        %v5835 = vunpack.c.h.b16 %v1505
        %v5836 = vunpack.c.l.b16 %v1506
        %v5837 = vunpack.c.h.b16 %v1506
        %v5838 = vunpack.c.l.b16 %v1507
        %v5839 = vunpack.c.l.b16 %v1508
        %v5840 = vunpack.c.h.b16 %v1508
        %v5841 = vunpack.c.l.b16 %v1509
        %v5842 = vunpack.c.h.b16 %v1509
        %v5843 = vunpack.c.l.b16 %v1510
        %v5844 = vunpack.c.l.b16 %v1511
        %v5845 = vunpack.c.h.b16 %v1511
        %v5846 = vunpack.c.l.b16 %v1512
        %v5847 = vunpack.c.h.b16 %v1512
        %v5848 = vunpack.c.l.b16 %v1513
        %v5849 = vunpack.c.l.b16 %v1514
        %v5850 = vunpack.c.h.b16 %v1514
        %v5851 = vunpack.c.l.b16 %v1515
        %v5852 = vunpack.c.h.b16 %v1515
        %v5853 = vunpack.c.l.b16 %v1516
        %v5854 = vunpack.c.l.b16 %v1517
        %v5855 = vunpack.c.h.b16 %v1517
        %v5856 = vunpack.c.l.b16 %v1518
        %v5857 = vunpack.c.h.b16 %v1518
        %v5858 = vunpack.c.l.b16 %v1519
        %v5859 = vunpack.c.l.b16 %v1520
        %v5860 = vunpack.c.h.b16 %v1520
        %v5861 = vunpack.c.l.b16 %v1521
        %v5862 = vunpack.c.h.b16 %v1521
        %v5863 = vunpack.c.l.b16 %v1522
        %v5864 = vunpack.c.l.b16 %v1523
        %v5865 = vunpack.c.h.b16 %v1523
        %v5866 = vunpack.c.l.b16 %v1524
        %v5867 = vunpack.c.h.b16 %v1524
        %v5868 = vunpack.c.l.b16 %v1525
        %v5869 = vunpack.c.l.b16 %v1526
        %v5870 = vunpack.c.h.b16 %v1526
        %v5871 = vunpack.c.l.b16 %v1527
        %v5872 = vunpack.c.h.b16 %v1527
        %v5873 = vunpack.c.l.b16 %v1528
        %v5874 = vunpack.c.l.b16 %v1529
        %v5875 = vunpack.c.h.b16 %v1529
        %v5876 = vunpack.c.l.b16 %v1530
        %v5877 = vunpack.c.h.b16 %v1530
        %v5878 = vunpack.c.l.b16 %v1531
        %v5879 = vunpack.c.l.b16 %v1532
        %v5880 = vunpack.c.h.b16 %v1532
        %v5881 = vunpack.c.l.b16 %v1533
        %v5882 = vunpack.c.h.b16 %v1533
        %v5883 = vunpack.c.l.b16 %v1534
        %v5884 = vunpack.c.l.b16 %v1535
        %v5885 = vunpack.c.h.b16 %v1535
        %v5886 = vunpack.c.l.b16 %v1536
        %v5887 = vunpack.c.h.b16 %v1536
        %v5888 = vunpack.c.l.b16 %v1537
        %v5889 = vunpack.c.l.b16 %v1538
        %v5890 = vunpack.c.h.b16 %v1538
        %v5891 = vunpack.c.l.b16 %v1539
        %v5892 = vunpack.c.h.b16 %v1539
        %v5893 = vunpack.c.l.b16 %v1540
        %v5894 = vunpack.c.l.b16 %v1541
        %v5895 = vunpack.c.h.b16 %v1541
        %v5896 = vunpack.c.l.b16 %v1542
        %v5897 = vunpack.c.h.b16 %v1542
        %v5898 = vunpack.c.l.b16 %v1543
        %v5899 = vunpack.c.l.b16 %v1544
        %v5900 = vunpack.c.h.b16 %v1544
        %v5901 = vunpack.c.l.b16 %v1545
        %v5902 = vunpack.c.h.b16 %v1545
        %v5903 = vunpack.c.l.b16 %v1546
        %v5904 = vunpack.c.l.b16 %v1547
        %v5905 = vunpack.c.h.b16 %v1547
        %v5906 = vunpack.c.l.b16 %v1548
        %v5907 = vunpack.c.h.b16 %v1548
        %v5908 = vunpack.c.l.b16 %v1549
        %v5909 = vunpack.c.l.b16 %v1550
        %v5910 = vunpack.c.h.b16 %v1550
        %v5911 = vunpack.c.l.b16 %v1551
        %v5912 = vunpack.c.h.b16 %v1551
        %v5913 = vunpack.c.l.b16 %v1552
        %v5914 = vunpack.c.l.b16 %v1553
        %v5915 = vunpack.c.h.b16 %v1553
        %v5916 = vunpack.c.l.b16 %v1554
        %v5917 = vunpack.c.h.b16 %v1554
        %v5918 = vunpack.c.l.b16 %v1555
        %v5919 = vunpack.c.l.b16 %v1556
        %v5920 = vunpack.c.h.b16 %v1556
        %v5921 = vunpack.c.l.b16 %v1557
        %v5922 = vunpack.c.h.b16 %v1557
        %v5923 = vunpack.c.l.b16 %v1558
        %v5924 = vunpack.c.l.b16 %v1559
        %v5925 = vunpack.c.h.b16 %v1559
        %v5926 = vunpack.c.l.b16 %v1560
        %v5927 = vunpack.c.h.b16 %v1560
        %v5928 = vunpack.c.l.b16 %v1561
        %v5929 = vunpack.c.l.b16 %v1562
        %v5930 = vunpack.c.h.b16 %v1562
        %v5931 = vunpack.c.l.b16 %v1563
        %v5932 = vunpack.c.h.b16 %v1563
        %v5933 = vunpack.c.l.b16 %v1564
        %v5934 = vunpack.c.l.b16 %v1565
        %v5935 = vunpack.c.h.b16 %v1565
        %v5936 = vunpack.c.l.b16 %v1566
        %v5937 = vunpack.c.h.b16 %v1566
        %v5938 = vunpack.c.l.b16 %v1567
        %v5939 = vunpack.c.l.b16 %v1568
        %v5940 = vunpack.c.h.b16 %v1568
        %v5941 = vunpack.c.l.b16 %v1569
        %v5942 = vunpack.c.h.b16 %v1569
        %v5943 = vunpack.c.l.b16 %v1570
        %v5944 = vunpack.c.l.b16 %v1571
        %v5945 = vunpack.c.h.b16 %v1571
        %v5946 = vunpack.c.l.b16 %v1572
        %v5947 = vunpack.c.h.b16 %v1572
        %v5948 = vunpack.c.l.b16 %v1573
        %v5949 = vunpack.c.l.b16 %v1574
        %v5950 = vunpack.c.h.b16 %v1574
        %v5951 = vunpack.c.l.b16 %v1575
        %v5952 = vunpack.c.h.b16 %v1575
        %v5953 = vunpack.c.l.b16 %v1576
        %v5954 = vunpack.c.l.b16 %v1577
        %v5955 = vunpack.c.h.b16 %v1577
        %v5956 = vunpack.c.l.b16 %v1578
        %v5957 = vunpack.c.h.b16 %v1578
        %v5958 = vunpack.c.l.b16 %v1579
        %v5959 = vunpack.c.l.b16 %v1580
        %v5960 = vunpack.c.h.b16 %v1580
        %v5961 = vunpack.c.l.b16 %v1581
        %v5962 = vunpack.c.h.b16 %v1581
        %v5963 = vunpack.c.l.b16 %v1582
        %v5964 = vunpack.c.l.b16 %v1583
        %v5965 = vunpack.c.h.b16 %v1583
        %v5966 = vunpack.c.l.b16 %v1584
        %v5967 = vunpack.c.h.b16 %v1584
        %v5968 = vunpack.c.l.b16 %v1585
        %v5969 = vunpack.c.l.b16 %v1586
        %v5970 = vunpack.c.h.b16 %v1586
        %v5971 = vunpack.c.l.b16 %v1587
        %v5972 = vunpack.c.h.b16 %v1587
        %v5973 = vunpack.c.l.b16 %v1588
        %v5974 = vunpack.c.l.b16 %v1589
        %v5975 = vunpack.c.h.b16 %v1589
        %v5976 = vunpack.c.l.b16 %v1590
        %v5977 = vunpack.c.h.b16 %v1590
        %v5978 = vunpack.c.l.b16 %v1591
        %v5979 = vunpack.c.l.b16 %v1592
        %v5980 = vunpack.c.h.b16 %v1592
        %v5981 = vunpack.c.l.b16 %v1593
        %v5982 = vunpack.c.h.b16 %v1593
        %v5983 = vunpack.c.l.b16 %v1594
        %v5984 = vunpack.c.l.b16 %v1595
        %v5985 = vunpack.c.h.b16 %v1595
        %v5986 = vunpack.c.l.b16 %v1596
        %v5987 = vunpack.c.h.b16 %v1596
        %v5988 = vunpack.c.l.b16 %v1597
        %v5989 = vunpack.c.l.b16 %v1598
        %v5990 = vunpack.c.h.b16 %v1598
        %v5991 = vunpack.c.l.b16 %v1599
        %v5992 = vunpack.c.h.b16 %v1599
        %v5993 = vunpack.c.l.b16 %v1600
        %v5994 = vunpack.c.l.b16 %v1601
        %v5995 = vunpack.c.h.b16 %v1601
        %v5996 = vunpack.c.l.b16 %v1602
        %v5997 = vunpack.c.h.b16 %v1602
        %v5998 = vunpack.c.l.b16 %v1603
        %v5999 = vunpack.c.l.b16 %v1604
        %v6000 = vunpack.c.h.b16 %v1604
        %v6001 = vunpack.c.l.b16 %v1605
        %v6002 = vunpack.c.h.b16 %v1605
        %v6003 = vunpack.c.l.b16 %v1606
        %v6004 = vunpack.c.l.b16 %v1607
        %v6005 = vunpack.c.h.b16 %v1607
        %v6006 = vunpack.c.l.b16 %v1608
        %v6007 = vunpack.c.h.b16 %v1608
        %v6008 = vunpack.c.l.b16 %v1609
        %v6009 = vunpack.c.l.b16 %v1610
        %v6010 = vunpack.c.h.b16 %v1610
        %v6011 = vunpack.c.l.b16 %v1611
        %v6012 = vunpack.c.h.b16 %v1611
        %v6013 = vunpack.c.l.b16 %v1612
        %v6014 = vunpack.c.l.b16 %v1613
        %v6015 = vunpack.c.h.b16 %v1613
        %v6016 = vunpack.c.l.b16 %v1614
        %v6017 = vunpack.c.h.b16 %v1614
        %v6018 = vunpack.c.l.b16 %v1615
        %v6019 = vunpack.c.l.b16 %v1616
        %v6020 = vunpack.c.h.b16 %v1616
        %v6021 = vunpack.c.l.b16 %v1617
        %v6022 = vunpack.c.h.b16 %v1617
        %v6023 = vunpack.c.l.b16 %v1618
        %v6024 = vunpack.c.l.b16 %v1619
        %v6025 = vunpack.c.h.b16 %v1619
        %v6026 = vunpack.c.l.b16 %v1620
        %v6027 = vunpack.c.h.b16 %v1620
        %v6028 = vunpack.c.l.b16 %v1621
        %v6029 = vunpack.c.l.b16 %v1622
        %v6030 = vunpack.c.h.b16 %v1622
        %v6031 = vunpack.c.l.b16 %v1623
        %v6032 = vunpack.c.h.b16 %v1623
        %v6033 = vunpack.c.l.b16 %v1624
        %v6034 = vunpack.c.l.b16 %v1625
        %v6035 = vunpack.c.h.b16 %v1625
        %v6036 = vunpack.c.l.b16 %v1626
        %v6037 = vunpack.c.h.b16 %v1626
        %v6038 = vunpack.c.l.b16 %v1627
        %v6039 = vunpack.c.l.b16 %v1628
        %v6040 = vunpack.c.h.b16 %v1628
        %v6041 = vunpack.c.l.b16 %v1629
        %v6042 = vunpack.c.h.b16 %v1629
        %v6043 = vunpack.c.l.b16 %v1630
        %v6044 = vunpack.c.l.b16 %v1631
        %v6045 = vunpack.c.h.b16 %v1631
        %v6046 = vunpack.c.l.b16 %v1632
        %v6047 = vunpack.c.h.b16 %v1632
        %v6048 = vunpack.c.l.b16 %v1633
        %v6049 = vunpack.c.l.b16 %v1634
        %v6050 = vunpack.c.h.b16 %v1634
        %v6051 = vunpack.c.l.b16 %v1635
        %v6052 = vunpack.c.h.b16 %v1635
        %v6053 = vunpack.c.l.b16 %v1636
        %v6054 = vunpack.c.l.b16 %v1637
        %v6055 = vunpack.c.h.b16 %v1637
        %v6056 = vunpack.c.l.b16 %v1638
        %v6057 = vunpack.c.h.b16 %v1638
        %v6058 = vunpack.c.l.b16 %v1639
        %v6059 = vunpack.c.l.b16 %v1640
        %v6060 = vunpack.c.h.b16 %v1640
        %v6061 = vunpack.c.l.b16 %v1641
        %v6062 = vunpack.c.h.b16 %v1641
        %v6063 = vunpack.c.l.b16 %v1642
        %v6064 = vunpack.c.l.b16 %v1643
        %v6065 = vunpack.c.h.b16 %v1643
        %v6066 = vunpack.c.l.b16 %v1644
        %v6067 = vunpack.c.h.b16 %v1644
        %v6068 = vunpack.c.l.b16 %v1645
        %v6069 = vunpack.c.l.b16 %v1646
        %v6070 = vunpack.c.h.b16 %v1646
        %v6071 = vunpack.c.l.b16 %v1647
        %v6072 = vunpack.c.h.b16 %v1647
        %v6073 = vunpack.c.l.b16 %v1648
        %v6074 = vunpack.c.l.b16 %v1649
        %v6075 = vunpack.c.h.b16 %v1649
        %v6076 = vunpack.c.l.b16 %v1650
        %v6077 = vunpack.c.h.b16 %v1650
        %v6078 = vunpack.c.l.b16 %v1651
        %v6079 = vunpack.c.l.b16 %v1652
        %v6080 = vunpack.c.h.b16 %v1652
        %v6081 = vunpack.c.l.b16 %v1653
        %v6082 = vunpack.c.h.b16 %v1653
        %v6083 = vunpack.c.l.b16 %v1654
        %v6084 = vunpack.c.l.b16 %v1655
        %v6085 = vunpack.c.h.b16 %v1655
        %v6086 = vunpack.c.l.b16 %v1656
        %v6087 = vunpack.c.h.b16 %v1656
        %v6088 = vunpack.c.l.b16 %v1657
        %v6089 = vunpack.c.l.b16 %v1658
        %v6090 = vunpack.c.h.b16 %v1658
        %v6091 = vunpack.c.l.b16 %v1659
        %v6092 = vunpack.c.h.b16 %v1659
        %v6093 = vunpack.c.l.b16 %v1660
        %v6094 = vunpack.c.l.b16 %v1661
        %v6095 = vunpack.c.h.b16 %v1661
        %v6096 = vunpack.c.l.b16 %v1662
        %v6097 = vunpack.c.h.b16 %v1662
        %v6098 = vunpack.c.l.b16 %v1663
        %v6099 = vunpack.c.l.b16 %v1664
        %v6100 = vunpack.c.h.b16 %v1664
        %v6101 = vunpack.c.l.b16 %v1665
        %v6102 = vunpack.c.h.b16 %v1665
        %v6103 = vunpack.c.l.b16 %v1666
        %v6104 = vunpack.c.l.b16 %v1667
        %v6105 = vunpack.c.h.b16 %v1667
        %v6106 = vunpack.c.l.b16 %v1668
        %v6107 = vunpack.c.h.b16 %v1668
        %v6108 = vunpack.c.l.b16 %v1669
        %v6109 = vunpack.c.l.b16 %v1670
        %v6110 = vunpack.c.h.b16 %v1670
        %v6111 = vunpack.c.l.b16 %v1671
        %v6112 = vunpack.c.h.b16 %v1671
        %v6113 = vunpack.c.l.b16 %v1672
        %v6114 = vunpack.c.l.b16 %v1673
        %v6115 = vunpack.c.h.b16 %v1673
        %v6116 = vunpack.c.l.b16 %v1674
        %v6117 = vunpack.c.h.b16 %v1674
        %v6118 = vunpack.c.l.b16 %v1675
        %v6119 = vunpack.c.l.b16 %v1676
        %v6120 = vunpack.c.h.b16 %v1676
        %v6121 = vunpack.c.l.b16 %v1677
        %v6122 = vunpack.c.h.b16 %v1677
        %v6123 = vunpack.c.l.b16 %v1678
        %v6124 = vunpack.c.l.b16 %v1679
        %v6125 = vunpack.c.h.b16 %v1679
        %v6126 = vunpack.c.l.b16 %v1680
        %v6127 = vunpack.c.h.b16 %v1680
        %v6128 = vunpack.c.l.b16 %v1681
        %v6129 = vunpack.c.l.b16 %v1682
        %v6130 = vunpack.c.h.b16 %v1682
        %v6131 = vunpack.c.l.b16 %v1683
        %v6132 = vunpack.c.h.b16 %v1683
        %v6133 = vunpack.c.l.b16 %v1684
        %v6134 = vunpack.c.l.b16 %v1685
        %v6135 = vunpack.c.h.b16 %v1685
        %v6136 = vunpack.c.l.b16 %v1686
        %v6137 = vunpack.c.h.b16 %v1686
        %v6138 = vunpack.c.l.b16 %v1687
        %v6139 = vunpack.c.l.b16 %v1688
        %v6140 = vunpack.c.h.b16 %v1688
        %v6141 = vunpack.c.l.b16 %v1689
        %v6142 = vunpack.c.h.b16 %v1689
        %v6143 = vunpack.c.l.b16 %v1690
        %v6144 = vunpack.c.l.b16 %v1691
        %v6145 = vunpack.c.h.b16 %v1691
        %v6146 = vunpack.c.l.b16 %v1692
        %v6147 = vunpack.c.h.b16 %v1692
        %v6148 = vunpack.c.l.b16 %v1693
        %v6149 = vunpack.c.l.b16 %v1694
        %v6150 = vunpack.c.h.b16 %v1694
        %v6151 = vunpack.c.l.b16 %v1695
        %v6152 = vunpack.c.h.b16 %v1695
        %v6153 = vunpack.c.l.b16 %v1696
        %v6154 = vunpack.c.l.b16 %v1697
        %v6155 = vunpack.c.h.b16 %v1697
        %v6156 = vunpack.c.l.b16 %v1698
        %v6157 = vunpack.c.h.b16 %v1698
        %v6158 = vunpack.c.l.b16 %v1699
        %v6159 = vunpack.c.l.b16 %v1700
        %v6160 = vunpack.c.h.b16 %v1700
        %v6161 = vunpack.c.l.b16 %v1701
        %v6162 = vunpack.c.h.b16 %v1701
        %v6163 = vunpack.c.l.b16 %v1702
        %v6164 = vunpack.c.l.b16 %v1703
        %v6165 = vunpack.c.h.b16 %v1703
        %v6166 = vunpack.c.l.b16 %v1704
        %v6167 = vunpack.c.h.b16 %v1704
        %v6168 = vunpack.c.l.b16 %v1705
        %v6169 = vunpack.c.l.b16 %v1706
        %v6170 = vunpack.c.h.b16 %v1706
        %v6171 = vunpack.c.l.b16 %v1707
        %v6172 = vunpack.c.h.b16 %v1707
        %v6173 = vunpack.c.l.b16 %v1708
        %v6174 = vunpack.c.l.b16 %v1709
        %v6175 = vunpack.c.h.b16 %v1709
        %v6176 = vunpack.c.l.b16 %v1710
        %v6177 = vunpack.c.h.b16 %v1710
        %v6178 = vunpack.c.l.b16 %v1711
        %v6179 = vunpack.c.l.b16 %v1712
        %v6180 = vunpack.c.h.b16 %v1712
        %v6181 = vunpack.c.l.b16 %v1713
        %v6182 = vunpack.c.h.b16 %v1713
        %v6183 = vunpack.c.l.b16 %v1714
        %v6184 = vunpack.c.l.b16 %v1715
        %v6185 = vunpack.c.h.b16 %v1715
        %v6186 = vunpack.c.l.b16 %v1716
        %v6187 = vunpack.c.h.b16 %v1716
        %v6188 = vunpack.c.l.b16 %v1717
        %v6189 = vunpack.c.l.b16 %v1718
        %v6190 = vunpack.c.h.b16 %v1718
        %v6191 = vunpack.c.l.b16 %v1719
        %v6192 = vunpack.c.h.b16 %v1719
        %v6193 = vunpack.c.l.b16 %v1720
        %v6194 = vunpack.c.l.b16 %v1721
        %v6195 = vunpack.c.h.b16 %v1721
        %v6196 = vunpack.c.l.b16 %v1722
        %v6197 = vunpack.c.h.b16 %v1722
        %v6198 = vunpack.c.l.b16 %v1723
        %v6199 = vunpack.c.l.b16 %v1724
        %v6200 = vunpack.c.h.b16 %v1724
        %v6201 = vunpack.c.l.b16 %v1725
        %v6202 = vunpack.c.h.b16 %v1725
        %v6203 = vunpack.c.l.b16 %v1726
        %v6204 = vunpack.c.l.b16 %v1727
        %v6205 = vunpack.c.h.b16 %v1727
        %v6206 = vunpack.c.l.b16 %v1728
        %v6207 = vunpack.c.h.b16 %v1728
        %v6208 = vunpack.c.l.b16 %v1729
        %v6209 = vunpack.c.l.b16 %v1730
        %v6210 = vunpack.c.h.b16 %v1730
        %v6211 = vunpack.c.l.b16 %v1731
        %v6212 = vunpack.c.h.b16 %v1731
        %v6213 = vunpack.c.l.b16 %v1732
        %v6214 = vunpack.c.l.b16 %v1733
        %v6215 = vunpack.c.h.b16 %v1733
        %v6216 = vunpack.c.l.b16 %v1734
        %v6217 = vunpack.c.h.b16 %v1734
        %v6218 = vunpack.c.l.b16 %v1735
        %v6219 = vunpack.c.l.b16 %v1736
        %v6220 = vunpack.c.h.b16 %v1736
        %v6221 = vunpack.c.l.b16 %v1737
        %v6222 = vunpack.c.h.b16 %v1737
        %v6223 = vunpack.c.l.b16 %v1738
        %v6224 = vunpack.c.l.b16 %v1739
        %v6225 = vunpack.c.h.b16 %v1739
        %v6226 = vunpack.c.l.b16 %v1740
        %v6227 = vunpack.c.h.b16 %v1740
        %v6228 = vunpack.c.l.b16 %v1741
        %v6229 = vunpack.c.l.b16 %v1742
        %v6230 = vunpack.c.h.b16 %v1742
        %v6231 = vunpack.c.l.b16 %v1743
        %v6232 = vunpack.c.h.b16 %v1743
        %v6233 = vunpack.c.l.b16 %v1744
        %v6234 = vunpack.c.l.b16 %v1745
        %v6235 = vunpack.c.h.b16 %v1745
        %v6236 = vunpack.c.l.b16 %v1746
        %v6237 = vunpack.c.h.b16 %v1746
        %v6238 = vunpack.c.l.b16 %v1747
        %v6239 = vunpack.c.l.b16 %v1748
        %v6240 = vunpack.c.h.b16 %v1748
        %v6241 = vunpack.c.l.b16 %v1749
        %v6242 = vunpack.c.h.b16 %v1749
        %v6243 = vunpack.c.l.b16 %v1750
        %v6244 = vunpack.c.l.b16 %v1751
        %v6245 = vunpack.c.h.b16 %v1751
        %v6246 = vunpack.c.l.b16 %v1752
        %v6247 = vunpack.c.h.b16 %v1752
        %v6248 = vunpack.c.l.b16 %v1753
        %v6249 = vunpack.c.l.b16 %v1754
        %v6250 = vunpack.c.h.b16 %v1754
        %v6251 = vunpack.c.l.b16 %v1755
        %v6252 = vunpack.c.h.b16 %v1755
        %v6253 = vunpack.c.l.b16 %v1756
        %v6254 = vunpack.c.l.b16 %v1757
        %v6255 = vunpack.c.h.b16 %v1757
        %v6256 = vunpack.c.l.b16 %v1758
        %v6257 = vunpack.c.h.b16 %v1758
        %v6258 = vunpack.c.l.b16 %v1759
        %v6259 = vunpack.c.l.b16 %v1760
        %v6260 = vunpack.c.h.b16 %v1760
        %v6261 = vunpack.c.l.b16 %v1761
        %v6262 = vunpack.c.h.b16 %v1761
        %v6263 = vunpack.c.l.b16 %v1762
        %v6264 = vunpack.c.l.b16 %v1763
        %v6265 = vunpack.c.h.b16 %v1763
        %v6266 = vunpack.c.l.b16 %v1764
        %v6267 = vunpack.c.h.b16 %v1764
        %v6268 = vunpack.c.l.b16 %v1765
        %v6269 = vunpack.c.l.b16 %v1766
        %v6270 = vunpack.c.h.b16 %v1766
        %v6271 = vunpack.c.l.b16 %v1767
        %v6272 = vunpack.c.h.b16 %v1767
        %v6273 = vunpack.c.l.b16 %v1768
        %v6274 = vunpack.c.l.b16 %v1769
        %v6275 = vunpack.c.h.b16 %v1769
        %v6276 = vunpack.c.l.b16 %v1770
        %v6277 = vunpack.c.h.b16 %v1770
        %v6278 = vunpack.c.l.b16 %v1771
        %v6279 = vunpack.c.l.b16 %v1772
        %v6280 = vunpack.c.h.b16 %v1772
        %v6281 = vunpack.c.l.b16 %v1773
        %v6282 = vunpack.c.h.b16 %v1773
        %v6283 = vunpack.c.l.b16 %v1774
        %v6284 = vunpack.c.l.b16 %v1775
        %v6285 = vunpack.c.h.b16 %v1775
        %v6286 = vunpack.c.l.b16 %v1776
        %v6287 = vunpack.c.h.b16 %v1776
        %v6288 = vunpack.c.l.b16 %v1777
        %v6289 = vunpack.c.l.b16 %v1778
        %v6290 = vunpack.c.h.b16 %v1778
        %v6291 = vunpack.c.l.b16 %v1779
        %v6292 = vunpack.c.h.b16 %v1779
        %v6293 = vunpack.c.l.b16 %v1780
        %v6294 = vunpack.c.l.b16 %v1781
        %v6295 = vunpack.c.h.b16 %v1781
        %v6296 = vunpack.c.l.b16 %v1782
        %v6297 = vunpack.c.h.b16 %v1782
        %v6298 = vunpack.c.l.b16 %v1783
        %v6299 = vunpack.c.l.b16 %v1784
        %v6300 = vunpack.c.h.b16 %v1784
        %v6301 = vunpack.c.l.b16 %v1785
        %v6302 = vunpack.c.h.b16 %v1785
        %v6303 = vunpack.c.l.b16 %v1786
        %v6304 = vunpack.c.l.b16 %v1787
        %v6305 = vunpack.c.h.b16 %v1787
        %v6306 = vunpack.c.l.b16 %v1788
        %v6307 = vunpack.c.h.b16 %v1788
        %v6308 = vunpack.c.l.b16 %v1789
        %v6309 = vunpack.c.l.b16 %v1790
        %v6310 = vunpack.c.h.b16 %v1790
        %v6311 = vunpack.c.l.b16 %v1791
        %v6312 = vunpack.c.h.b16 %v1791
        %v6313 = vunpack.c.l.b16 %v1792
        %v6314 = vunpack.c.l.b16 %v1793
        %v6315 = vunpack.c.h.b16 %v1793
        %v6316 = vunpack.c.l.b16 %v1794
        %v6317 = vunpack.c.h.b16 %v1794
        %v6318 = vunpack.c.l.b16 %v1795
        %v6319 = vunpack.c.l.b16 %v1796
        %v6320 = vunpack.c.h.b16 %v1796
        %v6321 = vunpack.c.l.b16 %v1797
        %v6322 = vunpack.c.h.b16 %v1797
        %v6323 = vunpack.c.l.b16 %v1798
        %v6324 = vunpack.c.l.b16 %v1799
        %v6325 = vunpack.c.h.b16 %v1799
        %v6326 = vunpack.c.l.b16 %v1800
        %v6327 = vunpack.c.h.b16 %v1800
        %v6328 = vunpack.c.l.b16 %v1801
        %v6329 = vunpack.c.l.b16 %v1802
        %v6330 = vunpack.c.h.b16 %v1802
        %v6331 = vunpack.c.l.b16 %v1803
        %v6332 = vunpack.c.h.b16 %v1803
        %v6333 = vunpack.c.l.b16 %v1804
        %v6334 = vunpack.c.l.b16 %v1805
        %v6335 = vunpack.c.h.b16 %v1805
        %v6336 = vunpack.c.l.b16 %v1806
        %v6337 = vunpack.c.h.b16 %v1806
        %v6338 = vunpack.c.l.b16 %v1807
        %v6339 = vunpack.c.l.b16 %v1808
        %v6340 = vunpack.c.h.b16 %v1808
        %v6341 = vunpack.c.l.b16 %v1809
        %v6342 = vunpack.c.h.b16 %v1809
        %v6343 = vunpack.c.l.b16 %v1810
        %v6344 = vunpack.c.l.b16 %v1811
        %v6345 = vunpack.c.h.b16 %v1811
        %v6346 = vunpack.c.l.b16 %v1812
        %v6347 = vunpack.c.h.b16 %v1812
        %v6348 = vunpack.c.l.b16 %v1813
        %v6349 = vunpack.c.l.b16 %v1814
        %v6350 = vunpack.c.h.b16 %v1814
        %v6351 = vunpack.c.l.b16 %v1815
        %v6352 = vunpack.c.h.b16 %v1815
        %v6353 = vunpack.c.l.b16 %v1816
        %v6354 = vunpack.c.l.b16 %v1817
        %v6355 = vunpack.c.h.b16 %v1817
        %v6356 = vunpack.c.l.b16 %v1818
        %v6357 = vunpack.c.h.b16 %v1818
        %v6358 = vunpack.c.l.b16 %v1819
        %v6359 = vunpack.c.l.b16 %v1820
        %v6360 = vunpack.c.h.b16 %v1820
        %v6361 = vunpack.c.l.b16 %v1821
        %v6362 = vunpack.c.h.b16 %v1821
        %v6363 = vunpack.c.l.b16 %v1822
        %v6364 = vunpack.c.l.b16 %v1823
        %v6365 = vunpack.c.h.b16 %v1823
        %v6366 = vunpack.c.l.b16 %v1824
        %v6367 = vunpack.c.h.b16 %v1824
        %v6368 = vunpack.c.l.b16 %v1825
        %v6369 = vunpack.c.l.b16 %v1826
        %v6370 = vunpack.c.h.b16 %v1826
        %v6371 = vunpack.c.l.b16 %v1827
        %v6372 = vunpack.c.h.b16 %v1827
        %v6373 = vunpack.c.l.b16 %v1828
        %v6374 = vunpack.c.l.b16 %v1829
        %v6375 = vunpack.c.h.b16 %v1829
        %v6376 = vunpack.c.l.b16 %v1830
        %v6377 = vunpack.c.h.b16 %v1830
        %v6378 = vunpack.c.l.b16 %v1831
        %v6379 = vunpack.c.l.b16 %v1832
        %v6380 = vunpack.c.h.b16 %v1832
        %v6381 = vunpack.c.l.b16 %v1833
        %v6382 = vunpack.c.h.b16 %v1833
        %v6383 = vunpack.c.l.b16 %v1834
        %v6384 = vunpack.c.l.b16 %v1835
        %v6385 = vunpack.c.h.b16 %v1835
        %v6386 = vunpack.c.l.b16 %v1836
        %v6387 = vunpack.c.h.b16 %v1836
        %v6388 = vunpack.c.l.b16 %v1837
        %v6389 = vunpack.c.l.b16 %v1838
        %v6390 = vunpack.c.h.b16 %v1838
        %v6391 = vunpack.c.l.b16 %v1839
        %v6392 = vunpack.c.h.b16 %v1839
        %v6393 = vunpack.c.l.b16 %v1840
        %v6394 = vunpack.c.l.b16 %v1841
        %v6395 = vunpack.c.h.b16 %v1841
        %v6396 = vunpack.c.l.b16 %v1842
        %v6397 = vunpack.c.h.b16 %v1842
        %v6398 = vunpack.c.l.b16 %v1843
        %v6399 = vunpack.c.l.b16 %v1844
        %v6400 = vunpack.c.h.b16 %v1844
        %v6401 = vunpack.c.l.b16 %v1845
        %v6402 = vunpack.c.h.b16 %v1845
        %v6403 = vunpack.c.l.b16 %v1846
        %v6404 = vunpack.c.l.b16 %v1847
        %v6405 = vunpack.c.h.b16 %v1847
        %v6406 = vunpack.c.l.b16 %v1848
        %v6407 = vunpack.c.h.b16 %v1848
        %v6408 = vunpack.c.l.b16 %v1849
        %v6409 = vunpack.c.l.b16 %v1850
        %v6410 = vunpack.c.h.b16 %v1850
        %v6411 = vunpack.c.l.b16 %v1851
        %v6412 = vunpack.c.h.b16 %v1851
        %v6413 = vunpack.c.l.b16 %v1852
        %v6414 = vunpack.c.l.b16 %v1853
        %v6415 = vunpack.c.h.b16 %v1853
        %v6416 = vunpack.c.l.b16 %v1854
        %v6417 = vunpack.c.h.b16 %v1854
        %v6418 = vunpack.c.l.b16 %v1855
        %v6419 = vunpack.c.l.b16 %v1856
        %v6420 = vunpack.c.h.b16 %v1856
        %v6421 = vunpack.c.l.b16 %v1857
        %v6422 = vunpack.c.h.b16 %v1857
        %v6423 = vunpack.c.l.b16 %v1858
        %v6424 = vunpack.c.l.b16 %v1859
        %v6425 = vunpack.c.h.b16 %v1859
        %v6426 = vunpack.c.l.b16 %v1860
        %v6427 = vunpack.c.h.b16 %v1860
        %v6428 = vunpack.c.l.b16 %v1861
        %v6429 = vunpack.c.l.b16 %v1862
        %v6430 = vunpack.c.h.b16 %v1862
        %v6431 = vunpack.c.l.b16 %v1863
        %v6432 = vunpack.c.h.b16 %v1863
        %v6433 = vunpack.c.l.b16 %v1864
        %v6434 = vunpack.c.l.b16 %v1865
        %v6435 = vunpack.c.h.b16 %v1865
        %v6436 = vunpack.c.l.b16 %v1866
        %v6437 = vunpack.c.h.b16 %v1866
        %v6438 = vunpack.c.l.b16 %v1867
        %v6439 = vunpack.c.l.b16 %v1868
        %v6440 = vunpack.c.h.b16 %v1868
        %v6441 = vunpack.c.l.b16 %v1869
        %v6442 = vunpack.c.h.b16 %v1869
        %v6443 = vunpack.c.l.b16 %v1870
        %v6444 = vunpack.c.l.b16 %v1871
        %v6445 = vunpack.c.h.b16 %v1871
        %v6446 = vunpack.c.l.b16 %v1872
        %v6447 = vunpack.c.h.b16 %v1872
        %v6448 = vunpack.c.l.b16 %v1873
        %v6449 = vunpack.c.l.b16 %v1874
        %v6450 = vunpack.c.h.b16 %v1874
        %v6451 = vunpack.c.l.b16 %v1875
        %v6452 = vunpack.c.h.b16 %v1875
        %v6453 = vunpack.c.l.b16 %v1876
        %v6454 = vunpack.c.l.b16 %v1877
        %v6455 = vunpack.c.h.b16 %v1877
        %v6456 = vunpack.c.l.b16 %v1878
        %v6457 = vunpack.c.h.b16 %v1878
        %v6458 = vunpack.c.l.b16 %v1879
        %v6459 = vunpack.c.l.b16 %v1880
        %v6460 = vunpack.c.h.b16 %v1880
        %v6461 = vunpack.c.l.b16 %v1881
        %v6462 = vunpack.c.h.b16 %v1881
        %v6463 = vunpack.c.l.b16 %v1882
        %v6464 = vunpack.c.l.b16 %v1883
        %v6465 = vunpack.c.h.b16 %v1883
        %v6466 = vunpack.c.l.b16 %v1884
        %v6467 = vunpack.c.h.b16 %v1884
        %v6468 = vunpack.c.l.b16 %v1885
        %v6469 = vunpack.c.l.b16 %v1886
        %v6470 = vunpack.c.h.b16 %v1886
        %v6471 = vunpack.c.l.b16 %v1887
        %v6472 = vunpack.c.h.b16 %v1887
        %v6473 = vunpack.c.l.b16 %v1888
        %v6474 = vunpack.c.l.b16 %v1889
        %v6475 = vunpack.c.h.b16 %v1889
        %v6476 = vunpack.c.l.b16 %v1890
        %v6477 = vunpack.c.h.b16 %v1890
        %v6478 = vunpack.c.l.b16 %v1891
        %v6479 = vunpack.c.l.b16 %v1892
        %v6480 = vunpack.c.h.b16 %v1892
        %v6481 = vunpack.c.l.b16 %v1893
        %v6482 = vunpack.c.h.b16 %v1893
        %v6483 = vunpack.c.l.b16 %v1894
        %v6484 = vunpack.c.l.b16 %v1895
        %v6485 = vunpack.c.h.b16 %v1895
        %v6486 = vunpack.c.l.b16 %v1896
        %v6487 = vunpack.c.h.b16 %v1896
        %v6488 = vunpack.c.l.b16 %v1897
        %v6489 = vunpack.c.l.b16 %v1898
        %v6490 = vunpack.c.h.b16 %v1898
        %v6491 = vunpack.c.l.b16 %v1899
        %v6492 = vunpack.c.h.b16 %v1899
        %v6493 = vunpack.c.l.b16 %v1900
        %v6494 = vunpack.c.l.b16 %v1901
        %v6495 = vunpack.c.h.b16 %v1901
        %v6496 = vunpack.c.l.b16 %v1902
        %v6497 = vunpack.c.h.b16 %v1902
        %v6498 = vunpack.c.l.b16 %v1903
        %v6499 = vunpack.c.l.b16 %v1904
        %v6500 = vunpack.c.h.b16 %v1904
        %v6501 = vunpack.c.l.b16 %v1905
        %v6502 = vunpack.c.h.b16 %v1905
        %v6503 = vunpack.c.l.b16 %v1906
        %v6504 = vunpack.c.l.b16 %v1907
        %v6505 = vunpack.c.h.b16 %v1907
        %v6506 = vunpack.c.l.b16 %v1908
        %v6507 = vunpack.c.h.b16 %v1908
        %v6508 = vunpack.c.l.b16 %v1909
        %v6509 = vunpack.c.l.b16 %v1910
        %v6510 = vunpack.c.h.b16 %v1910
        %v6511 = vunpack.c.l.b16 %v1911
        %v6512 = vunpack.c.h.b16 %v1911
        %v6513 = vunpack.c.l.b16 %v1912
        %v6514 = vunpack.c.l.b16 %v1913
        %v6515 = vunpack.c.h.b16 %v1913
        %v6516 = vunpack.c.l.b16 %v1914
        %v6517 = vunpack.c.h.b16 %v1914
        %v6518 = vunpack.c.l.b16 %v1915
        %v6519 = vunpack.c.l.b16 %v1916
        %v6520 = vunpack.c.h.b16 %v1916
        %v6521 = vunpack.c.l.b16 %v1917
        %v6522 = vunpack.c.h.b16 %v1917
        %v6523 = vunpack.c.l.b16 %v1918
        %v6524 = vunpack.c.l.b16 %v1919
        %v6525 = vunpack.c.h.b16 %v1919
        %v6526 = vunpack.c.l.b16 %v1920
        %v6527 = vunpack.c.h.b16 %v1920
        %v6528 = vunpack.c.l.b16 %v1921
        %v6529 = vunpack.c.l.b16 %v1922
        %v6530 = vunpack.c.h.b16 %v1922
        %v6531 = vunpack.c.l.b16 %v1923
        %v6532 = vunpack.c.h.b16 %v1923
        %v6533 = vunpack.c.l.b16 %v1924
        %v6534 = vunpack.c.l.b16 %v1925
        %v6535 = vunpack.c.h.b16 %v1925
        %v6536 = vunpack.c.l.b16 %v1926
        %v6537 = vunpack.c.h.b16 %v1926
        %v6538 = vunpack.c.l.b16 %v1927
        %v6539 = vunpack.c.l.b16 %v1928
        %v6540 = vunpack.c.h.b16 %v1928
        %v6541 = vunpack.c.l.b16 %v1929
        %v6542 = vunpack.c.h.b16 %v1929
        %v6543 = vunpack.c.l.b16 %v1930
        %v6544 = vunpack.c.l.b16 %v1931
        %v6545 = vunpack.c.h.b16 %v1931
        %v6546 = vunpack.c.l.b16 %v1932
        %v6547 = vunpack.c.h.b16 %v1932
        %v6548 = vunpack.c.l.b16 %v1933
        %v6549 = vunpack.c.l.b16 %v1934
        %v6550 = vunpack.c.h.b16 %v1934
        %v6551 = vunpack.c.l.b16 %v1935
        %v6552 = vunpack.c.h.b16 %v1935
        %v6553 = vunpack.c.l.b16 %v1936
        %v6554 = vunpack.c.l.b16 %v1937
        %v6555 = vunpack.c.h.b16 %v1937
        %v6556 = vunpack.c.l.b16 %v1938
        %v6557 = vunpack.c.h.b16 %v1938
        %v6558 = vunpack.c.l.b16 %v1939
        %v6559 = vunpack.c.l.b16 %v1940
        %v6560 = vunpack.c.h.b16 %v1940
        %v6561 = vunpack.c.l.b16 %v1941
        %v6562 = vunpack.c.h.b16 %v1941
        %v6563 = vunpack.c.l.b16 %v1942
        %v6564 = vunpack.c.l.b16 %v1943
        %v6565 = vunpack.c.h.b16 %v1943
        %v6566 = vunpack.c.l.b16 %v1944
        %v6567 = vunpack.c.h.b16 %v1944
        %v6568 = vunpack.c.l.b16 %v1945
        %v6569 = vunpack.c.l.b16 %v1946
        %v6570 = vunpack.c.h.b16 %v1946
        %v6571 = vunpack.c.l.b16 %v1947
        %v6572 = vunpack.c.h.b16 %v1947
        %v6573 = vunpack.c.l.b16 %v1948
        %v6574 = vunpack.c.l.b16 %v1949
        %v6575 = vunpack.c.h.b16 %v1949
        %v6576 = vunpack.c.l.b16 %v1950
        %v6577 = vunpack.c.h.b16 %v1950
        %v6578 = vunpack.c.l.b16 %v1951
        %v6579 = vunpack.c.l.b16 %v1952
        %v6580 = vunpack.c.h.b16 %v1952
        %v6581 = vunpack.c.l.b16 %v1953
        %v6582 = vunpack.c.h.b16 %v1953
        %v6583 = vunpack.c.l.b16 %v1954
        %v6584 = vunpack.c.l.b16 %v1955
        %v6585 = vunpack.c.h.b16 %v1955
        %v6586 = vunpack.c.l.b16 %v1956
        %v6587 = vunpack.c.h.b16 %v1956
        %v6588 = vunpack.c.l.b16 %v1957
        %v6589 = vunpack.c.l.b16 %v1958
        %v6590 = vunpack.c.h.b16 %v1958
        %v6591 = vunpack.c.l.b16 %v1959
        %v6592 = vunpack.c.h.b16 %v1959
        %v6593 = vunpack.c.l.b16 %v1960
        %v6594 = vunpack.c.l.b16 %v1961
        %v6595 = vunpack.c.h.b16 %v1961
        %v6596 = vunpack.c.l.b16 %v1962
        %v6597 = vunpack.c.h.b16 %v1962
        %v6598 = vunpack.c.l.b16 %v1963
        %v6599 = vunpack.c.l.b16 %v1964
        %v6600 = vunpack.c.h.b16 %v1964
        %v6601 = vunpack.c.l.b16 %v1965
        %v6602 = vunpack.c.h.b16 %v1965
        %v6603 = vunpack.c.l.b16 %v1966
        %v6604 = vunpack.c.l.b16 %v1967
        %v6605 = vunpack.c.h.b16 %v1967
        %v6606 = vunpack.c.l.b16 %v1968
        %v6607 = vunpack.c.h.b16 %v1968
        %v6608 = vunpack.c.l.b16 %v1969
        %v6609 = vunpack.c.l.b16 %v1970
        %v6610 = vunpack.c.h.b16 %v1970
        %v6611 = vunpack.c.l.b16 %v1971
        %v6612 = vunpack.c.h.b16 %v1971
        %v6613 = vunpack.c.l.b16 %v1972
        %v6614 = vunpack.c.l.b16 %v1973
        %v6615 = vunpack.c.h.b16 %v1973
        %v6616 = vunpack.c.l.b16 %v1974
        %v6617 = vunpack.c.h.b16 %v1974
        %v6618 = vunpack.c.l.b16 %v1975
        %v6619 = vunpack.c.l.b16 %v1976
        %v6620 = vunpack.c.h.b16 %v1976
        %v6621 = vunpack.c.l.b16 %v1977
        %v6622 = vunpack.c.h.b16 %v1977
        %v6623 = vunpack.c.l.b16 %v1978
        %v6624 = vunpack.c.l.b16 %v1979
        %v6625 = vunpack.c.h.b16 %v1979
        %v6626 = vunpack.c.l.b16 %v1980
        %v6627 = vunpack.c.h.b16 %v1980
        %v6628 = vunpack.c.l.b16 %v1981
        %v6629 = vunpack.c.l.b16 %v1982
        %v6630 = vunpack.c.h.b16 %v1982
        %v6631 = vunpack.c.l.b16 %v1983
        %v6632 = vunpack.c.h.b16 %v1983
        %v6633 = vunpack.c.l.b16 %v1984
        %v6634 = vunpack.c.l.b16 %v1985
        %v6635 = vunpack.c.h.b16 %v1985
        %v6636 = vunpack.c.l.b16 %v1986
        %v6637 = vunpack.c.h.b16 %v1986
        %v6638 = vunpack.c.l.b16 %v1987
        %v6639 = vunpack.c.l.b16 %v1988
        %v6640 = vunpack.c.h.b16 %v1988
        %v6641 = vunpack.c.l.b16 %v1989
        %v6642 = vunpack.c.h.b16 %v1989
        %v6643 = vunpack.c.l.b16 %v1990
        %v6644 = vunpack.c.l.b16 %v1991
        %v6645 = vunpack.c.h.b16 %v1991
        %v6646 = vunpack.c.l.b16 %v1992
        %v6647 = vunpack.c.h.b16 %v1992
        %v6648 = vunpack.c.l.b16 %v1993
        %v6649 = vunpack.c.l.b16 %v1994
        %v6650 = vunpack.c.h.b16 %v1994
        %v6651 = vunpack.c.l.b16 %v1995
        %v6652 = vunpack.c.h.b16 %v1995
        %v6653 = vunpack.c.l.b16 %v1996
        %v6654 = vunpack.c.l.b16 %v1997
        %v6655 = vunpack.c.h.b16 %v1997
        %v6656 = vunpack.c.l.b16 %v1998
        %v6657 = vunpack.c.h.b16 %v1998
        %v6658 = vunpack.c.l.b16 %v1999
        %v6659 = vunpack.c.l.b16 %v2000
        %v6660 = vunpack.c.h.b16 %v2000
        %v6661 = vunpack.c.l.b16 %v2001
        %v6662 = vunpack.c.h.b16 %v2001
        %v6663 = vunpack.c.l.b16 %v2002
        %v6664 = vunpack.c.l.b16 %v2003
        %v6665 = vunpack.c.h.b16 %v2003
        %v6666 = vunpack.c.l.b16 %v2004
        %v6667 = vunpack.c.h.b16 %v2004
        %v6668 = vunpack.c.l.b16 %v2005
        %v6669 = vunpack.c.l.b16 %v2006
        %v6670 = vunpack.c.h.b16 %v2006
        %v6671 = vunpack.c.l.b16 %v2007
        %v6672 = vunpack.c.h.b16 %v2007
        %v6673 = vunpack.c.l.b16 %v2008
        %v6674 = vunpack.c.l.b16 %v2009
        %v6675 = vunpack.c.h.b16 %v2009
        %v6676 = vunpack.c.l.b16 %v2010
        %v6677 = vunpack.c.h.b16 %v2010
        %v6678 = vunpack.c.l.b16 %v2011
        %v6679 = vunpack.c.l.b16 %v2012
        %v6680 = vunpack.c.h.b16 %v2012
        %v6681 = vunpack.c.l.b16 %v2013
        %v6682 = vunpack.c.h.b16 %v2013
        %v6683 = vunpack.c.l.b16 %v2014
        %v6684 = vunpack.c.l.b16 %v2015
        %v6685 = vunpack.c.h.b16 %v2015
        %v6686 = vunpack.c.l.b16 %v2016
        %v6687 = vunpack.c.h.b16 %v2016
        %v6688 = vunpack.c.l.b16 %v2017
        %v6689 = vunpack.c.l.b16 %v2018
        %v6690 = vunpack.c.h.b16 %v2018
        %v6691 = vunpack.c.l.b16 %v2019
        %v6692 = vunpack.c.h.b16 %v2019
        %v6693 = vunpack.c.l.b16 %v2020
        %v6694 = vunpack.c.l.b16 %v2021
        %v6695 = vunpack.c.h.b16 %v2021
        %v6696 = vunpack.c.l.b16 %v2022
        %v6697 = vunpack.c.h.b16 %v2022
        %v6698 = vunpack.c.l.b16 %v2023
        %v6699 = vunpack.c.l.b16 %v2024
        %v6700 = vunpack.c.h.b16 %v2024
        %v6701 = vunpack.c.l.b16 %v2025
        %v6702 = vunpack.c.h.b16 %v2025
        %v6703 = vunpack.c.l.b16 %v2026
        %v6704 = vunpack.c.l.b16 %v2027
        %v6705 = vunpack.c.h.b16 %v2027
        %v6706 = vunpack.c.l.b16 %v2028
        %v6707 = vunpack.c.h.b16 %v2028
        %v6708 = vunpack.c.l.b16 %v2029
        %v6709 = vunpack.c.l.b16 %v2030
        %v6710 = vunpack.c.h.b16 %v2030
        %v6711 = vunpack.c.l.b16 %v2031
        %v6712 = vunpack.c.h.b16 %v2031
        %v6713 = vunpack.c.l.b16 %v2032
        %v6714 = vunpack.c.l.b16 %v2033
        %v6715 = vunpack.c.h.b16 %v2033
        %v6716 = vunpack.c.l.b16 %v2034
        %v6717 = vunpack.c.h.b16 %v2034
        %v6718 = vunpack.c.l.b16 %v2035
        %v6719 = vunpack.c.l.b16 %v2036
        %v6720 = vunpack.c.h.b16 %v2036
        %v6721 = vunpack.c.l.b16 %v2037
        %v6722 = vunpack.c.h.b16 %v2037
        %v6723 = vunpack.c.l.b16 %v2038
        %v6724 = vunpack.c.l.b16 %v2039
        %v6725 = vunpack.c.h.b16 %v2039
        %v6726 = vunpack.c.l.b16 %v2040
        %v6727 = vunpack.c.h.b16 %v2040
        %v6728 = vunpack.c.l.b16 %v2041
        %v6729 = vunpack.c.l.b16 %v2042
        %v6730 = vunpack.c.h.b16 %v2042
        %v6731 = vunpack.c.l.b16 %v2043
        %v6732 = vunpack.c.h.b16 %v2043
        %v6733 = vunpack.c.l.b16 %v2044
        %v6734 = vunpack.c.l.b16 %v2045
        %v6735 = vunpack.c.h.b16 %v2045
        %v6736 = vunpack.c.l.b16 %v2046
        %v6737 = vunpack.c.h.b16 %v2046
        %v6738 = vunpack.c.l.b16 %v2047
        %v6739 = vunpack.c.l.b16 %v2048
        %v6740 = vunpack.c.h.b16 %v2048
        %v6741 = vunpack.c.l.b16 %v2049
        %v6742 = vunpack.c.h.b16 %v2049
        %v6743 = vunpack.c.l.b16 %v2050
        %v6744 = vunpack.c.l.b16 %v2051
        %v6745 = vunpack.c.h.b16 %v2051
        %v6746 = vunpack.c.l.b16 %v2052
        %v6747 = vunpack.c.h.b16 %v2052
        %v6748 = vunpack.c.l.b16 %v2053
        %v6749 = vunpack.c.l.b16 %v2054
        %v6750 = vunpack.c.h.b16 %v2054
        %v6751 = vunpack.c.l.b16 %v2055
        %v6752 = vunpack.c.h.b16 %v2055
        %v6753 = vunpack.c.l.b16 %v2056
        %v6754 = vunpack.c.l.b16 %v2057
        %v6755 = vunpack.c.h.b16 %v2057
        %v6756 = vunpack.c.l.b16 %v2058
        %v6757 = vunpack.c.h.b16 %v2058
        %v6758 = vunpack.c.l.b16 %v2059
        %v6759 = vunpack.c.l.b16 %v2060
        %v6760 = vunpack.c.h.b16 %v2060
        %v6761 = vunpack.c.l.b16 %v2061
        %v6762 = vunpack.c.h.b16 %v2061
        %v6763 = vunpack.c.l.b16 %v2062
        %v6764 = vunpack.c.l.b16 %v2063
        %v6765 = vunpack.c.h.b16 %v2063
        %v6766 = vunpack.c.l.b16 %v2064
        %v6767 = vunpack.c.h.b16 %v2064
        %v6768 = vunpack.c.l.b16 %v2065
        %v6769 = vunpack.c.l.b16 %v2066
        %v6770 = vunpack.c.h.b16 %v2066
        %v6771 = vunpack.c.l.b16 %v2067
        %v6772 = vunpack.c.h.b16 %v2067
        %v6773 = vunpack.c.l.b16 %v2068
        %v6774 = vunpack.c.l.b16 %v2069
        %v6775 = vunpack.c.h.b16 %v2069
        %v6776 = vunpack.c.l.b16 %v2070
        %v6777 = vunpack.c.h.b16 %v2070
        %v6778 = vunpack.c.l.b16 %v2071
        %v6779 = vunpack.c.l.b16 %v2072
        %v6780 = vunpack.c.h.b16 %v2072
        %v6781 = vunpack.c.l.b16 %v2073
        %v6782 = vunpack.c.h.b16 %v2073
        %v6783 = vunpack.c.l.b16 %v2074
        %v6784 = vunpack.c.l.b16 %v2075
        %v6785 = vunpack.c.h.b16 %v2075
        %v6786 = vunpack.c.l.b16 %v2076
        %v6787 = vunpack.c.h.b16 %v2076
        %v6788 = vunpack.c.l.b16 %v2077
        %v6789 = vunpack.c.l.b16 %v2078
        %v6790 = vunpack.c.h.b16 %v2078
        %v6791 = vunpack.c.l.b16 %v2079
        %v6792 = vunpack.c.h.b16 %v2079
        %v6793 = vunpack.c.l.b16 %v2080
        %v6794 = vunpack.c.l.b16 %v2081
        %v6795 = vunpack.c.h.b16 %v2081
        %v6796 = vunpack.c.l.b16 %v2082
        %v6797 = vunpack.c.h.b16 %v2082
        %v6798 = vunpack.c.l.b16 %v2083
        %v6799 = vunpack.c.l.b16 %v2084
        %v6800 = vunpack.c.h.b16 %v2084
        %v6801 = vunpack.c.l.b16 %v2085
        %v6802 = vunpack.c.h.b16 %v2085
        %v6803 = vunpack.c.l.b16 %v2086
        %v6804 = vunpack.c.l.b16 %v2087
        %v6805 = vunpack.c.h.b16 %v2087
        %v6806 = vunpack.c.l.b16 %v2088
        %v6807 = vunpack.c.h.b16 %v2088
        %v6808 = vunpack.c.l.b16 %v2089
        %v6809 = vunpack.c.l.b16 %v2090
        %v6810 = vunpack.c.h.b16 %v2090
        %v6811 = vunpack.c.l.b16 %v2091
        %v6812 = vunpack.c.h.b16 %v2091
        %v6813 = vunpack.c.l.b16 %v2092
        %v6814 = vunpack.c.l.b16 %v2093
        %v6815 = vunpack.c.h.b16 %v2093
        %v6816 = vunpack.c.l.b16 %v2094
        %v6817 = vunpack.c.h.b16 %v2094
        %v6818 = vunpack.c.l.b16 %v2095
        %v6819 = vunpack.c.l.b16 %v2096
        %v6820 = vunpack.c.h.b16 %v2096
        %v6821 = vunpack.c.l.b16 %v2097
        %v6822 = vunpack.c.h.b16 %v2097
        %v6823 = vunpack.c.l.b16 %v2098
        %v6824 = vunpack.c.l.b16 %v2099
        %v6825 = vunpack.c.h.b16 %v2099
        %v6826 = vunpack.c.l.b16 %v2100
        %v6827 = vunpack.c.h.b16 %v2100
        %v6828 = vunpack.c.l.b16 %v2101
        %v6829 = vunpack.c.l.b16 %v2102
        %v6830 = vunpack.c.h.b16 %v2102
        %v6831 = vunpack.c.l.b16 %v2103
        %v6832 = vunpack.c.h.b16 %v2103
        %v6833 = vunpack.c.l.b16 %v2104
        %v6834 = vunpack.c.l.b16 %v2105
        %v6835 = vunpack.c.h.b16 %v2105
        %v6836 = vunpack.c.l.b16 %v2106
        %v6837 = vunpack.c.h.b16 %v2106
        %v6838 = vunpack.c.l.b16 %v2107
        %v6839 = vunpack.c.l.b16 %v2108
        %v6840 = vunpack.c.h.b16 %v2108
        %v6841 = vunpack.c.l.b16 %v2109
        %v6842 = vunpack.c.h.b16 %v2109
        %v6843 = vunpack.c.l.b16 %v2110
        %v6844 = vunpack.c.l.b16 %v2111
        %v6845 = vunpack.c.h.b16 %v2111
        %v6846 = vunpack.c.l.b16 %v2112
        %v6847 = vunpack.c.h.b16 %v2112
        %v6848 = vunpack.c.l.b16 %v2113
        %v6849 = vunpack.c.l.b16 %v2114
        %v6850 = vunpack.c.h.b16 %v2114
        %v6851 = vunpack.c.l.b16 %v2115
        %v6852 = vunpack.c.h.b16 %v2115
        %v6853 = vunpack.c.l.b16 %v2116
        %v6854 = vunpack.c.l.b16 %v2117
        %v6855 = vunpack.c.h.b16 %v2117
        %v6856 = vunpack.c.l.b16 %v2118
        %v6857 = vunpack.c.h.b16 %v2118
        %v6858 = vunpack.c.l.b16 %v2119
        %v6859 = vunpack.c.l.b16 %v2120
        %v6860 = vunpack.c.h.b16 %v2120
        %v6861 = vunpack.c.l.b16 %v2121
        %v6862 = vunpack.c.h.b16 %v2121
        %v6863 = vunpack.c.l.b16 %v2122
        %v6864 = vunpack.c.l.b16 %v2123
        %v6865 = vunpack.c.h.b16 %v2123
        %v6866 = vunpack.c.l.b16 %v2124
        %v6867 = vunpack.c.h.b16 %v2124
        %v6868 = vunpack.c.l.b16 %v2125
        %v6869 = vunpack.c.l.b16 %v2126
        %v6870 = vunpack.c.h.b16 %v2126
        %v6871 = vunpack.c.l.b16 %v2127
        %v6872 = vunpack.c.h.b16 %v2127
        %v6873 = vunpack.c.l.b16 %v2128
        %v6874 = vunpack.c.l.b16 %v2129
        %v6875 = vunpack.c.h.b16 %v2129
        %v6876 = vunpack.c.l.b16 %v2130
        %v6877 = vunpack.c.h.b16 %v2130
        %v6878 = vunpack.c.l.b16 %v2131
        %v6879 = vunpack.c.l.b16 %v2132
        %v6880 = vunpack.c.h.b16 %v2132
        %v6881 = vunpack.c.l.b16 %v2133
        %v6882 = vunpack.c.h.b16 %v2133
        %v6883 = vunpack.c.l.b16 %v2134
        %v6884 = vunpack.c.l.b16 %v2135
        %v6885 = vunpack.c.h.b16 %v2135
        %v6886 = vunpack.c.l.b16 %v2136
        %v6887 = vunpack.c.h.b16 %v2136
        %v6888 = vunpack.c.l.b16 %v2137
        %v6889 = vunpack.c.l.b16 %v2138
        %v6890 = vunpack.c.h.b16 %v2138
        %v6891 = vunpack.c.l.b16 %v2139
        %v6892 = vunpack.c.h.b16 %v2139
        %v6893 = vunpack.c.l.b16 %v2140
        %v6894 = vunpack.c.l.b16 %v2141
        %v6895 = vunpack.c.h.b16 %v2141
        %v6896 = vunpack.c.l.b16 %v2142
        %v6897 = vunpack.c.h.b16 %v2142
        %v6898 = vunpack.c.l.b16 %v2143
        %v6899 = vunpack.c.l.b16 %v2144
        %v6900 = vunpack.c.h.b16 %v2144
        %v6901 = vunpack.c.l.b16 %v2145
        %v6902 = vunpack.c.h.b16 %v2145
        %v6903 = vunpack.c.l.b16 %v2146
        %v6904 = vunpack.c.l.b16 %v2147
        %v6905 = vunpack.c.h.b16 %v2147
        %v6906 = vunpack.c.l.b16 %v2148
        %v6907 = vunpack.c.h.b16 %v2148
        %v6908 = vunpack.c.l.b16 %v2149
        %v6909 = vunpack.c.l.b16 %v2150
        %v6910 = vunpack.c.h.b16 %v2150
        %v6911 = vunpack.c.l.b16 %v2151
        %v6912 = vunpack.c.h.b16 %v2151
        %v6913 = vunpack.c.l.b16 %v2152
        %v6914 = vunpack.c.l.b16 %v2153
        %v6915 = vunpack.c.h.b16 %v2153
        %v6916 = vunpack.c.l.b16 %v2154
        %v6917 = vunpack.c.h.b16 %v2154
        %v6918 = vunpack.c.l.b16 %v2155
        %v6919 = vunpack.c.l.b16 %v2156
        %v6920 = vunpack.c.h.b16 %v2156
        %v6921 = vunpack.c.l.b16 %v2157
        %v6922 = vunpack.c.h.b16 %v2157
        %v6923 = vunpack.c.l.b16 %v2158
        %v6924 = vunpack.c.l.b16 %v2159
        %v6925 = vunpack.c.h.b16 %v2159
        %v6926 = vunpack.c.l.b16 %v2160
        %v6927 = vunpack.c.h.b16 %v2160
        %v6928 = vunpack.c.l.b16 %v2161
        %v6929 = vunpack.c.l.b16 %v2162
        %v6930 = vunpack.c.h.b16 %v2162
        %v6931 = vunpack.c.l.b16 %v2163
        %v6932 = vunpack.c.h.b16 %v2163
        %v6933 = vunpack.c.l.b16 %v2164
        %v6934 = vunpack.c.l.b16 %v2165
        %v6935 = vunpack.c.h.b16 %v2165
        %v6936 = vunpack.c.l.b16 %v2166
        %v6937 = vunpack.c.h.b16 %v2166
        %v6938 = vunpack.c.l.b16 %v2167
        %v6939 = vunpack.c.l.b16 %v2168
        %v6940 = vunpack.c.h.b16 %v2168
        %v6941 = vunpack.c.l.b16 %v2169
        %v6942 = vunpack.c.h.b16 %v2169
        %v6943 = vunpack.c.l.b16 %v2170
        %v6944 = vunpack.c.l.b16 %v2171
        %v6945 = vunpack.c.h.b16 %v2171
        %v6946 = vunpack.c.l.b16 %v2172
        %v6947 = vunpack.c.h.b16 %v2172
        %v6948 = vunpack.c.l.b16 %v2173
        %v6949 = vunpack.c.l.b16 %v2174
        %v6950 = vunpack.c.h.b16 %v2174
        %v6951 = vunpack.c.l.b16 %v2175
        %v6952 = vunpack.c.h.b16 %v2175
        %v6953 = vunpack.c.l.b16 %v2176
        %v6954 = vunpack.c.l.b16 %v2177
        %v6955 = vunpack.c.h.b16 %v2177
        %v6956 = vunpack.c.l.b16 %v2178
        %v6957 = vunpack.c.h.b16 %v2178
        %v6958 = vunpack.c.l.b16 %v2179
        %v6959 = vunpack.c.l.b16 %v2180
        %v6960 = vunpack.c.h.b16 %v2180
        %v6961 = vunpack.c.l.b16 %v2181
        %v6962 = vunpack.c.h.b16 %v2181
        %v6963 = vunpack.c.l.b16 %v2182
        %v6964 = vunpack.c.l.b16 %v2183
        %v6965 = vunpack.c.h.b16 %v2183
        %v6966 = vunpack.c.l.b16 %v2184
        %v6967 = vunpack.c.h.b16 %v2184
        %v6968 = vunpack.c.l.b16 %v2185
        %v6969 = vunpack.c.l.b16 %v2186
        %v6970 = vunpack.c.h.b16 %v2186
        %v6971 = vunpack.c.l.b16 %v2187
        %v6972 = vunpack.c.h.b16 %v2187
        %v6973 = vunpack.c.l.b16 %v2188
        %v6974 = vunpack.c.l.b16 %v2189
        %v6975 = vunpack.c.h.b16 %v2189
        %v6976 = vunpack.c.l.b16 %v2190
        %v6977 = vunpack.c.h.b16 %v2190
        %v6978 = vunpack.c.l.b16 %v2191
        %v6979 = vunpack.c.l.b16 %v2192
        %v6980 = vunpack.c.h.b16 %v2192
        %v6981 = vunpack.c.l.b16 %v2193
        %v6982 = vunpack.c.h.b16 %v2193
        %v6983 = vunpack.c.l.b16 %v2194
        %v6984 = vunpack.c.l.b16 %v2195
        %v6985 = vunpack.c.h.b16 %v2195
        %v6986 = vunpack.c.l.b16 %v2196
        %v6987 = vunpack.c.h.b16 %v2196
        %v6988 = vunpack.c.l.b16 %v2197
        %v6989 = vunpack.c.l.b16 %v2198
        %v6990 = vunpack.c.h.b16 %v2198
        %v6991 = vunpack.c.l.b16 %v2199
        %v6992 = vunpack.c.h.b16 %v2199
        %v6993 = vunpack.c.l.b16 %v2200
        %v6994 = vunpack.c.l.b16 %v2201
        %v6995 = vunpack.c.h.b16 %v2201
        %v6996 = vunpack.c.l.b16 %v2202
        %v6997 = vunpack.c.h.b16 %v2202
        %v6998 = vunpack.c.l.b16 %v2203
        %v6999 = vunpack.c.l.b16 %v2204
        %v7000 = vunpack.c.h.b16 %v2204
        %v7001 = vunpack.c.l.b16 %v2205
        %v7002 = vunpack.c.h.b16 %v2205
        %v7003 = vunpack.c.l.b16 %v2206
        %v7004 = vunpack.c.l.b16 %v2207
        %v7005 = vunpack.c.h.b16 %v2207
        %v7006 = vunpack.c.l.b16 %v2208
        %v7007 = vunpack.c.h.b16 %v2208
        %v7008 = vunpack.c.l.b16 %v2209
        %v7009 = vunpack.c.l.b16 %v2210
        %v7010 = vunpack.c.h.b16 %v2210
        %v7011 = vunpack.c.l.b16 %v2211
        %v7012 = vunpack.c.h.b16 %v2211
        %v7013 = vunpack.c.l.b16 %v2212
        %v7014 = vunpack.c.l.b16 %v2213
        %v7015 = vunpack.c.h.b16 %v2213
        %v7016 = vunpack.c.l.b16 %v2214
        %v7017 = vunpack.c.h.b16 %v2214
        %v7018 = vunpack.c.l.b16 %v2215
        %v7019 = vunpack.c.l.b16 %v2216
        %v7020 = vunpack.c.h.b16 %v2216
        %v7021 = vunpack.c.l.b16 %v2217
        %v7022 = vunpack.c.h.b16 %v2217
        %v7023 = vunpack.c.l.b16 %v2218
        %v7024 = vunpack.c.l.b16 %v2219
        %v7025 = vunpack.c.h.b16 %v2219
        %v7026 = vunpack.c.l.b16 %v2220
        %v7027 = vunpack.c.h.b16 %v2220
        %v7028 = vunpack.c.l.b16 %v2221
        %v7029 = vunpack.c.l.b16 %v2222
        %v7030 = vunpack.c.h.b16 %v2222
        %v7031 = vunpack.c.l.b16 %v2223
        %v7032 = vunpack.c.h.b16 %v2223
        %v7033 = vunpack.c.l.b16 %v2224
        %v7034 = vunpack.c.l.b16 %v2225
        %v7035 = vunpack.c.h.b16 %v2225
        %v7036 = vunpack.c.l.b16 %v2226
        %v7037 = vunpack.c.h.b16 %v2226
        %v7038 = vunpack.c.l.b16 %v2227
        %v7039 = vunpack.c.l.b16 %v2228
        %v7040 = vunpack.c.h.b16 %v2228
        %v7041 = vunpack.c.l.b16 %v2229
        %v7042 = vunpack.c.h.b16 %v2229
        %v7043 = vunpack.c.l.b16 %v2230
        %v7044 = vunpack.c.l.b16 %v2231
        %v7045 = vunpack.c.h.b16 %v2231
        %v7046 = vunpack.c.l.b16 %v2232
        %v7047 = vunpack.c.h.b16 %v2232
        %v7048 = vunpack.c.l.b16 %v2233
        %v7049 = vunpack.c.l.b16 %v2234
        %v7050 = vunpack.c.h.b16 %v2234
        %v7051 = vunpack.c.l.b16 %v2235
        %v7052 = vunpack.c.h.b16 %v2235
        %v7053 = vunpack.c.l.b16 %v2236
        %v7054 = vunpack.c.l.b16 %v2237
        %v7055 = vunpack.c.h.b16 %v2237
        %v7056 = vunpack.c.l.b16 %v2238
        %v7057 = vunpack.c.h.b16 %v2238
        %v7058 = vunpack.c.l.b16 %v2239
        %v7059 = vunpack.c.l.b16 %v2240
        %v7060 = vunpack.c.h.b16 %v2240
        %v7061 = vunpack.c.l.b16 %v2241
        %v7062 = vunpack.c.h.b16 %v2241
        %v7063 = vunpack.c.l.b16 %v2242
        %v7064 = vunpack.c.l.b16 %v2243
        %v7065 = vunpack.c.h.b16 %v2243
        %v7066 = vunpack.c.l.b16 %v2244
        %v7067 = vunpack.c.h.b16 %v2244
        %v7068 = vunpack.c.l.b16 %v2245
        %v7069 = vunpack.c.l.b16 %v2246
        %v7070 = vunpack.c.h.b16 %v2246
        %v7071 = vunpack.c.l.b16 %v2247
        %v7072 = vunpack.c.h.b16 %v2247
        %v7073 = vunpack.c.l.b16 %v2248
        %v7074 = vunpack.c.l.b16 %v2249
        %v7075 = vunpack.c.h.b16 %v2249
        %v7076 = vunpack.c.l.b16 %v2250
        %v7077 = vunpack.c.h.b16 %v2250
        %v7078 = vunpack.c.l.b16 %v2251
        %v7079 = vunpack.c.l.b16 %v2252
        %v7080 = vunpack.c.h.b16 %v2252
        %v7081 = vunpack.c.l.b16 %v2253
        %v7082 = vunpack.c.h.b16 %v2253
        %v7083 = vunpack.c.l.b16 %v2254
        %v7084 = vunpack.c.l.b16 %v2255
        %v7085 = vunpack.c.h.b16 %v2255
        %v7086 = vunpack.c.l.b16 %v2256
        %v7087 = vunpack.c.h.b16 %v2256
        %v7088 = vunpack.c.l.b16 %v2257
        %v7089 = vunpack.c.l.b16 %v2258
        %v7090 = vunpack.c.h.b16 %v2258
        %v7091 = vunpack.c.l.b16 %v2259
        %v7092 = vunpack.c.h.b16 %v2259
        %v7093 = vunpack.c.l.b16 %v2260
        %v7094 = vunpack.c.l.b16 %v2261
        %v7095 = vunpack.c.h.b16 %v2261
        %v7096 = vunpack.c.l.b16 %v2262
        %v7097 = vunpack.c.h.b16 %v2262
        %v7098 = vunpack.c.l.b16 %v2263
        %v7099 = vunpack.c.l.b16 %v2264
        %v7100 = vunpack.c.h.b16 %v2264
        %v7101 = vunpack.c.l.b16 %v2265
        %v7102 = vunpack.c.h.b16 %v2265
        %v7103 = vunpack.c.l.b16 %v2266
        %v7104 = vunpack.c.l.b16 %v2267
        %v7105 = vunpack.c.h.b16 %v2267
        %v7106 = vunpack.c.l.b16 %v2268
        %v7107 = vunpack.c.h.b16 %v2268
        %v7108 = vunpack.c.l.b16 %v2269
        %v7109 = vunpack.c.l.b16 %v2270
        %v7110 = vunpack.c.h.b16 %v2270
        %v7111 = vunpack.c.l.b16 %v2271
        %v7112 = vunpack.c.h.b16 %v2271
        %v7113 = vunpack.c.l.b16 %v2272
        %v7114 = vunpack.c.l.b16 %v2273
        %v7115 = vunpack.c.h.b16 %v2273
        %v7116 = vunpack.c.l.b16 %v2274
        %v7117 = vunpack.c.h.b16 %v2274
        %v7118 = vunpack.c.l.b16 %v2275
        %v7119 = vunpack.c.l.b16 %v2276
        %v7120 = vunpack.c.h.b16 %v2276
        %v7121 = vunpack.c.l.b16 %v2277
        %v7122 = vunpack.c.h.b16 %v2277
        %v7123 = vunpack.c.l.b16 %v2278
        %v7124 = vunpack.c.l.b16 %v2279
        %v7125 = vunpack.c.h.b16 %v2279
        %v7126 = vunpack.c.l.b16 %v2280
        %v7127 = vunpack.c.h.b16 %v2280
        %v7128 = vunpack.c.l.b16 %v2281
        %v7129 = vunpack.c.l.b16 %v2282
        %v7130 = vunpack.c.h.b16 %v2282
        %v7131 = vunpack.c.l.b16 %v2283
        %v7132 = vunpack.c.h.b16 %v2283
        %v7133 = vunpack.c.l.b16 %v2284
        %v7134 = vunpack.c.l.b16 %v2285
        %v7135 = vunpack.c.h.b16 %v2285
        %v7136 = vunpack.c.l.b16 %v2286
        %v7137 = vunpack.c.h.b16 %v2286
        %v7138 = vunpack.c.l.b16 %v2287
        %v7139 = vunpack.c.l.b16 %v2288
        %v7140 = vunpack.c.h.b16 %v2288
        %v7141 = vunpack.c.l.b16 %v2289
        %v7142 = vunpack.c.h.b16 %v2289
        %v7143 = vunpack.c.l.b16 %v2290
        %v7144 = vunpack.c.l.b16 %v2291
        %v7145 = vunpack.c.h.b16 %v2291
        %v7146 = vunpack.c.l.b16 %v2292
        %v7147 = vunpack.c.h.b16 %v2292
        %v7148 = vunpack.c.l.b16 %v2293
        %v7149 = vunpack.c.l.b16 %v2294
        %v7150 = vunpack.c.h.b16 %v2294
        %v7151 = vunpack.c.l.b16 %v2295
        %v7152 = vunpack.c.h.b16 %v2295
        %v7153 = vunpack.c.l.b16 %v2296
        %v7154 = vunpack.c.l.b16 %v2297
        %v7155 = vunpack.c.h.b16 %v2297
        %v7156 = vunpack.c.l.b16 %v2298
        %v7157 = vunpack.c.h.b16 %v2298
        %v7158 = vunpack.c.l.b16 %v2299
        %v7159 = vunpack.c.l.b16 %v2300
        %v7160 = vunpack.c.h.b16 %v2300
        %v7161 = vunpack.c.l.b16 %v2301
        %v7162 = vunpack.c.h.b16 %v2301
        %v7163 = vunpack.c.l.b16 %v2302
        %v7164 = vunpack.c.l.b16 %v2303
        %v7165 = vunpack.c.h.b16 %v2303
        %v7166 = vunpack.c.l.b16 %v2304
        %v7167 = vunpack.c.h.b16 %v2304
        %v7168 = vunpack.c.l.b16 %v2305
        %v7169 = vunpack.c.l.b16 %v2306
        %v7170 = vunpack.c.h.b16 %v2306
        %v7171 = vunpack.c.l.b16 %v2307
        %v7172 = vunpack.c.h.b16 %v2307
        %v7173 = vunpack.c.l.b16 %v2308
        %v7174 = vunpack.c.l.b16 %v2309
        %v7175 = vunpack.c.h.b16 %v2309
        %v7176 = vunpack.c.l.b16 %v2310
        %v7177 = vunpack.c.h.b16 %v2310
        %v7178 = vunpack.c.l.b16 %v2311
        %v7179 = vunpack.c.l.b16 %v2312
        %v7180 = vunpack.c.h.b16 %v2312
        %v7181 = vunpack.c.l.b16 %v2313
        %v7182 = vunpack.c.h.b16 %v2313
        %v7183 = vunpack.c.l.b16 %v2314
        %v7184 = vunpack.c.l.b16 %v2315
        %v7185 = vunpack.c.h.b16 %v2315
        %v7186 = vunpack.c.l.b16 %v2316
        %v7187 = vunpack.c.h.b16 %v2316
        %v7188 = vunpack.c.l.b16 %v2317
        %v7189 = vunpack.c.l.b16 %v2318
        %v7190 = vunpack.c.h.b16 %v2318
        %v7191 = vunpack.c.l.b16 %v2319
        %v7192 = vunpack.c.h.b16 %v2319
        %v7193 = vunpack.c.l.b16 %v2320
        %v7194 = vunpack.c.l.b16 %v2321
        %v7195 = vunpack.c.h.b16 %v2321
        %v7196 = vunpack.c.l.b16 %v2322
        %v7197 = vunpack.c.h.b16 %v2322
        %v7198 = vunpack.c.l.b16 %v2323
        %v7199 = vunpack.c.l.b16 %v2324
        %v7200 = vunpack.c.h.b16 %v2324
        %v7201 = vunpack.c.l.b16 %v2325
        %v7202 = vunpack.c.h.b16 %v2325
        %v7203 = vunpack.c.l.b16 %v2326
        %v7204 = vunpack.c.l.b16 %v2327
        %v7205 = vunpack.c.h.b16 %v2327
        %v7206 = vunpack.c.l.b16 %v2328
        %v7207 = vunpack.c.h.b16 %v2328
        %v7208 = vunpack.c.l.b16 %v2329
        %v7209 = vunpack.c.l.b16 %v2330
        %v7210 = vunpack.c.h.b16 %v2330
        %v7211 = vunpack.c.l.b16 %v2331
        %v7212 = vunpack.c.h.b16 %v2331
        %v7213 = vunpack.c.l.b16 %v2332
        %v7214 = vunpack.c.l.b16 %v2333
        %v7215 = vunpack.c.h.b16 %v2333
        %v7216 = vunpack.c.l.b16 %v2334
        %v7217 = vunpack.c.h.b16 %v2334
        %v7218 = vunpack.c.l.b16 %v2335
        %v7219 = vunpack.c.l.b16 %v2336
        %v7220 = vunpack.c.h.b16 %v2336
        %v7221 = vunpack.c.l.b16 %v2337
        %v7222 = vunpack.c.h.b16 %v2337
        %v7223 = vunpack.c.l.b16 %v2338
        %v7224 = vunpack.c.l.b16 %v2339
        %v7225 = vunpack.c.h.b16 %v2339
        %v7226 = vunpack.c.l.b16 %v2340
        %v7227 = vunpack.c.h.b16 %v2340
        %v7228 = vunpack.c.l.b16 %v2341
        %v7229 = vunpack.c.l.b16 %v2342
        %v7230 = vunpack.c.h.b16 %v2342
        %v7231 = vunpack.c.l.b16 %v2343
        %v7232 = vunpack.c.h.b16 %v2343
        %v7233 = vunpack.c.l.b16 %v2344
        %v7234 = vunpack.c.l.b16 %v2345
        %v7235 = vunpack.c.h.b16 %v2345
        %v7236 = vunpack.c.l.b16 %v2346
        %v7237 = vunpack.c.h.b16 %v2346
        %v7238 = vunpack.c.l.b16 %v2347
        %v7239 = vunpack.c.l.b16 %v2348
        %v7240 = vunpack.c.h.b16 %v2348
        %v7241 = vunpack.c.l.b16 %v2349
        %v7242 = vunpack.c.h.b16 %v2349
        %v7243 = vunpack.c.l.b16 %v2350
        %v7244 = vunpack.c.l.b16 %v2351
        %v7245 = vunpack.c.h.b16 %v2351
        %v7246 = vunpack.c.l.b16 %v2352
        %v7247 = vunpack.c.h.b16 %v2352
        %v7248 = vunpack.c.l.b16 %v2353
        %v7249 = vunpack.c.l.b16 %v2354
        %v7250 = vunpack.c.h.b16 %v2354
        %v7251 = vunpack.c.l.b16 %v2355
        %v7252 = vunpack.c.h.b16 %v2355
        %v7253 = vunpack.c.l.b16 %v2356
        %v7254 = vunpack.c.l.b16 %v2357
        %v7255 = vunpack.c.h.b16 %v2357
        %v7256 = vunpack.c.l.b16 %v2358
        %v7257 = vunpack.c.h.b16 %v2358
        %v7258 = vunpack.c.l.b16 %v2359
        %v7259 = vunpack.c.l.b16 %v2360
        %v7260 = vunpack.c.h.b16 %v2360
        %v7261 = vunpack.c.l.b16 %v2361
        %v7262 = vunpack.c.h.b16 %v2361
        %v7263 = vunpack.c.l.b16 %v2362
        %v7264 = vunpack.c.l.b16 %v2363
        %v7265 = vunpack.c.h.b16 %v2363
        %v7266 = vunpack.c.l.b16 %v2364
        %v7267 = vunpack.c.h.b16 %v2364
        %v7268 = vunpack.c.l.b16 %v2365
        %v7269 = vunpack.c.l.b16 %v2366
        %v7270 = vunpack.c.h.b16 %v2366
        %v7271 = vunpack.c.l.b16 %v2367
        %v7272 = vunpack.c.h.b16 %v2367
        %v7273 = vunpack.c.l.b16 %v2368
        %v7274 = vunpack.c.l.b16 %v2369
        %v7275 = vunpack.c.h.b16 %v2369
        %v7276 = vunpack.c.l.b16 %v2370
        %v7277 = vunpack.c.h.b16 %v2370
        %v7278 = vunpack.c.l.b16 %v2371
        %v7279 = vunpack.c.l.b16 %v2372
        %v7280 = vunpack.c.h.b16 %v2372
        %v7281 = vunpack.c.l.b16 %v2373
        %v7282 = vunpack.c.h.b16 %v2373
        %v7283 = vunpack.c.l.b16 %v2374
        %v7284 = vunpack.c.l.b16 %v2375
        %v7285 = vunpack.c.h.b16 %v2375
        %v7286 = vunpack.c.l.b16 %v2376
        %v7287 = vunpack.c.h.b16 %v2376
        %v7288 = vunpack.c.l.b16 %v2377
        %v7289 = vunpack.c.l.b16 %v2378
        %v7290 = vunpack.c.h.b16 %v2378
        %v7291 = vunpack.c.l.b16 %v2379
        %v7292 = vunpack.c.h.b16 %v2379
        %v7293 = vunpack.c.l.b16 %v2380
        %v7294 = vunpack.c.l.b16 %v2381
        %v7295 = vunpack.c.h.b16 %v2381
        %v7296 = vunpack.c.l.b16 %v2382
        %v7297 = vunpack.c.h.b16 %v2382
        %v7298 = vunpack.c.l.b16 %v2383
        %v7299 = vunpack.c.l.b16 %v2384
        %v7300 = vunpack.c.h.b16 %v2384
        %v7301 = vunpack.c.l.b16 %v2385
        %v7302 = vunpack.c.h.b16 %v2385
        %v7303 = vunpack.c.l.b16 %v2386
        %v7304 = vunpack.c.l.b16 %v2387
        %v7305 = vunpack.c.h.b16 %v2387
        %v7306 = vunpack.c.l.b16 %v2388
        %v7307 = vunpack.c.h.b16 %v2388
        %v7308 = vunpack.c.l.b16 %v2389
        %v7309 = vunpack.c.l.b16 %v2390
        %v7310 = vunpack.c.h.b16 %v2390
        %v7311 = vunpack.c.l.b16 %v2391
        %v7312 = vunpack.c.h.b16 %v2391
        %v7313 = vunpack.c.l.b16 %v2392
        %v7314 = vunpack.c.l.b16 %v2393
        %v7315 = vunpack.c.h.b16 %v2393
        %v7316 = vunpack.c.l.b16 %v2394
        %v7317 = vunpack.c.h.b16 %v2394
        %v7318 = vunpack.c.l.b16 %v2395
        %v7319 = vunpack.c.l.b16 %v2396
        %v7320 = vunpack.c.h.b16 %v2396
        %v7321 = vunpack.c.l.b16 %v2397
        %v7322 = vunpack.c.h.b16 %v2397
        %v7323 = vunpack.c.l.b16 %v2398
        %v7324 = vunpack.c.l.b16 %v2399
        %v7325 = vunpack.c.h.b16 %v2399
        %v7326 = vunpack.c.l.b16 %v2400
        %v7327 = vunpack.c.h.b16 %v2400
        %v7328 = vunpack.c.l.b16 %v2401
        %v7329 = vunpack.c.l.b16 %v2402
        %v7330 = vunpack.c.h.b16 %v2402
        %v7331 = vunpack.c.l.b16 %v2403
        %v7332 = vunpack.c.h.b16 %v2403
        %v7333 = vunpack.c.l.b16 %v2404
        %v7334 = vunpack.c.l.b16 %v2405
        %v7335 = vunpack.c.h.b16 %v2405
        %v7336 = vunpack.c.l.b16 %v2406
        %v7337 = vunpack.c.h.b16 %v2406
        %v7338 = vunpack.c.l.b16 %v2407
        %v7339 = vunpack.c.l.b16 %v2408
        %v7340 = vunpack.c.h.b16 %v2408
        %v7341 = vunpack.c.l.b16 %v2409
        %v7342 = vunpack.c.h.b16 %v2409
        %v7343 = vunpack.c.l.b16 %v2410
        %v7344 = vunpack.c.l.b16 %v2411
        %v7345 = vunpack.c.h.b16 %v2411
        %v7346 = vunpack.c.l.b16 %v2412
        %v7347 = vunpack.c.h.b16 %v2412
        %v7348 = vunpack.c.l.b16 %v2413
        %v7349 = vunpack.c.l.b16 %v2414
        %v7350 = vunpack.c.h.b16 %v2414
        %v7351 = vunpack.c.l.b16 %v2415
        %v7352 = vunpack.c.h.b16 %v2415
        %v7353 = vunpack.c.l.b16 %v2416
        %v7354 = vunpack.c.l.b16 %v2417
        %v7355 = vunpack.c.h.b16 %v2417
        %v7356 = vunpack.c.l.b16 %v2418
        %v7357 = vunpack.c.h.b16 %v2418
        %v7358 = vunpack.c.l.b16 %v2419
        %v7359 = vunpack.c.l.b16 %v2420
        %v7360 = vunpack.c.h.b16 %v2420
        %v7361 = vunpack.c.l.b16 %v2421
        %v7362 = vunpack.c.h.b16 %v2421
        %v7363 = vunpack.c.l.b16 %v2422
        %v7364 = vunpack.c.l.b16 %v2423
        %v7365 = vunpack.c.h.b16 %v2423
        %v7366 = vunpack.c.l.b16 %v2424
        %v7367 = vunpack.c.h.b16 %v2424
        %v7368 = vunpack.c.l.b16 %v2425
        %v7369 = vunpack.c.l.b16 %v2426
        %v7370 = vunpack.c.h.b16 %v2426
        %v7371 = vunpack.c.l.b16 %v2427
        %v7372 = vunpack.c.h.b16 %v2427
        %v7373 = vunpack.c.l.b16 %v2428
        %v7374 = vunpack.c.l.b16 %v2429
        %v7375 = vunpack.c.h.b16 %v2429
        %v7376 = vunpack.c.l.b16 %v2430
        %v7377 = vunpack.c.h.b16 %v2430
        %v7378 = vunpack.c.l.b16 %v2431
        %v7379 = vunpack.c.l.b16 %v2432
        %v7380 = vunpack.c.h.b16 %v2432
        %v7381 = vunpack.c.l.b16 %v2433
        %v7382 = vunpack.c.h.b16 %v2433
        %v7383 = vunpack.c.l.b16 %v2434
        %v7384 = vunpack.c.l.b16 %v2435
        %v7385 = vunpack.c.h.b16 %v2435
        %v7386 = vunpack.c.l.b16 %v2436
        %v7387 = vunpack.c.h.b16 %v2436
        %v7388 = vunpack.c.l.b16 %v2437
        %v7389 = vunpack.c.l.b16 %v2438
        %v7390 = vunpack.c.h.b16 %v2438
        %v7391 = vunpack.c.l.b16 %v2439
        %v7392 = vunpack.c.h.b16 %v2439
        %v7393 = vunpack.c.l.b16 %v2440
        %v7394 = vunpack.c.l.b16 %v2441
        %v7395 = vunpack.c.h.b16 %v2441
        %v7396 = vunpack.c.l.b16 %v2442
        %v7397 = vunpack.c.h.b16 %v2442
        %v7398 = vunpack.c.l.b16 %v2443
        %v7399 = vunpack.c.l.b16 %v2444
        %v7400 = vunpack.c.h.b16 %v2444
        %v7401 = vunpack.c.l.b16 %v2445
        %v7402 = vunpack.c.h.b16 %v2445
        %v7403 = vunpack.c.l.b16 %v2446
        %v7404 = vunpack.c.l.b16 %v2447
        %v7405 = vunpack.c.h.b16 %v2447
        %v7406 = vunpack.c.l.b16 %v2448
        %v7407 = vunpack.c.h.b16 %v2448
        %v7408 = vunpack.c.l.b16 %v2449
        %v7409 = vunpack.c.l.b16 %v2450
        %v7410 = vunpack.c.h.b16 %v2450
        %v7411 = vunpack.c.l.b16 %v2451
        %v7412 = vunpack.c.h.b16 %v2451
        %v7413 = vunpack.c.l.b16 %v2452
        %v7414 = vunpack.c.l.b16 %v2453
        %v7415 = vunpack.c.h.b16 %v2453
        %v7416 = vunpack.c.l.b16 %v2454
        %v7417 = vunpack.c.h.b16 %v2454
        %v7418 = vunpack.c.l.b16 %v2455
        %v7419 = vunpack.c.l.b16 %v2456
        %v7420 = vunpack.c.h.b16 %v2456
        %v7421 = vunpack.c.l.b16 %v2457
        %v7422 = vunpack.c.h.b16 %v2457
        %v7423 = vunpack.c.l.b16 %v2458
        %v7424 = vunpack.c.l.b16 %v2459
        %v7425 = vunpack.c.h.b16 %v2459
        %v7426 = vunpack.c.l.b16 %v2460
        %v7427 = vunpack.c.h.b16 %v2460
        %v7428 = vunpack.c.l.b16 %v2461
        %v7429 = vunpack.c.l.b16 %v2462
        %v7430 = vunpack.c.h.b16 %v2462
        %v7431 = vunpack.c.l.b16 %v2463
        %v7432 = vunpack.c.h.b16 %v2463
        %v7433 = vunpack.c.l.b16 %v2464
        %v7434 = vunpack.c.l.b16 %v2465
        %v7435 = vunpack.c.h.b16 %v2465
        %v7436 = vunpack.c.l.b16 %v2466
        %v7437 = vunpack.c.h.b16 %v2466
        %v7438 = vunpack.c.l.b16 %v2467
        %v7439 = vunpack.c.l.b16 %v2468
        %v7440 = vunpack.c.h.b16 %v2468
        %v7441 = vunpack.c.l.b16 %v2469
        %v7442 = vunpack.c.h.b16 %v2469
        %v7443 = vunpack.c.l.b16 %v2470
        %v7444 = vunpack.c.l.b16 %v2471
        %v7445 = vunpack.c.h.b16 %v2471
        %v7446 = vunpack.c.l.b16 %v2472
        %v7447 = vunpack.c.h.b16 %v2472
        %v7448 = vunpack.c.l.b16 %v2473
        %v7449 = vunpack.c.l.b16 %v2474
        %v7450 = vunpack.c.h.b16 %v2474
        %v7451 = vunpack.c.l.b16 %v2475
        %v7452 = vunpack.c.h.b16 %v2475
        %v7453 = vunpack.c.l.b16 %v2476
        %v7454 = vunpack.c.l.b16 %v2477
        %v7455 = vunpack.c.h.b16 %v2477
        %v7456 = vunpack.c.l.b16 %v2478
        %v7457 = vunpack.c.h.b16 %v2478
        %v7458 = vunpack.c.l.b16 %v2479
        %v7459 = vunpack.c.l.b16 %v2480
        %v7460 = vunpack.c.h.b16 %v2480
        %v7461 = vunpack.c.l.b16 %v2481
        %v7462 = vunpack.c.h.b16 %v2481
        %v7463 = vunpack.c.l.b16 %v2482
        %v7464 = vunpack.c.l.b16 %v2483
        %v7465 = vunpack.c.h.b16 %v2483
        %v7466 = vunpack.c.l.b16 %v2484
        %v7467 = vunpack.c.h.b16 %v2484
        %v7468 = vunpack.c.l.b16 %v2485
        %v7469 = vunpack.c.l.b16 %v2486
        %v7470 = vunpack.c.h.b16 %v2486
        %v7471 = vunpack.c.l.b16 %v2487
        %v7472 = vunpack.c.h.b16 %v2487
        %v7473 = vunpack.c.l.b16 %v2488
        %v7474 = vunpack.c.l.b16 %v2489
        %v7475 = vunpack.c.h.b16 %v2489
        %v7476 = vunpack.c.l.b16 %v2490
        %v7477 = vunpack.c.h.b16 %v2490
        %v7478 = vunpack.c.l.b16 %v2491
        %v7479 = vunpack.c.l.b16 %v2492
        %v7480 = vunpack.c.h.b16 %v2492
        %v7481 = vunpack.c.l.b16 %v2493
        %v7482 = vunpack.c.h.b16 %v2493
        %v7483 = vunpack.c.l.b16 %v2494
        %v7484 = vunpack.c.l.b16 %v2495
        %v7485 = vunpack.c.h.b16 %v2495
        %v7486 = vunpack.c.l.b16 %v2496
        %v7487 = vunpack.c.h.b16 %v2496
        %v7488 = vunpack.c.l.b16 %v2497
        %v7489 = vunpack.c.l.b16 %v2498
        %v7490 = vunpack.c.h.b16 %v2498
        %v7491 = vunpack.c.l.b16 %v2499
        %v7492 = vunpack.c.h.b16 %v2499
        %v7493 = vunpack.c.l.b16 %v2500
        %v7494 = vunpack.c.l.b16 %v2501
        %v7495 = vunpack.c.h.b16 %v2501
        %v7496 = vunpack.c.l.b16 %v2502
        %v7497 = vunpack.c.h.b16 %v2502
        %v7498 = vunpack.c.l.b16 %v2503
        %v7499 = vunpack.c.l.b16 %v2504
        %v7500 = vunpack.c.h.b16 %v2504
        %v7501 = vunpack.c.l.b16 %v2505
        %v7502 = vunpack.c.h.b16 %v2505
        %v7503 = vunpack.c.l.b16 %v2506
        %v7504 = vunpack.c.l.b16 %v2507
        %v7505 = vunpack.c.h.b16 %v2507
        %v7506 = vunpack.c.l.b16 %v2508
        %v7507 = vunpack.c.h.b16 %v2508
        %v7508 = vunpack.c.l.b16 %v2509
        %v7509 = vunpack.c.l.b16 %v2510
        %v7510 = vunpack.c.h.b16 %v2510
        %v7511 = vunpack.c.l.b16 %v2511
        %v7512 = vunpack.c.h.b16 %v2511
        %v7513 = vunpack.c.l.b16 %v2512
        %v7514 = vunpack.c.l.b16 %v2513
        %v7515 = vunpack.c.h.b16 %v2513
        %v7516 = vunpack.c.l.b16 %v2514
        %v7517 = vunpack.c.h.b16 %v2514
        %v7518 = vunpack.c.l.b16 %v2515
        %v7519 = vunpack.c.l.b16 %v2516
        %v7520 = vunpack.c.h.b16 %v2516
        %v7521 = vunpack.c.l.b16 %v2517
        %v7522 = vunpack.c.h.b16 %v2517
        %v7523 = vunpack.c.l.b16 %v2518
        %v7524 = vunpack.c.l.b16 %v2519
        %v7525 = vunpack.c.h.b16 %v2519
        %v7526 = vunpack.c.l.b16 %v2520
        %v7527 = vunpack.c.h.b16 %v2520
        %v7528 = vunpack.c.l.b16 %v2521
        %v7529 = vunpack.c.l.b16 %v2522
        %v7530 = vunpack.c.h.b16 %v2522
        %v7531 = vunpack.c.l.b16 %v2523
        %v7532 = vunpack.c.h.b16 %v2523
        %v7533 = vunpack.c.l.b16 %v2524
        %v7534 = vunpack.c.l.b16 %v2525
        %v7535 = vunpack.c.h.b16 %v2525
        %v7536 = vunpack.c.l.b16 %v2526
        %v7537 = vunpack.c.h.b16 %v2526
        %v7538 = vunpack.c.l.b16 %v2527
        %v7539 = vunpack.c.l.b16 %v2528
        %v7540 = vunpack.c.h.b16 %v2528
        %v7541 = vunpack.c.l.b16 %v2529
        %v7542 = vunpack.c.h.b16 %v2529
        %v7543 = vunpack.c.l.b16 %v2530
        %v7544 = vunpack.c.l.b16 %v2531
        %v7545 = vunpack.c.h.b16 %v2531
        %v7546 = vunpack.c.l.b16 %v2532
        %v7547 = vunpack.c.h.b16 %v2532
        %v7548 = vunpack.c.l.b16 %v2533
        %v7549 = vunpack.c.l.b16 %v2534
        %v7550 = vunpack.c.h.b16 %v2534
        %v7551 = vunpack.c.l.b16 %v2535
        %v7552 = vunpack.c.h.b16 %v2535
        %v7553 = vunpack.c.l.b16 %v2536
        %v7554 = vunpack.c.l.b16 %v2537
        %v7555 = vunpack.c.h.b16 %v2537
        %v7556 = vunpack.c.l.b16 %v2538
        %v7557 = vunpack.c.h.b16 %v2538
        %v7558 = vunpack.c.l.b16 %v2539
        %v7559 = vunpack.c.l.b16 %v2540
        %v7560 = vunpack.c.h.b16 %v2540
        %v7561 = vunpack.c.l.b16 %v2541
        %v7562 = vunpack.c.h.b16 %v2541
        %v7563 = vunpack.c.l.b16 %v2542
        %v7564 = vunpack.c.l.b16 %v2543
        %v7565 = vunpack.c.h.b16 %v2543
        %v7566 = vunpack.c.l.b16 %v2544
        %v7567 = vunpack.c.h.b16 %v2544
        %v7568 = vunpack.c.l.b16 %v2545
        %v7569 = vunpack.c.l.b16 %v2546
        %v7570 = vunpack.c.h.b16 %v2546
        %v7571 = vunpack.c.l.b16 %v2547
        %v7572 = vunpack.c.h.b16 %v2547
        %v7573 = vunpack.c.l.b16 %v2548
        %v7574 = vunpack.c.l.b16 %v2549
        %v7575 = vunpack.c.h.b16 %v2549
        %v7576 = vunpack.c.l.b16 %v2550
        %v7577 = vunpack.c.h.b16 %v2550
        %v7578 = vunpack.c.l.b16 %v2551
        %v7579 = vpack.c.b16 %v4459, %v4454
        %v7580 = vpack.c.b16 %v4460, %v4455
        %v7581 = vpack.c.b16 %v4461, %v4456
        %v7582 = vpack.c.b16 %v4462, %v4457
        %v7583 = vpack.c.b16 %v4463, %v4458
        %v7584 = vpack.c.b16 %v4469, %v4464
        %v7585 = vpack.c.b16 %v4470, %v4465
        %v7586 = vpack.c.b16 %v4471, %v4466
        %v7587 = vpack.c.b16 %v4472, %v4467
        %v7588 = vpack.c.b16 %v4473, %v4468
        %v7589 = vpack.c.b16 %v4479, %v4474
        %v7590 = vpack.c.b16 %v4480, %v4475
        %v7591 = vpack.c.b16 %v4481, %v4476
        %v7592 = vpack.c.b16 %v4482, %v4477
        %v7593 = vpack.c.b16 %v4483, %v4478
        %v7594 = vpack.c.b16 %v4489, %v4484
        %v7595 = vpack.c.b16 %v4490, %v4485
        %v7596 = vpack.c.b16 %v4491, %v4486
        %v7597 = vpack.c.b16 %v4492, %v4487
        %v7598 = vpack.c.b16 %v4493, %v4488
        %v7599 = vpack.c.b16 %v4499, %v4494
        %v7600 = vpack.c.b16 %v4500, %v4495
        %v7601 = vpack.c.b16 %v4501, %v4496
        %v7602 = vpack.c.b16 %v4502, %v4497
        %v7603 = vpack.c.b16 %v4503, %v4498
        %v7604 = vpack.c.b16 %v4509, %v4504
        %v7605 = vpack.c.b16 %v4510, %v4505
        %v7606 = vpack.c.b16 %v4511, %v4506
        %v7607 = vpack.c.b16 %v4512, %v4507
        %v7608 = vpack.c.b16 %v4513, %v4508
        %v7609 = vpack.c.b16 %v4519, %v4514
        %v7610 = vpack.c.b16 %v4520, %v4515
        %v7611 = vpack.c.b16 %v4521, %v4516
        %v7612 = vpack.c.b16 %v4522, %v4517
        %v7613 = vpack.c.b16 %v4523, %v4518
        %v7614 = vpack.c.b16 %v4529, %v4524
        %v7615 = vpack.c.b16 %v4530, %v4525
        %v7616 = vpack.c.b16 %v4531, %v4526
        %v7617 = vpack.c.b16 %v4532, %v4527
        %v7618 = vpack.c.b16 %v4533, %v4528
        %v7619 = vpack.c.b16 %v4539, %v4534
        %v7620 = vpack.c.b16 %v4540, %v4535
        %v7621 = vpack.c.b16 %v4541, %v4536
        %v7622 = vpack.c.b16 %v4542, %v4537
        %v7623 = vpack.c.b16 %v4543, %v4538
        %v7624 = vpack.c.b16 %v4549, %v4544
        %v7625 = vpack.c.b16 %v4550, %v4545
        %v7626 = vpack.c.b16 %v4551, %v4546
        %v7627 = vpack.c.b16 %v4552, %v4547
        %v7628 = vpack.c.b16 %v4553, %v4548
        %v7629 = vpack.c.b16 %v4559, %v4554
        %v7630 = vpack.c.b16 %v4560, %v4555
        %v7631 = vpack.c.b16 %v4561, %v4556
        %v7632 = vpack.c.b16 %v4562, %v4557
        %v7633 = vpack.c.b16 %v4563, %v4558
        %v7634 = vpack.c.b16 %v4569, %v4564
        %v7635 = vpack.c.b16 %v4570, %v4565
        %v7636 = vpack.c.b16 %v4571, %v4566
        %v7637 = vpack.c.b16 %v4572, %v4567
        %v7638 = vpack.c.b16 %v4573, %v4568
        %v7639 = vpack.c.b16 %v4579, %v4574
        %v7640 = vpack.c.b16 %v4580, %v4575
        %v7641 = vpack.c.b16 %v4581, %v4576
        %v7642 = vpack.c.b16 %v4582, %v4577
        %v7643 = vpack.c.b16 %v4583, %v4578
        %v7644 = vpack.c.b16 %v4589, %v4584
        %v7645 = vpack.c.b16 %v4590, %v4585
        %v7646 = vpack.c.b16 %v4591, %v4586
        %v7647 = vpack.c.b16 %v4592, %v4587
        %v7648 = vpack.c.b16 %v4593, %v4588
        %v7649 = vpack.c.b16 %v4599, %v4594
        %v7650 = vpack.c.b16 %v4600, %v4595
        %v7651 = vpack.c.b16 %v4601, %v4596
        %v7652 = vpack.c.b16 %v4602, %v4597
        %v7653 = vpack.c.b16 %v4603, %v4598
        %v7654 = vpack.c.b16 %v4609, %v4604
        %v7655 = vpack.c.b16 %v4610, %v4605
        %v7656 = vpack.c.b16 %v4611, %v4606
        %v7657 = vpack.c.b16 %v4612, %v4607
        %v7658 = vpack.c.b16 %v4613, %v4608
        %v7659 = vpack.c.b16 %v4619, %v4614
        %v7660 = vpack.c.b16 %v4620, %v4615
        %v7661 = vpack.c.b16 %v4621, %v4616
        %v7662 = vpack.c.b16 %v4622, %v4617
        %v7663 = vpack.c.b16 %v4623, %v4618
        %v7664 = vpack.c.b16 %v4629, %v4624
        %v7665 = vpack.c.b16 %v4630, %v4625
        %v7666 = vpack.c.b16 %v4631, %v4626
        %v7667 = vpack.c.b16 %v4632, %v4627
        %v7668 = vpack.c.b16 %v4633, %v4628
        %v7669 = vpack.c.b16 %v4639, %v4634
        %v7670 = vpack.c.b16 %v4640, %v4635
        %v7671 = vpack.c.b16 %v4641, %v4636
        %v7672 = vpack.c.b16 %v4642, %v4637
        %v7673 = vpack.c.b16 %v4643, %v4638
        %v7674 = vpack.c.b16 %v4649, %v4644
        %v7675 = vpack.c.b16 %v4650, %v4645
        %v7676 = vpack.c.b16 %v4651, %v4646
        %v7677 = vpack.c.b16 %v4652, %v4647
        %v7678 = vpack.c.b16 %v4653, %v4648
        %v7679 = vpack.c.b16 %v4659, %v4654
        %v7680 = vpack.c.b16 %v4660, %v4655
        %v7681 = vpack.c.b16 %v4661, %v4656
        %v7682 = vpack.c.b16 %v4662, %v4657
        %v7683 = vpack.c.b16 %v4663, %v4658
        %v7684 = vpack.c.b16 %v4669, %v4664
        %v7685 = vpack.c.b16 %v4670, %v4665
        %v7686 = vpack.c.b16 %v4671, %v4666
        %v7687 = vpack.c.b16 %v4672, %v4667
        %v7688 = vpack.c.b16 %v4673, %v4668
        %v7689 = vpack.c.b16 %v4679, %v4674
        %v7690 = vpack.c.b16 %v4680, %v4675
        %v7691 = vpack.c.b16 %v4681, %v4676
        %v7692 = vpack.c.b16 %v4682, %v4677
        %v7693 = vpack.c.b16 %v4683, %v4678
        %v7694 = vpack.c.b16 %v4689, %v4684
        %v7695 = vpack.c.b16 %v4690, %v4685
        %v7696 = vpack.c.b16 %v4691, %v4686
        %v7697 = vpack.c.b16 %v4692, %v4687
        %v7698 = vpack.c.b16 %v4693, %v4688
        %v7699 = vpack.c.b16 %v4699, %v4694
        %v7700 = vpack.c.b16 %v4700, %v4695
        %v7701 = vpack.c.b16 %v4701, %v4696
        %v7702 = vpack.c.b16 %v4702, %v4697
        %v7703 = vpack.c.b16 %v4703, %v4698
        %v7704 = vpack.c.b16 %v4709, %v4704
        %v7705 = vpack.c.b16 %v4710, %v4705
        %v7706 = vpack.c.b16 %v4711, %v4706
        %v7707 = vpack.c.b16 %v4712, %v4707
        %v7708 = vpack.c.b16 %v4713, %v4708
        %v7709 = vpack.c.b16 %v4719, %v4714
        %v7710 = vpack.c.b16 %v4720, %v4715
        %v7711 = vpack.c.b16 %v4721, %v4716
        %v7712 = vpack.c.b16 %v4722, %v4717
        %v7713 = vpack.c.b16 %v4723, %v4718
        %v7714 = vpack.c.b16 %v4729, %v4724
        %v7715 = vpack.c.b16 %v4730, %v4725
        %v7716 = vpack.c.b16 %v4731, %v4726
        %v7717 = vpack.c.b16 %v4732, %v4727
        %v7718 = vpack.c.b16 %v4733, %v4728
        %v7719 = vpack.c.b16 %v4739, %v4734
        %v7720 = vpack.c.b16 %v4740, %v4735
        %v7721 = vpack.c.b16 %v4741, %v4736
        %v7722 = vpack.c.b16 %v4742, %v4737
        %v7723 = vpack.c.b16 %v4743, %v4738
        %v7724 = vpack.c.b16 %v4749, %v4744
        %v7725 = vpack.c.b16 %v4750, %v4745
        %v7726 = vpack.c.b16 %v4751, %v4746
        %v7727 = vpack.c.b16 %v4752, %v4747
        %v7728 = vpack.c.b16 %v4753, %v4748
        %v7729 = vpack.c.b16 %v4759, %v4754
        %v7730 = vpack.c.b16 %v4760, %v4755
        %v7731 = vpack.c.b16 %v4761, %v4756
        %v7732 = vpack.c.b16 %v4762, %v4757
        %v7733 = vpack.c.b16 %v4763, %v4758
        %v7734 = vpack.c.b16 %v4769, %v4764
        %v7735 = vpack.c.b16 %v4770, %v4765
        %v7736 = vpack.c.b16 %v4771, %v4766
        %v7737 = vpack.c.b16 %v4772, %v4767
        %v7738 = vpack.c.b16 %v4773, %v4768
        %v7739 = vpack.c.b16 %v4779, %v4774
        %v7740 = vpack.c.b16 %v4780, %v4775
        %v7741 = vpack.c.b16 %v4781, %v4776
        %v7742 = vpack.c.b16 %v4782, %v4777
        %v7743 = vpack.c.b16 %v4783, %v4778
        %v7744 = vpack.c.b16 %v4789, %v4784
        %v7745 = vpack.c.b16 %v4790, %v4785
        %v7746 = vpack.c.b16 %v4791, %v4786
        %v7747 = vpack.c.b16 %v4792, %v4787
        %v7748 = vpack.c.b16 %v4793, %v4788
        %v7749 = vpack.c.b16 %v4799, %v4794
        %v7750 = vpack.c.b16 %v4800, %v4795
        %v7751 = vpack.c.b16 %v4801, %v4796
        %v7752 = vpack.c.b16 %v4802, %v4797
        %v7753 = vpack.c.b16 %v4803, %v4798
        %v7754 = vpack.c.b16 %v4809, %v4804
        %v7755 = vpack.c.b16 %v4810, %v4805
        %v7756 = vpack.c.b16 %v4811, %v4806
        %v7757 = vpack.c.b16 %v4812, %v4807
        %v7758 = vpack.c.b16 %v4813, %v4808
        %v7759 = vpack.c.b16 %v4819, %v4814
        %v7760 = vpack.c.b16 %v4820, %v4815
        %v7761 = vpack.c.b16 %v4821, %v4816
        %v7762 = vpack.c.b16 %v4822, %v4817
        %v7763 = vpack.c.b16 %v4823, %v4818
        %v7764 = vpack.c.b16 %v4829, %v4824
        %v7765 = vpack.c.b16 %v4830, %v4825
        %v7766 = vpack.c.b16 %v4831, %v4826
        %v7767 = vpack.c.b16 %v4832, %v4827
        %v7768 = vpack.c.b16 %v4833, %v4828
        %v7769 = vpack.c.b16 %v4839, %v4834
        %v7770 = vpack.c.b16 %v4840, %v4835
        %v7771 = vpack.c.b16 %v4841, %v4836
        %v7772 = vpack.c.b16 %v4842, %v4837
        %v7773 = vpack.c.b16 %v4843, %v4838
        %v7774 = vpack.c.b16 %v4849, %v4844
        %v7775 = vpack.c.b16 %v4850, %v4845
        %v7776 = vpack.c.b16 %v4851, %v4846
        %v7777 = vpack.c.b16 %v4852, %v4847
        %v7778 = vpack.c.b16 %v4853, %v4848
        %v7779 = vpack.c.b16 %v4859, %v4854
        %v7780 = vpack.c.b16 %v4860, %v4855
        %v7781 = vpack.c.b16 %v4861, %v4856
        %v7782 = vpack.c.b16 %v4862, %v4857
        %v7783 = vpack.c.b16 %v4863, %v4858
        %v7784 = vpack.c.b16 %v4869, %v4864
        %v7785 = vpack.c.b16 %v4870, %v4865
        %v7786 = vpack.c.b16 %v4871, %v4866
        %v7787 = vpack.c.b16 %v4872, %v4867
        %v7788 = vpack.c.b16 %v4873, %v4868
        %v7789 = vpack.c.b16 %v4879, %v4874
        %v7790 = vpack.c.b16 %v4880, %v4875
        %v7791 = vpack.c.b16 %v4881, %v4876
        %v7792 = vpack.c.b16 %v4882, %v4877
        %v7793 = vpack.c.b16 %v4883, %v4878
        %v7794 = vpack.c.b16 %v4889, %v4884
        %v7795 = vpack.c.b16 %v4890, %v4885
        %v7796 = vpack.c.b16 %v4891, %v4886
        %v7797 = vpack.c.b16 %v4892, %v4887
        %v7798 = vpack.c.b16 %v4893, %v4888
        %v7799 = vpack.c.b16 %v4899, %v4894
        %v7800 = vpack.c.b16 %v4900, %v4895
        %v7801 = vpack.c.b16 %v4901, %v4896
        %v7802 = vpack.c.b16 %v4902, %v4897
        %v7803 = vpack.c.b16 %v4903, %v4898
        %v7804 = vpack.c.b16 %v4909, %v4904
        %v7805 = vpack.c.b16 %v4910, %v4905
        %v7806 = vpack.c.b16 %v4911, %v4906
        %v7807 = vpack.c.b16 %v4912, %v4907
        %v7808 = vpack.c.b16 %v4913, %v4908
        %v7809 = vpack.c.b16 %v4919, %v4914
        %v7810 = vpack.c.b16 %v4920, %v4915
        %v7811 = vpack.c.b16 %v4921, %v4916
        %v7812 = vpack.c.b16 %v4922, %v4917
        %v7813 = vpack.c.b16 %v4923, %v4918
        %v7814 = vpack.c.b16 %v4929, %v4924
        %v7815 = vpack.c.b16 %v4930, %v4925
        %v7816 = vpack.c.b16 %v4931, %v4926
        %v7817 = vpack.c.b16 %v4932, %v4927
        %v7818 = vpack.c.b16 %v4933, %v4928
        %v7819 = vpack.c.b16 %v4939, %v4934
        %v7820 = vpack.c.b16 %v4940, %v4935
        %v7821 = vpack.c.b16 %v4941, %v4936
        %v7822 = vpack.c.b16 %v4942, %v4937
        %v7823 = vpack.c.b16 %v4943, %v4938
        %v7824 = vpack.c.b16 %v4949, %v4944
        %v7825 = vpack.c.b16 %v4950, %v4945
        %v7826 = vpack.c.b16 %v4951, %v4946
        %v7827 = vpack.c.b16 %v4952, %v4947
        %v7828 = vpack.c.b16 %v4953, %v4948
        %v7829 = vpack.c.b16 %v4959, %v4954
        %v7830 = vpack.c.b16 %v4960, %v4955
        %v7831 = vpack.c.b16 %v4961, %v4956
        %v7832 = vpack.c.b16 %v4962, %v4957
        %v7833 = vpack.c.b16 %v4963, %v4958
        %v7834 = vpack.c.b16 %v4969, %v4964
        %v7835 = vpack.c.b16 %v4970, %v4965
        %v7836 = vpack.c.b16 %v4971, %v4966
        %v7837 = vpack.c.b16 %v4972, %v4967
        %v7838 = vpack.c.b16 %v4973, %v4968
        %v7839 = vpack.c.b16 %v4979, %v4974
        %v7840 = vpack.c.b16 %v4980, %v4975
        %v7841 = vpack.c.b16 %v4981, %v4976
        %v7842 = vpack.c.b16 %v4982, %v4977
        %v7843 = vpack.c.b16 %v4983, %v4978
        %v7844 = vpack.c.b16 %v4989, %v4984
        %v7845 = vpack.c.b16 %v4990, %v4985
        %v7846 = vpack.c.b16 %v4991, %v4986
        %v7847 = vpack.c.b16 %v4992, %v4987
        %v7848 = vpack.c.b16 %v4993, %v4988
        %v7849 = vpack.c.b16 %v4999, %v4994
        %v7850 = vpack.c.b16 %v5000, %v4995
        %v7851 = vpack.c.b16 %v5001, %v4996
        %v7852 = vpack.c.b16 %v5002, %v4997
        %v7853 = vpack.c.b16 %v5003, %v4998
        %v7854 = vpack.c.b16 %v5009, %v5004
        %v7855 = vpack.c.b16 %v5010, %v5005
        %v7856 = vpack.c.b16 %v5011, %v5006
        %v7857 = vpack.c.b16 %v5012, %v5007
        %v7858 = vpack.c.b16 %v5013, %v5008
        %v7859 = vpack.c.b16 %v5019, %v5014
        %v7860 = vpack.c.b16 %v5020, %v5015
        %v7861 = vpack.c.b16 %v5021, %v5016
        %v7862 = vpack.c.b16 %v5022, %v5017
        %v7863 = vpack.c.b16 %v5023, %v5018
        %v7864 = vpack.c.b16 %v5029, %v5024
        %v7865 = vpack.c.b16 %v5030, %v5025
        %v7866 = vpack.c.b16 %v5031, %v5026
        %v7867 = vpack.c.b16 %v5032, %v5027
        %v7868 = vpack.c.b16 %v5033, %v5028
        %v7869 = vpack.c.b16 %v5039, %v5034
        %v7870 = vpack.c.b16 %v5040, %v5035
        %v7871 = vpack.c.b16 %v5041, %v5036
        %v7872 = vpack.c.b16 %v5042, %v5037
        %v7873 = vpack.c.b16 %v5043, %v5038
        %v7874 = vpack.c.b16 %v5049, %v5044
        %v7875 = vpack.c.b16 %v5050, %v5045
        %v7876 = vpack.c.b16 %v5051, %v5046
        %v7877 = vpack.c.b16 %v5052, %v5047
        %v7878 = vpack.c.b16 %v5053, %v5048
        %v7879 = vpack.c.b16 %v5059, %v5054
        %v7880 = vpack.c.b16 %v5060, %v5055
        %v7881 = vpack.c.b16 %v5061, %v5056
        %v7882 = vpack.c.b16 %v5062, %v5057
        %v7883 = vpack.c.b16 %v5063, %v5058
        %v7884 = vpack.c.b16 %v5069, %v5064
        %v7885 = vpack.c.b16 %v5070, %v5065
        %v7886 = vpack.c.b16 %v5071, %v5066
        %v7887 = vpack.c.b16 %v5072, %v5067
        %v7888 = vpack.c.b16 %v5073, %v5068
        %v7889 = vpack.c.b16 %v5079, %v5074
        %v7890 = vpack.c.b16 %v5080, %v5075
        %v7891 = vpack.c.b16 %v5081, %v5076
        %v7892 = vpack.c.b16 %v5082, %v5077
        %v7893 = vpack.c.b16 %v5083, %v5078
        %v7894 = vpack.c.b16 %v5089, %v5084
        %v7895 = vpack.c.b16 %v5090, %v5085
        %v7896 = vpack.c.b16 %v5091, %v5086
        %v7897 = vpack.c.b16 %v5092, %v5087
        %v7898 = vpack.c.b16 %v5093, %v5088
        %v7899 = vpack.c.b16 %v5099, %v5094
        %v7900 = vpack.c.b16 %v5100, %v5095
        %v7901 = vpack.c.b16 %v5101, %v5096
        %v7902 = vpack.c.b16 %v5102, %v5097
        %v7903 = vpack.c.b16 %v5103, %v5098
        %v7904 = vpack.c.b16 %v5109, %v5104
        %v7905 = vpack.c.b16 %v5110, %v5105
        %v7906 = vpack.c.b16 %v5111, %v5106
        %v7907 = vpack.c.b16 %v5112, %v5107
        %v7908 = vpack.c.b16 %v5113, %v5108
        %v7909 = vpack.c.b16 %v5119, %v5114
        %v7910 = vpack.c.b16 %v5120, %v5115
        %v7911 = vpack.c.b16 %v5121, %v5116
        %v7912 = vpack.c.b16 %v5122, %v5117
        %v7913 = vpack.c.b16 %v5123, %v5118
        %v7914 = vpack.c.b16 %v5129, %v5124
        %v7915 = vpack.c.b16 %v5130, %v5125
        %v7916 = vpack.c.b16 %v5131, %v5126
        %v7917 = vpack.c.b16 %v5132, %v5127
        %v7918 = vpack.c.b16 %v5133, %v5128
        %v7919 = vpack.c.b16 %v5139, %v5134
        %v7920 = vpack.c.b16 %v5140, %v5135
        %v7921 = vpack.c.b16 %v5141, %v5136
        %v7922 = vpack.c.b16 %v5142, %v5137
        %v7923 = vpack.c.b16 %v5143, %v5138
        %v7924 = vpack.c.b16 %v5149, %v5144
        %v7925 = vpack.c.b16 %v5150, %v5145
        %v7926 = vpack.c.b16 %v5151, %v5146
        %v7927 = vpack.c.b16 %v5152, %v5147
        %v7928 = vpack.c.b16 %v5153, %v5148
        %v7929 = vpack.c.b16 %v5159, %v5154
        %v7930 = vpack.c.b16 %v5160, %v5155
        %v7931 = vpack.c.b16 %v5161, %v5156
        %v7932 = vpack.c.b16 %v5162, %v5157
        %v7933 = vpack.c.b16 %v5163, %v5158
        %v7934 = vpack.c.b16 %v5169, %v5164
        %v7935 = vpack.c.b16 %v5170, %v5165
        %v7936 = vpack.c.b16 %v5171, %v5166
        %v7937 = vpack.c.b16 %v5172, %v5167
        %v7938 = vpack.c.b16 %v5173, %v5168
        %v7939 = vpack.c.b16 %v5179, %v5174
        %v7940 = vpack.c.b16 %v5180, %v5175
        %v7941 = vpack.c.b16 %v5181, %v5176
        %v7942 = vpack.c.b16 %v5182, %v5177
        %v7943 = vpack.c.b16 %v5183, %v5178
        %v7944 = vpack.c.b16 %v5189, %v5184
        %v7945 = vpack.c.b16 %v5190, %v5185
        %v7946 = vpack.c.b16 %v5191, %v5186
        %v7947 = vpack.c.b16 %v5192, %v5187
        %v7948 = vpack.c.b16 %v5193, %v5188
        %v7949 = vpack.c.b16 %v5199, %v5194
        %v7950 = vpack.c.b16 %v5200, %v5195
        %v7951 = vpack.c.b16 %v5201, %v5196
        %v7952 = vpack.c.b16 %v5202, %v5197
        %v7953 = vpack.c.b16 %v5203, %v5198
        %v7954 = vpack.c.b16 %v5209, %v5204
        %v7955 = vpack.c.b16 %v5210, %v5205
        %v7956 = vpack.c.b16 %v5211, %v5206
        %v7957 = vpack.c.b16 %v5212, %v5207
        %v7958 = vpack.c.b16 %v5213, %v5208
        %v7959 = vpack.c.b16 %v5219, %v5214
        %v7960 = vpack.c.b16 %v5220, %v5215
        %v7961 = vpack.c.b16 %v5221, %v5216
        %v7962 = vpack.c.b16 %v5222, %v5217
        %v7963 = vpack.c.b16 %v5223, %v5218
        %v7964 = vpack.c.b16 %v5229, %v5224
        %v7965 = vpack.c.b16 %v5230, %v5225
        %v7966 = vpack.c.b16 %v5231, %v5226
        %v7967 = vpack.c.b16 %v5232, %v5227
        %v7968 = vpack.c.b16 %v5233, %v5228
        %v7969 = vpack.c.b16 %v5239, %v5234
        %v7970 = vpack.c.b16 %v5240, %v5235
        %v7971 = vpack.c.b16 %v5241, %v5236
        %v7972 = vpack.c.b16 %v5242, %v5237
        %v7973 = vpack.c.b16 %v5243, %v5238
        %v7974 = vpack.c.b16 %v5249, %v5244
        %v7975 = vpack.c.b16 %v5250, %v5245
        %v7976 = vpack.c.b16 %v5251, %v5246
        %v7977 = vpack.c.b16 %v5252, %v5247
        %v7978 = vpack.c.b16 %v5253, %v5248
        %v7979 = vpack.c.b16 %v5259, %v5254
        %v7980 = vpack.c.b16 %v5260, %v5255
        %v7981 = vpack.c.b16 %v5261, %v5256
        %v7982 = vpack.c.b16 %v5262, %v5257
        %v7983 = vpack.c.b16 %v5263, %v5258
        %v7984 = vpack.c.b16 %v5269, %v5264
        %v7985 = vpack.c.b16 %v5270, %v5265
        %v7986 = vpack.c.b16 %v5271, %v5266
        %v7987 = vpack.c.b16 %v5272, %v5267
        %v7988 = vpack.c.b16 %v5273, %v5268
        %v7989 = vpack.c.b16 %v5279, %v5274
        %v7990 = vpack.c.b16 %v5280, %v5275
        %v7991 = vpack.c.b16 %v5281, %v5276
        %v7992 = vpack.c.b16 %v5282, %v5277
        %v7993 = vpack.c.b16 %v5283, %v5278
        %v7994 = vpack.c.b16 %v5289, %v5284
        %v7995 = vpack.c.b16 %v5290, %v5285
        %v7996 = vpack.c.b16 %v5291, %v5286
        %v7997 = vpack.c.b16 %v5292, %v5287
        %v7998 = vpack.c.b16 %v5293, %v5288
        %v7999 = vpack.c.b16 %v5299, %v5294
        %v8000 = vpack.c.b16 %v5300, %v5295
        %v8001 = vpack.c.b16 %v5301, %v5296
        %v8002 = vpack.c.b16 %v5302, %v5297
        %v8003 = vpack.c.b16 %v5303, %v5298
        %v8004 = vpack.c.b16 %v5309, %v5304
        %v8005 = vpack.c.b16 %v5310, %v5305
        %v8006 = vpack.c.b16 %v5311, %v5306
        %v8007 = vpack.c.b16 %v5312, %v5307
        %v8008 = vpack.c.b16 %v5313, %v5308
        %v8009 = vpack.c.b16 %v5319, %v5314
        %v8010 = vpack.c.b16 %v5320, %v5315
        %v8011 = vpack.c.b16 %v5321, %v5316
        %v8012 = vpack.c.b16 %v5322, %v5317
        %v8013 = vpack.c.b16 %v5323, %v5318
        %v8014 = vpack.c.b16 %v5329, %v5324
        %v8015 = vpack.c.b16 %v5330, %v5325
        %v8016 = vpack.c.b16 %v5331, %v5326
        %v8017 = vpack.c.b16 %v5332, %v5327
        %v8018 = vpack.c.b16 %v5333, %v5328
        %v8019 = vpack.c.b16 %v5339, %v5334
        %v8020 = vpack.c.b16 %v5340, %v5335
        %v8021 = vpack.c.b16 %v5341, %v5336
        %v8022 = vpack.c.b16 %v5342, %v5337
        %v8023 = vpack.c.b16 %v5343, %v5338
        %v8024 = vpack.c.b16 %v5349, %v5344
        %v8025 = vpack.c.b16 %v5350, %v5345
        %v8026 = vpack.c.b16 %v5351, %v5346
        %v8027 = vpack.c.b16 %v5352, %v5347
        %v8028 = vpack.c.b16 %v5353, %v5348
        %v8029 = vpack.c.b16 %v5359, %v5354
        %v8030 = vpack.c.b16 %v5360, %v5355
        %v8031 = vpack.c.b16 %v5361, %v5356
        %v8032 = vpack.c.b16 %v5362, %v5357
        %v8033 = vpack.c.b16 %v5363, %v5358
        %v8034 = vpack.c.b16 %v5369, %v5364
        %v8035 = vpack.c.b16 %v5370, %v5365
        %v8036 = vpack.c.b16 %v5371, %v5366
        %v8037 = vpack.c.b16 %v5372, %v5367
        %v8038 = vpack.c.b16 %v5373, %v5368
        %v8039 = vpack.c.b16 %v5379, %v5374
        %v8040 = vpack.c.b16 %v5380, %v5375
        %v8041 = vpack.c.b16 %v5381, %v5376
        %v8042 = vpack.c.b16 %v5382, %v5377
        %v8043 = vpack.c.b16 %v5383, %v5378
        %v8044 = vpack.c.b16 %v5389, %v5384
        %v8045 = vpack.c.b16 %v5390, %v5385
        %v8046 = vpack.c.b16 %v5391, %v5386
        %v8047 = vpack.c.b16 %v5392, %v5387
        %v8048 = vpack.c.b16 %v5393, %v5388
        %v8049 = vpack.c.b16 %v5399, %v5394
        %v8050 = vpack.c.b16 %v5400, %v5395
        %v8051 = vpack.c.b16 %v5401, %v5396
        %v8052 = vpack.c.b16 %v5402, %v5397
        %v8053 = vpack.c.b16 %v5403, %v5398
        %v8054 = vpack.c.b16 %v5409, %v5404
        %v8055 = vpack.c.b16 %v5410, %v5405
        %v8056 = vpack.c.b16 %v5411, %v5406
        %v8057 = vpack.c.b16 %v5412, %v5407
        %v8058 = vpack.c.b16 %v5413, %v5408
        %v8059 = vpack.c.b16 %v5419, %v5414
        %v8060 = vpack.c.b16 %v5420, %v5415
        %v8061 = vpack.c.b16 %v5421, %v5416
        %v8062 = vpack.c.b16 %v5422, %v5417
        %v8063 = vpack.c.b16 %v5423, %v5418
        %v8064 = vpack.c.b16 %v5429, %v5424
        %v8065 = vpack.c.b16 %v5430, %v5425
        %v8066 = vpack.c.b16 %v5431, %v5426
        %v8067 = vpack.c.b16 %v5432, %v5427
        %v8068 = vpack.c.b16 %v5433, %v5428
        %v8069 = vpack.c.b16 %v5439, %v5434
        %v8070 = vpack.c.b16 %v5440, %v5435
        %v8071 = vpack.c.b16 %v5441, %v5436
        %v8072 = vpack.c.b16 %v5442, %v5437
        %v8073 = vpack.c.b16 %v5443, %v5438
        %v8074 = vpack.c.b16 %v5449, %v5444
        %v8075 = vpack.c.b16 %v5450, %v5445
        %v8076 = vpack.c.b16 %v5451, %v5446
        %v8077 = vpack.c.b16 %v5452, %v5447
        %v8078 = vpack.c.b16 %v5453, %v5448
        %v8079 = vpack.c.b16 %v5459, %v5454
        %v8080 = vpack.c.b16 %v5460, %v5455
        %v8081 = vpack.c.b16 %v5461, %v5456
        %v8082 = vpack.c.b16 %v5462, %v5457
        %v8083 = vpack.c.b16 %v5463, %v5458
        %v8084 = vpack.c.b16 %v5469, %v5464
        %v8085 = vpack.c.b16 %v5470, %v5465
        %v8086 = vpack.c.b16 %v5471, %v5466
        %v8087 = vpack.c.b16 %v5472, %v5467
        %v8088 = vpack.c.b16 %v5473, %v5468
        %v8089 = vpack.c.b16 %v5479, %v5474
        %v8090 = vpack.c.b16 %v5480, %v5475
        %v8091 = vpack.c.b16 %v5481, %v5476
        %v8092 = vpack.c.b16 %v5482, %v5477
        %v8093 = vpack.c.b16 %v5483, %v5478
        %v8094 = vpack.c.b16 %v5489, %v5484
        %v8095 = vpack.c.b16 %v5490, %v5485
        %v8096 = vpack.c.b16 %v5491, %v5486
        %v8097 = vpack.c.b16 %v5492, %v5487
        %v8098 = vpack.c.b16 %v5493, %v5488
        %v8099 = vpack.c.b16 %v5499, %v5494
        %v8100 = vpack.c.b16 %v5500, %v5495
        %v8101 = vpack.c.b16 %v5501, %v5496
        %v8102 = vpack.c.b16 %v5502, %v5497
        %v8103 = vpack.c.b16 %v5503, %v5498
        %v8104 = vpack.c.b16 %v5509, %v5504
        %v8105 = vpack.c.b16 %v5510, %v5505
        %v8106 = vpack.c.b16 %v5511, %v5506
        %v8107 = vpack.c.b16 %v5512, %v5507
        %v8108 = vpack.c.b16 %v5513, %v5508
        %v8109 = vpack.c.b16 %v5519, %v5514
        %v8110 = vpack.c.b16 %v5520, %v5515
        %v8111 = vpack.c.b16 %v5521, %v5516
        %v8112 = vpack.c.b16 %v5522, %v5517
        %v8113 = vpack.c.b16 %v5523, %v5518
        %v8114 = vpack.c.b16 %v5529, %v5524
        %v8115 = vpack.c.b16 %v5530, %v5525
        %v8116 = vpack.c.b16 %v5531, %v5526
        %v8117 = vpack.c.b16 %v5532, %v5527
        %v8118 = vpack.c.b16 %v5533, %v5528
        %v8119 = vpack.c.b16 %v5539, %v5534
        %v8120 = vpack.c.b16 %v5540, %v5535
        %v8121 = vpack.c.b16 %v5541, %v5536
        %v8122 = vpack.c.b16 %v5542, %v5537
        %v8123 = vpack.c.b16 %v5543, %v5538
        %v8124 = vpack.c.b16 %v5549, %v5544
        %v8125 = vpack.c.b16 %v5550, %v5545
        %v8126 = vpack.c.b16 %v5551, %v5546
        %v8127 = vpack.c.b16 %v5552, %v5547
        %v8128 = vpack.c.b16 %v5553, %v5548
        %v8129 = vpack.c.b16 %v5559, %v5554
        %v8130 = vpack.c.b16 %v5560, %v5555
        %v8131 = vpack.c.b16 %v5561, %v5556
        %v8132 = vpack.c.b16 %v5562, %v5557
        %v8133 = vpack.c.b16 %v5563, %v5558
        %v8134 = vpack.c.b16 %v5569, %v5564
        %v8135 = vpack.c.b16 %v5570, %v5565
        %v8136 = vpack.c.b16 %v5571, %v5566
        %v8137 = vpack.c.b16 %v5572, %v5567
        %v8138 = vpack.c.b16 %v5573, %v5568
        %v8139 = vpack.c.b16 %v5579, %v5574
        %v8140 = vpack.c.b16 %v5580, %v5575
        %v8141 = vpack.c.b16 %v5581, %v5576
        %v8142 = vpack.c.b16 %v5582, %v5577
        %v8143 = vpack.c.b16 %v5583, %v5578
        %v8144 = vpack.c.b16 %v5589, %v5584
        %v8145 = vpack.c.b16 %v5590, %v5585
        %v8146 = vpack.c.b16 %v5591, %v5586
        %v8147 = vpack.c.b16 %v5592, %v5587
        %v8148 = vpack.c.b16 %v5593, %v5588
        %v8149 = vpack.c.b16 %v5599, %v5594
        %v8150 = vpack.c.b16 %v5600, %v5595
        %v8151 = vpack.c.b16 %v5601, %v5596
        %v8152 = vpack.c.b16 %v5602, %v5597
        %v8153 = vpack.c.b16 %v5603, %v5598
        %v8154 = vpack.c.b16 %v5609, %v5604
        %v8155 = vpack.c.b16 %v5610, %v5605
        %v8156 = vpack.c.b16 %v5611, %v5606
        %v8157 = vpack.c.b16 %v5612, %v5607
        %v8158 = vpack.c.b16 %v5613, %v5608
        %v8159 = vpack.c.b16 %v5619, %v5614
        %v8160 = vpack.c.b16 %v5620, %v5615
        %v8161 = vpack.c.b16 %v5621, %v5616
        %v8162 = vpack.c.b16 %v5622, %v5617
        %v8163 = vpack.c.b16 %v5623, %v5618
        %v8164 = vpack.c.b16 %v5629, %v5624
        %v8165 = vpack.c.b16 %v5630, %v5625
        %v8166 = vpack.c.b16 %v5631, %v5626
        %v8167 = vpack.c.b16 %v5632, %v5627
        %v8168 = vpack.c.b16 %v5633, %v5628
        %v8169 = vpack.c.b16 %v5639, %v5634
        %v8170 = vpack.c.b16 %v5640, %v5635
        %v8171 = vpack.c.b16 %v5641, %v5636
        %v8172 = vpack.c.b16 %v5642, %v5637
        %v8173 = vpack.c.b16 %v5643, %v5638
        %v8174 = vpack.c.b16 %v5649, %v5644
        %v8175 = vpack.c.b16 %v5650, %v5645
        %v8176 = vpack.c.b16 %v5651, %v5646
        %v8177 = vpack.c.b16 %v5652, %v5647
        %v8178 = vpack.c.b16 %v5653, %v5648
        %v8179 = vpack.c.b16 %v5659, %v5654
        %v8180 = vpack.c.b16 %v5660, %v5655
        %v8181 = vpack.c.b16 %v5661, %v5656
        %v8182 = vpack.c.b16 %v5662, %v5657
        %v8183 = vpack.c.b16 %v5663, %v5658
        %v8184 = vpack.c.b16 %v5669, %v5664
        %v8185 = vpack.c.b16 %v5670, %v5665
        %v8186 = vpack.c.b16 %v5671, %v5666
        %v8187 = vpack.c.b16 %v5672, %v5667
        %v8188 = vpack.c.b16 %v5673, %v5668
        %v8189 = vpack.c.b16 %v5679, %v5674
        %v8190 = vpack.c.b16 %v5680, %v5675
        %v8191 = vpack.c.b16 %v5681, %v5676
        %v8192 = vpack.c.b16 %v5682, %v5677
        %v8193 = vpack.c.b16 %v5683, %v5678
        %v8194 = vpack.c.b16 %v5689, %v5684
        %v8195 = vpack.c.b16 %v5690, %v5685
        %v8196 = vpack.c.b16 %v5691, %v5686
        %v8197 = vpack.c.b16 %v5692, %v5687
        %v8198 = vpack.c.b16 %v5693, %v5688
        %v8199 = vpack.c.b16 %v5699, %v5694
        %v8200 = vpack.c.b16 %v5700, %v5695
        %v8201 = vpack.c.b16 %v5701, %v5696
        %v8202 = vpack.c.b16 %v5702, %v5697
        %v8203 = vpack.c.b16 %v5703, %v5698
        %v8204 = vpack.c.b16 %v5709, %v5704
        %v8205 = vpack.c.b16 %v5710, %v5705
        %v8206 = vpack.c.b16 %v5711, %v5706
        %v8207 = vpack.c.b16 %v5712, %v5707
        %v8208 = vpack.c.b16 %v5713, %v5708
        %v8209 = vpack.c.b16 %v5719, %v5714
        %v8210 = vpack.c.b16 %v5720, %v5715
        %v8211 = vpack.c.b16 %v5721, %v5716
        %v8212 = vpack.c.b16 %v5722, %v5717
        %v8213 = vpack.c.b16 %v5723, %v5718
        %v8214 = vpack.c.b16 %v5729, %v5724
        %v8215 = vpack.c.b16 %v5730, %v5725
        %v8216 = vpack.c.b16 %v5731, %v5726
        %v8217 = vpack.c.b16 %v5732, %v5727
        %v8218 = vpack.c.b16 %v5733, %v5728
        %v8219 = vpack.c.b16 %v5739, %v5734
        %v8220 = vpack.c.b16 %v5740, %v5735
        %v8221 = vpack.c.b16 %v5741, %v5736
        %v8222 = vpack.c.b16 %v5742, %v5737
        %v8223 = vpack.c.b16 %v5743, %v5738
        %v8224 = vpack.c.b16 %v5749, %v5744
        %v8225 = vpack.c.b16 %v5750, %v5745
        %v8226 = vpack.c.b16 %v5751, %v5746
        %v8227 = vpack.c.b16 %v5752, %v5747
        %v8228 = vpack.c.b16 %v5753, %v5748
        %v8229 = vpack.c.b16 %v5759, %v5754
        %v8230 = vpack.c.b16 %v5760, %v5755
        %v8231 = vpack.c.b16 %v5761, %v5756
        %v8232 = vpack.c.b16 %v5762, %v5757
        %v8233 = vpack.c.b16 %v5763, %v5758
        %v8234 = vpack.c.b16 %v5769, %v5764
        %v8235 = vpack.c.b16 %v5770, %v5765
        %v8236 = vpack.c.b16 %v5771, %v5766
        %v8237 = vpack.c.b16 %v5772, %v5767
        %v8238 = vpack.c.b16 %v5773, %v5768
        %v8239 = vpack.c.b16 %v5779, %v5774
        %v8240 = vpack.c.b16 %v5780, %v5775
        %v8241 = vpack.c.b16 %v5781, %v5776
        %v8242 = vpack.c.b16 %v5782, %v5777
        %v8243 = vpack.c.b16 %v5783, %v5778
        %v8244 = vpack.c.b16 %v5789, %v5784
        %v8245 = vpack.c.b16 %v5790, %v5785
        %v8246 = vpack.c.b16 %v5791, %v5786
        %v8247 = vpack.c.b16 %v5792, %v5787
        %v8248 = vpack.c.b16 %v5793, %v5788
        %v8249 = vpack.c.b16 %v5799, %v5794
        %v8250 = vpack.c.b16 %v5800, %v5795
        %v8251 = vpack.c.b16 %v5801, %v5796
        %v8252 = vpack.c.b16 %v5802, %v5797
        %v8253 = vpack.c.b16 %v5803, %v5798
        %v8254 = vpack.c.b16 %v5809, %v5804
        %v8255 = vpack.c.b16 %v5810, %v5805
        %v8256 = vpack.c.b16 %v5811, %v5806
        %v8257 = vpack.c.b16 %v5812, %v5807
        %v8258 = vpack.c.b16 %v5813, %v5808
        %v8259 = vpack.c.b16 %v5819, %v5814
        %v8260 = vpack.c.b16 %v5820, %v5815
        %v8261 = vpack.c.b16 %v5821, %v5816
        %v8262 = vpack.c.b16 %v5822, %v5817
        %v8263 = vpack.c.b16 %v5823, %v5818
        %v8264 = vpack.c.b16 %v5829, %v5824
        %v8265 = vpack.c.b16 %v5830, %v5825
        %v8266 = vpack.c.b16 %v5831, %v5826
        %v8267 = vpack.c.b16 %v5832, %v5827
        %v8268 = vpack.c.b16 %v5833, %v5828
        %v8269 = vpack.c.b16 %v5839, %v5834
        %v8270 = vpack.c.b16 %v5840, %v5835
        %v8271 = vpack.c.b16 %v5841, %v5836
        %v8272 = vpack.c.b16 %v5842, %v5837
        %v8273 = vpack.c.b16 %v5843, %v5838
        %v8274 = vpack.c.b16 %v5849, %v5844
        %v8275 = vpack.c.b16 %v5850, %v5845
        %v8276 = vpack.c.b16 %v5851, %v5846
        %v8277 = vpack.c.b16 %v5852, %v5847
        %v8278 = vpack.c.b16 %v5853, %v5848
        %v8279 = vpack.c.b16 %v5859, %v5854
        %v8280 = vpack.c.b16 %v5860, %v5855
        %v8281 = vpack.c.b16 %v5861, %v5856
        %v8282 = vpack.c.b16 %v5862, %v5857
        %v8283 = vpack.c.b16 %v5863, %v5858
        %v8284 = vpack.c.b16 %v5869, %v5864
        %v8285 = vpack.c.b16 %v5870, %v5865
        %v8286 = vpack.c.b16 %v5871, %v5866
        %v8287 = vpack.c.b16 %v5872, %v5867
        %v8288 = vpack.c.b16 %v5873, %v5868
        %v8289 = vpack.c.b16 %v5879, %v5874
        %v8290 = vpack.c.b16 %v5880, %v5875
        %v8291 = vpack.c.b16 %v5881, %v5876
        %v8292 = vpack.c.b16 %v5882, %v5877
        %v8293 = vpack.c.b16 %v5883, %v5878
        %v8294 = vpack.c.b16 %v5889, %v5884
        %v8295 = vpack.c.b16 %v5890, %v5885
        %v8296 = vpack.c.b16 %v5891, %v5886
        %v8297 = vpack.c.b16 %v5892, %v5887
        %v8298 = vpack.c.b16 %v5893, %v5888
        %v8299 = vpack.c.b16 %v5899, %v5894
        %v8300 = vpack.c.b16 %v5900, %v5895
        %v8301 = vpack.c.b16 %v5901, %v5896
        %v8302 = vpack.c.b16 %v5902, %v5897
        %v8303 = vpack.c.b16 %v5903, %v5898
        %v8304 = vpack.c.b16 %v5909, %v5904
        %v8305 = vpack.c.b16 %v5910, %v5905
        %v8306 = vpack.c.b16 %v5911, %v5906
        %v8307 = vpack.c.b16 %v5912, %v5907
        %v8308 = vpack.c.b16 %v5913, %v5908
        %v8309 = vpack.c.b16 %v5919, %v5914
        %v8310 = vpack.c.b16 %v5920, %v5915
        %v8311 = vpack.c.b16 %v5921, %v5916
        %v8312 = vpack.c.b16 %v5922, %v5917
        %v8313 = vpack.c.b16 %v5923, %v5918
        %v8314 = vpack.c.b16 %v5929, %v5924
        %v8315 = vpack.c.b16 %v5930, %v5925
        %v8316 = vpack.c.b16 %v5931, %v5926
        %v8317 = vpack.c.b16 %v5932, %v5927
        %v8318 = vpack.c.b16 %v5933, %v5928
        %v8319 = vpack.c.b16 %v5939, %v5934
        %v8320 = vpack.c.b16 %v5940, %v5935
        %v8321 = vpack.c.b16 %v5941, %v5936
        %v8322 = vpack.c.b16 %v5942, %v5937
        %v8323 = vpack.c.b16 %v5943, %v5938
        %v8324 = vpack.c.b16 %v5949, %v5944
        %v8325 = vpack.c.b16 %v5950, %v5945
        %v8326 = vpack.c.b16 %v5951, %v5946
        %v8327 = vpack.c.b16 %v5952, %v5947
        %v8328 = vpack.c.b16 %v5953, %v5948
        %v8329 = vpack.c.b16 %v5959, %v5954
        %v8330 = vpack.c.b16 %v5960, %v5955
        %v8331 = vpack.c.b16 %v5961, %v5956
        %v8332 = vpack.c.b16 %v5962, %v5957
        %v8333 = vpack.c.b16 %v5963, %v5958
        %v8334 = vpack.c.b16 %v5969, %v5964
        %v8335 = vpack.c.b16 %v5970, %v5965
        %v8336 = vpack.c.b16 %v5971, %v5966
        %v8337 = vpack.c.b16 %v5972, %v5967
        %v8338 = vpack.c.b16 %v5973, %v5968
        %v8339 = vpack.c.b16 %v5979, %v5974
        %v8340 = vpack.c.b16 %v5980, %v5975
        %v8341 = vpack.c.b16 %v5981, %v5976
        %v8342 = vpack.c.b16 %v5982, %v5977
        %v8343 = vpack.c.b16 %v5983, %v5978
        %v8344 = vpack.c.b16 %v5989, %v5984
        %v8345 = vpack.c.b16 %v5990, %v5985
        %v8346 = vpack.c.b16 %v5991, %v5986
        %v8347 = vpack.c.b16 %v5992, %v5987
        %v8348 = vpack.c.b16 %v5993, %v5988
        %v8349 = vpack.c.b16 %v5999, %v5994
        %v8350 = vpack.c.b16 %v6000, %v5995
        %v8351 = vpack.c.b16 %v6001, %v5996
        %v8352 = vpack.c.b16 %v6002, %v5997
        %v8353 = vpack.c.b16 %v6003, %v5998
        %v8354 = vpack.c.b16 %v6009, %v6004
        %v8355 = vpack.c.b16 %v6010, %v6005
        %v8356 = vpack.c.b16 %v6011, %v6006
        %v8357 = vpack.c.b16 %v6012, %v6007
        %v8358 = vpack.c.b16 %v6013, %v6008
        %v8359 = vpack.c.b16 %v6019, %v6014
        %v8360 = vpack.c.b16 %v6020, %v6015
        %v8361 = vpack.c.b16 %v6021, %v6016
        %v8362 = vpack.c.b16 %v6022, %v6017
        %v8363 = vpack.c.b16 %v6023, %v6018
        %v8364 = vpack.c.b16 %v6029, %v6024
        %v8365 = vpack.c.b16 %v6030, %v6025
        %v8366 = vpack.c.b16 %v6031, %v6026
        %v8367 = vpack.c.b16 %v6032, %v6027
        %v8368 = vpack.c.b16 %v6033, %v6028
        %v8369 = vpack.c.b16 %v6039, %v6034
        %v8370 = vpack.c.b16 %v6040, %v6035
        %v8371 = vpack.c.b16 %v6041, %v6036
        %v8372 = vpack.c.b16 %v6042, %v6037
        %v8373 = vpack.c.b16 %v6043, %v6038
        %v8374 = vpack.c.b16 %v6049, %v6044
        %v8375 = vpack.c.b16 %v6050, %v6045
        %v8376 = vpack.c.b16 %v6051, %v6046
        %v8377 = vpack.c.b16 %v6052, %v6047
        %v8378 = vpack.c.b16 %v6053, %v6048
        %v8379 = vpack.c.b16 %v6059, %v6054
        %v8380 = vpack.c.b16 %v6060, %v6055
        %v8381 = vpack.c.b16 %v6061, %v6056
        %v8382 = vpack.c.b16 %v6062, %v6057
        %v8383 = vpack.c.b16 %v6063, %v6058
        %v8384 = vpack.c.b16 %v6069, %v6064
        %v8385 = vpack.c.b16 %v6070, %v6065
        %v8386 = vpack.c.b16 %v6071, %v6066
        %v8387 = vpack.c.b16 %v6072, %v6067
        %v8388 = vpack.c.b16 %v6073, %v6068
        %v8389 = vpack.c.b16 %v6079, %v6074
        %v8390 = vpack.c.b16 %v6080, %v6075
        %v8391 = vpack.c.b16 %v6081, %v6076
        %v8392 = vpack.c.b16 %v6082, %v6077
        %v8393 = vpack.c.b16 %v6083, %v6078
        %v8394 = vpack.c.b16 %v6089, %v6084
        %v8395 = vpack.c.b16 %v6090, %v6085
        %v8396 = vpack.c.b16 %v6091, %v6086
        %v8397 = vpack.c.b16 %v6092, %v6087
        %v8398 = vpack.c.b16 %v6093, %v6088
        %v8399 = vpack.c.b16 %v6099, %v6094
        %v8400 = vpack.c.b16 %v6100, %v6095
        %v8401 = vpack.c.b16 %v6101, %v6096
        %v8402 = vpack.c.b16 %v6102, %v6097
        %v8403 = vpack.c.b16 %v6103, %v6098
        %v8404 = vpack.c.b16 %v6109, %v6104
        %v8405 = vpack.c.b16 %v6110, %v6105
        %v8406 = vpack.c.b16 %v6111, %v6106
        %v8407 = vpack.c.b16 %v6112, %v6107
        %v8408 = vpack.c.b16 %v6113, %v6108
        %v8409 = vpack.c.b16 %v6119, %v6114
        %v8410 = vpack.c.b16 %v6120, %v6115
        %v8411 = vpack.c.b16 %v6121, %v6116
        %v8412 = vpack.c.b16 %v6122, %v6117
        %v8413 = vpack.c.b16 %v6123, %v6118
        %v8414 = vpack.c.b16 %v6129, %v6124
        %v8415 = vpack.c.b16 %v6130, %v6125
        %v8416 = vpack.c.b16 %v6131, %v6126
        %v8417 = vpack.c.b16 %v6132, %v6127
        %v8418 = vpack.c.b16 %v6133, %v6128
        %v8419 = vpack.c.b16 %v6139, %v6134
        %v8420 = vpack.c.b16 %v6140, %v6135
        %v8421 = vpack.c.b16 %v6141, %v6136
        %v8422 = vpack.c.b16 %v6142, %v6137
        %v8423 = vpack.c.b16 %v6143, %v6138
        %v8424 = vpack.c.b16 %v6149, %v6144
        %v8425 = vpack.c.b16 %v6150, %v6145
        %v8426 = vpack.c.b16 %v6151, %v6146
        %v8427 = vpack.c.b16 %v6152, %v6147
        %v8428 = vpack.c.b16 %v6153, %v6148
        %v8429 = vpack.c.b16 %v6159, %v6154
        %v8430 = vpack.c.b16 %v6160, %v6155
        %v8431 = vpack.c.b16 %v6161, %v6156
        %v8432 = vpack.c.b16 %v6162, %v6157
        %v8433 = vpack.c.b16 %v6163, %v6158
        %v8434 = vpack.c.b16 %v6169, %v6164
        %v8435 = vpack.c.b16 %v6170, %v6165
        %v8436 = vpack.c.b16 %v6171, %v6166
        %v8437 = vpack.c.b16 %v6172, %v6167
        %v8438 = vpack.c.b16 %v6173, %v6168
        %v8439 = vpack.c.b16 %v6179, %v6174
        %v8440 = vpack.c.b16 %v6180, %v6175
        %v8441 = vpack.c.b16 %v6181, %v6176
        %v8442 = vpack.c.b16 %v6182, %v6177
        %v8443 = vpack.c.b16 %v6183, %v6178
        %v8444 = vpack.c.b16 %v6189, %v6184
        %v8445 = vpack.c.b16 %v6190, %v6185
        %v8446 = vpack.c.b16 %v6191, %v6186
        %v8447 = vpack.c.b16 %v6192, %v6187
        %v8448 = vpack.c.b16 %v6193, %v6188
        %v8449 = vpack.c.b16 %v6199, %v6194
        %v8450 = vpack.c.b16 %v6200, %v6195
        %v8451 = vpack.c.b16 %v6201, %v6196
        %v8452 = vpack.c.b16 %v6202, %v6197
        %v8453 = vpack.c.b16 %v6203, %v6198
        %v8454 = vpack.c.b16 %v6209, %v6204
        %v8455 = vpack.c.b16 %v6210, %v6205
        %v8456 = vpack.c.b16 %v6211, %v6206
        %v8457 = vpack.c.b16 %v6212, %v6207
        %v8458 = vpack.c.b16 %v6213, %v6208
        %v8459 = vpack.c.b16 %v6219, %v6214
        %v8460 = vpack.c.b16 %v6220, %v6215
        %v8461 = vpack.c.b16 %v6221, %v6216
        %v8462 = vpack.c.b16 %v6222, %v6217
        %v8463 = vpack.c.b16 %v6223, %v6218
        %v8464 = vpack.c.b16 %v6229, %v6224
        %v8465 = vpack.c.b16 %v6230, %v6225
        %v8466 = vpack.c.b16 %v6231, %v6226
        %v8467 = vpack.c.b16 %v6232, %v6227
        %v8468 = vpack.c.b16 %v6233, %v6228
        %v8469 = vpack.c.b16 %v6239, %v6234
        %v8470 = vpack.c.b16 %v6240, %v6235
        %v8471 = vpack.c.b16 %v6241, %v6236
        %v8472 = vpack.c.b16 %v6242, %v6237
        %v8473 = vpack.c.b16 %v6243, %v6238
        %v8474 = vpack.c.b16 %v6249, %v6244
        %v8475 = vpack.c.b16 %v6250, %v6245
        %v8476 = vpack.c.b16 %v6251, %v6246
        %v8477 = vpack.c.b16 %v6252, %v6247
        %v8478 = vpack.c.b16 %v6253, %v6248
        %v8479 = vpack.c.b16 %v6259, %v6254
        %v8480 = vpack.c.b16 %v6260, %v6255
        %v8481 = vpack.c.b16 %v6261, %v6256
        %v8482 = vpack.c.b16 %v6262, %v6257
        %v8483 = vpack.c.b16 %v6263, %v6258
        %v8484 = vpack.c.b16 %v6269, %v6264
        %v8485 = vpack.c.b16 %v6270, %v6265
        %v8486 = vpack.c.b16 %v6271, %v6266
        %v8487 = vpack.c.b16 %v6272, %v6267
        %v8488 = vpack.c.b16 %v6273, %v6268
        %v8489 = vpack.c.b16 %v6279, %v6274
        %v8490 = vpack.c.b16 %v6280, %v6275
        %v8491 = vpack.c.b16 %v6281, %v6276
        %v8492 = vpack.c.b16 %v6282, %v6277
        %v8493 = vpack.c.b16 %v6283, %v6278
        %v8494 = vpack.c.b16 %v6289, %v6284
        %v8495 = vpack.c.b16 %v6290, %v6285
        %v8496 = vpack.c.b16 %v6291, %v6286
        %v8497 = vpack.c.b16 %v6292, %v6287
        %v8498 = vpack.c.b16 %v6293, %v6288
        %v8499 = vpack.c.b16 %v6299, %v6294
        %v8500 = vpack.c.b16 %v6300, %v6295
        %v8501 = vpack.c.b16 %v6301, %v6296
        %v8502 = vpack.c.b16 %v6302, %v6297
        %v8503 = vpack.c.b16 %v6303, %v6298
        %v8504 = vpack.c.b16 %v6309, %v6304
        %v8505 = vpack.c.b16 %v6310, %v6305
        %v8506 = vpack.c.b16 %v6311, %v6306
        %v8507 = vpack.c.b16 %v6312, %v6307
        %v8508 = vpack.c.b16 %v6313, %v6308
        %v8509 = vpack.c.b16 %v6319, %v6314
        %v8510 = vpack.c.b16 %v6320, %v6315
        %v8511 = vpack.c.b16 %v6321, %v6316
        %v8512 = vpack.c.b16 %v6322, %v6317
        %v8513 = vpack.c.b16 %v6323, %v6318
        %v8514 = vpack.c.b16 %v6329, %v6324
        %v8515 = vpack.c.b16 %v6330, %v6325
        %v8516 = vpack.c.b16 %v6331, %v6326
        %v8517 = vpack.c.b16 %v6332, %v6327
        %v8518 = vpack.c.b16 %v6333, %v6328
        %v8519 = vpack.c.b16 %v6339, %v6334
        %v8520 = vpack.c.b16 %v6340, %v6335
        %v8521 = vpack.c.b16 %v6341, %v6336
        %v8522 = vpack.c.b16 %v6342, %v6337
        %v8523 = vpack.c.b16 %v6343, %v6338
        %v8524 = vpack.c.b16 %v6349, %v6344
        %v8525 = vpack.c.b16 %v6350, %v6345
        %v8526 = vpack.c.b16 %v6351, %v6346
        %v8527 = vpack.c.b16 %v6352, %v6347
        %v8528 = vpack.c.b16 %v6353, %v6348
        %v8529 = vpack.c.b16 %v6359, %v6354
        %v8530 = vpack.c.b16 %v6360, %v6355
        %v8531 = vpack.c.b16 %v6361, %v6356
        %v8532 = vpack.c.b16 %v6362, %v6357
        %v8533 = vpack.c.b16 %v6363, %v6358
        %v8534 = vpack.c.b16 %v6369, %v6364
        %v8535 = vpack.c.b16 %v6370, %v6365
        %v8536 = vpack.c.b16 %v6371, %v6366
        %v8537 = vpack.c.b16 %v6372, %v6367
        %v8538 = vpack.c.b16 %v6373, %v6368
        %v8539 = vpack.c.b16 %v6379, %v6374
        %v8540 = vpack.c.b16 %v6380, %v6375
        %v8541 = vpack.c.b16 %v6381, %v6376
        %v8542 = vpack.c.b16 %v6382, %v6377
        %v8543 = vpack.c.b16 %v6383, %v6378
        %v8544 = vpack.c.b16 %v6389, %v6384
        %v8545 = vpack.c.b16 %v6390, %v6385
        %v8546 = vpack.c.b16 %v6391, %v6386
        %v8547 = vpack.c.b16 %v6392, %v6387
        %v8548 = vpack.c.b16 %v6393, %v6388
        %v8549 = vpack.c.b16 %v6399, %v6394
        %v8550 = vpack.c.b16 %v6400, %v6395
        %v8551 = vpack.c.b16 %v6401, %v6396
        %v8552 = vpack.c.b16 %v6402, %v6397
        %v8553 = vpack.c.b16 %v6403, %v6398
        %v8554 = vpack.c.b16 %v6409, %v6404
        %v8555 = vpack.c.b16 %v6410, %v6405
        %v8556 = vpack.c.b16 %v6411, %v6406
        %v8557 = vpack.c.b16 %v6412, %v6407
        %v8558 = vpack.c.b16 %v6413, %v6408
        %v8559 = vpack.c.b16 %v6419, %v6414
        %v8560 = vpack.c.b16 %v6420, %v6415
        %v8561 = vpack.c.b16 %v6421, %v6416
        %v8562 = vpack.c.b16 %v6422, %v6417
        %v8563 = vpack.c.b16 %v6423, %v6418
        %v8564 = vpack.c.b16 %v6429, %v6424
        %v8565 = vpack.c.b16 %v6430, %v6425
        %v8566 = vpack.c.b16 %v6431, %v6426
        %v8567 = vpack.c.b16 %v6432, %v6427
        %v8568 = vpack.c.b16 %v6433, %v6428
        %v8569 = vpack.c.b16 %v6439, %v6434
        %v8570 = vpack.c.b16 %v6440, %v6435
        %v8571 = vpack.c.b16 %v6441, %v6436
        %v8572 = vpack.c.b16 %v6442, %v6437
        %v8573 = vpack.c.b16 %v6443, %v6438
        %v8574 = vpack.c.b16 %v6449, %v6444
        %v8575 = vpack.c.b16 %v6450, %v6445
        %v8576 = vpack.c.b16 %v6451, %v6446
        %v8577 = vpack.c.b16 %v6452, %v6447
        %v8578 = vpack.c.b16 %v6453, %v6448
        %v8579 = vpack.c.b16 %v6459, %v6454
        %v8580 = vpack.c.b16 %v6460, %v6455
        %v8581 = vpack.c.b16 %v6461, %v6456
        %v8582 = vpack.c.b16 %v6462, %v6457
        %v8583 = vpack.c.b16 %v6463, %v6458
        %v8584 = vpack.c.b16 %v6469, %v6464
        %v8585 = vpack.c.b16 %v6470, %v6465
        %v8586 = vpack.c.b16 %v6471, %v6466
        %v8587 = vpack.c.b16 %v6472, %v6467
        %v8588 = vpack.c.b16 %v6473, %v6468
        %v8589 = vpack.c.b16 %v6479, %v6474
        %v8590 = vpack.c.b16 %v6480, %v6475
        %v8591 = vpack.c.b16 %v6481, %v6476
        %v8592 = vpack.c.b16 %v6482, %v6477
        %v8593 = vpack.c.b16 %v6483, %v6478
        %v8594 = vpack.c.b16 %v6489, %v6484
        %v8595 = vpack.c.b16 %v6490, %v6485
        %v8596 = vpack.c.b16 %v6491, %v6486
        %v8597 = vpack.c.b16 %v6492, %v6487
        %v8598 = vpack.c.b16 %v6493, %v6488
        %v8599 = vpack.c.b16 %v6499, %v6494
        %v8600 = vpack.c.b16 %v6500, %v6495
        %v8601 = vpack.c.b16 %v6501, %v6496
        %v8602 = vpack.c.b16 %v6502, %v6497
        %v8603 = vpack.c.b16 %v6503, %v6498
        %v8604 = vpack.c.b16 %v6509, %v6504
        %v8605 = vpack.c.b16 %v6510, %v6505
        %v8606 = vpack.c.b16 %v6511, %v6506
        %v8607 = vpack.c.b16 %v6512, %v6507
        %v8608 = vpack.c.b16 %v6513, %v6508
        %v8609 = vpack.c.b16 %v6519, %v6514
        %v8610 = vpack.c.b16 %v6520, %v6515
        %v8611 = vpack.c.b16 %v6521, %v6516
        %v8612 = vpack.c.b16 %v6522, %v6517
        %v8613 = vpack.c.b16 %v6523, %v6518
        %v8614 = vpack.c.b16 %v6529, %v6524
        %v8615 = vpack.c.b16 %v6530, %v6525
        %v8616 = vpack.c.b16 %v6531, %v6526
        %v8617 = vpack.c.b16 %v6532, %v6527
        %v8618 = vpack.c.b16 %v6533, %v6528
        %v8619 = vpack.c.b16 %v6539, %v6534
        %v8620 = vpack.c.b16 %v6540, %v6535
        %v8621 = vpack.c.b16 %v6541, %v6536
        %v8622 = vpack.c.b16 %v6542, %v6537
        %v8623 = vpack.c.b16 %v6543, %v6538
        %v8624 = vpack.c.b16 %v6549, %v6544
        %v8625 = vpack.c.b16 %v6550, %v6545
        %v8626 = vpack.c.b16 %v6551, %v6546
        %v8627 = vpack.c.b16 %v6552, %v6547
        %v8628 = vpack.c.b16 %v6553, %v6548
        %v8629 = vpack.c.b16 %v6559, %v6554
        %v8630 = vpack.c.b16 %v6560, %v6555
        %v8631 = vpack.c.b16 %v6561, %v6556
        %v8632 = vpack.c.b16 %v6562, %v6557
        %v8633 = vpack.c.b16 %v6563, %v6558
        %v8634 = vpack.c.b16 %v6569, %v6564
        %v8635 = vpack.c.b16 %v6570, %v6565
        %v8636 = vpack.c.b16 %v6571, %v6566
        %v8637 = vpack.c.b16 %v6572, %v6567
        %v8638 = vpack.c.b16 %v6573, %v6568
        %v8639 = vpack.c.b16 %v6579, %v6574
        %v8640 = vpack.c.b16 %v6580, %v6575
        %v8641 = vpack.c.b16 %v6581, %v6576
        %v8642 = vpack.c.b16 %v6582, %v6577
        %v8643 = vpack.c.b16 %v6583, %v6578
        %v8644 = vpack.c.b16 %v6589, %v6584
        %v8645 = vpack.c.b16 %v6590, %v6585
        %v8646 = vpack.c.b16 %v6591, %v6586
        %v8647 = vpack.c.b16 %v6592, %v6587
        %v8648 = vpack.c.b16 %v6593, %v6588
        %v8649 = vpack.c.b16 %v6599, %v6594
        %v8650 = vpack.c.b16 %v6600, %v6595
        %v8651 = vpack.c.b16 %v6601, %v6596
        %v8652 = vpack.c.b16 %v6602, %v6597
        %v8653 = vpack.c.b16 %v6603, %v6598
        %v8654 = vpack.c.b16 %v6609, %v6604
        %v8655 = vpack.c.b16 %v6610, %v6605
        %v8656 = vpack.c.b16 %v6611, %v6606
        %v8657 = vpack.c.b16 %v6612, %v6607
        %v8658 = vpack.c.b16 %v6613, %v6608
        %v8659 = vpack.c.b16 %v6619, %v6614
        %v8660 = vpack.c.b16 %v6620, %v6615
        %v8661 = vpack.c.b16 %v6621, %v6616
        %v8662 = vpack.c.b16 %v6622, %v6617
        %v8663 = vpack.c.b16 %v6623, %v6618
        %v8664 = vpack.c.b16 %v6629, %v6624
        %v8665 = vpack.c.b16 %v6630, %v6625
        %v8666 = vpack.c.b16 %v6631, %v6626
        %v8667 = vpack.c.b16 %v6632, %v6627
        %v8668 = vpack.c.b16 %v6633, %v6628
        %v8669 = vpack.c.b16 %v6639, %v6634
        %v8670 = vpack.c.b16 %v6640, %v6635
        %v8671 = vpack.c.b16 %v6641, %v6636
        %v8672 = vpack.c.b16 %v6642, %v6637
        %v8673 = vpack.c.b16 %v6643, %v6638
        %v8674 = vpack.c.b16 %v6649, %v6644
        %v8675 = vpack.c.b16 %v6650, %v6645
        %v8676 = vpack.c.b16 %v6651, %v6646
        %v8677 = vpack.c.b16 %v6652, %v6647
        %v8678 = vpack.c.b16 %v6653, %v6648
        %v8679 = vpack.c.b16 %v6659, %v6654
        %v8680 = vpack.c.b16 %v6660, %v6655
        %v8681 = vpack.c.b16 %v6661, %v6656
        %v8682 = vpack.c.b16 %v6662, %v6657
        %v8683 = vpack.c.b16 %v6663, %v6658
        %v8684 = vpack.c.b16 %v6669, %v6664
        %v8685 = vpack.c.b16 %v6670, %v6665
        %v8686 = vpack.c.b16 %v6671, %v6666
        %v8687 = vpack.c.b16 %v6672, %v6667
        %v8688 = vpack.c.b16 %v6673, %v6668
        %v8689 = vpack.c.b16 %v6679, %v6674
        %v8690 = vpack.c.b16 %v6680, %v6675
        %v8691 = vpack.c.b16 %v6681, %v6676
        %v8692 = vpack.c.b16 %v6682, %v6677
        %v8693 = vpack.c.b16 %v6683, %v6678
        %v8694 = vpack.c.b16 %v6689, %v6684
        %v8695 = vpack.c.b16 %v6690, %v6685
        %v8696 = vpack.c.b16 %v6691, %v6686
        %v8697 = vpack.c.b16 %v6692, %v6687
        %v8698 = vpack.c.b16 %v6693, %v6688
        %v8699 = vpack.c.b16 %v6699, %v6694
        %v8700 = vpack.c.b16 %v6700, %v6695
        %v8701 = vpack.c.b16 %v6701, %v6696
        %v8702 = vpack.c.b16 %v6702, %v6697
        %v8703 = vpack.c.b16 %v6703, %v6698
        %v8704 = vpack.c.b16 %v6709, %v6704
        %v8705 = vpack.c.b16 %v6710, %v6705
        %v8706 = vpack.c.b16 %v6711, %v6706
        %v8707 = vpack.c.b16 %v6712, %v6707
        %v8708 = vpack.c.b16 %v6713, %v6708
        %v8709 = vpack.c.b16 %v6719, %v6714
        %v8710 = vpack.c.b16 %v6720, %v6715
        %v8711 = vpack.c.b16 %v6721, %v6716
        %v8712 = vpack.c.b16 %v6722, %v6717
        %v8713 = vpack.c.b16 %v6723, %v6718
        %v8714 = vpack.c.b16 %v6729, %v6724
        %v8715 = vpack.c.b16 %v6730, %v6725
        %v8716 = vpack.c.b16 %v6731, %v6726
        %v8717 = vpack.c.b16 %v6732, %v6727
        %v8718 = vpack.c.b16 %v6733, %v6728
        %v8719 = vpack.c.b16 %v6739, %v6734
        %v8720 = vpack.c.b16 %v6740, %v6735
        %v8721 = vpack.c.b16 %v6741, %v6736
        %v8722 = vpack.c.b16 %v6742, %v6737
        %v8723 = vpack.c.b16 %v6743, %v6738
        %v8724 = vpack.c.b16 %v6749, %v6744
        %v8725 = vpack.c.b16 %v6750, %v6745
        %v8726 = vpack.c.b16 %v6751, %v6746
        %v8727 = vpack.c.b16 %v6752, %v6747
        %v8728 = vpack.c.b16 %v6753, %v6748
        %v8729 = vpack.c.b16 %v6759, %v6754
        %v8730 = vpack.c.b16 %v6760, %v6755
        %v8731 = vpack.c.b16 %v6761, %v6756
        %v8732 = vpack.c.b16 %v6762, %v6757
        %v8733 = vpack.c.b16 %v6763, %v6758
        %v8734 = vpack.c.b16 %v6769, %v6764
        %v8735 = vpack.c.b16 %v6770, %v6765
        %v8736 = vpack.c.b16 %v6771, %v6766
        %v8737 = vpack.c.b16 %v6772, %v6767
        %v8738 = vpack.c.b16 %v6773, %v6768
        %v8739 = vpack.c.b16 %v6779, %v6774
        %v8740 = vpack.c.b16 %v6780, %v6775
        %v8741 = vpack.c.b16 %v6781, %v6776
        %v8742 = vpack.c.b16 %v6782, %v6777
        %v8743 = vpack.c.b16 %v6783, %v6778
        %v8744 = vpack.c.b16 %v6789, %v6784
        %v8745 = vpack.c.b16 %v6790, %v6785
        %v8746 = vpack.c.b16 %v6791, %v6786
        %v8747 = vpack.c.b16 %v6792, %v6787
        %v8748 = vpack.c.b16 %v6793, %v6788
        %v8749 = vpack.c.b16 %v6799, %v6794
        %v8750 = vpack.c.b16 %v6800, %v6795
        %v8751 = vpack.c.b16 %v6801, %v6796
        %v8752 = vpack.c.b16 %v6802, %v6797
        %v8753 = vpack.c.b16 %v6803, %v6798
        %v8754 = vpack.c.b16 %v6809, %v6804
        %v8755 = vpack.c.b16 %v6810, %v6805
        %v8756 = vpack.c.b16 %v6811, %v6806
        %v8757 = vpack.c.b16 %v6812, %v6807
        %v8758 = vpack.c.b16 %v6813, %v6808
        %v8759 = vpack.c.b16 %v6819, %v6814
        %v8760 = vpack.c.b16 %v6820, %v6815
        %v8761 = vpack.c.b16 %v6821, %v6816
        %v8762 = vpack.c.b16 %v6822, %v6817
        %v8763 = vpack.c.b16 %v6823, %v6818
        %v8764 = vpack.c.b16 %v6829, %v6824
        %v8765 = vpack.c.b16 %v6830, %v6825
        %v8766 = vpack.c.b16 %v6831, %v6826
        %v8767 = vpack.c.b16 %v6832, %v6827
        %v8768 = vpack.c.b16 %v6833, %v6828
        %v8769 = vpack.c.b16 %v6839, %v6834
        %v8770 = vpack.c.b16 %v6840, %v6835
        %v8771 = vpack.c.b16 %v6841, %v6836
        %v8772 = vpack.c.b16 %v6842, %v6837
        %v8773 = vpack.c.b16 %v6843, %v6838
        %v8774 = vpack.c.b16 %v6849, %v6844
        %v8775 = vpack.c.b16 %v6850, %v6845
        %v8776 = vpack.c.b16 %v6851, %v6846
        %v8777 = vpack.c.b16 %v6852, %v6847
        %v8778 = vpack.c.b16 %v6853, %v6848
        %v8779 = vpack.c.b16 %v6859, %v6854
        %v8780 = vpack.c.b16 %v6860, %v6855
        %v8781 = vpack.c.b16 %v6861, %v6856
        %v8782 = vpack.c.b16 %v6862, %v6857
        %v8783 = vpack.c.b16 %v6863, %v6858
        %v8784 = vpack.c.b16 %v6869, %v6864
        %v8785 = vpack.c.b16 %v6870, %v6865
        %v8786 = vpack.c.b16 %v6871, %v6866
        %v8787 = vpack.c.b16 %v6872, %v6867
        %v8788 = vpack.c.b16 %v6873, %v6868
        %v8789 = vpack.c.b16 %v6879, %v6874
        %v8790 = vpack.c.b16 %v6880, %v6875
        %v8791 = vpack.c.b16 %v6881, %v6876
        %v8792 = vpack.c.b16 %v6882, %v6877
        %v8793 = vpack.c.b16 %v6883, %v6878
        %v8794 = vpack.c.b16 %v6889, %v6884
        %v8795 = vpack.c.b16 %v6890, %v6885
        %v8796 = vpack.c.b16 %v6891, %v6886
        %v8797 = vpack.c.b16 %v6892, %v6887
        %v8798 = vpack.c.b16 %v6893, %v6888
        %v8799 = vpack.c.b16 %v6899, %v6894
        %v8800 = vpack.c.b16 %v6900, %v6895
        %v8801 = vpack.c.b16 %v6901, %v6896
        %v8802 = vpack.c.b16 %v6902, %v6897
        %v8803 = vpack.c.b16 %v6903, %v6898
        %v8804 = vpack.c.b16 %v6909, %v6904
        %v8805 = vpack.c.b16 %v6910, %v6905
        %v8806 = vpack.c.b16 %v6911, %v6906
        %v8807 = vpack.c.b16 %v6912, %v6907
        %v8808 = vpack.c.b16 %v6913, %v6908
        %v8809 = vpack.c.b16 %v6919, %v6914
        %v8810 = vpack.c.b16 %v6920, %v6915
        %v8811 = vpack.c.b16 %v6921, %v6916
        %v8812 = vpack.c.b16 %v6922, %v6917
        %v8813 = vpack.c.b16 %v6923, %v6918
        %v8814 = vpack.c.b16 %v6929, %v6924
        %v8815 = vpack.c.b16 %v6930, %v6925
        %v8816 = vpack.c.b16 %v6931, %v6926
        %v8817 = vpack.c.b16 %v6932, %v6927
        %v8818 = vpack.c.b16 %v6933, %v6928
        %v8819 = vpack.c.b16 %v6939, %v6934
        %v8820 = vpack.c.b16 %v6940, %v6935
        %v8821 = vpack.c.b16 %v6941, %v6936
        %v8822 = vpack.c.b16 %v6942, %v6937
        %v8823 = vpack.c.b16 %v6943, %v6938
        %v8824 = vpack.c.b16 %v6949, %v6944
        %v8825 = vpack.c.b16 %v6950, %v6945
        %v8826 = vpack.c.b16 %v6951, %v6946
        %v8827 = vpack.c.b16 %v6952, %v6947
        %v8828 = vpack.c.b16 %v6953, %v6948
        %v8829 = vpack.c.b16 %v6959, %v6954
        %v8830 = vpack.c.b16 %v6960, %v6955
        %v8831 = vpack.c.b16 %v6961, %v6956
        %v8832 = vpack.c.b16 %v6962, %v6957
        %v8833 = vpack.c.b16 %v6963, %v6958
        %v8834 = vpack.c.b16 %v6969, %v6964
        %v8835 = vpack.c.b16 %v6970, %v6965
        %v8836 = vpack.c.b16 %v6971, %v6966
        %v8837 = vpack.c.b16 %v6972, %v6967
        %v8838 = vpack.c.b16 %v6973, %v6968
        %v8839 = vpack.c.b16 %v6979, %v6974
        %v8840 = vpack.c.b16 %v6980, %v6975
        %v8841 = vpack.c.b16 %v6981, %v6976
        %v8842 = vpack.c.b16 %v6982, %v6977
        %v8843 = vpack.c.b16 %v6983, %v6978
        %v8844 = vpack.c.b16 %v6989, %v6984
        %v8845 = vpack.c.b16 %v6990, %v6985
        %v8846 = vpack.c.b16 %v6991, %v6986
        %v8847 = vpack.c.b16 %v6992, %v6987
        %v8848 = vpack.c.b16 %v6993, %v6988
        %v8849 = vpack.c.b16 %v6999, %v6994
        %v8850 = vpack.c.b16 %v7000, %v6995
        %v8851 = vpack.c.b16 %v7001, %v6996
        %v8852 = vpack.c.b16 %v7002, %v6997
        %v8853 = vpack.c.b16 %v7003, %v6998
        %v8854 = vpack.c.b16 %v7009, %v7004
        %v8855 = vpack.c.b16 %v7010, %v7005
        %v8856 = vpack.c.b16 %v7011, %v7006
        %v8857 = vpack.c.b16 %v7012, %v7007
        %v8858 = vpack.c.b16 %v7013, %v7008
        %v8859 = vpack.c.b16 %v7019, %v7014
        %v8860 = vpack.c.b16 %v7020, %v7015
        %v8861 = vpack.c.b16 %v7021, %v7016
        %v8862 = vpack.c.b16 %v7022, %v7017
        %v8863 = vpack.c.b16 %v7023, %v7018
        %v8864 = vpack.c.b16 %v7029, %v7024
        %v8865 = vpack.c.b16 %v7030, %v7025
        %v8866 = vpack.c.b16 %v7031, %v7026
        %v8867 = vpack.c.b16 %v7032, %v7027
        %v8868 = vpack.c.b16 %v7033, %v7028
        %v8869 = vpack.c.b16 %v7039, %v7034
        %v8870 = vpack.c.b16 %v7040, %v7035
        %v8871 = vpack.c.b16 %v7041, %v7036
        %v8872 = vpack.c.b16 %v7042, %v7037
        %v8873 = vpack.c.b16 %v7043, %v7038
        %v8874 = vpack.c.b16 %v7049, %v7044
        %v8875 = vpack.c.b16 %v7050, %v7045
        %v8876 = vpack.c.b16 %v7051, %v7046
        %v8877 = vpack.c.b16 %v7052, %v7047
        %v8878 = vpack.c.b16 %v7053, %v7048
        %v8879 = vpack.c.b16 %v7059, %v7054
        %v8880 = vpack.c.b16 %v7060, %v7055
        %v8881 = vpack.c.b16 %v7061, %v7056
        %v8882 = vpack.c.b16 %v7062, %v7057
        %v8883 = vpack.c.b16 %v7063, %v7058
        %v8884 = vpack.c.b16 %v7069, %v7064
        %v8885 = vpack.c.b16 %v7070, %v7065
        %v8886 = vpack.c.b16 %v7071, %v7066
        %v8887 = vpack.c.b16 %v7072, %v7067
        %v8888 = vpack.c.b16 %v7073, %v7068
        %v8889 = vpack.c.b16 %v7079, %v7074
        %v8890 = vpack.c.b16 %v7080, %v7075
        %v8891 = vpack.c.b16 %v7081, %v7076
        %v8892 = vpack.c.b16 %v7082, %v7077
        %v8893 = vpack.c.b16 %v7083, %v7078
        %v8894 = vpack.c.b16 %v7089, %v7084
        %v8895 = vpack.c.b16 %v7090, %v7085
        %v8896 = vpack.c.b16 %v7091, %v7086
        %v8897 = vpack.c.b16 %v7092, %v7087
        %v8898 = vpack.c.b16 %v7093, %v7088
        %v8899 = vpack.c.b16 %v7099, %v7094
        %v8900 = vpack.c.b16 %v7100, %v7095
        %v8901 = vpack.c.b16 %v7101, %v7096
        %v8902 = vpack.c.b16 %v7102, %v7097
        %v8903 = vpack.c.b16 %v7103, %v7098
        %v8904 = vpack.c.b16 %v7109, %v7104
        %v8905 = vpack.c.b16 %v7110, %v7105
        %v8906 = vpack.c.b16 %v7111, %v7106
        %v8907 = vpack.c.b16 %v7112, %v7107
        %v8908 = vpack.c.b16 %v7113, %v7108
        %v8909 = vpack.c.b16 %v7119, %v7114
        %v8910 = vpack.c.b16 %v7120, %v7115
        %v8911 = vpack.c.b16 %v7121, %v7116
        %v8912 = vpack.c.b16 %v7122, %v7117
        %v8913 = vpack.c.b16 %v7123, %v7118
        %v8914 = vpack.c.b16 %v7129, %v7124
        %v8915 = vpack.c.b16 %v7130, %v7125
        %v8916 = vpack.c.b16 %v7131, %v7126
        %v8917 = vpack.c.b16 %v7132, %v7127
        %v8918 = vpack.c.b16 %v7133, %v7128
        %v8919 = vpack.c.b16 %v7139, %v7134
        %v8920 = vpack.c.b16 %v7140, %v7135
        %v8921 = vpack.c.b16 %v7141, %v7136
        %v8922 = vpack.c.b16 %v7142, %v7137
        %v8923 = vpack.c.b16 %v7143, %v7138
        %v8924 = vpack.c.b16 %v7149, %v7144
        %v8925 = vpack.c.b16 %v7150, %v7145
        %v8926 = vpack.c.b16 %v7151, %v7146
        %v8927 = vpack.c.b16 %v7152, %v7147
        %v8928 = vpack.c.b16 %v7153, %v7148
        %v8929 = vpack.c.b16 %v7159, %v7154
        %v8930 = vpack.c.b16 %v7160, %v7155
        %v8931 = vpack.c.b16 %v7161, %v7156
        %v8932 = vpack.c.b16 %v7162, %v7157
        %v8933 = vpack.c.b16 %v7163, %v7158
        %v8934 = vpack.c.b16 %v7169, %v7164
        %v8935 = vpack.c.b16 %v7170, %v7165
        %v8936 = vpack.c.b16 %v7171, %v7166
        %v8937 = vpack.c.b16 %v7172, %v7167
        %v8938 = vpack.c.b16 %v7173, %v7168
        %v8939 = vpack.c.b16 %v7179, %v7174
        %v8940 = vpack.c.b16 %v7180, %v7175
        %v8941 = vpack.c.b16 %v7181, %v7176
        %v8942 = vpack.c.b16 %v7182, %v7177
        %v8943 = vpack.c.b16 %v7183, %v7178
        %v8944 = vpack.c.b16 %v7189, %v7184
        %v8945 = vpack.c.b16 %v7190, %v7185
        %v8946 = vpack.c.b16 %v7191, %v7186
        %v8947 = vpack.c.b16 %v7192, %v7187
        %v8948 = vpack.c.b16 %v7193, %v7188
        %v8949 = vpack.c.b16 %v7199, %v7194
        %v8950 = vpack.c.b16 %v7200, %v7195
        %v8951 = vpack.c.b16 %v7201, %v7196
        %v8952 = vpack.c.b16 %v7202, %v7197
        %v8953 = vpack.c.b16 %v7203, %v7198
        %v8954 = vpack.c.b16 %v7209, %v7204
        %v8955 = vpack.c.b16 %v7210, %v7205
        %v8956 = vpack.c.b16 %v7211, %v7206
        %v8957 = vpack.c.b16 %v7212, %v7207
        %v8958 = vpack.c.b16 %v7213, %v7208
        %v8959 = vpack.c.b16 %v7219, %v7214
        %v8960 = vpack.c.b16 %v7220, %v7215
        %v8961 = vpack.c.b16 %v7221, %v7216
        %v8962 = vpack.c.b16 %v7222, %v7217
        %v8963 = vpack.c.b16 %v7223, %v7218
        %v8964 = vpack.c.b16 %v7229, %v7224
        %v8965 = vpack.c.b16 %v7230, %v7225
        %v8966 = vpack.c.b16 %v7231, %v7226
        %v8967 = vpack.c.b16 %v7232, %v7227
        %v8968 = vpack.c.b16 %v7233, %v7228
        %v8969 = vpack.c.b16 %v7239, %v7234
        %v8970 = vpack.c.b16 %v7240, %v7235
        %v8971 = vpack.c.b16 %v7241, %v7236
        %v8972 = vpack.c.b16 %v7242, %v7237
        %v8973 = vpack.c.b16 %v7243, %v7238
        %v8974 = vpack.c.b16 %v7249, %v7244
        %v8975 = vpack.c.b16 %v7250, %v7245
        %v8976 = vpack.c.b16 %v7251, %v7246
        %v8977 = vpack.c.b16 %v7252, %v7247
        %v8978 = vpack.c.b16 %v7253, %v7248
        %v8979 = vpack.c.b16 %v7259, %v7254
        %v8980 = vpack.c.b16 %v7260, %v7255
        %v8981 = vpack.c.b16 %v7261, %v7256
        %v8982 = vpack.c.b16 %v7262, %v7257
        %v8983 = vpack.c.b16 %v7263, %v7258
        %v8984 = vpack.c.b16 %v7269, %v7264
        %v8985 = vpack.c.b16 %v7270, %v7265
        %v8986 = vpack.c.b16 %v7271, %v7266
        %v8987 = vpack.c.b16 %v7272, %v7267
        %v8988 = vpack.c.b16 %v7273, %v7268
        %v8989 = vpack.c.b16 %v7279, %v7274
        %v8990 = vpack.c.b16 %v7280, %v7275
        %v8991 = vpack.c.b16 %v7281, %v7276
        %v8992 = vpack.c.b16 %v7282, %v7277
        %v8993 = vpack.c.b16 %v7283, %v7278
        %v8994 = vpack.c.b16 %v7289, %v7284
        %v8995 = vpack.c.b16 %v7290, %v7285
        %v8996 = vpack.c.b16 %v7291, %v7286
        %v8997 = vpack.c.b16 %v7292, %v7287
        %v8998 = vpack.c.b16 %v7293, %v7288
        %v8999 = vpack.c.b16 %v7299, %v7294
        %v9000 = vpack.c.b16 %v7300, %v7295
        %v9001 = vpack.c.b16 %v7301, %v7296
        %v9002 = vpack.c.b16 %v7302, %v7297
        %v9003 = vpack.c.b16 %v7303, %v7298
        %v9004 = vpack.c.b16 %v7309, %v7304
        %v9005 = vpack.c.b16 %v7310, %v7305
        %v9006 = vpack.c.b16 %v7311, %v7306
        %v9007 = vpack.c.b16 %v7312, %v7307
        %v9008 = vpack.c.b16 %v7313, %v7308
        %v9009 = vpack.c.b16 %v7319, %v7314
        %v9010 = vpack.c.b16 %v7320, %v7315
        %v9011 = vpack.c.b16 %v7321, %v7316
        %v9012 = vpack.c.b16 %v7322, %v7317
        %v9013 = vpack.c.b16 %v7323, %v7318
        %v9014 = vpack.c.b16 %v7329, %v7324
        %v9015 = vpack.c.b16 %v7330, %v7325
        %v9016 = vpack.c.b16 %v7331, %v7326
        %v9017 = vpack.c.b16 %v7332, %v7327
        %v9018 = vpack.c.b16 %v7333, %v7328
        %v9019 = vpack.c.b16 %v7339, %v7334
        %v9020 = vpack.c.b16 %v7340, %v7335
        %v9021 = vpack.c.b16 %v7341, %v7336
        %v9022 = vpack.c.b16 %v7342, %v7337
        %v9023 = vpack.c.b16 %v7343, %v7338
        %v9024 = vpack.c.b16 %v7349, %v7344
        %v9025 = vpack.c.b16 %v7350, %v7345
        %v9026 = vpack.c.b16 %v7351, %v7346
        %v9027 = vpack.c.b16 %v7352, %v7347
        %v9028 = vpack.c.b16 %v7353, %v7348
        %v9029 = vpack.c.b16 %v7359, %v7354
        %v9030 = vpack.c.b16 %v7360, %v7355
        %v9031 = vpack.c.b16 %v7361, %v7356
        %v9032 = vpack.c.b16 %v7362, %v7357
        %v9033 = vpack.c.b16 %v7363, %v7358
        %v9034 = vpack.c.b16 %v7369, %v7364
        %v9035 = vpack.c.b16 %v7370, %v7365
        %v9036 = vpack.c.b16 %v7371, %v7366
        %v9037 = vpack.c.b16 %v7372, %v7367
        %v9038 = vpack.c.b16 %v7373, %v7368
        %v9039 = vpack.c.b16 %v7379, %v7374
        %v9040 = vpack.c.b16 %v7380, %v7375
        %v9041 = vpack.c.b16 %v7381, %v7376
        %v9042 = vpack.c.b16 %v7382, %v7377
        %v9043 = vpack.c.b16 %v7383, %v7378
        %v9044 = vpack.c.b16 %v7389, %v7384
        %v9045 = vpack.c.b16 %v7390, %v7385
        %v9046 = vpack.c.b16 %v7391, %v7386
        %v9047 = vpack.c.b16 %v7392, %v7387
        %v9048 = vpack.c.b16 %v7393, %v7388
        %v9049 = vpack.c.b16 %v7399, %v7394
        %v9050 = vpack.c.b16 %v7400, %v7395
        %v9051 = vpack.c.b16 %v7401, %v7396
        %v9052 = vpack.c.b16 %v7402, %v7397
        %v9053 = vpack.c.b16 %v7403, %v7398
        %v9054 = vpack.c.b16 %v7409, %v7404
        %v9055 = vpack.c.b16 %v7410, %v7405
        %v9056 = vpack.c.b16 %v7411, %v7406
        %v9057 = vpack.c.b16 %v7412, %v7407
        %v9058 = vpack.c.b16 %v7413, %v7408
        %v9059 = vpack.c.b16 %v7419, %v7414
        %v9060 = vpack.c.b16 %v7420, %v7415
        %v9061 = vpack.c.b16 %v7421, %v7416
        %v9062 = vpack.c.b16 %v7422, %v7417
        %v9063 = vpack.c.b16 %v7423, %v7418
        %v9064 = vpack.c.b16 %v7429, %v7424
        %v9065 = vpack.c.b16 %v7430, %v7425
        %v9066 = vpack.c.b16 %v7431, %v7426
        %v9067 = vpack.c.b16 %v7432, %v7427
        %v9068 = vpack.c.b16 %v7433, %v7428
        %v9069 = vpack.c.b16 %v7439, %v7434
        %v9070 = vpack.c.b16 %v7440, %v7435
        %v9071 = vpack.c.b16 %v7441, %v7436
        %v9072 = vpack.c.b16 %v7442, %v7437
        %v9073 = vpack.c.b16 %v7443, %v7438
        %v9074 = vpack.c.b16 %v7449, %v7444
        %v9075 = vpack.c.b16 %v7450, %v7445
        %v9076 = vpack.c.b16 %v7451, %v7446
        %v9077 = vpack.c.b16 %v7452, %v7447
        %v9078 = vpack.c.b16 %v7453, %v7448
        %v9079 = vpack.c.b16 %v7459, %v7454
        %v9080 = vpack.c.b16 %v7460, %v7455
        %v9081 = vpack.c.b16 %v7461, %v7456
        %v9082 = vpack.c.b16 %v7462, %v7457
        %v9083 = vpack.c.b16 %v7463, %v7458
        %v9084 = vpack.c.b16 %v7469, %v7464
        %v9085 = vpack.c.b16 %v7470, %v7465
        %v9086 = vpack.c.b16 %v7471, %v7466
        %v9087 = vpack.c.b16 %v7472, %v7467
        %v9088 = vpack.c.b16 %v7473, %v7468
        %v9089 = vpack.c.b16 %v7479, %v7474
        %v9090 = vpack.c.b16 %v7480, %v7475
        %v9091 = vpack.c.b16 %v7481, %v7476
        %v9092 = vpack.c.b16 %v7482, %v7477
        %v9093 = vpack.c.b16 %v7483, %v7478
        %v9094 = vpack.c.b16 %v7489, %v7484
        %v9095 = vpack.c.b16 %v7490, %v7485
        %v9096 = vpack.c.b16 %v7491, %v7486
        %v9097 = vpack.c.b16 %v7492, %v7487
        %v9098 = vpack.c.b16 %v7493, %v7488
        %v9099 = vpack.c.b16 %v7499, %v7494
        %v9100 = vpack.c.b16 %v7500, %v7495
        %v9101 = vpack.c.b16 %v7501, %v7496
        %v9102 = vpack.c.b16 %v7502, %v7497
        %v9103 = vpack.c.b16 %v7503, %v7498
        %v9104 = vpack.c.b16 %v7509, %v7504
        %v9105 = vpack.c.b16 %v7510, %v7505
        %v9106 = vpack.c.b16 %v7511, %v7506
        %v9107 = vpack.c.b16 %v7512, %v7507
        %v9108 = vpack.c.b16 %v7513, %v7508
        %v9109 = vpack.c.b16 %v7519, %v7514
        %v9110 = vpack.c.b16 %v7520, %v7515
        %v9111 = vpack.c.b16 %v7521, %v7516
        %v9112 = vpack.c.b16 %v7522, %v7517
        %v9113 = vpack.c.b16 %v7523, %v7518
        %v9114 = vpack.c.b16 %v7529, %v7524
        %v9115 = vpack.c.b16 %v7530, %v7525
        %v9116 = vpack.c.b16 %v7531, %v7526
        %v9117 = vpack.c.b16 %v7532, %v7527
        %v9118 = vpack.c.b16 %v7533, %v7528
        %v9119 = vpack.c.b16 %v7539, %v7534
        %v9120 = vpack.c.b16 %v7540, %v7535
        %v9121 = vpack.c.b16 %v7541, %v7536
        %v9122 = vpack.c.b16 %v7542, %v7537
        %v9123 = vpack.c.b16 %v7543, %v7538
        %v9124 = vpack.c.b16 %v7549, %v7544
        %v9125 = vpack.c.b16 %v7550, %v7545
        %v9126 = vpack.c.b16 %v7551, %v7546
        %v9127 = vpack.c.b16 %v7552, %v7547
        %v9128 = vpack.c.b16 %v7553, %v7548
        %v9129 = vpack.c.b16 %v7559, %v7554
        %v9130 = vpack.c.b16 %v7560, %v7555
        %v9131 = vpack.c.b16 %v7561, %v7556
        %v9132 = vpack.c.b16 %v7562, %v7557
        %v9133 = vpack.c.b16 %v7563, %v7558
        %v9134 = vpack.c.b16 %v7569, %v7564
        %v9135 = vpack.c.b16 %v7570, %v7565
        %v9136 = vpack.c.b16 %v7571, %v7566
        %v9137 = vpack.c.b16 %v7572, %v7567
        %v9138 = vpack.c.b16 %v7573, %v7568
        %v9139 = vpack.c.b16 %v7574, %v7574
        %v9140 = vpack.c.b16 %v7575, %v7575
        %v9141 = vpack.c.b16 %v7576, %v7576
        %v9142 = vpack.c.b16 %v7577, %v7577
        %v9143 = vpack.c.b16 %v7578, %v7578
        %vm10704 = vcmask 64512
        %v10706 = vsel %vm10704, %v676, 0
        %vm10708 = vcmask 1043456
        %v10710 = vsel %vm10708, %v9139, 0
        %v10713 = vsel %vm10708, %v9140, 0
        %v10716 = vsel %vm10708, %v9141, 0
        %v10719 = vsel %vm10708, %v9142, 0
        %v10722 = vsel %vm10708, %v9143, 0
        %10724 = vmatprep.subr.bf16.mxu0 %v7615
        %10725 = vmatpush1.bf16.msra.mxu0 %v7614
        %10726 = vmatprep.subr.bf16.mxu0 %v7610
        %10727 = vmatpush1.bf16.msra.mxu0 %v7609
        %10728 = vmatprep.subr.bf16.mxu0 %v7605
        %10729 = vmatpush1.bf16.msra.mxu0 %v7604
        %10730 = vmatprep.subr.bf16.mxu0 %v7600
        %10731 = vmatpush1.bf16.msra.mxu0 %v7599
        %10732 = vmatprep.subr.bf16.mxu0 %v7595
        %10733 = vmatpush1.bf16.msra.mxu0 %v7594
        %10734 = vmatprep.subr.bf16.mxu0 %v7590
        %10735 = vmatpush1.bf16.msra.mxu0 %v7589
        %10736 = vmatprep.subr.bf16.mxu0 %v7585
        %10737 = vmatpush1.bf16.msra.mxu0 %v7584
        %10738 = vmatprep.subr.bf16.mxu0 %v7580
        %10739 = vmatpush1.bf16.msra.mxu0 %v7579
        %10740 = vmatprep.subr.bf16.mxu0 %v7655
        %10741 = vmatpush2.bf16.msra.mxu0 %v7654
        %10742 = vmatprep.subr.bf16.mxu0 %v7650
        %10743 = vmatpush2.bf16.msra.mxu0 %v7649
        %10744 = vmatprep.subr.bf16.mxu0 %v7645
        %10745 = vmatpush2.bf16.msra.mxu0 %v7644
        %10746 = vmatprep.subr.bf16.mxu0 %v7640
        %10747 = vmatpush2.bf16.msra.mxu0 %v7639
        %10748 = vmatprep.subr.bf16.mxu0 %v7635
        %10749 = vmatpush2.bf16.msra.mxu0 %v7634
        %10750 = vmatprep.subr.bf16.mxu0 %v7630
        %10751 = vmatpush2.bf16.msra.mxu0 %v7629
        %10752 = vmatprep.subr.bf16.mxu0 %v7625
        %10753 = vmatpush2.bf16.msra.mxu0 %v7624
        %10754 = vmatprep.subr.bf16.mxu0 %v7620
        %10755 = vmatpush2.bf16.msra.mxu0 %v7619
        %10756 = vmatprep.mubr.bf16.mxu0 %v638
        %10757 = vmatmul.mubr.bf16.gmra.mxu0 %v637
        %v10758 = vpop.f32.mrf.mxu0
        %v10759 = vadd.f32 %v2557, %v10758
        %v10760 = vpop.f32.mrf.mxu0
        %v10761 = vadd.f32 %v2561, %v10760
        %v10762 = vpop.f32.mrf.mxu0
        %v10763 = vpop.f32.mrf.mxu0
        %10764 = vdwg.mxu0
        %10765 = vmatprep.subr.bf16.mxu0 %v7695
        %10766 = vmatpush1.bf16.msra.mxu0 %v7694
        %10767 = vmatprep.subr.bf16.mxu0 %v7690
        %10768 = vmatpush1.bf16.msra.mxu0 %v7689
        %10769 = vmatprep.subr.bf16.mxu0 %v7685
        %10770 = vmatpush1.bf16.msra.mxu0 %v7684
        %10771 = vmatprep.subr.bf16.mxu0 %v7680
        %10772 = vmatpush1.bf16.msra.mxu0 %v7679
        %10773 = vmatprep.subr.bf16.mxu0 %v7675
        %10774 = vmatpush1.bf16.msra.mxu0 %v7674
        %10775 = vmatprep.subr.bf16.mxu0 %v7670
        %10776 = vmatpush1.bf16.msra.mxu0 %v7669
        %10777 = vmatprep.subr.bf16.mxu0 %v7665
        %10778 = vmatpush1.bf16.msra.mxu0 %v7664
        %10779 = vmatprep.subr.bf16.mxu0 %v7660
        %10780 = vmatpush1.bf16.msra.mxu0 %v7659
        %10781 = vmatprep.subr.bf16.mxu0 %v7735
        %10782 = vmatpush2.bf16.msra.mxu0 %v7734
        %10783 = vmatprep.subr.bf16.mxu0 %v7730
        %10784 = vmatpush2.bf16.msra.mxu0 %v7729
        %10785 = vmatprep.subr.bf16.mxu0 %v7725
        %10786 = vmatpush2.bf16.msra.mxu0 %v7724
        %10787 = vmatprep.subr.bf16.mxu0 %v7720
        %10788 = vmatpush2.bf16.msra.mxu0 %v7719
        %10789 = vmatprep.subr.bf16.mxu0 %v7715
        %10790 = vmatpush2.bf16.msra.mxu0 %v7714
        %10791 = vmatprep.subr.bf16.mxu0 %v7710
        %10792 = vmatpush2.bf16.msra.mxu0 %v7709
        %10793 = vmatprep.subr.bf16.mxu0 %v7705
        %10794 = vmatpush2.bf16.msra.mxu0 %v7704
        %10795 = vmatprep.subr.bf16.mxu0 %v7700
        %10796 = vmatpush2.bf16.msra.mxu0 %v7699
        %10797 = vmatprep.mubr.bf16.mxu0 %v640
        %10798 = vmatmul.mubr.bf16.gmra.mxu0 %v639
        %v10799 = vpop.f32.mrf.mxu0
        %v10800 = vadd.f32 %v10759, %v10799
        %v10801 = vpop.f32.mrf.mxu0
        %v10802 = vadd.f32 %v10761, %v10801
        %v10803 = vpop.f32.mrf.mxu0
        %v10804 = vpop.f32.mrf.mxu0
        %10805 = vdwg.mxu0
        %10806 = vmatprep.subr.bf16.mxu0 %v7775
        %10807 = vmatpush1.bf16.msra.mxu0 %v7774
        %10808 = vmatprep.subr.bf16.mxu0 %v7770
        %10809 = vmatpush1.bf16.msra.mxu0 %v7769
        %10810 = vmatprep.subr.bf16.mxu0 %v7765
        %10811 = vmatpush1.bf16.msra.mxu0 %v7764
        %10812 = vmatprep.subr.bf16.mxu0 %v7760
        %10813 = vmatpush1.bf16.msra.mxu0 %v7759
        %10814 = vmatprep.subr.bf16.mxu0 %v7755
        %10815 = vmatpush1.bf16.msra.mxu0 %v7754
        %10816 = vmatprep.subr.bf16.mxu0 %v7750
        %10817 = vmatpush1.bf16.msra.mxu0 %v7749
        %10818 = vmatprep.subr.bf16.mxu0 %v7745
        %10819 = vmatpush1.bf16.msra.mxu0 %v7744
        %10820 = vmatprep.subr.bf16.mxu0 %v7740
        %10821 = vmatpush1.bf16.msra.mxu0 %v7739
        %10822 = vmatprep.subr.bf16.mxu0 %v7815
        %10823 = vmatpush2.bf16.msra.mxu0 %v7814
        %10824 = vmatprep.subr.bf16.mxu0 %v7810
        %10825 = vmatpush2.bf16.msra.mxu0 %v7809
        %10826 = vmatprep.subr.bf16.mxu0 %v7805
        %10827 = vmatpush2.bf16.msra.mxu0 %v7804
        %10828 = vmatprep.subr.bf16.mxu0 %v7800
        %10829 = vmatpush2.bf16.msra.mxu0 %v7799
        %10830 = vmatprep.subr.bf16.mxu0 %v7795
        %10831 = vmatpush2.bf16.msra.mxu0 %v7794
        %10832 = vmatprep.subr.bf16.mxu0 %v7790
        %10833 = vmatpush2.bf16.msra.mxu0 %v7789
        %10834 = vmatprep.subr.bf16.mxu0 %v7785
        %10835 = vmatpush2.bf16.msra.mxu0 %v7784
        %10836 = vmatprep.subr.bf16.mxu0 %v7780
        %10837 = vmatpush2.bf16.msra.mxu0 %v7779
        %10838 = vmatprep.mubr.bf16.mxu0 %v642
        %10839 = vmatmul.mubr.bf16.gmra.mxu0 %v641
        %v10840 = vpop.f32.mrf.mxu0
        %v10841 = vadd.f32 %v10800, %v10840
        %v10842 = vpop.f32.mrf.mxu0
        %v10843 = vadd.f32 %v10802, %v10842
        %v10844 = vpop.f32.mrf.mxu0
        %v10845 = vpop.f32.mrf.mxu0
        %10846 = vdwg.mxu0
        %10847 = vmatprep.subr.bf16.mxu0 %v7855
        %10848 = vmatpush1.bf16.msra.mxu0 %v7854
        %10849 = vmatprep.subr.bf16.mxu0 %v7850
        %10850 = vmatpush1.bf16.msra.mxu0 %v7849
        %10851 = vmatprep.subr.bf16.mxu0 %v7845
        %10852 = vmatpush1.bf16.msra.mxu0 %v7844
        %10853 = vmatprep.subr.bf16.mxu0 %v7840
        %10854 = vmatpush1.bf16.msra.mxu0 %v7839
        %10855 = vmatprep.subr.bf16.mxu0 %v7835
        %10856 = vmatpush1.bf16.msra.mxu0 %v7834
        %10857 = vmatprep.subr.bf16.mxu0 %v7830
        %10858 = vmatpush1.bf16.msra.mxu0 %v7829
        %10859 = vmatprep.subr.bf16.mxu0 %v7825
        %10860 = vmatpush1.bf16.msra.mxu0 %v7824
        %10861 = vmatprep.subr.bf16.mxu0 %v7820
        %10862 = vmatpush1.bf16.msra.mxu0 %v7819
        %10863 = vmatprep.subr.bf16.mxu0 %v7895
        %10864 = vmatpush2.bf16.msra.mxu0 %v7894
        %10865 = vmatprep.subr.bf16.mxu0 %v7890
        %10866 = vmatpush2.bf16.msra.mxu0 %v7889
        %10867 = vmatprep.subr.bf16.mxu0 %v7885
        %10868 = vmatpush2.bf16.msra.mxu0 %v7884
        %10869 = vmatprep.subr.bf16.mxu0 %v7880
        %10870 = vmatpush2.bf16.msra.mxu0 %v7879
        %10871 = vmatprep.subr.bf16.mxu0 %v7875
        %10872 = vmatpush2.bf16.msra.mxu0 %v7874
        %10873 = vmatprep.subr.bf16.mxu0 %v7870
        %10874 = vmatpush2.bf16.msra.mxu0 %v7869
        %10875 = vmatprep.subr.bf16.mxu0 %v7865
        %10876 = vmatpush2.bf16.msra.mxu0 %v7864
        %10877 = vmatprep.subr.bf16.mxu0 %v7860
        %10878 = vmatpush2.bf16.msra.mxu0 %v7859
        %10879 = vmatprep.mubr.bf16.mxu0 %v644
        %10880 = vmatmul.mubr.bf16.gmra.mxu0 %v643
        %v10881 = vpop.f32.mrf.mxu0
        %v10882 = vadd.f32 %v10841, %v10881
        %v10883 = vpop.f32.mrf.mxu0
        %v10884 = vadd.f32 %v10843, %v10883
        %v10885 = vpop.f32.mrf.mxu0
        %v10886 = vpop.f32.mrf.mxu0
        %10887 = vdwg.mxu0
        %10888 = vmatprep.subr.bf16.mxu0 %v7935
        %10889 = vmatpush1.bf16.msra.mxu0 %v7934
        %10890 = vmatprep.subr.bf16.mxu0 %v7930
        %10891 = vmatpush1.bf16.msra.mxu0 %v7929
        %10892 = vmatprep.subr.bf16.mxu0 %v7925
        %10893 = vmatpush1.bf16.msra.mxu0 %v7924
        %10894 = vmatprep.subr.bf16.mxu0 %v7920
        %10895 = vmatpush1.bf16.msra.mxu0 %v7919
        %10896 = vmatprep.subr.bf16.mxu0 %v7915
        %10897 = vmatpush1.bf16.msra.mxu0 %v7914
        %10898 = vmatprep.subr.bf16.mxu0 %v7910
        %10899 = vmatpush1.bf16.msra.mxu0 %v7909
        %10900 = vmatprep.subr.bf16.mxu0 %v7905
        %10901 = vmatpush1.bf16.msra.mxu0 %v7904
        %10902 = vmatprep.subr.bf16.mxu0 %v7900
        %10903 = vmatpush1.bf16.msra.mxu0 %v7899
        %10904 = vmatprep.subr.bf16.mxu0 %v7975
        %10905 = vmatpush2.bf16.msra.mxu0 %v7974
        %10906 = vmatprep.subr.bf16.mxu0 %v7970
        %10907 = vmatpush2.bf16.msra.mxu0 %v7969
        %10908 = vmatprep.subr.bf16.mxu0 %v7965
        %10909 = vmatpush2.bf16.msra.mxu0 %v7964
        %10910 = vmatprep.subr.bf16.mxu0 %v7960
        %10911 = vmatpush2.bf16.msra.mxu0 %v7959
        %10912 = vmatprep.subr.bf16.mxu0 %v7955
        %10913 = vmatpush2.bf16.msra.mxu0 %v7954
        %10914 = vmatprep.subr.bf16.mxu0 %v7950
        %10915 = vmatpush2.bf16.msra.mxu0 %v7949
        %10916 = vmatprep.subr.bf16.mxu0 %v7945
        %10917 = vmatpush2.bf16.msra.mxu0 %v7944
        %10918 = vmatprep.subr.bf16.mxu0 %v7940
        %10919 = vmatpush2.bf16.msra.mxu0 %v7939
        %10920 = vmatprep.mubr.bf16.mxu0 %v646
        %10921 = vmatmul.mubr.bf16.gmra.mxu0 %v645
        %v10922 = vpop.f32.mrf.mxu0
        %v10923 = vadd.f32 %v10882, %v10922
        %v10924 = vpop.f32.mrf.mxu0
        %v10925 = vadd.f32 %v10884, %v10924
        %v10926 = vpop.f32.mrf.mxu0
        %v10927 = vpop.f32.mrf.mxu0
        %10928 = vdwg.mxu0
        %10929 = vmatprep.subr.bf16.mxu0 %v8015
        %10930 = vmatpush1.bf16.msra.mxu0 %v8014
        %10931 = vmatprep.subr.bf16.mxu0 %v8010
        %10932 = vmatpush1.bf16.msra.mxu0 %v8009
        %10933 = vmatprep.subr.bf16.mxu0 %v8005
        %10934 = vmatpush1.bf16.msra.mxu0 %v8004
        %10935 = vmatprep.subr.bf16.mxu0 %v8000
        %10936 = vmatpush1.bf16.msra.mxu0 %v7999
        %10937 = vmatprep.subr.bf16.mxu0 %v7995
        %10938 = vmatpush1.bf16.msra.mxu0 %v7994
        %10939 = vmatprep.subr.bf16.mxu0 %v7990
        %10940 = vmatpush1.bf16.msra.mxu0 %v7989
        %10941 = vmatprep.subr.bf16.mxu0 %v7985
        %10942 = vmatpush1.bf16.msra.mxu0 %v7984
        %10943 = vmatprep.subr.bf16.mxu0 %v7980
        %10944 = vmatpush1.bf16.msra.mxu0 %v7979
        %10945 = vmatprep.subr.bf16.mxu0 %v8055
        %10946 = vmatpush2.bf16.msra.mxu0 %v8054
        %10947 = vmatprep.subr.bf16.mxu0 %v8050
        %10948 = vmatpush2.bf16.msra.mxu0 %v8049
        %10949 = vmatprep.subr.bf16.mxu0 %v8045
        %10950 = vmatpush2.bf16.msra.mxu0 %v8044
        %10951 = vmatprep.subr.bf16.mxu0 %v8040
        %10952 = vmatpush2.bf16.msra.mxu0 %v8039
        %10953 = vmatprep.subr.bf16.mxu0 %v8035
        %10954 = vmatpush2.bf16.msra.mxu0 %v8034
        %10955 = vmatprep.subr.bf16.mxu0 %v8030
        %10956 = vmatpush2.bf16.msra.mxu0 %v8029
        %10957 = vmatprep.subr.bf16.mxu0 %v8025
        %10958 = vmatpush2.bf16.msra.mxu0 %v8024
        %10959 = vmatprep.subr.bf16.mxu0 %v8020
        %10960 = vmatpush2.bf16.msra.mxu0 %v8019
        %10961 = vmatprep.mubr.bf16.mxu0 %v648
        %10962 = vmatmul.mubr.bf16.gmra.mxu0 %v647
        %v10963 = vpop.f32.mrf.mxu0
        %v10964 = vadd.f32 %v10923, %v10963
        %v10965 = vpop.f32.mrf.mxu0
        %v10966 = vadd.f32 %v10925, %v10965
        %v10967 = vpop.f32.mrf.mxu0
        %v10968 = vpop.f32.mrf.mxu0
        %10969 = vdwg.mxu0
        %10970 = vmatprep.subr.bf16.mxu0 %v8095
        %10971 = vmatpush1.bf16.msra.mxu0 %v8094
        %10972 = vmatprep.subr.bf16.mxu0 %v8090
        %10973 = vmatpush1.bf16.msra.mxu0 %v8089
        %10974 = vmatprep.subr.bf16.mxu0 %v8085
        %10975 = vmatpush1.bf16.msra.mxu0 %v8084
        %10976 = vmatprep.subr.bf16.mxu0 %v8080
        %10977 = vmatpush1.bf16.msra.mxu0 %v8079
        %10978 = vmatprep.subr.bf16.mxu0 %v8075
        %10979 = vmatpush1.bf16.msra.mxu0 %v8074
        %10980 = vmatprep.subr.bf16.mxu0 %v8070
        %10981 = vmatpush1.bf16.msra.mxu0 %v8069
        %10982 = vmatprep.subr.bf16.mxu0 %v8065
        %10983 = vmatpush1.bf16.msra.mxu0 %v8064
        %10984 = vmatprep.subr.bf16.mxu0 %v8060
        %10985 = vmatpush1.bf16.msra.mxu0 %v8059
        %10986 = vmatprep.subr.bf16.mxu0 %v8135
        %10987 = vmatpush2.bf16.msra.mxu0 %v8134
        %10988 = vmatprep.subr.bf16.mxu0 %v8130
        %10989 = vmatpush2.bf16.msra.mxu0 %v8129
        %10990 = vmatprep.subr.bf16.mxu0 %v8125
        %10991 = vmatpush2.bf16.msra.mxu0 %v8124
        %10992 = vmatprep.subr.bf16.mxu0 %v8120
        %10993 = vmatpush2.bf16.msra.mxu0 %v8119
        %10994 = vmatprep.subr.bf16.mxu0 %v8115
        %10995 = vmatpush2.bf16.msra.mxu0 %v8114
        %10996 = vmatprep.subr.bf16.mxu0 %v8110
        %10997 = vmatpush2.bf16.msra.mxu0 %v8109
        %10998 = vmatprep.subr.bf16.mxu0 %v8105
        %10999 = vmatpush2.bf16.msra.mxu0 %v8104
        %11000 = vmatprep.subr.bf16.mxu0 %v8100
        %11001 = vmatpush2.bf16.msra.mxu0 %v8099
        %11002 = vmatprep.mubr.bf16.mxu0 %v650
        %11003 = vmatmul.mubr.bf16.gmra.mxu0 %v649
        %v11004 = vpop.f32.mrf.mxu0
        %v11005 = vadd.f32 %v10964, %v11004
        %v11006 = vpop.f32.mrf.mxu0
        %v11007 = vadd.f32 %v10966, %v11006
        %v11008 = vpop.f32.mrf.mxu0
        %v11009 = vpop.f32.mrf.mxu0
        %11010 = vdwg.mxu0
        %11011 = vmatprep.subr.bf16.mxu0 %v8175
        %11012 = vmatpush1.bf16.msra.mxu0 %v8174
        %11013 = vmatprep.subr.bf16.mxu0 %v8170
        %11014 = vmatpush1.bf16.msra.mxu0 %v8169
        %11015 = vmatprep.subr.bf16.mxu0 %v8165
        %11016 = vmatpush1.bf16.msra.mxu0 %v8164
        %11017 = vmatprep.subr.bf16.mxu0 %v8160
        %11018 = vmatpush1.bf16.msra.mxu0 %v8159
        %11019 = vmatprep.subr.bf16.mxu0 %v8155
        %11020 = vmatpush1.bf16.msra.mxu0 %v8154
        %11021 = vmatprep.subr.bf16.mxu0 %v8150
        %11022 = vmatpush1.bf16.msra.mxu0 %v8149
        %11023 = vmatprep.subr.bf16.mxu0 %v8145
        %11024 = vmatpush1.bf16.msra.mxu0 %v8144
        %11025 = vmatprep.subr.bf16.mxu0 %v8140
        %11026 = vmatpush1.bf16.msra.mxu0 %v8139
        %11027 = vmatprep.subr.bf16.mxu0 %v8215
        %11028 = vmatpush2.bf16.msra.mxu0 %v8214
        %11029 = vmatprep.subr.bf16.mxu0 %v8210
        %11030 = vmatpush2.bf16.msra.mxu0 %v8209
        %11031 = vmatprep.subr.bf16.mxu0 %v8205
        %11032 = vmatpush2.bf16.msra.mxu0 %v8204
        %11033 = vmatprep.subr.bf16.mxu0 %v8200
        %11034 = vmatpush2.bf16.msra.mxu0 %v8199
        %11035 = vmatprep.subr.bf16.mxu0 %v8195
        %11036 = vmatpush2.bf16.msra.mxu0 %v8194
        %11037 = vmatprep.subr.bf16.mxu0 %v8190
        %11038 = vmatpush2.bf16.msra.mxu0 %v8189
        %11039 = vmatprep.subr.bf16.mxu0 %v8185
        %11040 = vmatpush2.bf16.msra.mxu0 %v8184
        %11041 = vmatprep.subr.bf16.mxu0 %v8180
        %11042 = vmatpush2.bf16.msra.mxu0 %v8179
        %11043 = vmatprep.mubr.bf16.mxu0 %v652
        %11044 = vmatmul.mubr.bf16.gmra.mxu0 %v651
        %v11045 = vpop.f32.mrf.mxu0
        %v11046 = vadd.f32 %v11005, %v11045
        %v11047 = vpop.f32.mrf.mxu0
        %v11048 = vadd.f32 %v11007, %v11047
        %v11049 = vpop.f32.mrf.mxu0
        %v11050 = vpop.f32.mrf.mxu0
        %11051 = vdwg.mxu0
        %11052 = vmatprep.subr.bf16.mxu0 %v8255
        %11053 = vmatpush1.bf16.msra.mxu0 %v8254
        %11054 = vmatprep.subr.bf16.mxu0 %v8250
        %11055 = vmatpush1.bf16.msra.mxu0 %v8249
        %11056 = vmatprep.subr.bf16.mxu0 %v8245
        %11057 = vmatpush1.bf16.msra.mxu0 %v8244
        %11058 = vmatprep.subr.bf16.mxu0 %v8240
        %11059 = vmatpush1.bf16.msra.mxu0 %v8239
        %11060 = vmatprep.subr.bf16.mxu0 %v8235
        %11061 = vmatpush1.bf16.msra.mxu0 %v8234
        %11062 = vmatprep.subr.bf16.mxu0 %v8230
        %11063 = vmatpush1.bf16.msra.mxu0 %v8229
        %11064 = vmatprep.subr.bf16.mxu0 %v8225
        %11065 = vmatpush1.bf16.msra.mxu0 %v8224
        %11066 = vmatprep.subr.bf16.mxu0 %v8220
        %11067 = vmatpush1.bf16.msra.mxu0 %v8219
        %11068 = vmatprep.subr.bf16.mxu0 %v8295
        %11069 = vmatpush2.bf16.msra.mxu0 %v8294
        %11070 = vmatprep.subr.bf16.mxu0 %v8290
        %11071 = vmatpush2.bf16.msra.mxu0 %v8289
        %11072 = vmatprep.subr.bf16.mxu0 %v8285
        %11073 = vmatpush2.bf16.msra.mxu0 %v8284
        %11074 = vmatprep.subr.bf16.mxu0 %v8280
        %11075 = vmatpush2.bf16.msra.mxu0 %v8279
        %11076 = vmatprep.subr.bf16.mxu0 %v8275
        %11077 = vmatpush2.bf16.msra.mxu0 %v8274
        %11078 = vmatprep.subr.bf16.mxu0 %v8270
        %11079 = vmatpush2.bf16.msra.mxu0 %v8269
        %11080 = vmatprep.subr.bf16.mxu0 %v8265
        %11081 = vmatpush2.bf16.msra.mxu0 %v8264
        %11082 = vmatprep.subr.bf16.mxu0 %v8260
        %11083 = vmatpush2.bf16.msra.mxu0 %v8259
        %11084 = vmatprep.mubr.bf16.mxu0 %v654
        %11085 = vmatmul.mubr.bf16.gmra.mxu0 %v653
        %v11086 = vpop.f32.mrf.mxu0
        %v11087 = vadd.f32 %v11046, %v11086
        %v11088 = vpop.f32.mrf.mxu0
        %v11089 = vadd.f32 %v11048, %v11088
        %v11090 = vpop.f32.mrf.mxu0
        %v11091 = vpop.f32.mrf.mxu0
        %11092 = vdwg.mxu0
        %11093 = vmatprep.subr.bf16.mxu0 %v8335
        %11094 = vmatpush1.bf16.msra.mxu0 %v8334
        %11095 = vmatprep.subr.bf16.mxu0 %v8330
        %11096 = vmatpush1.bf16.msra.mxu0 %v8329
        %11097 = vmatprep.subr.bf16.mxu0 %v8325
        %11098 = vmatpush1.bf16.msra.mxu0 %v8324
        %11099 = vmatprep.subr.bf16.mxu0 %v8320
        %11100 = vmatpush1.bf16.msra.mxu0 %v8319
        %11101 = vmatprep.subr.bf16.mxu0 %v8315
        %11102 = vmatpush1.bf16.msra.mxu0 %v8314
        %11103 = vmatprep.subr.bf16.mxu0 %v8310
        %11104 = vmatpush1.bf16.msra.mxu0 %v8309
        %11105 = vmatprep.subr.bf16.mxu0 %v8305
        %11106 = vmatpush1.bf16.msra.mxu0 %v8304
        %11107 = vmatprep.subr.bf16.mxu0 %v8300
        %11108 = vmatpush1.bf16.msra.mxu0 %v8299
        %11109 = vmatprep.subr.bf16.mxu0 %v8375
        %11110 = vmatpush2.bf16.msra.mxu0 %v8374
        %11111 = vmatprep.subr.bf16.mxu0 %v8370
        %11112 = vmatpush2.bf16.msra.mxu0 %v8369
        %11113 = vmatprep.subr.bf16.mxu0 %v8365
        %11114 = vmatpush2.bf16.msra.mxu0 %v8364
        %11115 = vmatprep.subr.bf16.mxu0 %v8360
        %11116 = vmatpush2.bf16.msra.mxu0 %v8359
        %11117 = vmatprep.subr.bf16.mxu0 %v8355
        %11118 = vmatpush2.bf16.msra.mxu0 %v8354
        %11119 = vmatprep.subr.bf16.mxu0 %v8350
        %11120 = vmatpush2.bf16.msra.mxu0 %v8349
        %11121 = vmatprep.subr.bf16.mxu0 %v8345
        %11122 = vmatpush2.bf16.msra.mxu0 %v8344
        %11123 = vmatprep.subr.bf16.mxu0 %v8340
        %11124 = vmatpush2.bf16.msra.mxu0 %v8339
        %11125 = vmatprep.mubr.bf16.mxu0 %v656
        %11126 = vmatmul.mubr.bf16.gmra.mxu0 %v655
        %v11127 = vpop.f32.mrf.mxu0
        %v11128 = vadd.f32 %v11087, %v11127
        %v11129 = vpop.f32.mrf.mxu0
        %v11130 = vadd.f32 %v11089, %v11129
        %v11131 = vpop.f32.mrf.mxu0
        %v11132 = vpop.f32.mrf.mxu0
        %11133 = vdwg.mxu0
        %11134 = vmatprep.subr.bf16.mxu0 %v8415
        %11135 = vmatpush1.bf16.msra.mxu0 %v8414
        %11136 = vmatprep.subr.bf16.mxu0 %v8410
        %11137 = vmatpush1.bf16.msra.mxu0 %v8409
        %11138 = vmatprep.subr.bf16.mxu0 %v8405
        %11139 = vmatpush1.bf16.msra.mxu0 %v8404
        %11140 = vmatprep.subr.bf16.mxu0 %v8400
        %11141 = vmatpush1.bf16.msra.mxu0 %v8399
        %11142 = vmatprep.subr.bf16.mxu0 %v8395
        %11143 = vmatpush1.bf16.msra.mxu0 %v8394
        %11144 = vmatprep.subr.bf16.mxu0 %v8390
        %11145 = vmatpush1.bf16.msra.mxu0 %v8389
        %11146 = vmatprep.subr.bf16.mxu0 %v8385
        %11147 = vmatpush1.bf16.msra.mxu0 %v8384
        %11148 = vmatprep.subr.bf16.mxu0 %v8380
        %11149 = vmatpush1.bf16.msra.mxu0 %v8379
        %11150 = vmatprep.subr.bf16.mxu0 %v8455
        %11151 = vmatpush2.bf16.msra.mxu0 %v8454
        %11152 = vmatprep.subr.bf16.mxu0 %v8450
        %11153 = vmatpush2.bf16.msra.mxu0 %v8449
        %11154 = vmatprep.subr.bf16.mxu0 %v8445
        %11155 = vmatpush2.bf16.msra.mxu0 %v8444
        %11156 = vmatprep.subr.bf16.mxu0 %v8440
        %11157 = vmatpush2.bf16.msra.mxu0 %v8439
        %11158 = vmatprep.subr.bf16.mxu0 %v8435
        %11159 = vmatpush2.bf16.msra.mxu0 %v8434
        %11160 = vmatprep.subr.bf16.mxu0 %v8430
        %11161 = vmatpush2.bf16.msra.mxu0 %v8429
        %11162 = vmatprep.subr.bf16.mxu0 %v8425
        %11163 = vmatpush2.bf16.msra.mxu0 %v8424
        %11164 = vmatprep.subr.bf16.mxu0 %v8420
        %11165 = vmatpush2.bf16.msra.mxu0 %v8419
        %11166 = vmatprep.mubr.bf16.mxu0 %v658
        %11167 = vmatmul.mubr.bf16.gmra.mxu0 %v657
        %v11168 = vpop.f32.mrf.mxu0
        %v11169 = vadd.f32 %v11128, %v11168
        %v11170 = vpop.f32.mrf.mxu0
        %v11171 = vadd.f32 %v11130, %v11170
        %v11172 = vpop.f32.mrf.mxu0
        %v11173 = vpop.f32.mrf.mxu0
        %11174 = vdwg.mxu0
        %11175 = vmatprep.subr.bf16.mxu0 %v8495
        %11176 = vmatpush1.bf16.msra.mxu0 %v8494
        %11177 = vmatprep.subr.bf16.mxu0 %v8490
        %11178 = vmatpush1.bf16.msra.mxu0 %v8489
        %11179 = vmatprep.subr.bf16.mxu0 %v8485
        %11180 = vmatpush1.bf16.msra.mxu0 %v8484
        %11181 = vmatprep.subr.bf16.mxu0 %v8480
        %11182 = vmatpush1.bf16.msra.mxu0 %v8479
        %11183 = vmatprep.subr.bf16.mxu0 %v8475
        %11184 = vmatpush1.bf16.msra.mxu0 %v8474
        %11185 = vmatprep.subr.bf16.mxu0 %v8470
        %11186 = vmatpush1.bf16.msra.mxu0 %v8469
        %11187 = vmatprep.subr.bf16.mxu0 %v8465
        %11188 = vmatpush1.bf16.msra.mxu0 %v8464
        %11189 = vmatprep.subr.bf16.mxu0 %v8460
        %11190 = vmatpush1.bf16.msra.mxu0 %v8459
        %11191 = vmatprep.subr.bf16.mxu0 %v8535
        %11192 = vmatpush2.bf16.msra.mxu0 %v8534
        %11193 = vmatprep.subr.bf16.mxu0 %v8530
        %11194 = vmatpush2.bf16.msra.mxu0 %v8529
        %11195 = vmatprep.subr.bf16.mxu0 %v8525
        %11196 = vmatpush2.bf16.msra.mxu0 %v8524
        %11197 = vmatprep.subr.bf16.mxu0 %v8520
        %11198 = vmatpush2.bf16.msra.mxu0 %v8519
        %11199 = vmatprep.subr.bf16.mxu0 %v8515
        %11200 = vmatpush2.bf16.msra.mxu0 %v8514
        %11201 = vmatprep.subr.bf16.mxu0 %v8510
        %11202 = vmatpush2.bf16.msra.mxu0 %v8509
        %11203 = vmatprep.subr.bf16.mxu0 %v8505
        %11204 = vmatpush2.bf16.msra.mxu0 %v8504
        %11205 = vmatprep.subr.bf16.mxu0 %v8500
        %11206 = vmatpush2.bf16.msra.mxu0 %v8499
        %11207 = vmatprep.mubr.bf16.mxu0 %v660
        %11208 = vmatmul.mubr.bf16.gmra.mxu0 %v659
        %v11209 = vpop.f32.mrf.mxu0
        %v11210 = vadd.f32 %v11169, %v11209
        %v11211 = vpop.f32.mrf.mxu0
        %v11212 = vadd.f32 %v11171, %v11211
        %v11213 = vpop.f32.mrf.mxu0
        %v11214 = vpop.f32.mrf.mxu0
        %11215 = vdwg.mxu0
        %11216 = vmatprep.subr.bf16.mxu0 %v8575
        %11217 = vmatpush1.bf16.msra.mxu0 %v8574
        %11218 = vmatprep.subr.bf16.mxu0 %v8570
        %11219 = vmatpush1.bf16.msra.mxu0 %v8569
        %11220 = vmatprep.subr.bf16.mxu0 %v8565
        %11221 = vmatpush1.bf16.msra.mxu0 %v8564
        %11222 = vmatprep.subr.bf16.mxu0 %v8560
        %11223 = vmatpush1.bf16.msra.mxu0 %v8559
        %11224 = vmatprep.subr.bf16.mxu0 %v8555
        %11225 = vmatpush1.bf16.msra.mxu0 %v8554
        %11226 = vmatprep.subr.bf16.mxu0 %v8550
        %11227 = vmatpush1.bf16.msra.mxu0 %v8549
        %11228 = vmatprep.subr.bf16.mxu0 %v8545
        %11229 = vmatpush1.bf16.msra.mxu0 %v8544
        %11230 = vmatprep.subr.bf16.mxu0 %v8540
        %11231 = vmatpush1.bf16.msra.mxu0 %v8539
        %11232 = vmatprep.subr.bf16.mxu0 %v8615
        %11233 = vmatpush2.bf16.msra.mxu0 %v8614
        %11234 = vmatprep.subr.bf16.mxu0 %v8610
        %11235 = vmatpush2.bf16.msra.mxu0 %v8609
        %11236 = vmatprep.subr.bf16.mxu0 %v8605
        %11237 = vmatpush2.bf16.msra.mxu0 %v8604
        %11238 = vmatprep.subr.bf16.mxu0 %v8600
        %11239 = vmatpush2.bf16.msra.mxu0 %v8599
        %11240 = vmatprep.subr.bf16.mxu0 %v8595
        %11241 = vmatpush2.bf16.msra.mxu0 %v8594
        %11242 = vmatprep.subr.bf16.mxu0 %v8590
        %11243 = vmatpush2.bf16.msra.mxu0 %v8589
        %11244 = vmatprep.subr.bf16.mxu0 %v8585
        %11245 = vmatpush2.bf16.msra.mxu0 %v8584
        %11246 = vmatprep.subr.bf16.mxu0 %v8580
        %11247 = vmatpush2.bf16.msra.mxu0 %v8579
        %11248 = vmatprep.mubr.bf16.mxu0 %v662
        %11249 = vmatmul.mubr.bf16.gmra.mxu0 %v661
        %v11250 = vpop.f32.mrf.mxu0
        %v11251 = vadd.f32 %v11210, %v11250
        %v11252 = vpop.f32.mrf.mxu0
        %v11253 = vadd.f32 %v11212, %v11252
        %v11254 = vpop.f32.mrf.mxu0
        %v11255 = vpop.f32.mrf.mxu0
        %11256 = vdwg.mxu0
        %11257 = vmatprep.subr.bf16.mxu0 %v8655
        %11258 = vmatpush1.bf16.msra.mxu0 %v8654
        %11259 = vmatprep.subr.bf16.mxu0 %v8650
        %11260 = vmatpush1.bf16.msra.mxu0 %v8649
        %11261 = vmatprep.subr.bf16.mxu0 %v8645
        %11262 = vmatpush1.bf16.msra.mxu0 %v8644
        %11263 = vmatprep.subr.bf16.mxu0 %v8640
        %11264 = vmatpush1.bf16.msra.mxu0 %v8639
        %11265 = vmatprep.subr.bf16.mxu0 %v8635
        %11266 = vmatpush1.bf16.msra.mxu0 %v8634
        %11267 = vmatprep.subr.bf16.mxu0 %v8630
        %11268 = vmatpush1.bf16.msra.mxu0 %v8629
        %11269 = vmatprep.subr.bf16.mxu0 %v8625
        %11270 = vmatpush1.bf16.msra.mxu0 %v8624
        %11271 = vmatprep.subr.bf16.mxu0 %v8620
        %11272 = vmatpush1.bf16.msra.mxu0 %v8619
        %11273 = vmatprep.subr.bf16.mxu0 %v8695
        %11274 = vmatpush2.bf16.msra.mxu0 %v8694
        %11275 = vmatprep.subr.bf16.mxu0 %v8690
        %11276 = vmatpush2.bf16.msra.mxu0 %v8689
        %11277 = vmatprep.subr.bf16.mxu0 %v8685
        %11278 = vmatpush2.bf16.msra.mxu0 %v8684
        %11279 = vmatprep.subr.bf16.mxu0 %v8680
        %11280 = vmatpush2.bf16.msra.mxu0 %v8679
        %11281 = vmatprep.subr.bf16.mxu0 %v8675
        %11282 = vmatpush2.bf16.msra.mxu0 %v8674
        %11283 = vmatprep.subr.bf16.mxu0 %v8670
        %11284 = vmatpush2.bf16.msra.mxu0 %v8669
        %11285 = vmatprep.subr.bf16.mxu0 %v8665
        %11286 = vmatpush2.bf16.msra.mxu0 %v8664
        %11287 = vmatprep.subr.bf16.mxu0 %v8660
        %11288 = vmatpush2.bf16.msra.mxu0 %v8659
        %11289 = vmatprep.mubr.bf16.mxu0 %v664
        %11290 = vmatmul.mubr.bf16.gmra.mxu0 %v663
        %v11291 = vpop.f32.mrf.mxu0
        %v11292 = vadd.f32 %v11251, %v11291
        %v11293 = vpop.f32.mrf.mxu0
        %v11294 = vadd.f32 %v11253, %v11293
        %v11295 = vpop.f32.mrf.mxu0
        %v11296 = vpop.f32.mrf.mxu0
        %11297 = vdwg.mxu0
        %11298 = vmatprep.subr.bf16.mxu0 %v8735
        %11299 = vmatpush1.bf16.msra.mxu0 %v8734
        %11300 = vmatprep.subr.bf16.mxu0 %v8730
        %11301 = vmatpush1.bf16.msra.mxu0 %v8729
        %11302 = vmatprep.subr.bf16.mxu0 %v8725
        %11303 = vmatpush1.bf16.msra.mxu0 %v8724
        %11304 = vmatprep.subr.bf16.mxu0 %v8720
        %11305 = vmatpush1.bf16.msra.mxu0 %v8719
        %11306 = vmatprep.subr.bf16.mxu0 %v8715
        %11307 = vmatpush1.bf16.msra.mxu0 %v8714
        %11308 = vmatprep.subr.bf16.mxu0 %v8710
        %11309 = vmatpush1.bf16.msra.mxu0 %v8709
        %11310 = vmatprep.subr.bf16.mxu0 %v8705
        %11311 = vmatpush1.bf16.msra.mxu0 %v8704
        %11312 = vmatprep.subr.bf16.mxu0 %v8700
        %11313 = vmatpush1.bf16.msra.mxu0 %v8699
        %11314 = vmatprep.subr.bf16.mxu0 %v8775
        %11315 = vmatpush2.bf16.msra.mxu0 %v8774
        %11316 = vmatprep.subr.bf16.mxu0 %v8770
        %11317 = vmatpush2.bf16.msra.mxu0 %v8769
        %11318 = vmatprep.subr.bf16.mxu0 %v8765
        %11319 = vmatpush2.bf16.msra.mxu0 %v8764
        %11320 = vmatprep.subr.bf16.mxu0 %v8760
        %11321 = vmatpush2.bf16.msra.mxu0 %v8759
        %11322 = vmatprep.subr.bf16.mxu0 %v8755
        %11323 = vmatpush2.bf16.msra.mxu0 %v8754
        %11324 = vmatprep.subr.bf16.mxu0 %v8750
        %11325 = vmatpush2.bf16.msra.mxu0 %v8749
        %11326 = vmatprep.subr.bf16.mxu0 %v8745
        %11327 = vmatpush2.bf16.msra.mxu0 %v8744
        %11328 = vmatprep.subr.bf16.mxu0 %v8740
        %11329 = vmatpush2.bf16.msra.mxu0 %v8739
        %11330 = vmatprep.mubr.bf16.mxu0 %v666
        %11331 = vmatmul.mubr.bf16.gmra.mxu0 %v665
        %v11332 = vpop.f32.mrf.mxu0
        %v11333 = vadd.f32 %v11292, %v11332
        %v11334 = vpop.f32.mrf.mxu0
        %v11335 = vadd.f32 %v11294, %v11334
        %v11336 = vpop.f32.mrf.mxu0
        %v11337 = vpop.f32.mrf.mxu0
        %11338 = vdwg.mxu0
        %11339 = vmatprep.subr.bf16.mxu0 %v8815
        %11340 = vmatpush1.bf16.msra.mxu0 %v8814
        %11341 = vmatprep.subr.bf16.mxu0 %v8810
        %11342 = vmatpush1.bf16.msra.mxu0 %v8809
        %11343 = vmatprep.subr.bf16.mxu0 %v8805
        %11344 = vmatpush1.bf16.msra.mxu0 %v8804
        %11345 = vmatprep.subr.bf16.mxu0 %v8800
        %11346 = vmatpush1.bf16.msra.mxu0 %v8799
        %11347 = vmatprep.subr.bf16.mxu0 %v8795
        %11348 = vmatpush1.bf16.msra.mxu0 %v8794
        %11349 = vmatprep.subr.bf16.mxu0 %v8790
        %11350 = vmatpush1.bf16.msra.mxu0 %v8789
        %11351 = vmatprep.subr.bf16.mxu0 %v8785
        %11352 = vmatpush1.bf16.msra.mxu0 %v8784
        %11353 = vmatprep.subr.bf16.mxu0 %v8780
        %11354 = vmatpush1.bf16.msra.mxu0 %v8779
        %11355 = vmatprep.subr.bf16.mxu0 %v8855
        %11356 = vmatpush2.bf16.msra.mxu0 %v8854
        %11357 = vmatprep.subr.bf16.mxu0 %v8850
        %11358 = vmatpush2.bf16.msra.mxu0 %v8849
        %11359 = vmatprep.subr.bf16.mxu0 %v8845
        %11360 = vmatpush2.bf16.msra.mxu0 %v8844
        %11361 = vmatprep.subr.bf16.mxu0 %v8840
        %11362 = vmatpush2.bf16.msra.mxu0 %v8839
        %11363 = vmatprep.subr.bf16.mxu0 %v8835
        %11364 = vmatpush2.bf16.msra.mxu0 %v8834
        %11365 = vmatprep.subr.bf16.mxu0 %v8830
        %11366 = vmatpush2.bf16.msra.mxu0 %v8829
        %11367 = vmatprep.subr.bf16.mxu0 %v8825
        %11368 = vmatpush2.bf16.msra.mxu0 %v8824
        %11369 = vmatprep.subr.bf16.mxu0 %v8820
        %11370 = vmatpush2.bf16.msra.mxu0 %v8819
        %11371 = vmatprep.mubr.bf16.mxu0 %v668
        %11372 = vmatmul.mubr.bf16.gmra.mxu0 %v667
        %v11373 = vpop.f32.mrf.mxu0
        %v11374 = vadd.f32 %v11333, %v11373
        %v11375 = vpop.f32.mrf.mxu0
        %v11376 = vadd.f32 %v11335, %v11375
        %v11377 = vpop.f32.mrf.mxu0
        %v11378 = vpop.f32.mrf.mxu0
        %11379 = vdwg.mxu0
        %11380 = vmatprep.subr.bf16.mxu0 %v8895
        %11381 = vmatpush1.bf16.msra.mxu0 %v8894
        %11382 = vmatprep.subr.bf16.mxu0 %v8890
        %11383 = vmatpush1.bf16.msra.mxu0 %v8889
        %11384 = vmatprep.subr.bf16.mxu0 %v8885
        %11385 = vmatpush1.bf16.msra.mxu0 %v8884
        %11386 = vmatprep.subr.bf16.mxu0 %v8880
        %11387 = vmatpush1.bf16.msra.mxu0 %v8879
        %11388 = vmatprep.subr.bf16.mxu0 %v8875
        %11389 = vmatpush1.bf16.msra.mxu0 %v8874
        %11390 = vmatprep.subr.bf16.mxu0 %v8870
        %11391 = vmatpush1.bf16.msra.mxu0 %v8869
        %11392 = vmatprep.subr.bf16.mxu0 %v8865
        %11393 = vmatpush1.bf16.msra.mxu0 %v8864
        %11394 = vmatprep.subr.bf16.mxu0 %v8860
        %11395 = vmatpush1.bf16.msra.mxu0 %v8859
        %11396 = vmatprep.subr.bf16.mxu0 %v8935
        %11397 = vmatpush2.bf16.msra.mxu0 %v8934
        %11398 = vmatprep.subr.bf16.mxu0 %v8930
        %11399 = vmatpush2.bf16.msra.mxu0 %v8929
        %11400 = vmatprep.subr.bf16.mxu0 %v8925
        %11401 = vmatpush2.bf16.msra.mxu0 %v8924
        %11402 = vmatprep.subr.bf16.mxu0 %v8920
        %11403 = vmatpush2.bf16.msra.mxu0 %v8919
        %11404 = vmatprep.subr.bf16.mxu0 %v8915
        %11405 = vmatpush2.bf16.msra.mxu0 %v8914
        %11406 = vmatprep.subr.bf16.mxu0 %v8910
        %11407 = vmatpush2.bf16.msra.mxu0 %v8909
        %11408 = vmatprep.subr.bf16.mxu0 %v8905
        %11409 = vmatpush2.bf16.msra.mxu0 %v8904
        %11410 = vmatprep.subr.bf16.mxu0 %v8900
        %11411 = vmatpush2.bf16.msra.mxu0 %v8899
        %11412 = vmatprep.mubr.bf16.mxu0 %v670
        %11413 = vmatmul.mubr.bf16.gmra.mxu0 %v669
        %v11414 = vpop.f32.mrf.mxu0
        %v11415 = vadd.f32 %v11374, %v11414
        %v11416 = vpop.f32.mrf.mxu0
        %v11417 = vadd.f32 %v11376, %v11416
        %v11418 = vpop.f32.mrf.mxu0
        %v11419 = vpop.f32.mrf.mxu0
        %11420 = vdwg.mxu0
        %11421 = vmatprep.subr.bf16.mxu0 %v8975
        %11422 = vmatpush1.bf16.msra.mxu0 %v8974
        %11423 = vmatprep.subr.bf16.mxu0 %v8970
        %11424 = vmatpush1.bf16.msra.mxu0 %v8969
        %11425 = vmatprep.subr.bf16.mxu0 %v8965
        %11426 = vmatpush1.bf16.msra.mxu0 %v8964
        %11427 = vmatprep.subr.bf16.mxu0 %v8960
        %11428 = vmatpush1.bf16.msra.mxu0 %v8959
        %11429 = vmatprep.subr.bf16.mxu0 %v8955
        %11430 = vmatpush1.bf16.msra.mxu0 %v8954
        %11431 = vmatprep.subr.bf16.mxu0 %v8950
        %11432 = vmatpush1.bf16.msra.mxu0 %v8949
        %11433 = vmatprep.subr.bf16.mxu0 %v8945
        %11434 = vmatpush1.bf16.msra.mxu0 %v8944
        %11435 = vmatprep.subr.bf16.mxu0 %v8940
        %11436 = vmatpush1.bf16.msra.mxu0 %v8939
        %11437 = vmatprep.subr.bf16.mxu0 %v9015
        %11438 = vmatpush2.bf16.msra.mxu0 %v9014
        %11439 = vmatprep.subr.bf16.mxu0 %v9010
        %11440 = vmatpush2.bf16.msra.mxu0 %v9009
        %11441 = vmatprep.subr.bf16.mxu0 %v9005
        %11442 = vmatpush2.bf16.msra.mxu0 %v9004
        %11443 = vmatprep.subr.bf16.mxu0 %v9000
        %11444 = vmatpush2.bf16.msra.mxu0 %v8999
        %11445 = vmatprep.subr.bf16.mxu0 %v8995
        %11446 = vmatpush2.bf16.msra.mxu0 %v8994
        %11447 = vmatprep.subr.bf16.mxu0 %v8990
        %11448 = vmatpush2.bf16.msra.mxu0 %v8989
        %11449 = vmatprep.subr.bf16.mxu0 %v8985
        %11450 = vmatpush2.bf16.msra.mxu0 %v8984
        %11451 = vmatprep.subr.bf16.mxu0 %v8980
        %11452 = vmatpush2.bf16.msra.mxu0 %v8979
        %11453 = vmatprep.mubr.bf16.mxu0 %v672
        %11454 = vmatmul.mubr.bf16.gmra.mxu0 %v671
        %v11455 = vpop.f32.mrf.mxu0
        %v11456 = vadd.f32 %v11415, %v11455
        %v11457 = vpop.f32.mrf.mxu0
        %v11458 = vadd.f32 %v11417, %v11457
        %v11459 = vpop.f32.mrf.mxu0
        %v11460 = vpop.f32.mrf.mxu0
        %11461 = vdwg.mxu0
        %11462 = vmatprep.subr.bf16.mxu0 %v9055
        %11463 = vmatpush1.bf16.msra.mxu0 %v9054
        %11464 = vmatprep.subr.bf16.mxu0 %v9050
        %11465 = vmatpush1.bf16.msra.mxu0 %v9049
        %11466 = vmatprep.subr.bf16.mxu0 %v9045
        %11467 = vmatpush1.bf16.msra.mxu0 %v9044
        %11468 = vmatprep.subr.bf16.mxu0 %v9040
        %11469 = vmatpush1.bf16.msra.mxu0 %v9039
        %11470 = vmatprep.subr.bf16.mxu0 %v9035
        %11471 = vmatpush1.bf16.msra.mxu0 %v9034
        %11472 = vmatprep.subr.bf16.mxu0 %v9030
        %11473 = vmatpush1.bf16.msra.mxu0 %v9029
        %11474 = vmatprep.subr.bf16.mxu0 %v9025
        %11475 = vmatpush1.bf16.msra.mxu0 %v9024
        %11476 = vmatprep.subr.bf16.mxu0 %v9020
        %11477 = vmatpush1.bf16.msra.mxu0 %v9019
        %11478 = vmatprep.subr.bf16.mxu0 %v9095
        %11479 = vmatpush2.bf16.msra.mxu0 %v9094
        %11480 = vmatprep.subr.bf16.mxu0 %v9090
        %11481 = vmatpush2.bf16.msra.mxu0 %v9089
        %11482 = vmatprep.subr.bf16.mxu0 %v9085
        %11483 = vmatpush2.bf16.msra.mxu0 %v9084
        %11484 = vmatprep.subr.bf16.mxu0 %v9080
        %11485 = vmatpush2.bf16.msra.mxu0 %v9079
        %11486 = vmatprep.subr.bf16.mxu0 %v9075
        %11487 = vmatpush2.bf16.msra.mxu0 %v9074
        %11488 = vmatprep.subr.bf16.mxu0 %v9070
        %11489 = vmatpush2.bf16.msra.mxu0 %v9069
        %11490 = vmatprep.subr.bf16.mxu0 %v9065
        %11491 = vmatpush2.bf16.msra.mxu0 %v9064
        %11492 = vmatprep.subr.bf16.mxu0 %v9060
        %11493 = vmatpush2.bf16.msra.mxu0 %v9059
        %11494 = vmatprep.mubr.bf16.mxu0 %v674
        %11495 = vmatmul.mubr.bf16.gmra.mxu0 %v673
        %v11496 = vpop.f32.mrf.mxu0
        %v11497 = vadd.f32 %v11456, %v11496
        %v11498 = vpop.f32.mrf.mxu0
        %v11499 = vadd.f32 %v11458, %v11498
        %v11500 = vpop.f32.mrf.mxu0
        %v11501 = vpop.f32.mrf.mxu0
        %11502 = vdwg.mxu0
        %11503 = vmatprep.subr.bf16.mxu0 %v9135
        %11504 = vmatpush1.bf16.msra.mxu0 %v9134
        %11505 = vmatprep.subr.bf16.mxu0 %v9130
        %11506 = vmatpush1.bf16.msra.mxu0 %v9129
        %11507 = vmatprep.subr.bf16.mxu0 %v9125
        %11508 = vmatpush1.bf16.msra.mxu0 %v9124
        %11509 = vmatprep.subr.bf16.mxu0 %v9120
        %11510 = vmatpush1.bf16.msra.mxu0 %v9119
        %11511 = vmatprep.subr.bf16.mxu0 %v9115
        %11512 = vmatpush1.bf16.msra.mxu0 %v9114
        %11513 = vmatprep.subr.bf16.mxu0 %v9110
        %11514 = vmatpush1.bf16.msra.mxu0 %v9109
        %11515 = vmatprep.subr.bf16.mxu0 %v9105
        %11516 = vmatpush1.bf16.msra.mxu0 %v9104
        %11517 = vmatprep.subr.bf16.mxu0 %v9100
        %11518 = vmatpush1.bf16.msra.mxu0 %v9099
        %11519 = vmatprep.subr.bf16.mxu0 0
        %11520 = vmatpush2.bf16.msra.mxu0 0
        %11521 = vmatprep.subr.bf16.mxu0 0
        %11522 = vmatpush2.bf16.msra.mxu0 0
        %11523 = vmatprep.subr.bf16.mxu0 0
        %11524 = vmatpush2.bf16.msra.mxu0 0
        %11525 = vmatprep.subr.bf16.mxu0 0
        %11526 = vmatpush2.bf16.msra.mxu0 0
        %11527 = vmatprep.subr.bf16.mxu0 0
        %11528 = vmatpush2.bf16.msra.mxu0 0
        %11529 = vmatprep.subr.bf16.mxu0 0
        %11530 = vmatpush2.bf16.msra.mxu0 0
        %11531 = vmatprep.subr.bf16.mxu0 0
        %11532 = vmatpush2.bf16.msra.mxu0 0
        %11533 = vmatprep.subr.bf16.mxu0 %v10713
        %11534 = vmatpush2.bf16.msra.mxu0 %v10710
        %11535 = vmatprep.mubr.bf16.mxu0 %v10706
        %11536 = vmatmul.mubr.bf16.gmra.mxu0 %v675
        %v11537 = vpop.f32.mrf.mxu0
        %v11538 = vadd.f32 %v11497, %v11537
        %v11539 = vpop.f32.mrf.mxu0
        %v11540 = vadd.f32 %v11499, %v11539
        %v11541 = vpop.f32.mrf.mxu0
        %v11542 = vpop.f32.mrf.mxu0
        %11543 = vdwg.mxu0
        %11544 = vmatprep.subr.bf16.mxu0 %v7617
        %11545 = vmatpush1.bf16.msra.mxu0 %v7616
        %11546 = vmatprep.subr.bf16.mxu0 %v7612
        %11547 = vmatpush1.bf16.msra.mxu0 %v7611
        %11548 = vmatprep.subr.bf16.mxu0 %v7607
        %11549 = vmatpush1.bf16.msra.mxu0 %v7606
        %11550 = vmatprep.subr.bf16.mxu0 %v7602
        %11551 = vmatpush1.bf16.msra.mxu0 %v7601
        %11552 = vmatprep.subr.bf16.mxu0 %v7597
        %11553 = vmatpush1.bf16.msra.mxu0 %v7596
        %11554 = vmatprep.subr.bf16.mxu0 %v7592
        %11555 = vmatpush1.bf16.msra.mxu0 %v7591
        %11556 = vmatprep.subr.bf16.mxu0 %v7587
        %11557 = vmatpush1.bf16.msra.mxu0 %v7586
        %11558 = vmatprep.subr.bf16.mxu0 %v7582
        %11559 = vmatpush1.bf16.msra.mxu0 %v7581
        %11560 = vmatprep.subr.bf16.mxu0 %v7657
        %11561 = vmatpush2.bf16.msra.mxu0 %v7656
        %11562 = vmatprep.subr.bf16.mxu0 %v7652
        %11563 = vmatpush2.bf16.msra.mxu0 %v7651
        %11564 = vmatprep.subr.bf16.mxu0 %v7647
        %11565 = vmatpush2.bf16.msra.mxu0 %v7646
        %11566 = vmatprep.subr.bf16.mxu0 %v7642
        %11567 = vmatpush2.bf16.msra.mxu0 %v7641
        %11568 = vmatprep.subr.bf16.mxu0 %v7637
        %11569 = vmatpush2.bf16.msra.mxu0 %v7636
        %11570 = vmatprep.subr.bf16.mxu0 %v7632
        %11571 = vmatpush2.bf16.msra.mxu0 %v7631
        %11572 = vmatprep.subr.bf16.mxu0 %v7627
        %11573 = vmatpush2.bf16.msra.mxu0 %v7626
        %11574 = vmatprep.subr.bf16.mxu0 %v7622
        %11575 = vmatpush2.bf16.msra.mxu0 %v7621
        %11576 = vmatprep.mubr.bf16.mxu0 %v638
        %11577 = vmatmul.mubr.bf16.gmra.mxu0 %v637
        %v11578 = vpop.f32.mrf.mxu0
        %v11579 = vadd.f32 %v2565, %v11578
        %v11580 = vpop.f32.mrf.mxu0
        %v11581 = vadd.f32 %v2569, %v11580
        %v11582 = vpop.f32.mrf.mxu0
        %v11583 = vpop.f32.mrf.mxu0
        %11584 = vdwg.mxu0
        %11585 = vmatprep.subr.bf16.mxu0 %v7697
        %11586 = vmatpush1.bf16.msra.mxu0 %v7696
        %11587 = vmatprep.subr.bf16.mxu0 %v7692
        %11588 = vmatpush1.bf16.msra.mxu0 %v7691
        %11589 = vmatprep.subr.bf16.mxu0 %v7687
        %11590 = vmatpush1.bf16.msra.mxu0 %v7686
        %11591 = vmatprep.subr.bf16.mxu0 %v7682
        %11592 = vmatpush1.bf16.msra.mxu0 %v7681
        %11593 = vmatprep.subr.bf16.mxu0 %v7677
        %11594 = vmatpush1.bf16.msra.mxu0 %v7676
        %11595 = vmatprep.subr.bf16.mxu0 %v7672
        %11596 = vmatpush1.bf16.msra.mxu0 %v7671
        %11597 = vmatprep.subr.bf16.mxu0 %v7667
        %11598 = vmatpush1.bf16.msra.mxu0 %v7666
        %11599 = vmatprep.subr.bf16.mxu0 %v7662
        %11600 = vmatpush1.bf16.msra.mxu0 %v7661
        %11601 = vmatprep.subr.bf16.mxu0 %v7737
        %11602 = vmatpush2.bf16.msra.mxu0 %v7736
        %11603 = vmatprep.subr.bf16.mxu0 %v7732
        %11604 = vmatpush2.bf16.msra.mxu0 %v7731
        %11605 = vmatprep.subr.bf16.mxu0 %v7727
        %11606 = vmatpush2.bf16.msra.mxu0 %v7726
        %11607 = vmatprep.subr.bf16.mxu0 %v7722
        %11608 = vmatpush2.bf16.msra.mxu0 %v7721
        %11609 = vmatprep.subr.bf16.mxu0 %v7717
        %11610 = vmatpush2.bf16.msra.mxu0 %v7716
        %11611 = vmatprep.subr.bf16.mxu0 %v7712
        %11612 = vmatpush2.bf16.msra.mxu0 %v7711
        %11613 = vmatprep.subr.bf16.mxu0 %v7707
        %11614 = vmatpush2.bf16.msra.mxu0 %v7706
        %11615 = vmatprep.subr.bf16.mxu0 %v7702
        %11616 = vmatpush2.bf16.msra.mxu0 %v7701
        %11617 = vmatprep.mubr.bf16.mxu0 %v640
        %11618 = vmatmul.mubr.bf16.gmra.mxu0 %v639
        %v11619 = vpop.f32.mrf.mxu0
        %v11620 = vadd.f32 %v11579, %v11619
        %v11621 = vpop.f32.mrf.mxu0
        %v11622 = vadd.f32 %v11581, %v11621
        %v11623 = vpop.f32.mrf.mxu0
        %v11624 = vpop.f32.mrf.mxu0
        %11625 = vdwg.mxu0
        %11626 = vmatprep.subr.bf16.mxu0 %v7777
        %11627 = vmatpush1.bf16.msra.mxu0 %v7776
        %11628 = vmatprep.subr.bf16.mxu0 %v7772
        %11629 = vmatpush1.bf16.msra.mxu0 %v7771
        %11630 = vmatprep.subr.bf16.mxu0 %v7767
        %11631 = vmatpush1.bf16.msra.mxu0 %v7766
        %11632 = vmatprep.subr.bf16.mxu0 %v7762
        %11633 = vmatpush1.bf16.msra.mxu0 %v7761
        %11634 = vmatprep.subr.bf16.mxu0 %v7757
        %11635 = vmatpush1.bf16.msra.mxu0 %v7756
        %11636 = vmatprep.subr.bf16.mxu0 %v7752
        %11637 = vmatpush1.bf16.msra.mxu0 %v7751
        %11638 = vmatprep.subr.bf16.mxu0 %v7747
        %11639 = vmatpush1.bf16.msra.mxu0 %v7746
        %11640 = vmatprep.subr.bf16.mxu0 %v7742
        %11641 = vmatpush1.bf16.msra.mxu0 %v7741
        %11642 = vmatprep.subr.bf16.mxu0 %v7817
        %11643 = vmatpush2.bf16.msra.mxu0 %v7816
        %11644 = vmatprep.subr.bf16.mxu0 %v7812
        %11645 = vmatpush2.bf16.msra.mxu0 %v7811
        %11646 = vmatprep.subr.bf16.mxu0 %v7807
        %11647 = vmatpush2.bf16.msra.mxu0 %v7806
        %11648 = vmatprep.subr.bf16.mxu0 %v7802
        %11649 = vmatpush2.bf16.msra.mxu0 %v7801
        %11650 = vmatprep.subr.bf16.mxu0 %v7797
        %11651 = vmatpush2.bf16.msra.mxu0 %v7796
        %11652 = vmatprep.subr.bf16.mxu0 %v7792
        %11653 = vmatpush2.bf16.msra.mxu0 %v7791
        %11654 = vmatprep.subr.bf16.mxu0 %v7787
        %11655 = vmatpush2.bf16.msra.mxu0 %v7786
        %11656 = vmatprep.subr.bf16.mxu0 %v7782
        %11657 = vmatpush2.bf16.msra.mxu0 %v7781
        %11658 = vmatprep.mubr.bf16.mxu0 %v642
        %11659 = vmatmul.mubr.bf16.gmra.mxu0 %v641
        %v11660 = vpop.f32.mrf.mxu0
        %v11661 = vadd.f32 %v11620, %v11660
        %v11662 = vpop.f32.mrf.mxu0
        %v11663 = vadd.f32 %v11622, %v11662
        %v11664 = vpop.f32.mrf.mxu0
        %v11665 = vpop.f32.mrf.mxu0
        %11666 = vdwg.mxu0
        %11667 = vmatprep.subr.bf16.mxu0 %v7857
        %11668 = vmatpush1.bf16.msra.mxu0 %v7856
        %11669 = vmatprep.subr.bf16.mxu0 %v7852
        %11670 = vmatpush1.bf16.msra.mxu0 %v7851
        %11671 = vmatprep.subr.bf16.mxu0 %v7847
        %11672 = vmatpush1.bf16.msra.mxu0 %v7846
        %11673 = vmatprep.subr.bf16.mxu0 %v7842
        %11674 = vmatpush1.bf16.msra.mxu0 %v7841
        %11675 = vmatprep.subr.bf16.mxu0 %v7837
        %11676 = vmatpush1.bf16.msra.mxu0 %v7836
        %11677 = vmatprep.subr.bf16.mxu0 %v7832
        %11678 = vmatpush1.bf16.msra.mxu0 %v7831
        %11679 = vmatprep.subr.bf16.mxu0 %v7827
        %11680 = vmatpush1.bf16.msra.mxu0 %v7826
        %11681 = vmatprep.subr.bf16.mxu0 %v7822
        %11682 = vmatpush1.bf16.msra.mxu0 %v7821
        %11683 = vmatprep.subr.bf16.mxu0 %v7897
        %11684 = vmatpush2.bf16.msra.mxu0 %v7896
        %11685 = vmatprep.subr.bf16.mxu0 %v7892
        %11686 = vmatpush2.bf16.msra.mxu0 %v7891
        %11687 = vmatprep.subr.bf16.mxu0 %v7887
        %11688 = vmatpush2.bf16.msra.mxu0 %v7886
        %11689 = vmatprep.subr.bf16.mxu0 %v7882
        %11690 = vmatpush2.bf16.msra.mxu0 %v7881
        %11691 = vmatprep.subr.bf16.mxu0 %v7877
        %11692 = vmatpush2.bf16.msra.mxu0 %v7876
        %11693 = vmatprep.subr.bf16.mxu0 %v7872
        %11694 = vmatpush2.bf16.msra.mxu0 %v7871
        %11695 = vmatprep.subr.bf16.mxu0 %v7867
        %11696 = vmatpush2.bf16.msra.mxu0 %v7866
        %11697 = vmatprep.subr.bf16.mxu0 %v7862
        %11698 = vmatpush2.bf16.msra.mxu0 %v7861
        %11699 = vmatprep.mubr.bf16.mxu0 %v644
        %11700 = vmatmul.mubr.bf16.gmra.mxu0 %v643
        %v11701 = vpop.f32.mrf.mxu0
        %v11702 = vadd.f32 %v11661, %v11701
        %v11703 = vpop.f32.mrf.mxu0
        %v11704 = vadd.f32 %v11663, %v11703
        %v11705 = vpop.f32.mrf.mxu0
        %v11706 = vpop.f32.mrf.mxu0
        %11707 = vdwg.mxu0
        %11708 = vmatprep.subr.bf16.mxu0 %v7937
        %11709 = vmatpush1.bf16.msra.mxu0 %v7936
        %11710 = vmatprep.subr.bf16.mxu0 %v7932
        %11711 = vmatpush1.bf16.msra.mxu0 %v7931
        %11712 = vmatprep.subr.bf16.mxu0 %v7927
        %11713 = vmatpush1.bf16.msra.mxu0 %v7926
        %11714 = vmatprep.subr.bf16.mxu0 %v7922
        %11715 = vmatpush1.bf16.msra.mxu0 %v7921
        %11716 = vmatprep.subr.bf16.mxu0 %v7917
        %11717 = vmatpush1.bf16.msra.mxu0 %v7916
        %11718 = vmatprep.subr.bf16.mxu0 %v7912
        %11719 = vmatpush1.bf16.msra.mxu0 %v7911
        %11720 = vmatprep.subr.bf16.mxu0 %v7907
        %11721 = vmatpush1.bf16.msra.mxu0 %v7906
        %11722 = vmatprep.subr.bf16.mxu0 %v7902
        %11723 = vmatpush1.bf16.msra.mxu0 %v7901
        %11724 = vmatprep.subr.bf16.mxu0 %v7977
        %11725 = vmatpush2.bf16.msra.mxu0 %v7976
        %11726 = vmatprep.subr.bf16.mxu0 %v7972
        %11727 = vmatpush2.bf16.msra.mxu0 %v7971
        %11728 = vmatprep.subr.bf16.mxu0 %v7967
        %11729 = vmatpush2.bf16.msra.mxu0 %v7966
        %11730 = vmatprep.subr.bf16.mxu0 %v7962
        %11731 = vmatpush2.bf16.msra.mxu0 %v7961
        %11732 = vmatprep.subr.bf16.mxu0 %v7957
        %11733 = vmatpush2.bf16.msra.mxu0 %v7956
        %11734 = vmatprep.subr.bf16.mxu0 %v7952
        %11735 = vmatpush2.bf16.msra.mxu0 %v7951
        %11736 = vmatprep.subr.bf16.mxu0 %v7947
        %11737 = vmatpush2.bf16.msra.mxu0 %v7946
        %11738 = vmatprep.subr.bf16.mxu0 %v7942
        %11739 = vmatpush2.bf16.msra.mxu0 %v7941
        %11740 = vmatprep.mubr.bf16.mxu0 %v646
        %11741 = vmatmul.mubr.bf16.gmra.mxu0 %v645
        %v11742 = vpop.f32.mrf.mxu0
        %v11743 = vadd.f32 %v11702, %v11742
        %v11744 = vpop.f32.mrf.mxu0
        %v11745 = vadd.f32 %v11704, %v11744
        %v11746 = vpop.f32.mrf.mxu0
        %v11747 = vpop.f32.mrf.mxu0
        %11748 = vdwg.mxu0
        %11749 = vmatprep.subr.bf16.mxu0 %v8017
        %11750 = vmatpush1.bf16.msra.mxu0 %v8016
        %11751 = vmatprep.subr.bf16.mxu0 %v8012
        %11752 = vmatpush1.bf16.msra.mxu0 %v8011
        %11753 = vmatprep.subr.bf16.mxu0 %v8007
        %11754 = vmatpush1.bf16.msra.mxu0 %v8006
        %11755 = vmatprep.subr.bf16.mxu0 %v8002
        %11756 = vmatpush1.bf16.msra.mxu0 %v8001
        %11757 = vmatprep.subr.bf16.mxu0 %v7997
        %11758 = vmatpush1.bf16.msra.mxu0 %v7996
        %11759 = vmatprep.subr.bf16.mxu0 %v7992
        %11760 = vmatpush1.bf16.msra.mxu0 %v7991
        %11761 = vmatprep.subr.bf16.mxu0 %v7987
        %11762 = vmatpush1.bf16.msra.mxu0 %v7986
        %11763 = vmatprep.subr.bf16.mxu0 %v7982
        %11764 = vmatpush1.bf16.msra.mxu0 %v7981
        %11765 = vmatprep.subr.bf16.mxu0 %v8057
        %11766 = vmatpush2.bf16.msra.mxu0 %v8056
        %11767 = vmatprep.subr.bf16.mxu0 %v8052
        %11768 = vmatpush2.bf16.msra.mxu0 %v8051
        %11769 = vmatprep.subr.bf16.mxu0 %v8047
        %11770 = vmatpush2.bf16.msra.mxu0 %v8046
        %11771 = vmatprep.subr.bf16.mxu0 %v8042
        %11772 = vmatpush2.bf16.msra.mxu0 %v8041
        %11773 = vmatprep.subr.bf16.mxu0 %v8037
        %11774 = vmatpush2.bf16.msra.mxu0 %v8036
        %11775 = vmatprep.subr.bf16.mxu0 %v8032
        %11776 = vmatpush2.bf16.msra.mxu0 %v8031
        %11777 = vmatprep.subr.bf16.mxu0 %v8027
        %11778 = vmatpush2.bf16.msra.mxu0 %v8026
        %11779 = vmatprep.subr.bf16.mxu0 %v8022
        %11780 = vmatpush2.bf16.msra.mxu0 %v8021
        %11781 = vmatprep.mubr.bf16.mxu0 %v648
        %11782 = vmatmul.mubr.bf16.gmra.mxu0 %v647
        %v11783 = vpop.f32.mrf.mxu0
        %v11784 = vadd.f32 %v11743, %v11783
        %v11785 = vpop.f32.mrf.mxu0
        %v11786 = vadd.f32 %v11745, %v11785
        %v11787 = vpop.f32.mrf.mxu0
        %v11788 = vpop.f32.mrf.mxu0
        %11789 = vdwg.mxu0
        %11790 = vmatprep.subr.bf16.mxu0 %v8097
        %11791 = vmatpush1.bf16.msra.mxu0 %v8096
        %11792 = vmatprep.subr.bf16.mxu0 %v8092
        %11793 = vmatpush1.bf16.msra.mxu0 %v8091
        %11794 = vmatprep.subr.bf16.mxu0 %v8087
        %11795 = vmatpush1.bf16.msra.mxu0 %v8086
        %11796 = vmatprep.subr.bf16.mxu0 %v8082
        %11797 = vmatpush1.bf16.msra.mxu0 %v8081
        %11798 = vmatprep.subr.bf16.mxu0 %v8077
        %11799 = vmatpush1.bf16.msra.mxu0 %v8076
        %11800 = vmatprep.subr.bf16.mxu0 %v8072
        %11801 = vmatpush1.bf16.msra.mxu0 %v8071
        %11802 = vmatprep.subr.bf16.mxu0 %v8067
        %11803 = vmatpush1.bf16.msra.mxu0 %v8066
        %11804 = vmatprep.subr.bf16.mxu0 %v8062
        %11805 = vmatpush1.bf16.msra.mxu0 %v8061
        %11806 = vmatprep.subr.bf16.mxu0 %v8137
        %11807 = vmatpush2.bf16.msra.mxu0 %v8136
        %11808 = vmatprep.subr.bf16.mxu0 %v8132
        %11809 = vmatpush2.bf16.msra.mxu0 %v8131
        %11810 = vmatprep.subr.bf16.mxu0 %v8127
        %11811 = vmatpush2.bf16.msra.mxu0 %v8126
        %11812 = vmatprep.subr.bf16.mxu0 %v8122
        %11813 = vmatpush2.bf16.msra.mxu0 %v8121
        %11814 = vmatprep.subr.bf16.mxu0 %v8117
        %11815 = vmatpush2.bf16.msra.mxu0 %v8116
        %11816 = vmatprep.subr.bf16.mxu0 %v8112
        %11817 = vmatpush2.bf16.msra.mxu0 %v8111
        %11818 = vmatprep.subr.bf16.mxu0 %v8107
        %11819 = vmatpush2.bf16.msra.mxu0 %v8106
        %11820 = vmatprep.subr.bf16.mxu0 %v8102
        %11821 = vmatpush2.bf16.msra.mxu0 %v8101
        %11822 = vmatprep.mubr.bf16.mxu0 %v650
        %11823 = vmatmul.mubr.bf16.gmra.mxu0 %v649
        %v11824 = vpop.f32.mrf.mxu0
        %v11825 = vadd.f32 %v11784, %v11824
        %v11826 = vpop.f32.mrf.mxu0
        %v11827 = vadd.f32 %v11786, %v11826
        %v11828 = vpop.f32.mrf.mxu0
        %v11829 = vpop.f32.mrf.mxu0
        %11830 = vdwg.mxu0
        %11831 = vmatprep.subr.bf16.mxu0 %v8177
        %11832 = vmatpush1.bf16.msra.mxu0 %v8176
        %11833 = vmatprep.subr.bf16.mxu0 %v8172
        %11834 = vmatpush1.bf16.msra.mxu0 %v8171
        %11835 = vmatprep.subr.bf16.mxu0 %v8167
        %11836 = vmatpush1.bf16.msra.mxu0 %v8166
        %11837 = vmatprep.subr.bf16.mxu0 %v8162
        %11838 = vmatpush1.bf16.msra.mxu0 %v8161
        %11839 = vmatprep.subr.bf16.mxu0 %v8157
        %11840 = vmatpush1.bf16.msra.mxu0 %v8156
        %11841 = vmatprep.subr.bf16.mxu0 %v8152
        %11842 = vmatpush1.bf16.msra.mxu0 %v8151
        %11843 = vmatprep.subr.bf16.mxu0 %v8147
        %11844 = vmatpush1.bf16.msra.mxu0 %v8146
        %11845 = vmatprep.subr.bf16.mxu0 %v8142
        %11846 = vmatpush1.bf16.msra.mxu0 %v8141
        %11847 = vmatprep.subr.bf16.mxu0 %v8217
        %11848 = vmatpush2.bf16.msra.mxu0 %v8216
        %11849 = vmatprep.subr.bf16.mxu0 %v8212
        %11850 = vmatpush2.bf16.msra.mxu0 %v8211
        %11851 = vmatprep.subr.bf16.mxu0 %v8207
        %11852 = vmatpush2.bf16.msra.mxu0 %v8206
        %11853 = vmatprep.subr.bf16.mxu0 %v8202
        %11854 = vmatpush2.bf16.msra.mxu0 %v8201
        %11855 = vmatprep.subr.bf16.mxu0 %v8197
        %11856 = vmatpush2.bf16.msra.mxu0 %v8196
        %11857 = vmatprep.subr.bf16.mxu0 %v8192
        %11858 = vmatpush2.bf16.msra.mxu0 %v8191
        %11859 = vmatprep.subr.bf16.mxu0 %v8187
        %11860 = vmatpush2.bf16.msra.mxu0 %v8186
        %11861 = vmatprep.subr.bf16.mxu0 %v8182
        %11862 = vmatpush2.bf16.msra.mxu0 %v8181
        %11863 = vmatprep.mubr.bf16.mxu0 %v652
        %11864 = vmatmul.mubr.bf16.gmra.mxu0 %v651
        %v11865 = vpop.f32.mrf.mxu0
        %v11866 = vadd.f32 %v11825, %v11865
        %v11867 = vpop.f32.mrf.mxu0
        %v11868 = vadd.f32 %v11827, %v11867
        %v11869 = vpop.f32.mrf.mxu0
        %v11870 = vpop.f32.mrf.mxu0
        %11871 = vdwg.mxu0
        %11872 = vmatprep.subr.bf16.mxu0 %v8257
        %11873 = vmatpush1.bf16.msra.mxu0 %v8256
        %11874 = vmatprep.subr.bf16.mxu0 %v8252
        %11875 = vmatpush1.bf16.msra.mxu0 %v8251
        %11876 = vmatprep.subr.bf16.mxu0 %v8247
        %11877 = vmatpush1.bf16.msra.mxu0 %v8246
        %11878 = vmatprep.subr.bf16.mxu0 %v8242
        %11879 = vmatpush1.bf16.msra.mxu0 %v8241
        %11880 = vmatprep.subr.bf16.mxu0 %v8237
        %11881 = vmatpush1.bf16.msra.mxu0 %v8236
        %11882 = vmatprep.subr.bf16.mxu0 %v8232
        %11883 = vmatpush1.bf16.msra.mxu0 %v8231
        %11884 = vmatprep.subr.bf16.mxu0 %v8227
        %11885 = vmatpush1.bf16.msra.mxu0 %v8226
        %11886 = vmatprep.subr.bf16.mxu0 %v8222
        %11887 = vmatpush1.bf16.msra.mxu0 %v8221
        %11888 = vmatprep.subr.bf16.mxu0 %v8297
        %11889 = vmatpush2.bf16.msra.mxu0 %v8296
        %11890 = vmatprep.subr.bf16.mxu0 %v8292
        %11891 = vmatpush2.bf16.msra.mxu0 %v8291
        %11892 = vmatprep.subr.bf16.mxu0 %v8287
        %11893 = vmatpush2.bf16.msra.mxu0 %v8286
        %11894 = vmatprep.subr.bf16.mxu0 %v8282
        %11895 = vmatpush2.bf16.msra.mxu0 %v8281
        %11896 = vmatprep.subr.bf16.mxu0 %v8277
        %11897 = vmatpush2.bf16.msra.mxu0 %v8276
        %11898 = vmatprep.subr.bf16.mxu0 %v8272
        %11899 = vmatpush2.bf16.msra.mxu0 %v8271
        %11900 = vmatprep.subr.bf16.mxu0 %v8267
        %11901 = vmatpush2.bf16.msra.mxu0 %v8266
        %11902 = vmatprep.subr.bf16.mxu0 %v8262
        %11903 = vmatpush2.bf16.msra.mxu0 %v8261
        %11904 = vmatprep.mubr.bf16.mxu0 %v654
        %11905 = vmatmul.mubr.bf16.gmra.mxu0 %v653
        %v11906 = vpop.f32.mrf.mxu0
        %v11907 = vadd.f32 %v11866, %v11906
        %v11908 = vpop.f32.mrf.mxu0
        %v11909 = vadd.f32 %v11868, %v11908
        %v11910 = vpop.f32.mrf.mxu0
        %v11911 = vpop.f32.mrf.mxu0
        %11912 = vdwg.mxu0
        %11913 = vmatprep.subr.bf16.mxu0 %v8337
        %11914 = vmatpush1.bf16.msra.mxu0 %v8336
        %11915 = vmatprep.subr.bf16.mxu0 %v8332
        %11916 = vmatpush1.bf16.msra.mxu0 %v8331
        %11917 = vmatprep.subr.bf16.mxu0 %v8327
        %11918 = vmatpush1.bf16.msra.mxu0 %v8326
        %11919 = vmatprep.subr.bf16.mxu0 %v8322
        %11920 = vmatpush1.bf16.msra.mxu0 %v8321
        %11921 = vmatprep.subr.bf16.mxu0 %v8317
        %11922 = vmatpush1.bf16.msra.mxu0 %v8316
        %11923 = vmatprep.subr.bf16.mxu0 %v8312
        %11924 = vmatpush1.bf16.msra.mxu0 %v8311
        %11925 = vmatprep.subr.bf16.mxu0 %v8307
        %11926 = vmatpush1.bf16.msra.mxu0 %v8306
        %11927 = vmatprep.subr.bf16.mxu0 %v8302
        %11928 = vmatpush1.bf16.msra.mxu0 %v8301
        %11929 = vmatprep.subr.bf16.mxu0 %v8377
        %11930 = vmatpush2.bf16.msra.mxu0 %v8376
        %11931 = vmatprep.subr.bf16.mxu0 %v8372
        %11932 = vmatpush2.bf16.msra.mxu0 %v8371
        %11933 = vmatprep.subr.bf16.mxu0 %v8367
        %11934 = vmatpush2.bf16.msra.mxu0 %v8366
        %11935 = vmatprep.subr.bf16.mxu0 %v8362
        %11936 = vmatpush2.bf16.msra.mxu0 %v8361
        %11937 = vmatprep.subr.bf16.mxu0 %v8357
        %11938 = vmatpush2.bf16.msra.mxu0 %v8356
        %11939 = vmatprep.subr.bf16.mxu0 %v8352
        %11940 = vmatpush2.bf16.msra.mxu0 %v8351
        %11941 = vmatprep.subr.bf16.mxu0 %v8347
        %11942 = vmatpush2.bf16.msra.mxu0 %v8346
        %11943 = vmatprep.subr.bf16.mxu0 %v8342
        %11944 = vmatpush2.bf16.msra.mxu0 %v8341
        %11945 = vmatprep.mubr.bf16.mxu0 %v656
        %11946 = vmatmul.mubr.bf16.gmra.mxu0 %v655
        %v11947 = vpop.f32.mrf.mxu0
        %v11948 = vadd.f32 %v11907, %v11947
        %v11949 = vpop.f32.mrf.mxu0
        %v11950 = vadd.f32 %v11909, %v11949
        %v11951 = vpop.f32.mrf.mxu0
        %v11952 = vpop.f32.mrf.mxu0
        %11953 = vdwg.mxu0
        %11954 = vmatprep.subr.bf16.mxu0 %v8417
        %11955 = vmatpush1.bf16.msra.mxu0 %v8416
        %11956 = vmatprep.subr.bf16.mxu0 %v8412
        %11957 = vmatpush1.bf16.msra.mxu0 %v8411
        %11958 = vmatprep.subr.bf16.mxu0 %v8407
        %11959 = vmatpush1.bf16.msra.mxu0 %v8406
        %11960 = vmatprep.subr.bf16.mxu0 %v8402
        %11961 = vmatpush1.bf16.msra.mxu0 %v8401
        %11962 = vmatprep.subr.bf16.mxu0 %v8397
        %11963 = vmatpush1.bf16.msra.mxu0 %v8396
        %11964 = vmatprep.subr.bf16.mxu0 %v8392
        %11965 = vmatpush1.bf16.msra.mxu0 %v8391
        %11966 = vmatprep.subr.bf16.mxu0 %v8387
        %11967 = vmatpush1.bf16.msra.mxu0 %v8386
        %11968 = vmatprep.subr.bf16.mxu0 %v8382
        %11969 = vmatpush1.bf16.msra.mxu0 %v8381
        %11970 = vmatprep.subr.bf16.mxu0 %v8457
        %11971 = vmatpush2.bf16.msra.mxu0 %v8456
        %11972 = vmatprep.subr.bf16.mxu0 %v8452
        %11973 = vmatpush2.bf16.msra.mxu0 %v8451
        %11974 = vmatprep.subr.bf16.mxu0 %v8447
        %11975 = vmatpush2.bf16.msra.mxu0 %v8446
        %11976 = vmatprep.subr.bf16.mxu0 %v8442
        %11977 = vmatpush2.bf16.msra.mxu0 %v8441
        %11978 = vmatprep.subr.bf16.mxu0 %v8437
        %11979 = vmatpush2.bf16.msra.mxu0 %v8436
        %11980 = vmatprep.subr.bf16.mxu0 %v8432
        %11981 = vmatpush2.bf16.msra.mxu0 %v8431
        %11982 = vmatprep.subr.bf16.mxu0 %v8427
        %11983 = vmatpush2.bf16.msra.mxu0 %v8426
        %11984 = vmatprep.subr.bf16.mxu0 %v8422
        %11985 = vmatpush2.bf16.msra.mxu0 %v8421
        %11986 = vmatprep.mubr.bf16.mxu0 %v658
        %11987 = vmatmul.mubr.bf16.gmra.mxu0 %v657
        %v11988 = vpop.f32.mrf.mxu0
        %v11989 = vadd.f32 %v11948, %v11988
        %v11990 = vpop.f32.mrf.mxu0
        %v11991 = vadd.f32 %v11950, %v11990
        %v11992 = vpop.f32.mrf.mxu0
        %v11993 = vpop.f32.mrf.mxu0
        %11994 = vdwg.mxu0
        %11995 = vmatprep.subr.bf16.mxu0 %v8497
        %11996 = vmatpush1.bf16.msra.mxu0 %v8496
        %11997 = vmatprep.subr.bf16.mxu0 %v8492
        %11998 = vmatpush1.bf16.msra.mxu0 %v8491
        %11999 = vmatprep.subr.bf16.mxu0 %v8487
        %12000 = vmatpush1.bf16.msra.mxu0 %v8486
        %12001 = vmatprep.subr.bf16.mxu0 %v8482
        %12002 = vmatpush1.bf16.msra.mxu0 %v8481
        %12003 = vmatprep.subr.bf16.mxu0 %v8477
        %12004 = vmatpush1.bf16.msra.mxu0 %v8476
        %12005 = vmatprep.subr.bf16.mxu0 %v8472
        %12006 = vmatpush1.bf16.msra.mxu0 %v8471
        %12007 = vmatprep.subr.bf16.mxu0 %v8467
        %12008 = vmatpush1.bf16.msra.mxu0 %v8466
        %12009 = vmatprep.subr.bf16.mxu0 %v8462
        %12010 = vmatpush1.bf16.msra.mxu0 %v8461
        %12011 = vmatprep.subr.bf16.mxu0 %v8537
        %12012 = vmatpush2.bf16.msra.mxu0 %v8536
        %12013 = vmatprep.subr.bf16.mxu0 %v8532
        %12014 = vmatpush2.bf16.msra.mxu0 %v8531
        %12015 = vmatprep.subr.bf16.mxu0 %v8527
        %12016 = vmatpush2.bf16.msra.mxu0 %v8526
        %12017 = vmatprep.subr.bf16.mxu0 %v8522
        %12018 = vmatpush2.bf16.msra.mxu0 %v8521
        %12019 = vmatprep.subr.bf16.mxu0 %v8517
        %12020 = vmatpush2.bf16.msra.mxu0 %v8516
        %12021 = vmatprep.subr.bf16.mxu0 %v8512
        %12022 = vmatpush2.bf16.msra.mxu0 %v8511
        %12023 = vmatprep.subr.bf16.mxu0 %v8507
        %12024 = vmatpush2.bf16.msra.mxu0 %v8506
        %12025 = vmatprep.subr.bf16.mxu0 %v8502
        %12026 = vmatpush2.bf16.msra.mxu0 %v8501
        %12027 = vmatprep.mubr.bf16.mxu0 %v660
        %12028 = vmatmul.mubr.bf16.gmra.mxu0 %v659
        %v12029 = vpop.f32.mrf.mxu0
        %v12030 = vadd.f32 %v11989, %v12029
        %v12031 = vpop.f32.mrf.mxu0
        %v12032 = vadd.f32 %v11991, %v12031
        %v12033 = vpop.f32.mrf.mxu0
        %v12034 = vpop.f32.mrf.mxu0
        %12035 = vdwg.mxu0
        %12036 = vmatprep.subr.bf16.mxu0 %v8577
        %12037 = vmatpush1.bf16.msra.mxu0 %v8576
        %12038 = vmatprep.subr.bf16.mxu0 %v8572
        %12039 = vmatpush1.bf16.msra.mxu0 %v8571
        %12040 = vmatprep.subr.bf16.mxu0 %v8567
        %12041 = vmatpush1.bf16.msra.mxu0 %v8566
        %12042 = vmatprep.subr.bf16.mxu0 %v8562
        %12043 = vmatpush1.bf16.msra.mxu0 %v8561
        %12044 = vmatprep.subr.bf16.mxu0 %v8557
        %12045 = vmatpush1.bf16.msra.mxu0 %v8556
        %12046 = vmatprep.subr.bf16.mxu0 %v8552
        %12047 = vmatpush1.bf16.msra.mxu0 %v8551
        %12048 = vmatprep.subr.bf16.mxu0 %v8547
        %12049 = vmatpush1.bf16.msra.mxu0 %v8546
        %12050 = vmatprep.subr.bf16.mxu0 %v8542
        %12051 = vmatpush1.bf16.msra.mxu0 %v8541
        %12052 = vmatprep.subr.bf16.mxu0 %v8617
        %12053 = vmatpush2.bf16.msra.mxu0 %v8616
        %12054 = vmatprep.subr.bf16.mxu0 %v8612
        %12055 = vmatpush2.bf16.msra.mxu0 %v8611
        %12056 = vmatprep.subr.bf16.mxu0 %v8607
        %12057 = vmatpush2.bf16.msra.mxu0 %v8606
        %12058 = vmatprep.subr.bf16.mxu0 %v8602
        %12059 = vmatpush2.bf16.msra.mxu0 %v8601
        %12060 = vmatprep.subr.bf16.mxu0 %v8597
        %12061 = vmatpush2.bf16.msra.mxu0 %v8596
        %12062 = vmatprep.subr.bf16.mxu0 %v8592
        %12063 = vmatpush2.bf16.msra.mxu0 %v8591
        %12064 = vmatprep.subr.bf16.mxu0 %v8587
        %12065 = vmatpush2.bf16.msra.mxu0 %v8586
        %12066 = vmatprep.subr.bf16.mxu0 %v8582
        %12067 = vmatpush2.bf16.msra.mxu0 %v8581
        %12068 = vmatprep.mubr.bf16.mxu0 %v662
        %12069 = vmatmul.mubr.bf16.gmra.mxu0 %v661
        %v12070 = vpop.f32.mrf.mxu0
        %v12071 = vadd.f32 %v12030, %v12070
        %v12072 = vpop.f32.mrf.mxu0
        %v12073 = vadd.f32 %v12032, %v12072
        %v12074 = vpop.f32.mrf.mxu0
        %v12075 = vpop.f32.mrf.mxu0
        %12076 = vdwg.mxu0
        %12077 = vmatprep.subr.bf16.mxu0 %v8657
        %12078 = vmatpush1.bf16.msra.mxu0 %v8656
        %12079 = vmatprep.subr.bf16.mxu0 %v8652
        %12080 = vmatpush1.bf16.msra.mxu0 %v8651
        %12081 = vmatprep.subr.bf16.mxu0 %v8647
        %12082 = vmatpush1.bf16.msra.mxu0 %v8646
        %12083 = vmatprep.subr.bf16.mxu0 %v8642
        %12084 = vmatpush1.bf16.msra.mxu0 %v8641
        %12085 = vmatprep.subr.bf16.mxu0 %v8637
        %12086 = vmatpush1.bf16.msra.mxu0 %v8636
        %12087 = vmatprep.subr.bf16.mxu0 %v8632
        %12088 = vmatpush1.bf16.msra.mxu0 %v8631
        %12089 = vmatprep.subr.bf16.mxu0 %v8627
        %12090 = vmatpush1.bf16.msra.mxu0 %v8626
        %12091 = vmatprep.subr.bf16.mxu0 %v8622
        %12092 = vmatpush1.bf16.msra.mxu0 %v8621
        %12093 = vmatprep.subr.bf16.mxu0 %v8697
        %12094 = vmatpush2.bf16.msra.mxu0 %v8696
        %12095 = vmatprep.subr.bf16.mxu0 %v8692
        %12096 = vmatpush2.bf16.msra.mxu0 %v8691
        %12097 = vmatprep.subr.bf16.mxu0 %v8687
        %12098 = vmatpush2.bf16.msra.mxu0 %v8686
        %12099 = vmatprep.subr.bf16.mxu0 %v8682
        %12100 = vmatpush2.bf16.msra.mxu0 %v8681
        %12101 = vmatprep.subr.bf16.mxu0 %v8677
        %12102 = vmatpush2.bf16.msra.mxu0 %v8676
        %12103 = vmatprep.subr.bf16.mxu0 %v8672
        %12104 = vmatpush2.bf16.msra.mxu0 %v8671
        %12105 = vmatprep.subr.bf16.mxu0 %v8667
        %12106 = vmatpush2.bf16.msra.mxu0 %v8666
        %12107 = vmatprep.subr.bf16.mxu0 %v8662
        %12108 = vmatpush2.bf16.msra.mxu0 %v8661
        %12109 = vmatprep.mubr.bf16.mxu0 %v664
        %12110 = vmatmul.mubr.bf16.gmra.mxu0 %v663
        %v12111 = vpop.f32.mrf.mxu0
        %v12112 = vadd.f32 %v12071, %v12111
        %v12113 = vpop.f32.mrf.mxu0
        %v12114 = vadd.f32 %v12073, %v12113
        %v12115 = vpop.f32.mrf.mxu0
        %v12116 = vpop.f32.mrf.mxu0
        %12117 = vdwg.mxu0
        %12118 = vmatprep.subr.bf16.mxu0 %v8737
        %12119 = vmatpush1.bf16.msra.mxu0 %v8736
        %12120 = vmatprep.subr.bf16.mxu0 %v8732
        %12121 = vmatpush1.bf16.msra.mxu0 %v8731
        %12122 = vmatprep.subr.bf16.mxu0 %v8727
        %12123 = vmatpush1.bf16.msra.mxu0 %v8726
        %12124 = vmatprep.subr.bf16.mxu0 %v8722
        %12125 = vmatpush1.bf16.msra.mxu0 %v8721
        %12126 = vmatprep.subr.bf16.mxu0 %v8717
        %12127 = vmatpush1.bf16.msra.mxu0 %v8716
        %12128 = vmatprep.subr.bf16.mxu0 %v8712
        %12129 = vmatpush1.bf16.msra.mxu0 %v8711
        %12130 = vmatprep.subr.bf16.mxu0 %v8707
        %12131 = vmatpush1.bf16.msra.mxu0 %v8706
        %12132 = vmatprep.subr.bf16.mxu0 %v8702
        %12133 = vmatpush1.bf16.msra.mxu0 %v8701
        %12134 = vmatprep.subr.bf16.mxu0 %v8777
        %12135 = vmatpush2.bf16.msra.mxu0 %v8776
        %12136 = vmatprep.subr.bf16.mxu0 %v8772
        %12137 = vmatpush2.bf16.msra.mxu0 %v8771
        %12138 = vmatprep.subr.bf16.mxu0 %v8767
        %12139 = vmatpush2.bf16.msra.mxu0 %v8766
        %12140 = vmatprep.subr.bf16.mxu0 %v8762
        %12141 = vmatpush2.bf16.msra.mxu0 %v8761
        %12142 = vmatprep.subr.bf16.mxu0 %v8757
        %12143 = vmatpush2.bf16.msra.mxu0 %v8756
        %12144 = vmatprep.subr.bf16.mxu0 %v8752
        %12145 = vmatpush2.bf16.msra.mxu0 %v8751
        %12146 = vmatprep.subr.bf16.mxu0 %v8747
        %12147 = vmatpush2.bf16.msra.mxu0 %v8746
        %12148 = vmatprep.subr.bf16.mxu0 %v8742
        %12149 = vmatpush2.bf16.msra.mxu0 %v8741
        %12150 = vmatprep.mubr.bf16.mxu0 %v666
        %12151 = vmatmul.mubr.bf16.gmra.mxu0 %v665
        %v12152 = vpop.f32.mrf.mxu0
        %v12153 = vadd.f32 %v12112, %v12152
        %v12154 = vpop.f32.mrf.mxu0
        %v12155 = vadd.f32 %v12114, %v12154
        %v12156 = vpop.f32.mrf.mxu0
        %v12157 = vpop.f32.mrf.mxu0
        %12158 = vdwg.mxu0
        %12159 = vmatprep.subr.bf16.mxu0 %v8817
        %12160 = vmatpush1.bf16.msra.mxu0 %v8816
        %12161 = vmatprep.subr.bf16.mxu0 %v8812
        %12162 = vmatpush1.bf16.msra.mxu0 %v8811
        %12163 = vmatprep.subr.bf16.mxu0 %v8807
        %12164 = vmatpush1.bf16.msra.mxu0 %v8806
        %12165 = vmatprep.subr.bf16.mxu0 %v8802
        %12166 = vmatpush1.bf16.msra.mxu0 %v8801
        %12167 = vmatprep.subr.bf16.mxu0 %v8797
        %12168 = vmatpush1.bf16.msra.mxu0 %v8796
        %12169 = vmatprep.subr.bf16.mxu0 %v8792
        %12170 = vmatpush1.bf16.msra.mxu0 %v8791
        %12171 = vmatprep.subr.bf16.mxu0 %v8787
        %12172 = vmatpush1.bf16.msra.mxu0 %v8786
        %12173 = vmatprep.subr.bf16.mxu0 %v8782
        %12174 = vmatpush1.bf16.msra.mxu0 %v8781
        %12175 = vmatprep.subr.bf16.mxu0 %v8857
        %12176 = vmatpush2.bf16.msra.mxu0 %v8856
        %12177 = vmatprep.subr.bf16.mxu0 %v8852
        %12178 = vmatpush2.bf16.msra.mxu0 %v8851
        %12179 = vmatprep.subr.bf16.mxu0 %v8847
        %12180 = vmatpush2.bf16.msra.mxu0 %v8846
        %12181 = vmatprep.subr.bf16.mxu0 %v8842
        %12182 = vmatpush2.bf16.msra.mxu0 %v8841
        %12183 = vmatprep.subr.bf16.mxu0 %v8837
        %12184 = vmatpush2.bf16.msra.mxu0 %v8836
        %12185 = vmatprep.subr.bf16.mxu0 %v8832
        %12186 = vmatpush2.bf16.msra.mxu0 %v8831
        %12187 = vmatprep.subr.bf16.mxu0 %v8827
        %12188 = vmatpush2.bf16.msra.mxu0 %v8826
        %12189 = vmatprep.subr.bf16.mxu0 %v8822
        %12190 = vmatpush2.bf16.msra.mxu0 %v8821
        %12191 = vmatprep.mubr.bf16.mxu0 %v668
        %12192 = vmatmul.mubr.bf16.gmra.mxu0 %v667
        %v12193 = vpop.f32.mrf.mxu0
        %v12194 = vadd.f32 %v12153, %v12193
        %v12195 = vpop.f32.mrf.mxu0
        %v12196 = vadd.f32 %v12155, %v12195
        %v12197 = vpop.f32.mrf.mxu0
        %v12198 = vpop.f32.mrf.mxu0
        %12199 = vdwg.mxu0
        %12200 = vmatprep.subr.bf16.mxu0 %v8897
        %12201 = vmatpush1.bf16.msra.mxu0 %v8896
        %12202 = vmatprep.subr.bf16.mxu0 %v8892
        %12203 = vmatpush1.bf16.msra.mxu0 %v8891
        %12204 = vmatprep.subr.bf16.mxu0 %v8887
        %12205 = vmatpush1.bf16.msra.mxu0 %v8886
        %12206 = vmatprep.subr.bf16.mxu0 %v8882
        %12207 = vmatpush1.bf16.msra.mxu0 %v8881
        %12208 = vmatprep.subr.bf16.mxu0 %v8877
        %12209 = vmatpush1.bf16.msra.mxu0 %v8876
        %12210 = vmatprep.subr.bf16.mxu0 %v8872
        %12211 = vmatpush1.bf16.msra.mxu0 %v8871
        %12212 = vmatprep.subr.bf16.mxu0 %v8867
        %12213 = vmatpush1.bf16.msra.mxu0 %v8866
        %12214 = vmatprep.subr.bf16.mxu0 %v8862
        %12215 = vmatpush1.bf16.msra.mxu0 %v8861
        %12216 = vmatprep.subr.bf16.mxu0 %v8937
        %12217 = vmatpush2.bf16.msra.mxu0 %v8936
        %12218 = vmatprep.subr.bf16.mxu0 %v8932
        %12219 = vmatpush2.bf16.msra.mxu0 %v8931
        %12220 = vmatprep.subr.bf16.mxu0 %v8927
        %12221 = vmatpush2.bf16.msra.mxu0 %v8926
        %12222 = vmatprep.subr.bf16.mxu0 %v8922
        %12223 = vmatpush2.bf16.msra.mxu0 %v8921
        %12224 = vmatprep.subr.bf16.mxu0 %v8917
        %12225 = vmatpush2.bf16.msra.mxu0 %v8916
        %12226 = vmatprep.subr.bf16.mxu0 %v8912
        %12227 = vmatpush2.bf16.msra.mxu0 %v8911
        %12228 = vmatprep.subr.bf16.mxu0 %v8907
        %12229 = vmatpush2.bf16.msra.mxu0 %v8906
        %12230 = vmatprep.subr.bf16.mxu0 %v8902
        %12231 = vmatpush2.bf16.msra.mxu0 %v8901
        %12232 = vmatprep.mubr.bf16.mxu0 %v670
        %12233 = vmatmul.mubr.bf16.gmra.mxu0 %v669
        %v12234 = vpop.f32.mrf.mxu0
        %v12235 = vadd.f32 %v12194, %v12234
        %v12236 = vpop.f32.mrf.mxu0
        %v12237 = vadd.f32 %v12196, %v12236
        %v12238 = vpop.f32.mrf.mxu0
        %v12239 = vpop.f32.mrf.mxu0
        %12240 = vdwg.mxu0
        %12241 = vmatprep.subr.bf16.mxu0 %v8977
        %12242 = vmatpush1.bf16.msra.mxu0 %v8976
        %12243 = vmatprep.subr.bf16.mxu0 %v8972
        %12244 = vmatpush1.bf16.msra.mxu0 %v8971
        %12245 = vmatprep.subr.bf16.mxu0 %v8967
        %12246 = vmatpush1.bf16.msra.mxu0 %v8966
        %12247 = vmatprep.subr.bf16.mxu0 %v8962
        %12248 = vmatpush1.bf16.msra.mxu0 %v8961
        %12249 = vmatprep.subr.bf16.mxu0 %v8957
        %12250 = vmatpush1.bf16.msra.mxu0 %v8956
        %12251 = vmatprep.subr.bf16.mxu0 %v8952
        %12252 = vmatpush1.bf16.msra.mxu0 %v8951
        %12253 = vmatprep.subr.bf16.mxu0 %v8947
        %12254 = vmatpush1.bf16.msra.mxu0 %v8946
        %12255 = vmatprep.subr.bf16.mxu0 %v8942
        %12256 = vmatpush1.bf16.msra.mxu0 %v8941
        %12257 = vmatprep.subr.bf16.mxu0 %v9017
        %12258 = vmatpush2.bf16.msra.mxu0 %v9016
        %12259 = vmatprep.subr.bf16.mxu0 %v9012
        %12260 = vmatpush2.bf16.msra.mxu0 %v9011
        %12261 = vmatprep.subr.bf16.mxu0 %v9007
        %12262 = vmatpush2.bf16.msra.mxu0 %v9006
        %12263 = vmatprep.subr.bf16.mxu0 %v9002
        %12264 = vmatpush2.bf16.msra.mxu0 %v9001
        %12265 = vmatprep.subr.bf16.mxu0 %v8997
        %12266 = vmatpush2.bf16.msra.mxu0 %v8996
        %12267 = vmatprep.subr.bf16.mxu0 %v8992
        %12268 = vmatpush2.bf16.msra.mxu0 %v8991
        %12269 = vmatprep.subr.bf16.mxu0 %v8987
        %12270 = vmatpush2.bf16.msra.mxu0 %v8986
        %12271 = vmatprep.subr.bf16.mxu0 %v8982
        %12272 = vmatpush2.bf16.msra.mxu0 %v8981
        %12273 = vmatprep.mubr.bf16.mxu0 %v672
        %12274 = vmatmul.mubr.bf16.gmra.mxu0 %v671
        %v12275 = vpop.f32.mrf.mxu0
        %v12276 = vadd.f32 %v12235, %v12275
        %v12277 = vpop.f32.mrf.mxu0
        %v12278 = vadd.f32 %v12237, %v12277
        %v12279 = vpop.f32.mrf.mxu0
        %v12280 = vpop.f32.mrf.mxu0
        %12281 = vdwg.mxu0
        %12282 = vmatprep.subr.bf16.mxu0 %v9057
        %12283 = vmatpush1.bf16.msra.mxu0 %v9056
        %12284 = vmatprep.subr.bf16.mxu0 %v9052
        %12285 = vmatpush1.bf16.msra.mxu0 %v9051
        %12286 = vmatprep.subr.bf16.mxu0 %v9047
        %12287 = vmatpush1.bf16.msra.mxu0 %v9046
        %12288 = vmatprep.subr.bf16.mxu0 %v9042
        %12289 = vmatpush1.bf16.msra.mxu0 %v9041
        %12290 = vmatprep.subr.bf16.mxu0 %v9037
        %12291 = vmatpush1.bf16.msra.mxu0 %v9036
        %12292 = vmatprep.subr.bf16.mxu0 %v9032
        %12293 = vmatpush1.bf16.msra.mxu0 %v9031
        %12294 = vmatprep.subr.bf16.mxu0 %v9027
        %12295 = vmatpush1.bf16.msra.mxu0 %v9026
        %12296 = vmatprep.subr.bf16.mxu0 %v9022
        %12297 = vmatpush1.bf16.msra.mxu0 %v9021
        %12298 = vmatprep.subr.bf16.mxu0 %v9097
        %12299 = vmatpush2.bf16.msra.mxu0 %v9096
        %12300 = vmatprep.subr.bf16.mxu0 %v9092
        %12301 = vmatpush2.bf16.msra.mxu0 %v9091
        %12302 = vmatprep.subr.bf16.mxu0 %v9087
        %12303 = vmatpush2.bf16.msra.mxu0 %v9086
        %12304 = vmatprep.subr.bf16.mxu0 %v9082
        %12305 = vmatpush2.bf16.msra.mxu0 %v9081
        %12306 = vmatprep.subr.bf16.mxu0 %v9077
        %12307 = vmatpush2.bf16.msra.mxu0 %v9076
        %12308 = vmatprep.subr.bf16.mxu0 %v9072
        %12309 = vmatpush2.bf16.msra.mxu0 %v9071
        %12310 = vmatprep.subr.bf16.mxu0 %v9067
        %12311 = vmatpush2.bf16.msra.mxu0 %v9066
        %12312 = vmatprep.subr.bf16.mxu0 %v9062
        %12313 = vmatpush2.bf16.msra.mxu0 %v9061
        %12314 = vmatprep.mubr.bf16.mxu0 %v674
        %12315 = vmatmul.mubr.bf16.gmra.mxu0 %v673
        %v12316 = vpop.f32.mrf.mxu0
        %v12317 = vadd.f32 %v12276, %v12316
        %v12318 = vpop.f32.mrf.mxu0
        %v12319 = vadd.f32 %v12278, %v12318
        %v12320 = vpop.f32.mrf.mxu0
        %v12321 = vpop.f32.mrf.mxu0
        %12322 = vdwg.mxu0
        %12323 = vmatprep.subr.bf16.mxu0 %v9137
        %12324 = vmatpush1.bf16.msra.mxu0 %v9136
        %12325 = vmatprep.subr.bf16.mxu0 %v9132
        %12326 = vmatpush1.bf16.msra.mxu0 %v9131
        %12327 = vmatprep.subr.bf16.mxu0 %v9127
        %12328 = vmatpush1.bf16.msra.mxu0 %v9126
        %12329 = vmatprep.subr.bf16.mxu0 %v9122
        %12330 = vmatpush1.bf16.msra.mxu0 %v9121
        %12331 = vmatprep.subr.bf16.mxu0 %v9117
        %12332 = vmatpush1.bf16.msra.mxu0 %v9116
        %12333 = vmatprep.subr.bf16.mxu0 %v9112
        %12334 = vmatpush1.bf16.msra.mxu0 %v9111
        %12335 = vmatprep.subr.bf16.mxu0 %v9107
        %12336 = vmatpush1.bf16.msra.mxu0 %v9106
        %12337 = vmatprep.subr.bf16.mxu0 %v9102
        %12338 = vmatpush1.bf16.msra.mxu0 %v9101
        %12339 = vmatprep.subr.bf16.mxu0 0
        %12340 = vmatpush2.bf16.msra.mxu0 0
        %12341 = vmatprep.subr.bf16.mxu0 0
        %12342 = vmatpush2.bf16.msra.mxu0 0
        %12343 = vmatprep.subr.bf16.mxu0 0
        %12344 = vmatpush2.bf16.msra.mxu0 0
        %12345 = vmatprep.subr.bf16.mxu0 0
        %12346 = vmatpush2.bf16.msra.mxu0 0
        %12347 = vmatprep.subr.bf16.mxu0 0
        %12348 = vmatpush2.bf16.msra.mxu0 0
        %12349 = vmatprep.subr.bf16.mxu0 0
        %12350 = vmatpush2.bf16.msra.mxu0 0
        %12351 = vmatprep.subr.bf16.mxu0 0
        %12352 = vmatpush2.bf16.msra.mxu0 0
        %12353 = vmatprep.subr.bf16.mxu0 %v10719
        %12354 = vmatpush2.bf16.msra.mxu0 %v10716
        %12355 = vmatprep.mubr.bf16.mxu0 %v10706
        %12356 = vmatmul.mubr.bf16.gmra.mxu0 %v675
        %v12357 = vpop.f32.mrf.mxu0
        %v12358 = vadd.f32 %v12317, %v12357
        %v12359 = vpop.f32.mrf.mxu0
        %v12360 = vadd.f32 %v12319, %v12359
        %v12361 = vpop.f32.mrf.mxu0
        %v12362 = vpop.f32.mrf.mxu0
        %12363 = vdwg.mxu0
        %12364 = vmatprep.subr.bf16.mxu0 0
        %12365 = vmatpush1.bf16.msra.mxu0 %v7618
        %12366 = vmatprep.subr.bf16.mxu0 0
        %12367 = vmatpush1.bf16.msra.mxu0 %v7613
        %12368 = vmatprep.subr.bf16.mxu0 0
        %12369 = vmatpush1.bf16.msra.mxu0 %v7608
        %12370 = vmatprep.subr.bf16.mxu0 0
        %12371 = vmatpush1.bf16.msra.mxu0 %v7603
        %12372 = vmatprep.subr.bf16.mxu0 0
        %12373 = vmatpush1.bf16.msra.mxu0 %v7598
        %12374 = vmatprep.subr.bf16.mxu0 0
        %12375 = vmatpush1.bf16.msra.mxu0 %v7593
        %12376 = vmatprep.subr.bf16.mxu0 0
        %12377 = vmatpush1.bf16.msra.mxu0 %v7588
        %12378 = vmatprep.subr.bf16.mxu0 0
        %12379 = vmatpush1.bf16.msra.mxu0 %v7583
        %12380 = vmatprep.subr.bf16.mxu0 0
        %12381 = vmatpush2.bf16.msra.mxu0 %v7658
        %12382 = vmatprep.subr.bf16.mxu0 0
        %12383 = vmatpush2.bf16.msra.mxu0 %v7653
        %12384 = vmatprep.subr.bf16.mxu0 0
        %12385 = vmatpush2.bf16.msra.mxu0 %v7648
        %12386 = vmatprep.subr.bf16.mxu0 0
        %12387 = vmatpush2.bf16.msra.mxu0 %v7643
        %12388 = vmatprep.subr.bf16.mxu0 0
        %12389 = vmatpush2.bf16.msra.mxu0 %v7638
        %12390 = vmatprep.subr.bf16.mxu0 0
        %12391 = vmatpush2.bf16.msra.mxu0 %v7633
        %12392 = vmatprep.subr.bf16.mxu0 0
        %12393 = vmatpush2.bf16.msra.mxu0 %v7628
        %12394 = vmatprep.subr.bf16.mxu0 0
        %12395 = vmatpush2.bf16.msra.mxu0 %v7623
        %12396 = vmatprep.mubr.bf16.mxu0 %v638
        %12397 = vmatmul.mubr.bf16.gmra.mxu0 %v637
        %v12398 = vpop.f32.mrf.mxu0
        %v12399 = vadd.f32 %v2573, %v12398
        %v12400 = vpop.f32.mrf.mxu0
        %v12401 = vpop.f32.mrf.mxu0
        %v12402 = vpop.f32.mrf.mxu0
        %12403 = vdwg.mxu0
        %12404 = vmatprep.subr.bf16.mxu0 0
        %12405 = vmatpush1.bf16.msra.mxu0 %v7698
        %12406 = vmatprep.subr.bf16.mxu0 0
        %12407 = vmatpush1.bf16.msra.mxu0 %v7693
        %12408 = vmatprep.subr.bf16.mxu0 0
        %12409 = vmatpush1.bf16.msra.mxu0 %v7688
        %12410 = vmatprep.subr.bf16.mxu0 0
        %12411 = vmatpush1.bf16.msra.mxu0 %v7683
        %12412 = vmatprep.subr.bf16.mxu0 0
        %12413 = vmatpush1.bf16.msra.mxu0 %v7678
        %12414 = vmatprep.subr.bf16.mxu0 0
        %12415 = vmatpush1.bf16.msra.mxu0 %v7673
        %12416 = vmatprep.subr.bf16.mxu0 0
        %12417 = vmatpush1.bf16.msra.mxu0 %v7668
        %12418 = vmatprep.subr.bf16.mxu0 0
        %12419 = vmatpush1.bf16.msra.mxu0 %v7663
        %12420 = vmatprep.subr.bf16.mxu0 0
        %12421 = vmatpush2.bf16.msra.mxu0 %v7738
        %12422 = vmatprep.subr.bf16.mxu0 0
        %12423 = vmatpush2.bf16.msra.mxu0 %v7733
        %12424 = vmatprep.subr.bf16.mxu0 0
        %12425 = vmatpush2.bf16.msra.mxu0 %v7728
        %12426 = vmatprep.subr.bf16.mxu0 0
        %12427 = vmatpush2.bf16.msra.mxu0 %v7723
        %12428 = vmatprep.subr.bf16.mxu0 0
        %12429 = vmatpush2.bf16.msra.mxu0 %v7718
        %12430 = vmatprep.subr.bf16.mxu0 0
        %12431 = vmatpush2.bf16.msra.mxu0 %v7713
        %12432 = vmatprep.subr.bf16.mxu0 0
        %12433 = vmatpush2.bf16.msra.mxu0 %v7708
        %12434 = vmatprep.subr.bf16.mxu0 0
        %12435 = vmatpush2.bf16.msra.mxu0 %v7703
        %12436 = vmatprep.mubr.bf16.mxu0 %v640
        %12437 = vmatmul.mubr.bf16.gmra.mxu0 %v639
        %v12438 = vpop.f32.mrf.mxu0
        %v12439 = vadd.f32 %v12399, %v12438
        %v12440 = vpop.f32.mrf.mxu0
        %v12441 = vpop.f32.mrf.mxu0
        %v12442 = vpop.f32.mrf.mxu0
        %12443 = vdwg.mxu0
        %12444 = vmatprep.subr.bf16.mxu0 0
        %12445 = vmatpush1.bf16.msra.mxu0 %v7778
        %12446 = vmatprep.subr.bf16.mxu0 0
        %12447 = vmatpush1.bf16.msra.mxu0 %v7773
        %12448 = vmatprep.subr.bf16.mxu0 0
        %12449 = vmatpush1.bf16.msra.mxu0 %v7768
        %12450 = vmatprep.subr.bf16.mxu0 0
        %12451 = vmatpush1.bf16.msra.mxu0 %v7763
        %12452 = vmatprep.subr.bf16.mxu0 0
        %12453 = vmatpush1.bf16.msra.mxu0 %v7758
        %12454 = vmatprep.subr.bf16.mxu0 0
        %12455 = vmatpush1.bf16.msra.mxu0 %v7753
        %12456 = vmatprep.subr.bf16.mxu0 0
        %12457 = vmatpush1.bf16.msra.mxu0 %v7748
        %12458 = vmatprep.subr.bf16.mxu0 0
        %12459 = vmatpush1.bf16.msra.mxu0 %v7743
        %12460 = vmatprep.subr.bf16.mxu0 0
        %12461 = vmatpush2.bf16.msra.mxu0 %v7818
        %12462 = vmatprep.subr.bf16.mxu0 0
        %12463 = vmatpush2.bf16.msra.mxu0 %v7813
        %12464 = vmatprep.subr.bf16.mxu0 0
        %12465 = vmatpush2.bf16.msra.mxu0 %v7808
        %12466 = vmatprep.subr.bf16.mxu0 0
        %12467 = vmatpush2.bf16.msra.mxu0 %v7803
        %12468 = vmatprep.subr.bf16.mxu0 0
        %12469 = vmatpush2.bf16.msra.mxu0 %v7798
        %12470 = vmatprep.subr.bf16.mxu0 0
        %12471 = vmatpush2.bf16.msra.mxu0 %v7793
        %12472 = vmatprep.subr.bf16.mxu0 0
        %12473 = vmatpush2.bf16.msra.mxu0 %v7788
        %12474 = vmatprep.subr.bf16.mxu0 0
        %12475 = vmatpush2.bf16.msra.mxu0 %v7783
        %12476 = vmatprep.mubr.bf16.mxu0 %v642
        %12477 = vmatmul.mubr.bf16.gmra.mxu0 %v641
        %v12478 = vpop.f32.mrf.mxu0
        %v12479 = vadd.f32 %v12439, %v12478
        %v12480 = vpop.f32.mrf.mxu0
        %v12481 = vpop.f32.mrf.mxu0
        %v12482 = vpop.f32.mrf.mxu0
        %12483 = vdwg.mxu0
        %12484 = vmatprep.subr.bf16.mxu0 0
        %12485 = vmatpush1.bf16.msra.mxu0 %v7858
        %12486 = vmatprep.subr.bf16.mxu0 0
        %12487 = vmatpush1.bf16.msra.mxu0 %v7853
        %12488 = vmatprep.subr.bf16.mxu0 0
        %12489 = vmatpush1.bf16.msra.mxu0 %v7848
        %12490 = vmatprep.subr.bf16.mxu0 0
        %12491 = vmatpush1.bf16.msra.mxu0 %v7843
        %12492 = vmatprep.subr.bf16.mxu0 0
        %12493 = vmatpush1.bf16.msra.mxu0 %v7838
        %12494 = vmatprep.subr.bf16.mxu0 0
        %12495 = vmatpush1.bf16.msra.mxu0 %v7833
        %12496 = vmatprep.subr.bf16.mxu0 0
        %12497 = vmatpush1.bf16.msra.mxu0 %v7828
        %12498 = vmatprep.subr.bf16.mxu0 0
        %12499 = vmatpush1.bf16.msra.mxu0 %v7823
        %12500 = vmatprep.subr.bf16.mxu0 0
        %12501 = vmatpush2.bf16.msra.mxu0 %v7898
        %12502 = vmatprep.subr.bf16.mxu0 0
        %12503 = vmatpush2.bf16.msra.mxu0 %v7893
        %12504 = vmatprep.subr.bf16.mxu0 0
        %12505 = vmatpush2.bf16.msra.mxu0 %v7888
        %12506 = vmatprep.subr.bf16.mxu0 0
        %12507 = vmatpush2.bf16.msra.mxu0 %v7883
        %12508 = vmatprep.subr.bf16.mxu0 0
        %12509 = vmatpush2.bf16.msra.mxu0 %v7878
        %12510 = vmatprep.subr.bf16.mxu0 0
        %12511 = vmatpush2.bf16.msra.mxu0 %v7873
        %12512 = vmatprep.subr.bf16.mxu0 0
        %12513 = vmatpush2.bf16.msra.mxu0 %v7868
        %12514 = vmatprep.subr.bf16.mxu0 0
        %12515 = vmatpush2.bf16.msra.mxu0 %v7863
        %12516 = vmatprep.mubr.bf16.mxu0 %v644
        %12517 = vmatmul.mubr.bf16.gmra.mxu0 %v643
        %v12518 = vpop.f32.mrf.mxu0
        %v12519 = vadd.f32 %v12479, %v12518
        %v12520 = vpop.f32.mrf.mxu0
        %v12521 = vpop.f32.mrf.mxu0
        %v12522 = vpop.f32.mrf.mxu0
        %12523 = vdwg.mxu0
        %12524 = vmatprep.subr.bf16.mxu0 0
        %12525 = vmatpush1.bf16.msra.mxu0 %v7938
        %12526 = vmatprep.subr.bf16.mxu0 0
        %12527 = vmatpush1.bf16.msra.mxu0 %v7933
        %12528 = vmatprep.subr.bf16.mxu0 0
        %12529 = vmatpush1.bf16.msra.mxu0 %v7928
        %12530 = vmatprep.subr.bf16.mxu0 0
        %12531 = vmatpush1.bf16.msra.mxu0 %v7923
        %12532 = vmatprep.subr.bf16.mxu0 0
        %12533 = vmatpush1.bf16.msra.mxu0 %v7918
        %12534 = vmatprep.subr.bf16.mxu0 0
        %12535 = vmatpush1.bf16.msra.mxu0 %v7913
        %12536 = vmatprep.subr.bf16.mxu0 0
        %12537 = vmatpush1.bf16.msra.mxu0 %v7908
        %12538 = vmatprep.subr.bf16.mxu0 0
        %12539 = vmatpush1.bf16.msra.mxu0 %v7903
        %12540 = vmatprep.subr.bf16.mxu0 0
        %12541 = vmatpush2.bf16.msra.mxu0 %v7978
        %12542 = vmatprep.subr.bf16.mxu0 0
        %12543 = vmatpush2.bf16.msra.mxu0 %v7973
        %12544 = vmatprep.subr.bf16.mxu0 0
        %12545 = vmatpush2.bf16.msra.mxu0 %v7968
        %12546 = vmatprep.subr.bf16.mxu0 0
        %12547 = vmatpush2.bf16.msra.mxu0 %v7963
        %12548 = vmatprep.subr.bf16.mxu0 0
        %12549 = vmatpush2.bf16.msra.mxu0 %v7958
        %12550 = vmatprep.subr.bf16.mxu0 0
        %12551 = vmatpush2.bf16.msra.mxu0 %v7953
        %12552 = vmatprep.subr.bf16.mxu0 0
        %12553 = vmatpush2.bf16.msra.mxu0 %v7948
        %12554 = vmatprep.subr.bf16.mxu0 0
        %12555 = vmatpush2.bf16.msra.mxu0 %v7943
        %12556 = vmatprep.mubr.bf16.mxu0 %v646
        %12557 = vmatmul.mubr.bf16.gmra.mxu0 %v645
        %v12558 = vpop.f32.mrf.mxu0
        %v12559 = vadd.f32 %v12519, %v12558
        %v12560 = vpop.f32.mrf.mxu0
        %v12561 = vpop.f32.mrf.mxu0
        %v12562 = vpop.f32.mrf.mxu0
        %12563 = vdwg.mxu0
        %12564 = vmatprep.subr.bf16.mxu0 0
        %12565 = vmatpush1.bf16.msra.mxu0 %v8018
        %12566 = vmatprep.subr.bf16.mxu0 0
        %12567 = vmatpush1.bf16.msra.mxu0 %v8013
        %12568 = vmatprep.subr.bf16.mxu0 0
        %12569 = vmatpush1.bf16.msra.mxu0 %v8008
        %12570 = vmatprep.subr.bf16.mxu0 0
        %12571 = vmatpush1.bf16.msra.mxu0 %v8003
        %12572 = vmatprep.subr.bf16.mxu0 0
        %12573 = vmatpush1.bf16.msra.mxu0 %v7998
        %12574 = vmatprep.subr.bf16.mxu0 0
        %12575 = vmatpush1.bf16.msra.mxu0 %v7993
        %12576 = vmatprep.subr.bf16.mxu0 0
        %12577 = vmatpush1.bf16.msra.mxu0 %v7988
        %12578 = vmatprep.subr.bf16.mxu0 0
        %12579 = vmatpush1.bf16.msra.mxu0 %v7983
        %12580 = vmatprep.subr.bf16.mxu0 0
        %12581 = vmatpush2.bf16.msra.mxu0 %v8058
        %12582 = vmatprep.subr.bf16.mxu0 0
        %12583 = vmatpush2.bf16.msra.mxu0 %v8053
        %12584 = vmatprep.subr.bf16.mxu0 0
        %12585 = vmatpush2.bf16.msra.mxu0 %v8048
        %12586 = vmatprep.subr.bf16.mxu0 0
        %12587 = vmatpush2.bf16.msra.mxu0 %v8043
        %12588 = vmatprep.subr.bf16.mxu0 0
        %12589 = vmatpush2.bf16.msra.mxu0 %v8038
        %12590 = vmatprep.subr.bf16.mxu0 0
        %12591 = vmatpush2.bf16.msra.mxu0 %v8033
        %12592 = vmatprep.subr.bf16.mxu0 0
        %12593 = vmatpush2.bf16.msra.mxu0 %v8028
        %12594 = vmatprep.subr.bf16.mxu0 0
        %12595 = vmatpush2.bf16.msra.mxu0 %v8023
        %12596 = vmatprep.mubr.bf16.mxu0 %v648
        %12597 = vmatmul.mubr.bf16.gmra.mxu0 %v647
        %v12598 = vpop.f32.mrf.mxu0
        %v12599 = vadd.f32 %v12559, %v12598
        %v12600 = vpop.f32.mrf.mxu0
        %v12601 = vpop.f32.mrf.mxu0
        %v12602 = vpop.f32.mrf.mxu0
        %12603 = vdwg.mxu0
        %12604 = vmatprep.subr.bf16.mxu0 0
        %12605 = vmatpush1.bf16.msra.mxu0 %v8098
        %12606 = vmatprep.subr.bf16.mxu0 0
        %12607 = vmatpush1.bf16.msra.mxu0 %v8093
        %12608 = vmatprep.subr.bf16.mxu0 0
        %12609 = vmatpush1.bf16.msra.mxu0 %v8088
        %12610 = vmatprep.subr.bf16.mxu0 0
        %12611 = vmatpush1.bf16.msra.mxu0 %v8083
        %12612 = vmatprep.subr.bf16.mxu0 0
        %12613 = vmatpush1.bf16.msra.mxu0 %v8078
        %12614 = vmatprep.subr.bf16.mxu0 0
        %12615 = vmatpush1.bf16.msra.mxu0 %v8073
        %12616 = vmatprep.subr.bf16.mxu0 0
        %12617 = vmatpush1.bf16.msra.mxu0 %v8068
        %12618 = vmatprep.subr.bf16.mxu0 0
        %12619 = vmatpush1.bf16.msra.mxu0 %v8063
        %12620 = vmatprep.subr.bf16.mxu0 0
        %12621 = vmatpush2.bf16.msra.mxu0 %v8138
        %12622 = vmatprep.subr.bf16.mxu0 0
        %12623 = vmatpush2.bf16.msra.mxu0 %v8133
        %12624 = vmatprep.subr.bf16.mxu0 0
        %12625 = vmatpush2.bf16.msra.mxu0 %v8128
        %12626 = vmatprep.subr.bf16.mxu0 0
        %12627 = vmatpush2.bf16.msra.mxu0 %v8123
        %12628 = vmatprep.subr.bf16.mxu0 0
        %12629 = vmatpush2.bf16.msra.mxu0 %v8118
        %12630 = vmatprep.subr.bf16.mxu0 0
        %12631 = vmatpush2.bf16.msra.mxu0 %v8113
        %12632 = vmatprep.subr.bf16.mxu0 0
        %12633 = vmatpush2.bf16.msra.mxu0 %v8108
        %12634 = vmatprep.subr.bf16.mxu0 0
        %12635 = vmatpush2.bf16.msra.mxu0 %v8103
        %12636 = vmatprep.mubr.bf16.mxu0 %v650
        %12637 = vmatmul.mubr.bf16.gmra.mxu0 %v649
        %v12638 = vpop.f32.mrf.mxu0
        %v12639 = vadd.f32 %v12599, %v12638
        %v12640 = vpop.f32.mrf.mxu0
        %v12641 = vpop.f32.mrf.mxu0
        %v12642 = vpop.f32.mrf.mxu0
        %12643 = vdwg.mxu0
        %12644 = vmatprep.subr.bf16.mxu0 0
        %12645 = vmatpush1.bf16.msra.mxu0 %v8178
        %12646 = vmatprep.subr.bf16.mxu0 0
        %12647 = vmatpush1.bf16.msra.mxu0 %v8173
        %12648 = vmatprep.subr.bf16.mxu0 0
        %12649 = vmatpush1.bf16.msra.mxu0 %v8168
        %12650 = vmatprep.subr.bf16.mxu0 0
        %12651 = vmatpush1.bf16.msra.mxu0 %v8163
        %12652 = vmatprep.subr.bf16.mxu0 0
        %12653 = vmatpush1.bf16.msra.mxu0 %v8158
        %12654 = vmatprep.subr.bf16.mxu0 0
        %12655 = vmatpush1.bf16.msra.mxu0 %v8153
        %12656 = vmatprep.subr.bf16.mxu0 0
        %12657 = vmatpush1.bf16.msra.mxu0 %v8148
        %12658 = vmatprep.subr.bf16.mxu0 0
        %12659 = vmatpush1.bf16.msra.mxu0 %v8143
        %12660 = vmatprep.subr.bf16.mxu0 0
        %12661 = vmatpush2.bf16.msra.mxu0 %v8218
        %12662 = vmatprep.subr.bf16.mxu0 0
        %12663 = vmatpush2.bf16.msra.mxu0 %v8213
        %12664 = vmatprep.subr.bf16.mxu0 0
        %12665 = vmatpush2.bf16.msra.mxu0 %v8208
        %12666 = vmatprep.subr.bf16.mxu0 0
        %12667 = vmatpush2.bf16.msra.mxu0 %v8203
        %12668 = vmatprep.subr.bf16.mxu0 0
        %12669 = vmatpush2.bf16.msra.mxu0 %v8198
        %12670 = vmatprep.subr.bf16.mxu0 0
        %12671 = vmatpush2.bf16.msra.mxu0 %v8193
        %12672 = vmatprep.subr.bf16.mxu0 0
        %12673 = vmatpush2.bf16.msra.mxu0 %v8188
        %12674 = vmatprep.subr.bf16.mxu0 0
        %12675 = vmatpush2.bf16.msra.mxu0 %v8183
        %12676 = vmatprep.mubr.bf16.mxu0 %v652
        %12677 = vmatmul.mubr.bf16.gmra.mxu0 %v651
        %v12678 = vpop.f32.mrf.mxu0
        %v12679 = vadd.f32 %v12639, %v12678
        %v12680 = vpop.f32.mrf.mxu0
        %v12681 = vpop.f32.mrf.mxu0
        %v12682 = vpop.f32.mrf.mxu0
        %12683 = vdwg.mxu0
        %12684 = vmatprep.subr.bf16.mxu0 0
        %12685 = vmatpush1.bf16.msra.mxu0 %v8258
        %12686 = vmatprep.subr.bf16.mxu0 0
        %12687 = vmatpush1.bf16.msra.mxu0 %v8253
        %12688 = vmatprep.subr.bf16.mxu0 0
        %12689 = vmatpush1.bf16.msra.mxu0 %v8248
        %12690 = vmatprep.subr.bf16.mxu0 0
        %12691 = vmatpush1.bf16.msra.mxu0 %v8243
        %12692 = vmatprep.subr.bf16.mxu0 0
        %12693 = vmatpush1.bf16.msra.mxu0 %v8238
        %12694 = vmatprep.subr.bf16.mxu0 0
        %12695 = vmatpush1.bf16.msra.mxu0 %v8233
        %12696 = vmatprep.subr.bf16.mxu0 0
        %12697 = vmatpush1.bf16.msra.mxu0 %v8228
        %12698 = vmatprep.subr.bf16.mxu0 0
        %12699 = vmatpush1.bf16.msra.mxu0 %v8223
        %12700 = vmatprep.subr.bf16.mxu0 0
        %12701 = vmatpush2.bf16.msra.mxu0 %v8298
        %12702 = vmatprep.subr.bf16.mxu0 0
        %12703 = vmatpush2.bf16.msra.mxu0 %v8293
        %12704 = vmatprep.subr.bf16.mxu0 0
        %12705 = vmatpush2.bf16.msra.mxu0 %v8288
        %12706 = vmatprep.subr.bf16.mxu0 0
        %12707 = vmatpush2.bf16.msra.mxu0 %v8283
        %12708 = vmatprep.subr.bf16.mxu0 0
        %12709 = vmatpush2.bf16.msra.mxu0 %v8278
        %12710 = vmatprep.subr.bf16.mxu0 0
        %12711 = vmatpush2.bf16.msra.mxu0 %v8273
        %12712 = vmatprep.subr.bf16.mxu0 0
        %12713 = vmatpush2.bf16.msra.mxu0 %v8268
        %12714 = vmatprep.subr.bf16.mxu0 0
        %12715 = vmatpush2.bf16.msra.mxu0 %v8263
        %12716 = vmatprep.mubr.bf16.mxu0 %v654
        %12717 = vmatmul.mubr.bf16.gmra.mxu0 %v653
        %v12718 = vpop.f32.mrf.mxu0
        %v12719 = vadd.f32 %v12679, %v12718
        %v12720 = vpop.f32.mrf.mxu0
        %v12721 = vpop.f32.mrf.mxu0
        %v12722 = vpop.f32.mrf.mxu0
        %12723 = vdwg.mxu0
        %12724 = vmatprep.subr.bf16.mxu0 0
        %12725 = vmatpush1.bf16.msra.mxu0 %v8338
        %12726 = vmatprep.subr.bf16.mxu0 0
        %12727 = vmatpush1.bf16.msra.mxu0 %v8333
        %12728 = vmatprep.subr.bf16.mxu0 0
        %12729 = vmatpush1.bf16.msra.mxu0 %v8328
        %12730 = vmatprep.subr.bf16.mxu0 0
        %12731 = vmatpush1.bf16.msra.mxu0 %v8323
        %12732 = vmatprep.subr.bf16.mxu0 0
        %12733 = vmatpush1.bf16.msra.mxu0 %v8318
        %12734 = vmatprep.subr.bf16.mxu0 0
        %12735 = vmatpush1.bf16.msra.mxu0 %v8313
        %12736 = vmatprep.subr.bf16.mxu0 0
        %12737 = vmatpush1.bf16.msra.mxu0 %v8308
        %12738 = vmatprep.subr.bf16.mxu0 0
        %12739 = vmatpush1.bf16.msra.mxu0 %v8303
        %12740 = vmatprep.subr.bf16.mxu0 0
        %12741 = vmatpush2.bf16.msra.mxu0 %v8378
        %12742 = vmatprep.subr.bf16.mxu0 0
        %12743 = vmatpush2.bf16.msra.mxu0 %v8373
        %12744 = vmatprep.subr.bf16.mxu0 0
        %12745 = vmatpush2.bf16.msra.mxu0 %v8368
        %12746 = vmatprep.subr.bf16.mxu0 0
        %12747 = vmatpush2.bf16.msra.mxu0 %v8363
        %12748 = vmatprep.subr.bf16.mxu0 0
        %12749 = vmatpush2.bf16.msra.mxu0 %v8358
        %12750 = vmatprep.subr.bf16.mxu0 0
        %12751 = vmatpush2.bf16.msra.mxu0 %v8353
        %12752 = vmatprep.subr.bf16.mxu0 0
        %12753 = vmatpush2.bf16.msra.mxu0 %v8348
        %12754 = vmatprep.subr.bf16.mxu0 0
        %12755 = vmatpush2.bf16.msra.mxu0 %v8343
        %12756 = vmatprep.mubr.bf16.mxu0 %v656
        %12757 = vmatmul.mubr.bf16.gmra.mxu0 %v655
        %v12758 = vpop.f32.mrf.mxu0
        %v12759 = vadd.f32 %v12719, %v12758
        %v12760 = vpop.f32.mrf.mxu0
        %v12761 = vpop.f32.mrf.mxu0
        %v12762 = vpop.f32.mrf.mxu0
        %12763 = vdwg.mxu0
        %12764 = vmatprep.subr.bf16.mxu0 0
        %12765 = vmatpush1.bf16.msra.mxu0 %v8418
        %12766 = vmatprep.subr.bf16.mxu0 0
        %12767 = vmatpush1.bf16.msra.mxu0 %v8413
        %12768 = vmatprep.subr.bf16.mxu0 0
        %12769 = vmatpush1.bf16.msra.mxu0 %v8408
        %12770 = vmatprep.subr.bf16.mxu0 0
        %12771 = vmatpush1.bf16.msra.mxu0 %v8403
        %12772 = vmatprep.subr.bf16.mxu0 0
        %12773 = vmatpush1.bf16.msra.mxu0 %v8398
        %12774 = vmatprep.subr.bf16.mxu0 0
        %12775 = vmatpush1.bf16.msra.mxu0 %v8393
        %12776 = vmatprep.subr.bf16.mxu0 0
        %12777 = vmatpush1.bf16.msra.mxu0 %v8388
        %12778 = vmatprep.subr.bf16.mxu0 0
        %12779 = vmatpush1.bf16.msra.mxu0 %v8383
        %12780 = vmatprep.subr.bf16.mxu0 0
        %12781 = vmatpush2.bf16.msra.mxu0 %v8458
        %12782 = vmatprep.subr.bf16.mxu0 0
        %12783 = vmatpush2.bf16.msra.mxu0 %v8453
        %12784 = vmatprep.subr.bf16.mxu0 0
        %12785 = vmatpush2.bf16.msra.mxu0 %v8448
        %12786 = vmatprep.subr.bf16.mxu0 0
        %12787 = vmatpush2.bf16.msra.mxu0 %v8443
        %12788 = vmatprep.subr.bf16.mxu0 0
        %12789 = vmatpush2.bf16.msra.mxu0 %v8438
        %12790 = vmatprep.subr.bf16.mxu0 0
        %12791 = vmatpush2.bf16.msra.mxu0 %v8433
        %12792 = vmatprep.subr.bf16.mxu0 0
        %12793 = vmatpush2.bf16.msra.mxu0 %v8428
        %12794 = vmatprep.subr.bf16.mxu0 0
        %12795 = vmatpush2.bf16.msra.mxu0 %v8423
        %12796 = vmatprep.mubr.bf16.mxu0 %v658
        %12797 = vmatmul.mubr.bf16.gmra.mxu0 %v657
        %v12798 = vpop.f32.mrf.mxu0
        %v12799 = vadd.f32 %v12759, %v12798
        %v12800 = vpop.f32.mrf.mxu0
        %v12801 = vpop.f32.mrf.mxu0
        %v12802 = vpop.f32.mrf.mxu0
        %12803 = vdwg.mxu0
        %12804 = vmatprep.subr.bf16.mxu0 0
        %12805 = vmatpush1.bf16.msra.mxu0 %v8498
        %12806 = vmatprep.subr.bf16.mxu0 0
        %12807 = vmatpush1.bf16.msra.mxu0 %v8493
        %12808 = vmatprep.subr.bf16.mxu0 0
        %12809 = vmatpush1.bf16.msra.mxu0 %v8488
        %12810 = vmatprep.subr.bf16.mxu0 0
        %12811 = vmatpush1.bf16.msra.mxu0 %v8483
        %12812 = vmatprep.subr.bf16.mxu0 0
        %12813 = vmatpush1.bf16.msra.mxu0 %v8478
        %12814 = vmatprep.subr.bf16.mxu0 0
        %12815 = vmatpush1.bf16.msra.mxu0 %v8473
        %12816 = vmatprep.subr.bf16.mxu0 0
        %12817 = vmatpush1.bf16.msra.mxu0 %v8468
        %12818 = vmatprep.subr.bf16.mxu0 0
        %12819 = vmatpush1.bf16.msra.mxu0 %v8463
        %12820 = vmatprep.subr.bf16.mxu0 0
        %12821 = vmatpush2.bf16.msra.mxu0 %v8538
        %12822 = vmatprep.subr.bf16.mxu0 0
        %12823 = vmatpush2.bf16.msra.mxu0 %v8533
        %12824 = vmatprep.subr.bf16.mxu0 0
        %12825 = vmatpush2.bf16.msra.mxu0 %v8528
        %12826 = vmatprep.subr.bf16.mxu0 0
        %12827 = vmatpush2.bf16.msra.mxu0 %v8523
        %12828 = vmatprep.subr.bf16.mxu0 0
        %12829 = vmatpush2.bf16.msra.mxu0 %v8518
        %12830 = vmatprep.subr.bf16.mxu0 0
        %12831 = vmatpush2.bf16.msra.mxu0 %v8513
        %12832 = vmatprep.subr.bf16.mxu0 0
        %12833 = vmatpush2.bf16.msra.mxu0 %v8508
        %12834 = vmatprep.subr.bf16.mxu0 0
        %12835 = vmatpush2.bf16.msra.mxu0 %v8503
        %12836 = vmatprep.mubr.bf16.mxu0 %v660
        %12837 = vmatmul.mubr.bf16.gmra.mxu0 %v659
        %v12838 = vpop.f32.mrf.mxu0
        %v12839 = vadd.f32 %v12799, %v12838
        %v12840 = vpop.f32.mrf.mxu0
        %v12841 = vpop.f32.mrf.mxu0
        %v12842 = vpop.f32.mrf.mxu0
        %12843 = vdwg.mxu0
        %12844 = vmatprep.subr.bf16.mxu0 0
        %12845 = vmatpush1.bf16.msra.mxu0 %v8578
        %12846 = vmatprep.subr.bf16.mxu0 0
        %12847 = vmatpush1.bf16.msra.mxu0 %v8573
        %12848 = vmatprep.subr.bf16.mxu0 0
        %12849 = vmatpush1.bf16.msra.mxu0 %v8568
        %12850 = vmatprep.subr.bf16.mxu0 0
        %12851 = vmatpush1.bf16.msra.mxu0 %v8563
        %12852 = vmatprep.subr.bf16.mxu0 0
        %12853 = vmatpush1.bf16.msra.mxu0 %v8558
        %12854 = vmatprep.subr.bf16.mxu0 0
        %12855 = vmatpush1.bf16.msra.mxu0 %v8553
        %12856 = vmatprep.subr.bf16.mxu0 0
        %12857 = vmatpush1.bf16.msra.mxu0 %v8548
        %12858 = vmatprep.subr.bf16.mxu0 0
        %12859 = vmatpush1.bf16.msra.mxu0 %v8543
        %12860 = vmatprep.subr.bf16.mxu0 0
        %12861 = vmatpush2.bf16.msra.mxu0 %v8618
        %12862 = vmatprep.subr.bf16.mxu0 0
        %12863 = vmatpush2.bf16.msra.mxu0 %v8613
        %12864 = vmatprep.subr.bf16.mxu0 0
        %12865 = vmatpush2.bf16.msra.mxu0 %v8608
        %12866 = vmatprep.subr.bf16.mxu0 0
        %12867 = vmatpush2.bf16.msra.mxu0 %v8603
        %12868 = vmatprep.subr.bf16.mxu0 0
        %12869 = vmatpush2.bf16.msra.mxu0 %v8598
        %12870 = vmatprep.subr.bf16.mxu0 0
        %12871 = vmatpush2.bf16.msra.mxu0 %v8593
        %12872 = vmatprep.subr.bf16.mxu0 0
        %12873 = vmatpush2.bf16.msra.mxu0 %v8588
        %12874 = vmatprep.subr.bf16.mxu0 0
        %12875 = vmatpush2.bf16.msra.mxu0 %v8583
        %12876 = vmatprep.mubr.bf16.mxu0 %v662
        %12877 = vmatmul.mubr.bf16.gmra.mxu0 %v661
        %v12878 = vpop.f32.mrf.mxu0
        %v12879 = vadd.f32 %v12839, %v12878
        %v12880 = vpop.f32.mrf.mxu0
        %v12881 = vpop.f32.mrf.mxu0
        %v12882 = vpop.f32.mrf.mxu0
        %12883 = vdwg.mxu0
        %12884 = vmatprep.subr.bf16.mxu0 0
        %12885 = vmatpush1.bf16.msra.mxu0 %v8658
        %12886 = vmatprep.subr.bf16.mxu0 0
        %12887 = vmatpush1.bf16.msra.mxu0 %v8653
        %12888 = vmatprep.subr.bf16.mxu0 0
        %12889 = vmatpush1.bf16.msra.mxu0 %v8648
        %12890 = vmatprep.subr.bf16.mxu0 0
        %12891 = vmatpush1.bf16.msra.mxu0 %v8643
        %12892 = vmatprep.subr.bf16.mxu0 0
        %12893 = vmatpush1.bf16.msra.mxu0 %v8638
        %12894 = vmatprep.subr.bf16.mxu0 0
        %12895 = vmatpush1.bf16.msra.mxu0 %v8633
        %12896 = vmatprep.subr.bf16.mxu0 0
        %12897 = vmatpush1.bf16.msra.mxu0 %v8628
        %12898 = vmatprep.subr.bf16.mxu0 0
        %12899 = vmatpush1.bf16.msra.mxu0 %v8623
        %12900 = vmatprep.subr.bf16.mxu0 0
        %12901 = vmatpush2.bf16.msra.mxu0 %v8698
        %12902 = vmatprep.subr.bf16.mxu0 0
        %12903 = vmatpush2.bf16.msra.mxu0 %v8693
        %12904 = vmatprep.subr.bf16.mxu0 0
        %12905 = vmatpush2.bf16.msra.mxu0 %v8688
        %12906 = vmatprep.subr.bf16.mxu0 0
        %12907 = vmatpush2.bf16.msra.mxu0 %v8683
        %12908 = vmatprep.subr.bf16.mxu0 0
        %12909 = vmatpush2.bf16.msra.mxu0 %v8678
        %12910 = vmatprep.subr.bf16.mxu0 0
        %12911 = vmatpush2.bf16.msra.mxu0 %v8673
        %12912 = vmatprep.subr.bf16.mxu0 0
        %12913 = vmatpush2.bf16.msra.mxu0 %v8668
        %12914 = vmatprep.subr.bf16.mxu0 0
        %12915 = vmatpush2.bf16.msra.mxu0 %v8663
        %12916 = vmatprep.mubr.bf16.mxu0 %v664
        %12917 = vmatmul.mubr.bf16.gmra.mxu0 %v663
        %v12918 = vpop.f32.mrf.mxu0
        %v12919 = vadd.f32 %v12879, %v12918
        %v12920 = vpop.f32.mrf.mxu0
        %v12921 = vpop.f32.mrf.mxu0
        %v12922 = vpop.f32.mrf.mxu0
        %12923 = vdwg.mxu0
        %12924 = vmatprep.subr.bf16.mxu0 0
        %12925 = vmatpush1.bf16.msra.mxu0 %v8738
        %12926 = vmatprep.subr.bf16.mxu0 0
        %12927 = vmatpush1.bf16.msra.mxu0 %v8733
        %12928 = vmatprep.subr.bf16.mxu0 0
        %12929 = vmatpush1.bf16.msra.mxu0 %v8728
        %12930 = vmatprep.subr.bf16.mxu0 0
        %12931 = vmatpush1.bf16.msra.mxu0 %v8723
        %12932 = vmatprep.subr.bf16.mxu0 0
        %12933 = vmatpush1.bf16.msra.mxu0 %v8718
        %12934 = vmatprep.subr.bf16.mxu0 0
        %12935 = vmatpush1.bf16.msra.mxu0 %v8713
        %12936 = vmatprep.subr.bf16.mxu0 0
        %12937 = vmatpush1.bf16.msra.mxu0 %v8708
        %12938 = vmatprep.subr.bf16.mxu0 0
        %12939 = vmatpush1.bf16.msra.mxu0 %v8703
        %12940 = vmatprep.subr.bf16.mxu0 0
        %12941 = vmatpush2.bf16.msra.mxu0 %v8778
        %12942 = vmatprep.subr.bf16.mxu0 0
        %12943 = vmatpush2.bf16.msra.mxu0 %v8773
        %12944 = vmatprep.subr.bf16.mxu0 0
        %12945 = vmatpush2.bf16.msra.mxu0 %v8768
        %12946 = vmatprep.subr.bf16.mxu0 0
        %12947 = vmatpush2.bf16.msra.mxu0 %v8763
        %12948 = vmatprep.subr.bf16.mxu0 0
        %12949 = vmatpush2.bf16.msra.mxu0 %v8758
        %12950 = vmatprep.subr.bf16.mxu0 0
        %12951 = vmatpush2.bf16.msra.mxu0 %v8753
        %12952 = vmatprep.subr.bf16.mxu0 0
        %12953 = vmatpush2.bf16.msra.mxu0 %v8748
        %12954 = vmatprep.subr.bf16.mxu0 0
        %12955 = vmatpush2.bf16.msra.mxu0 %v8743
        %12956 = vmatprep.mubr.bf16.mxu0 %v666
        %12957 = vmatmul.mubr.bf16.gmra.mxu0 %v665
        %v12958 = vpop.f32.mrf.mxu0
        %v12959 = vadd.f32 %v12919, %v12958
        %v12960 = vpop.f32.mrf.mxu0
        %v12961 = vpop.f32.mrf.mxu0
        %v12962 = vpop.f32.mrf.mxu0
        %12963 = vdwg.mxu0
        %12964 = vmatprep.subr.bf16.mxu0 0
        %12965 = vmatpush1.bf16.msra.mxu0 %v8818
        %12966 = vmatprep.subr.bf16.mxu0 0
        %12967 = vmatpush1.bf16.msra.mxu0 %v8813
        %12968 = vmatprep.subr.bf16.mxu0 0
        %12969 = vmatpush1.bf16.msra.mxu0 %v8808
        %12970 = vmatprep.subr.bf16.mxu0 0
        %12971 = vmatpush1.bf16.msra.mxu0 %v8803
        %12972 = vmatprep.subr.bf16.mxu0 0
        %12973 = vmatpush1.bf16.msra.mxu0 %v8798
        %12974 = vmatprep.subr.bf16.mxu0 0
        %12975 = vmatpush1.bf16.msra.mxu0 %v8793
        %12976 = vmatprep.subr.bf16.mxu0 0
        %12977 = vmatpush1.bf16.msra.mxu0 %v8788
        %12978 = vmatprep.subr.bf16.mxu0 0
        %12979 = vmatpush1.bf16.msra.mxu0 %v8783
        %12980 = vmatprep.subr.bf16.mxu0 0
        %12981 = vmatpush2.bf16.msra.mxu0 %v8858
        %12982 = vmatprep.subr.bf16.mxu0 0
        %12983 = vmatpush2.bf16.msra.mxu0 %v8853
        %12984 = vmatprep.subr.bf16.mxu0 0
        %12985 = vmatpush2.bf16.msra.mxu0 %v8848
        %12986 = vmatprep.subr.bf16.mxu0 0
        %12987 = vmatpush2.bf16.msra.mxu0 %v8843
        %12988 = vmatprep.subr.bf16.mxu0 0
        %12989 = vmatpush2.bf16.msra.mxu0 %v8838
        %12990 = vmatprep.subr.bf16.mxu0 0
        %12991 = vmatpush2.bf16.msra.mxu0 %v8833
        %12992 = vmatprep.subr.bf16.mxu0 0
        %12993 = vmatpush2.bf16.msra.mxu0 %v8828
        %12994 = vmatprep.subr.bf16.mxu0 0
        %12995 = vmatpush2.bf16.msra.mxu0 %v8823
        %12996 = vmatprep.mubr.bf16.mxu0 %v668
        %12997 = vmatmul.mubr.bf16.gmra.mxu0 %v667
        %v12998 = vpop.f32.mrf.mxu0
        %v12999 = vadd.f32 %v12959, %v12998
        %v13000 = vpop.f32.mrf.mxu0
        %v13001 = vpop.f32.mrf.mxu0
        %v13002 = vpop.f32.mrf.mxu0
        %13003 = vdwg.mxu0
        %13004 = vmatprep.subr.bf16.mxu0 0
        %13005 = vmatpush1.bf16.msra.mxu0 %v8898
        %13006 = vmatprep.subr.bf16.mxu0 0
        %13007 = vmatpush1.bf16.msra.mxu0 %v8893
        %13008 = vmatprep.subr.bf16.mxu0 0
        %13009 = vmatpush1.bf16.msra.mxu0 %v8888
        %13010 = vmatprep.subr.bf16.mxu0 0
        %13011 = vmatpush1.bf16.msra.mxu0 %v8883
        %13012 = vmatprep.subr.bf16.mxu0 0
        %13013 = vmatpush1.bf16.msra.mxu0 %v8878
        %13014 = vmatprep.subr.bf16.mxu0 0
        %13015 = vmatpush1.bf16.msra.mxu0 %v8873
        %13016 = vmatprep.subr.bf16.mxu0 0
        %13017 = vmatpush1.bf16.msra.mxu0 %v8868
        %13018 = vmatprep.subr.bf16.mxu0 0
        %13019 = vmatpush1.bf16.msra.mxu0 %v8863
        %13020 = vmatprep.subr.bf16.mxu0 0
        %13021 = vmatpush2.bf16.msra.mxu0 %v8938
        %13022 = vmatprep.subr.bf16.mxu0 0
        %13023 = vmatpush2.bf16.msra.mxu0 %v8933
        %13024 = vmatprep.subr.bf16.mxu0 0
        %13025 = vmatpush2.bf16.msra.mxu0 %v8928
        %13026 = vmatprep.subr.bf16.mxu0 0
        %13027 = vmatpush2.bf16.msra.mxu0 %v8923
        %13028 = vmatprep.subr.bf16.mxu0 0
        %13029 = vmatpush2.bf16.msra.mxu0 %v8918
        %13030 = vmatprep.subr.bf16.mxu0 0
        %13031 = vmatpush2.bf16.msra.mxu0 %v8913
        %13032 = vmatprep.subr.bf16.mxu0 0
        %13033 = vmatpush2.bf16.msra.mxu0 %v8908
        %13034 = vmatprep.subr.bf16.mxu0 0
        %13035 = vmatpush2.bf16.msra.mxu0 %v8903
        %13036 = vmatprep.mubr.bf16.mxu0 %v670
        %13037 = vmatmul.mubr.bf16.gmra.mxu0 %v669
        %v13038 = vpop.f32.mrf.mxu0
        %v13039 = vadd.f32 %v12999, %v13038
        %v13040 = vpop.f32.mrf.mxu0
        %v13041 = vpop.f32.mrf.mxu0
        %v13042 = vpop.f32.mrf.mxu0
        %13043 = vdwg.mxu0
        %13044 = vmatprep.subr.bf16.mxu0 0
        %13045 = vmatpush1.bf16.msra.mxu0 %v8978
        %13046 = vmatprep.subr.bf16.mxu0 0
        %13047 = vmatpush1.bf16.msra.mxu0 %v8973
        %13048 = vmatprep.subr.bf16.mxu0 0
        %13049 = vmatpush1.bf16.msra.mxu0 %v8968
        %13050 = vmatprep.subr.bf16.mxu0 0
        %13051 = vmatpush1.bf16.msra.mxu0 %v8963
        %13052 = vmatprep.subr.bf16.mxu0 0
        %13053 = vmatpush1.bf16.msra.mxu0 %v8958
        %13054 = vmatprep.subr.bf16.mxu0 0
        %13055 = vmatpush1.bf16.msra.mxu0 %v8953
        %13056 = vmatprep.subr.bf16.mxu0 0
        %13057 = vmatpush1.bf16.msra.mxu0 %v8948
        %13058 = vmatprep.subr.bf16.mxu0 0
        %13059 = vmatpush1.bf16.msra.mxu0 %v8943
        %13060 = vmatprep.subr.bf16.mxu0 0
        %13061 = vmatpush2.bf16.msra.mxu0 %v9018
        %13062 = vmatprep.subr.bf16.mxu0 0
        %13063 = vmatpush2.bf16.msra.mxu0 %v9013
        %13064 = vmatprep.subr.bf16.mxu0 0
        %13065 = vmatpush2.bf16.msra.mxu0 %v9008
        %13066 = vmatprep.subr.bf16.mxu0 0
        %13067 = vmatpush2.bf16.msra.mxu0 %v9003
        %13068 = vmatprep.subr.bf16.mxu0 0
        %13069 = vmatpush2.bf16.msra.mxu0 %v8998
        %13070 = vmatprep.subr.bf16.mxu0 0
        %13071 = vmatpush2.bf16.msra.mxu0 %v8993
        %13072 = vmatprep.subr.bf16.mxu0 0
        %13073 = vmatpush2.bf16.msra.mxu0 %v8988
        %13074 = vmatprep.subr.bf16.mxu0 0
        %13075 = vmatpush2.bf16.msra.mxu0 %v8983
        %13076 = vmatprep.mubr.bf16.mxu0 %v672
        %13077 = vmatmul.mubr.bf16.gmra.mxu0 %v671
        %v13078 = vpop.f32.mrf.mxu0
        %v13079 = vadd.f32 %v13039, %v13078
        %v13080 = vpop.f32.mrf.mxu0
        %v13081 = vpop.f32.mrf.mxu0
        %v13082 = vpop.f32.mrf.mxu0
        %13083 = vdwg.mxu0
        %13084 = vmatprep.subr.bf16.mxu0 0
        %13085 = vmatpush1.bf16.msra.mxu0 %v9058
        %13086 = vmatprep.subr.bf16.mxu0 0
        %13087 = vmatpush1.bf16.msra.mxu0 %v9053
        %13088 = vmatprep.subr.bf16.mxu0 0
        %13089 = vmatpush1.bf16.msra.mxu0 %v9048
        %13090 = vmatprep.subr.bf16.mxu0 0
        %13091 = vmatpush1.bf16.msra.mxu0 %v9043
        %13092 = vmatprep.subr.bf16.mxu0 0
        %13093 = vmatpush1.bf16.msra.mxu0 %v9038
        %13094 = vmatprep.subr.bf16.mxu0 0
        %13095 = vmatpush1.bf16.msra.mxu0 %v9033
        %13096 = vmatprep.subr.bf16.mxu0 0
        %13097 = vmatpush1.bf16.msra.mxu0 %v9028
        %13098 = vmatprep.subr.bf16.mxu0 0
        %13099 = vmatpush1.bf16.msra.mxu0 %v9023
        %13100 = vmatprep.subr.bf16.mxu0 0
        %13101 = vmatpush2.bf16.msra.mxu0 %v9098
        %13102 = vmatprep.subr.bf16.mxu0 0
        %13103 = vmatpush2.bf16.msra.mxu0 %v9093
        %13104 = vmatprep.subr.bf16.mxu0 0
        %13105 = vmatpush2.bf16.msra.mxu0 %v9088
        %13106 = vmatprep.subr.bf16.mxu0 0
        %13107 = vmatpush2.bf16.msra.mxu0 %v9083
        %13108 = vmatprep.subr.bf16.mxu0 0
        %13109 = vmatpush2.bf16.msra.mxu0 %v9078
        %13110 = vmatprep.subr.bf16.mxu0 0
        %13111 = vmatpush2.bf16.msra.mxu0 %v9073
        %13112 = vmatprep.subr.bf16.mxu0 0
        %13113 = vmatpush2.bf16.msra.mxu0 %v9068
        %13114 = vmatprep.subr.bf16.mxu0 0
        %13115 = vmatpush2.bf16.msra.mxu0 %v9063
        %13116 = vmatprep.mubr.bf16.mxu0 %v674
        %13117 = vmatmul.mubr.bf16.gmra.mxu0 %v673
        %v13118 = vpop.f32.mrf.mxu0
        %v13119 = vadd.f32 %v13079, %v13118
        %v13120 = vpop.f32.mrf.mxu0
        %v13121 = vpop.f32.mrf.mxu0
        %v13122 = vpop.f32.mrf.mxu0
        %13123 = vdwg.mxu0
        %13124 = vmatprep.subr.bf16.mxu0 0
        %13125 = vmatpush1.bf16.msra.mxu0 %v9138
        %13126 = vmatprep.subr.bf16.mxu0 0
        %13127 = vmatpush1.bf16.msra.mxu0 %v9133
        %13128 = vmatprep.subr.bf16.mxu0 0
        %13129 = vmatpush1.bf16.msra.mxu0 %v9128
        %13130 = vmatprep.subr.bf16.mxu0 0
        %13131 = vmatpush1.bf16.msra.mxu0 %v9123
        %13132 = vmatprep.subr.bf16.mxu0 0
        %13133 = vmatpush1.bf16.msra.mxu0 %v9118
        %13134 = vmatprep.subr.bf16.mxu0 0
        %13135 = vmatpush1.bf16.msra.mxu0 %v9113
        %13136 = vmatprep.subr.bf16.mxu0 0
        %13137 = vmatpush1.bf16.msra.mxu0 %v9108
        %13138 = vmatprep.subr.bf16.mxu0 0
        %13139 = vmatpush1.bf16.msra.mxu0 %v9103
        %13140 = vmatprep.subr.bf16.mxu0 0
        %13141 = vmatpush2.bf16.msra.mxu0 0
        %13142 = vmatprep.subr.bf16.mxu0 0
        %13143 = vmatpush2.bf16.msra.mxu0 0
        %13144 = vmatprep.subr.bf16.mxu0 0
        %13145 = vmatpush2.bf16.msra.mxu0 0
        %13146 = vmatprep.subr.bf16.mxu0 0
        %13147 = vmatpush2.bf16.msra.mxu0 0
        %13148 = vmatprep.subr.bf16.mxu0 0
        %13149 = vmatpush2.bf16.msra.mxu0 0
        %13150 = vmatprep.subr.bf16.mxu0 0
        %13151 = vmatpush2.bf16.msra.mxu0 0
        %13152 = vmatprep.subr.bf16.mxu0 0
        %13153 = vmatpush2.bf16.msra.mxu0 0
        %13154 = vmatprep.subr.bf16.mxu0 0
        %13155 = vmatpush2.bf16.msra.mxu0 %v10722
        %13156 = vmatprep.mubr.bf16.mxu0 %v10706
        %13157 = vmatmul.mubr.bf16.gmra.mxu0 %v675
        %v13158 = vpop.f32.mrf.mxu0
        %v13159 = vadd.f32 %v13119, %v13158
        %v13160 = vpop.f32.mrf.mxu0
        %v13161 = vpop.f32.mrf.mxu0
        %v13162 = vpop.f32.mrf.mxu0
        %13163 = vdwg.mxu0
        %v13164 = vmax.f32 %v11538, 0.0
        %v13165 = vmax.f32 %v11540, 0.0
        %v13166 = vmax.f32 %v12358, 0.0
        %v13167 = vmax.f32 %v12360, 0.0
        %v13168 = vmax.f32 %v13159, 0.0
        %v13169 = vld [vmem:[#allocation2] sm:$0x3]
        %v13170 = vpack.c.bf16 %v13164, %v13164
        %v13171 = vpack.c.bf16 %v13165, %v13165
        %v13172 = vpack.c.bf16 %v13166, %v13166
        %v13173 = vpack.c.bf16 %v13167, %v13167
        %v13174 = vpack.c.bf16 %v13168, %v13168
        %v13175 = vld [vmem:[%s354] sm:$0xf]
        %v13176 = vld [vmem:[%s354 + $0x4] sm:$0xf]
        %v13177 = vld [vmem:[%s354 + $0x8] sm:$0xf]
        %v13178 = vld [vmem:[%s354 + $0xc] sm:$0xf]
        %v13179 = vld [vmem:[%s354 + $0x10] sm:$0xf]
        %v13180 = vld [vmem:[%s354 + $0x14] sm:$0xf]
        %v13181 = vld [vmem:[%s354 + $0x18] sm:$0xf]
        %v13182 = vld [vmem:[%s354 + $0x1c] sm:$0xf]
        %v13183 = vld [vmem:[%s354 + $0x20] sm:$0xf]
        %v13184 = vld [vmem:[%s354 + $0x24] sm:$0xf]
        %v13185 = vld [vmem:[%s354 + $0x28] sm:$0xf]
        %v13186 = vld [vmem:[%s354 + $0x2c] sm:$0xf]
        %v13187 = vld [vmem:[%s354 + $0x30] sm:$0xf]
        %v13188 = vld [vmem:[%s354 + $0x34] sm:$0xf]
        %v13189 = vld [vmem:[%s354 + $0x38] sm:$0xf]
        %v13190 = vld [vmem:[%s354 + $0x3c] sm:$0xf]
        %v13191 = vld [vmem:[%s354 + $0x40] sm:$0xf]
        %v13192 = vld [vmem:[%s354 + $0x44] sm:$0xf]
        %v13193 = vld [vmem:[%s354 + $0x48] sm:$0xf]
        %v13194 = vld [vmem:[%s354 + $0x4c] sm:$0xf]
        %v13195 = vld [vmem:[%s354 + $0x50] sm:$0xf]
        %v13196 = vld [vmem:[%s354 + $0x54] sm:$0xf]
        %v13197 = vld [vmem:[%s354 + $0x58] sm:$0xf]
        %v13198 = vld [vmem:[%s354 + $0x5c] sm:$0xf]
        %v13199 = vld [vmem:[%s354 + $0x60] sm:$0xf]
        %v13200 = vld [vmem:[%s354 + $0x64] sm:$0xf]
        %v13201 = vld [vmem:[%s354 + $0x68] sm:$0xf]
        %v13202 = vld [vmem:[%s354 + $0x6c] sm:$0xf]
        %v13203 = vld [vmem:[%s354 + $0x70] sm:$0xf]
        %v13204 = vld [vmem:[%s354 + $0x74] sm:$0xf]
        %v13205 = vld [vmem:[%s354 + $0x78] sm:$0xf]
        %v13206 = vld [vmem:[%s354 + $0x7c] sm:$0xf]
        %v13207 = vld [vmem:[%s354 + $0x80] sm:$0xf]
        %v13208 = vld [vmem:[%s354 + $0x84] sm:$0xf]
        %v13209 = vld [vmem:[%s354 + $0x88] sm:$0xf]
        %v13210 = vld [vmem:[%s354 + $0x8c] sm:$0xf]
        %v13211 = vld [vmem:[%s354 + $0x90] sm:$0xf]
        %v13212 = vld [vmem:[%s354 + $0x94] sm:$0xf]
        %v13213 = vld [vmem:[%s354 + $0x98] sm:$0xf]
        %v13214 = vld [vmem:[%s354 + $0x9c] sm:$0xf]
        %v13215 = vld [vmem:[%s354 + $0xa0] sm:$0xf]
        %v13216 = vld [vmem:[%s354 + $0xa4] sm:$0xf]
        %v13217 = vld [vmem:[%s354 + $0xa8] sm:$0xf]
        %v13218 = vld [vmem:[%s354 + $0xac] sm:$0xf]
        %v13219 = vld [vmem:[%s354 + $0xb0] sm:$0xf]
        %v13220 = vld [vmem:[%s354 + $0xb4] sm:$0xf]
        %v13221 = vld [vmem:[%s354 + $0xb8] sm:$0xf]
        %v13222 = vld [vmem:[%s354 + $0xbc] sm:$0xf]
        %v13223 = vld [vmem:[%s354 + $0xc0] sm:$0xf]
        %v13224 = vld [vmem:[%s354 + $0xc4] sm:$0xf]
        %v13225 = vld [vmem:[%s354 + $0xc8] sm:$0xf]
        %v13226 = vld [vmem:[%s354 + $0xcc] sm:$0xf]
        %v13227 = vld [vmem:[%s354 + $0xd0] sm:$0xf]
        %v13228 = vld [vmem:[%s354 + $0xd4] sm:$0xf]
        %v13229 = vld [vmem:[%s354 + $0xd8] sm:$0xf]
        %v13230 = vld [vmem:[%s354 + $0xdc] sm:$0xf]
        %v13231 = vld [vmem:[%s354 + $0xe0] sm:$0xf]
        %v13232 = vld [vmem:[%s354 + $0xe4] sm:$0xf]
        %v13233 = vld [vmem:[%s354 + $0xe8] sm:$0xf]
        %v13234 = vld [vmem:[%s354 + $0xec] sm:$0xf]
        %v13235 = vld [vmem:[%s354 + $0xf0] sm:$0xf]
        %v13236 = vld [vmem:[%s354 + $0xf4] sm:$0xf]
        %v13237 = vld [vmem:[%s354 + $0xf8] sm:$0xf]
        %v13238 = vld [vmem:[%s354 + $0xfc] sm:$0xf]
        %v13239 = vld [vmem:[%s354 + $0x100] sm:$0xf]
        %v13240 = vld [vmem:[%s354 + $0x104] sm:$0xf]
        %v13241 = vld [vmem:[%s354 + $0x108] sm:$0xf]
        %v13242 = vld [vmem:[%s354 + $0x10c] sm:$0xf]
        %v13243 = vld [vmem:[%s354 + $0x110] sm:$0xf]
        %v13244 = vld [vmem:[%s354 + $0x114] sm:$0xf]
        %v13245 = vld [vmem:[%s354 + $0x118] sm:$0xf]
        %v13246 = vld [vmem:[%s354 + $0x11c] sm:$0xf]
        %v13247 = vld [vmem:[%s354 + $0x120] sm:$0xf]
        %v13248 = vld [vmem:[%s354 + $0x124] sm:$0xf]
        %v13249 = vld [vmem:[%s354 + $0x128] sm:$0xf]
        %v13250 = vld [vmem:[%s354 + $0x12c] sm:$0xf]
        %v13251 = vld [vmem:[%s354 + $0x130] sm:$0xf]
        %v13252 = vld [vmem:[%s354 + $0x134] sm:$0xf]
        %v13253 = vld [vmem:[%s354 + $0x138] sm:$0xf]
        %v13254 = vld [vmem:[%s354 + $0x13c] sm:$0xf]
        %v13335 = vunpack.c.l.b16 %v13175
        %v13336 = vunpack.c.l.b16 %v13176
        %v13337 = vunpack.c.l.b16 %v13177
        %v13338 = vunpack.c.l.b16 %v13178
        %v13339 = vunpack.c.l.b16 %v13179
        %v13340 = vunpack.c.l.b16 %v13180
        %v13341 = vunpack.c.l.b16 %v13181
        %v13342 = vunpack.c.l.b16 %v13182
        %v13343 = vunpack.c.l.b16 %v13183
        %v13344 = vunpack.c.l.b16 %v13184
        %v13345 = vunpack.c.l.b16 %v13185
        %v13346 = vunpack.c.l.b16 %v13186
        %v13347 = vunpack.c.l.b16 %v13187
        %v13348 = vunpack.c.l.b16 %v13188
        %v13349 = vunpack.c.l.b16 %v13189
        %v13350 = vunpack.c.l.b16 %v13190
        %v13351 = vunpack.c.l.b16 %v13191
        %v13352 = vunpack.c.l.b16 %v13192
        %v13353 = vunpack.c.l.b16 %v13193
        %v13354 = vunpack.c.l.b16 %v13194
        %v13355 = vunpack.c.l.b16 %v13195
        %v13356 = vunpack.c.l.b16 %v13196
        %v13357 = vunpack.c.l.b16 %v13197
        %v13358 = vunpack.c.l.b16 %v13198
        %v13359 = vunpack.c.l.b16 %v13199
        %v13360 = vunpack.c.l.b16 %v13200
        %v13361 = vunpack.c.l.b16 %v13201
        %v13362 = vunpack.c.l.b16 %v13202
        %v13363 = vunpack.c.l.b16 %v13203
        %v13364 = vunpack.c.l.b16 %v13204
        %v13365 = vunpack.c.l.b16 %v13205
        %v13366 = vunpack.c.l.b16 %v13206
        %v13367 = vunpack.c.l.b16 %v13207
        %v13368 = vunpack.c.l.b16 %v13208
        %v13369 = vunpack.c.l.b16 %v13209
        %v13370 = vunpack.c.l.b16 %v13210
        %v13371 = vunpack.c.l.b16 %v13211
        %v13372 = vunpack.c.l.b16 %v13212
        %v13373 = vunpack.c.l.b16 %v13213
        %v13374 = vunpack.c.l.b16 %v13214
        %v13375 = vunpack.c.l.b16 %v13215
        %v13376 = vunpack.c.l.b16 %v13216
        %v13377 = vunpack.c.l.b16 %v13217
        %v13378 = vunpack.c.l.b16 %v13218
        %v13379 = vunpack.c.l.b16 %v13219
        %v13380 = vunpack.c.l.b16 %v13220
        %v13381 = vunpack.c.l.b16 %v13221
        %v13382 = vunpack.c.l.b16 %v13222
        %v13383 = vunpack.c.l.b16 %v13223
        %v13384 = vunpack.c.l.b16 %v13224
        %v13385 = vunpack.c.l.b16 %v13225
        %v13386 = vunpack.c.l.b16 %v13226
        %v13387 = vunpack.c.l.b16 %v13227
        %v13388 = vunpack.c.l.b16 %v13228
        %v13389 = vunpack.c.l.b16 %v13229
        %v13390 = vunpack.c.l.b16 %v13230
        %v13391 = vunpack.c.l.b16 %v13231
        %v13392 = vunpack.c.l.b16 %v13232
        %v13393 = vunpack.c.l.b16 %v13233
        %v13394 = vunpack.c.l.b16 %v13234
        %v13395 = vunpack.c.l.b16 %v13235
        %v13396 = vunpack.c.l.b16 %v13236
        %v13397 = vunpack.c.l.b16 %v13237
        %v13398 = vunpack.c.l.b16 %v13238
        %v13399 = vunpack.c.l.b16 %v13239
        %v13400 = vunpack.c.l.b16 %v13240
        %v13401 = vunpack.c.l.b16 %v13241
        %v13402 = vunpack.c.l.b16 %v13242
        %v13403 = vunpack.c.l.b16 %v13243
        %v13404 = vunpack.c.l.b16 %v13244
        %v13405 = vunpack.c.l.b16 %v13245
        %v13406 = vunpack.c.l.b16 %v13246
        %v13407 = vunpack.c.l.b16 %v13247
        %v13408 = vunpack.c.l.b16 %v13248
        %v13409 = vunpack.c.l.b16 %v13249
        %v13410 = vunpack.c.l.b16 %v13250
        %v13411 = vunpack.c.l.b16 %v13251
        %v13412 = vunpack.c.l.b16 %v13252
        %v13413 = vunpack.c.l.b16 %v13253
        %v13414 = vunpack.c.l.b16 %v13254
        %v13415 = vpack.c.b16 %v13336, %v13335
        %v13416 = vpack.c.b16 %v13338, %v13337
        %v13417 = vpack.c.b16 %v13340, %v13339
        %v13418 = vpack.c.b16 %v13342, %v13341
        %v13419 = vpack.c.b16 %v13344, %v13343
        %v13420 = vpack.c.b16 %v13346, %v13345
        %v13421 = vpack.c.b16 %v13348, %v13347
        %v13422 = vpack.c.b16 %v13350, %v13349
        %v13423 = vpack.c.b16 %v13352, %v13351
        %v13424 = vpack.c.b16 %v13354, %v13353
        %v13425 = vpack.c.b16 %v13356, %v13355
        %v13426 = vpack.c.b16 %v13358, %v13357
        %v13427 = vpack.c.b16 %v13360, %v13359
        %v13428 = vpack.c.b16 %v13362, %v13361
        %v13429 = vpack.c.b16 %v13364, %v13363
        %v13430 = vpack.c.b16 %v13366, %v13365
        %v13431 = vpack.c.b16 %v13368, %v13367
        %v13432 = vpack.c.b16 %v13370, %v13369
        %v13433 = vpack.c.b16 %v13372, %v13371
        %v13434 = vpack.c.b16 %v13374, %v13373
        %v13435 = vpack.c.b16 %v13376, %v13375
        %v13436 = vpack.c.b16 %v13378, %v13377
        %v13437 = vpack.c.b16 %v13380, %v13379
        %v13438 = vpack.c.b16 %v13382, %v13381
        %v13439 = vpack.c.b16 %v13384, %v13383
        %v13440 = vpack.c.b16 %v13386, %v13385
        %v13441 = vpack.c.b16 %v13388, %v13387
        %v13442 = vpack.c.b16 %v13390, %v13389
        %v13443 = vpack.c.b16 %v13392, %v13391
        %v13444 = vpack.c.b16 %v13394, %v13393
        %v13445 = vpack.c.b16 %v13396, %v13395
        %v13446 = vpack.c.b16 %v13398, %v13397
        %v13447 = vpack.c.b16 %v13400, %v13399
        %v13448 = vpack.c.b16 %v13402, %v13401
        %v13449 = vpack.c.b16 %v13404, %v13403
        %v13450 = vpack.c.b16 %v13406, %v13405
        %v13451 = vpack.c.b16 %v13408, %v13407
        %v13452 = vpack.c.b16 %v13410, %v13409
        %v13453 = vpack.c.b16 %v13412, %v13411
        %v13454 = vpack.c.b16 %v13414, %v13413
        %13495 = vmatprep.subr.bf16.mxu0 0
        %13496 = vmatpush1.bf16.msra.mxu0 %v13422
        %13497 = vmatprep.subr.bf16.mxu0 0
        %13498 = vmatpush1.bf16.msra.mxu0 %v13421
        %13499 = vmatprep.subr.bf16.mxu0 0
        %13500 = vmatpush1.bf16.msra.mxu0 %v13420
        %13501 = vmatprep.subr.bf16.mxu0 0
        %13502 = vmatpush1.bf16.msra.mxu0 %v13419
        %13503 = vmatprep.subr.bf16.mxu0 0
        %13504 = vmatpush1.bf16.msra.mxu0 %v13418
        %13505 = vmatprep.subr.bf16.mxu0 0
        %13506 = vmatpush1.bf16.msra.mxu0 %v13417
        %13507 = vmatprep.subr.bf16.mxu0 0
        %13508 = vmatpush1.bf16.msra.mxu0 %v13416
        %13509 = vmatprep.subr.bf16.mxu0 0
        %13510 = vmatpush1.bf16.msra.mxu0 %v13415
        %13511 = vmatprep.subr.bf16.mxu0 0
        %13512 = vmatpush2.bf16.msra.mxu0 %v13430
        %13513 = vmatprep.subr.bf16.mxu0 0
        %13514 = vmatpush2.bf16.msra.mxu0 %v13429
        %13515 = vmatprep.subr.bf16.mxu0 0
        %13516 = vmatpush2.bf16.msra.mxu0 %v13428
        %13517 = vmatprep.subr.bf16.mxu0 0
        %13518 = vmatpush2.bf16.msra.mxu0 %v13427
        %13519 = vmatprep.subr.bf16.mxu0 0
        %13520 = vmatpush2.bf16.msra.mxu0 %v13426
        %13521 = vmatprep.subr.bf16.mxu0 0
        %13522 = vmatpush2.bf16.msra.mxu0 %v13425
        %13523 = vmatprep.subr.bf16.mxu0 0
        %13524 = vmatpush2.bf16.msra.mxu0 %v13424
        %13525 = vmatprep.subr.bf16.mxu0 0
        %13526 = vmatpush2.bf16.msra.mxu0 %v13423
        %13527 = vmatprep.mubr.bf16.mxu0 %v13171
        %13528 = vmatmul.mubr.bf16.gmra.mxu0 %v13170
        %v13529 = vpop.f32.mrf.mxu0
        %v13530 = vadd.f32 0.0, %v13529
        %v13531 = vpop.f32.mrf.mxu0
        %v13532 = vpop.f32.mrf.mxu0
        %v13533 = vpop.f32.mrf.mxu0
        %13534 = vdwg.mxu0
        %13535 = vmatprep.subr.bf16.mxu0 0
        %13536 = vmatpush1.bf16.msra.mxu0 %v13438
        %13537 = vmatprep.subr.bf16.mxu0 0
        %13538 = vmatpush1.bf16.msra.mxu0 %v13437
        %13539 = vmatprep.subr.bf16.mxu0 0
        %13540 = vmatpush1.bf16.msra.mxu0 %v13436
        %13541 = vmatprep.subr.bf16.mxu0 0
        %13542 = vmatpush1.bf16.msra.mxu0 %v13435
        %13543 = vmatprep.subr.bf16.mxu0 0
        %13544 = vmatpush1.bf16.msra.mxu0 %v13434
        %13545 = vmatprep.subr.bf16.mxu0 0
        %13546 = vmatpush1.bf16.msra.mxu0 %v13433
        %13547 = vmatprep.subr.bf16.mxu0 0
        %13548 = vmatpush1.bf16.msra.mxu0 %v13432
        %13549 = vmatprep.subr.bf16.mxu0 0
        %13550 = vmatpush1.bf16.msra.mxu0 %v13431
        %13551 = vmatprep.subr.bf16.mxu0 0
        %13552 = vmatpush2.bf16.msra.mxu0 %v13446
        %13553 = vmatprep.subr.bf16.mxu0 0
        %13554 = vmatpush2.bf16.msra.mxu0 %v13445
        %13555 = vmatprep.subr.bf16.mxu0 0
        %13556 = vmatpush2.bf16.msra.mxu0 %v13444
        %13557 = vmatprep.subr.bf16.mxu0 0
        %13558 = vmatpush2.bf16.msra.mxu0 %v13443
        %13559 = vmatprep.subr.bf16.mxu0 0
        %13560 = vmatpush2.bf16.msra.mxu0 %v13442
        %13561 = vmatprep.subr.bf16.mxu0 0
        %13562 = vmatpush2.bf16.msra.mxu0 %v13441
        %13563 = vmatprep.subr.bf16.mxu0 0
        %13564 = vmatpush2.bf16.msra.mxu0 %v13440
        %13565 = vmatprep.subr.bf16.mxu0 0
        %13566 = vmatpush2.bf16.msra.mxu0 %v13439
        %13567 = vmatprep.mubr.bf16.mxu0 %v13173
        %13568 = vmatmul.mubr.bf16.gmra.mxu0 %v13172
        %v13569 = vpop.f32.mrf.mxu0
        %v13570 = vadd.f32 %v13530, %v13569
        %v13571 = vpop.f32.mrf.mxu0
        %v13572 = vpop.f32.mrf.mxu0
        %v13573 = vpop.f32.mrf.mxu0
        %13574 = vdwg.mxu0
        %13575 = vmatprep.subr.bf16.mxu0 0
        %13576 = vmatpush1.bf16.msra.mxu0 %v13454
        %13577 = vmatprep.subr.bf16.mxu0 0
        %13578 = vmatpush1.bf16.msra.mxu0 %v13453
        %13579 = vmatprep.subr.bf16.mxu0 0
        %13580 = vmatpush1.bf16.msra.mxu0 %v13452
        %13581 = vmatprep.subr.bf16.mxu0 0
        %13582 = vmatpush1.bf16.msra.mxu0 %v13451
        %13583 = vmatprep.subr.bf16.mxu0 0
        %13584 = vmatpush1.bf16.msra.mxu0 %v13450
        %13585 = vmatprep.subr.bf16.mxu0 0
        %13586 = vmatpush1.bf16.msra.mxu0 %v13449
        %13587 = vmatprep.subr.bf16.mxu0 0
        %13588 = vmatpush1.bf16.msra.mxu0 %v13448
        %13589 = vmatprep.subr.bf16.mxu0 0
        %13590 = vmatpush1.bf16.msra.mxu0 %v13447
        %13591 = vmatprep.subr.bf16.mxu0 0
        %13592 = vmatpush2.bf16.msra.mxu0 0
        %13593 = vmatprep.subr.bf16.mxu0 0
        %13594 = vmatpush2.bf16.msra.mxu0 0
        %13595 = vmatprep.subr.bf16.mxu0 0
        %13596 = vmatpush2.bf16.msra.mxu0 0
        %13597 = vmatprep.subr.bf16.mxu0 0
        %13598 = vmatpush2.bf16.msra.mxu0 0
        %13599 = vmatprep.subr.bf16.mxu0 0
        %13600 = vmatpush2.bf16.msra.mxu0 0
        %13601 = vmatprep.subr.bf16.mxu0 0
        %13602 = vmatpush2.bf16.msra.mxu0 0
        %13603 = vmatprep.subr.bf16.mxu0 0
        %13604 = vmatpush2.bf16.msra.mxu0 0
        %13605 = vmatprep.subr.bf16.mxu0 0
        %13606 = vmatpush2.bf16.msra.mxu0 0
        %13607 = vmatprep.mubr.bf16.mxu0 0
        %13608 = vmatmul.mubr.bf16.gmra.mxu0 %v13174
        %v13609 = vpop.f32.mrf.mxu0
        %v13610 = vadd.f32 %v13570, %v13609
        %v13611 = vpop.f32.mrf.mxu0
        %v13612 = vpop.f32.mrf.mxu0
        %v13613 = vpop.f32.mrf.mxu0
        %13614 = vdwg.mxu0
        %v13615 = vadd.f32 %v13169, %v13610
        %13616 = vst [vmem:[#allocation2] sm:$0x3] %v13615
        %p13617 = scmp.eq.s32.totalorder %s27, 1
        // Predicated region
        $region77: #{mlp_forward.1} parent=47 // pred_check
          %p13618 = pneg %p13617
        $region78: #{mlp_forward.1} parent=47 // pred_check_branch
          %13620 = sbr.rel (%p13618) target = $region80
        $region79: #{mlp_forward.1} parent=47 // pred_region
          %v13621 = vld [vmem:[#allocation2] sm:$0x3]
          %v13622 = vld [vmem:[#allocation11] sm:$0x1]
          %v13624 = vlaneseq
          %v13625 = vshrl.u32 %v13624, 7
          %v13626 = vsub.s32 0, %v13625
          %v13627 = vrot.slane %v13622, %v13626
          %v13629 = vadd.f32 %v13621, %v13627
          %v13630 = vmax.f32 %v13629, 0.0
          %v13631 = vld [vmem:[%s5] sm:$0xff]
          %v13632 = vld [vmem:[%s5 + $0x8] sm:$0xff]
          %v13633 = vld [vmem:[%s5 + $0x10] sm:$0xff]
          %v13634 = vld [vmem:[%s5 + $0x18] sm:$0xff]
          %v13635 = vld [vmem:[%s5 + $0x20] sm:$0xff]
          %v13636 = vld [vmem:[%s5 + $0x28] sm:$0xff]
          %v13637 = vld [vmem:[%s5 + $0x30] sm:$0xff]
          %v13638 = vld [vmem:[%s5 + $0x38] sm:$0xff]
          %v13639 = vld [vmem:[%s5 + $0x40] sm:$0xff]
          %v13640 = vld [vmem:[%s5 + $0x48] sm:$0xff]
          %v13641 = vld [vmem:[%s5 + $0x50] sm:$0xff]
          %v13642 = vld [vmem:[%s5 + $0x58] sm:$0xff]
          %v13643 = vld [vmem:[%s5 + $0x60] sm:$0xff]
          %v13644 = vld [vmem:[%s5 + $0x68] sm:$0xff]
          %v13645 = vld [vmem:[%s5 + $0x70] sm:$0xff]
          %v13646 = vld [vmem:[%s5 + $0x78] sm:$0xff]
          %v13647 = vld [vmem:[#allocation12] sm:$0x1]
          %v13649 = vlaneseq
          %v13650 = vshrl.u32 %v13649, 7
          %v13651 = vsub.s32 0, %v13650
          %v13652 = vrot.slane %v13647, %v13651
          %13654 = vmatprep.subr.mxu0 0.0
          %13655 = vmatpush1.msra.mxu0 %v13646
          %13656 = vmatprep.subr.mxu0 0.0
          %13657 = vmatpush1.msra.mxu0 %v13645
          %13658 = vmatprep.subr.mxu0 0.0
          %13659 = vmatpush1.msra.mxu0 %v13644
          %13660 = vmatprep.subr.mxu0 0.0
          %13661 = vmatpush1.msra.mxu0 %v13643
          %13662 = vmatprep.subr.mxu0 0.0
          %13663 = vmatpush1.msra.mxu0 %v13642
          %13664 = vmatprep.subr.mxu0 0.0
          %13665 = vmatpush1.msra.mxu0 %v13641
          %13666 = vmatprep.subr.mxu0 0.0
          %13667 = vmatpush1.msra.mxu0 %v13640
          %13668 = vmatprep.subr.mxu0 0.0
          %13669 = vmatpush1.msra.mxu0 %v13639
          %13670 = vmatprep.subr.mxu0 0.0
          %13671 = vmatpush1.msra.mxu0 %v13638
          %13672 = vmatprep.subr.mxu0 0.0
          %13673 = vmatpush1.msra.mxu0 %v13637
          %13674 = vmatprep.subr.mxu0 0.0
          %13675 = vmatpush1.msra.mxu0 %v13636
          %13676 = vmatprep.subr.mxu0 0.0
          %13677 = vmatpush1.msra.mxu0 %v13635
          %13678 = vmatprep.subr.mxu0 0.0
          %13679 = vmatpush1.msra.mxu0 %v13634
          %13680 = vmatprep.subr.mxu0 0.0
          %13681 = vmatpush1.msra.mxu0 %v13633
          %13682 = vmatprep.subr.mxu0 0.0
          %13683 = vmatpush1.msra.mxu0 %v13632
          %13684 = vmatprep.subr.mxu0 0.0
          %13685 = vmatpush1.msra.mxu0 %v13631
          %13686 = vmatprep.subr.mxu0 0.0
          %13687 = vmatpush2.msra.mxu0 0.0
          %13688 = vmatprep.subr.mxu0 0.0
          %13689 = vmatpush2.msra.mxu0 0.0
          %13690 = vmatprep.subr.mxu0 0.0
          %13691 = vmatpush2.msra.mxu0 0.0
          %13692 = vmatprep.subr.mxu0 0.0
          %13693 = vmatpush2.msra.mxu0 0.0
          %13694 = vmatprep.subr.mxu0 0.0
          %13695 = vmatpush2.msra.mxu0 0.0
          %13696 = vmatprep.subr.mxu0 0.0
          %13697 = vmatpush2.msra.mxu0 0.0
          %13698 = vmatprep.subr.mxu0 0.0
          %13699 = vmatpush2.msra.mxu0 0.0
          %13700 = vmatprep.subr.mxu0 0.0
          %13701 = vmatpush2.msra.mxu0 0.0
          %13702 = vmatprep.subr.mxu0 0.0
          %13703 = vmatpush2.msra.mxu0 0.0
          %13704 = vmatprep.subr.mxu0 0.0
          %13705 = vmatpush2.msra.mxu0 0.0
          %13706 = vmatprep.subr.mxu0 0.0
          %13707 = vmatpush2.msra.mxu0 0.0
          %13708 = vmatprep.subr.mxu0 0.0
          %13709 = vmatpush2.msra.mxu0 0.0
          %13710 = vmatprep.subr.mxu0 0.0
          %13711 = vmatpush2.msra.mxu0 0.0
          %13712 = vmatprep.subr.mxu0 0.0
          %13713 = vmatpush2.msra.mxu0 0.0
          %13714 = vmatprep.subr.mxu0 0.0
          %13715 = vmatpush2.msra.mxu0 0.0
          %13716 = vmatprep.subr.mxu0 0.0
          %13717 = vmatpush2.msra.mxu0 0.0
          %13718 = vmatprep.mubr.f32.mxu0 0.0
          %13719 = vmatmul.mubr.f32.gmra.mxu0 %v13630
          %v13720 = vpop.f32.mrf.mxu0
          %v13721 = vadd.f32 %v13652, %v13720
          %v13722 = vpop.f32.mrf.mxu0
          %13723 = vdwg.mxu0
          %vm13724 = vcmask 9216
          %13725 = vst.msk [vmem:[#allocation14] sm:$0x3] %vm13724, %v13721
        $region80: #{mlp_forward.1} parent=47 // pred_fallthru
          _
        // Predicated region
        $region81: #{mlp_forward.1} parent=47 // pred_check
          %p13726 = pneg %p202
        $region82: #{mlp_forward.1} parent=47 // pred_check_branch
          %13728 = sbr.rel (%p13726) target = $region84
        $region83: #{mlp_forward.1} parent=47 // pred_region
          %s13730 = ssub.s32 32, 32
          %13731 = vsyncadd [#allocation5], %s13730
          %s13733 = sshll.u32 [#allocation14], 4
          %s13734 = int_to_ptr.vmem [resolvable:$true] %s13733
          %13736 = dma.vmem_to_hbm [thread:$0]  %s13734, 32, %s7, [#allocation5]
        $region84: #{mlp_forward.1} parent=47 // pred_fallthru
          _
        // Predicated region
        $region85: #{mlp_forward.1} parent=47 // pred_check
          %p13737 = pneg %p202
        $region86: #{mlp_forward.1} parent=47 // pred_check_branch
          %13739 = sbr.rel (%p13737) target = $region88
        $region87: #{mlp_forward.1} parent=47 // pred_region
          %13740 = dma.done [#allocation5], 32
        $region88: #{mlp_forward.1} parent=47 // pred_fallthru
          _
      $region48: #{mlp_forward.1} parent=5 // pred_fallthru
        _
      %p13741 = scmp.le.s32.totalorder 2, %s22
      // Predicated region
      $region89: #{mlp_forward.1} parent=5 // pred_check
        %p13742 = pneg %p13741
      $region90: #{mlp_forward.1} parent=5 // pred_check_branch
        %13744 = sbr.rel (%p13742) target = $region92
      $region91: #{mlp_forward.1} parent=5 // pred_region
        %s13745 = ssub.s32 %s22, 2
      $region92: #{mlp_forward.1} parent=5 // pred_fallthru
        _
    $region6: #{mlp_forward.1} parent=1 // loop_footer
      %s26 = sadd.s32 1, %s22
    $region7: #{mlp_forward.1} parent=1 // loop_footer_branch
      %21 = sbr.rel target = $region3
    $region8: #{mlp_forward.1} parent=1 // loop_exit
      _
    %13746 = vsyncpa [#allocation4], 1
    %s13747 = scalar_lea.sflag [#allocation4], 1
    %13748 = vsyncpa %s13747, 1
    %13749 = vsyncpa [#allocation7], 1
    %s13750 = scalar_lea.sflag [#allocation7], 1
    %13751 = vsyncpa %s13750, 1
    %13752 = vsyncpa [#allocation10], 1
    %s13753 = scalar_lea.sflag [#allocation10], 1
    %13754 = vsyncpa %s13753, 1
    %13755 = vsyncpa [#allocation13], 1
    %13756 = vsyncpa [#allocation5], 1
    %s13757 = scalar_lea.sflag [#allocation5], 1
    %13758 = vsyncpa %s13757, 1

</llo_original>
